<compile_context>
chip_gen: v7x
topology: tpu7x:2x2x1
jax: 0.10.0
libtpu: 0.0.40
codegen_flags: <defaults>
</compile_context>

<pallas_src>
import jax
import jax.numpy as jnp
from jax.experimental import pallas as pl
from jax.experimental.pallas import tpu as pltpu


def _round_up(x, m):
    return ((x + m - 1) // m) * m


def word_encoder_kernel(ids_ref, emb_hbm, out_ref, sem):
    """Gather one tile of embedding rows via per-row DMA.

    ids_ref : (N_pad,) int32 flattened token ids in SMEM (scalar prefetch)
    emb_hbm : (V, D) embedding table, left in HBM (memory_space=pl.ANY)
    out_ref : (tm, D) output tile in VMEM
    sem     : DMA semaphore (shared by all row copies of this tile)
    """
    tm = out_ref.shape[0]
    base = pl.program_id(0) * tm

    # Issue all row-gather DMAs (HBM table row -> output VMEM row) ...
    for j in range(tm):
        tok = ids_ref[base + j]
        pltpu.make_async_copy(
            emb_hbm.at[pl.ds(tok, 1), :],
            out_ref.at[pl.ds(j, 1), :],
            sem,
        ).start()

    # ... then wait for all of them (all copies are the same size, so tm
    # waits on the shared semaphore consume exactly tm completions).
    for j in range(tm):
        pltpu.make_async_copy(
            emb_hbm.at[pl.ds(0, 1), :],
            out_ref.at[pl.ds(j, 1), :],
            sem,
        ).wait()


def word_encoder(token_ids, emb_table, *, tm=128):
    """Pallas equivalent of WordEncoder.forward.

    token_ids: int (B, P, W)
    emb_table: float32 (V, D)
    returns:   float32 (B, P, W, D)
    """
    B, P, W = token_ids.shape
    V, D = emb_table.shape
    N = B * P * W

    # Token tile per grid step: multiple of 8, no larger than the problem.
    tm = max(8, min(tm, _round_up(N, 8)))
    N_pad = _round_up(N, tm)

    ids_flat = token_ids.reshape(N).astype(jnp.int32)
    # PyTorch nn.Embedding raises on out-of-range ids; here we clamp so that
    # padded / bad ids never produce an out-of-bounds HBM DMA.
    ids_flat = jnp.clip(ids_flat, 0, V - 1)
    if N_pad != N:
        ids_flat = jnp.pad(ids_flat, (0, N_pad - N))

    out = pl.pallas_call(
        word_encoder_kernel,
        out_shape=jax.ShapeDtypeStruct((N_pad, D), emb_table.dtype),
        grid_spec=pltpu.PrefetchScalarGridSpec(
            num_scalar_prefetch=1,                      # ids -> SMEM
            grid=(N_pad // tm,),
            in_specs=[
                pl.BlockSpec(memory_space=pl.ANY),      # table stays in HBM
            ],
            out_specs=pl.BlockSpec((tm, D), lambda i, ids: (i, 0)),
            scratch_shapes=[pltpu.SemaphoreType.DMA(())],
        ),
        compiler_params=pltpu.CompilerParams(
            dimension_semantics=("parallel",),
        ),
    )(ids_flat, emb_table)

    return out[:N].reshape(B, P, W, D)


if __name__ == "__main__":
    # Config (synthetic, matches module __init__ shapes):
    #   max_vocab = 128, emb_dim = 32
    B, P, W = 2, 4, 8          # batch_size, num_posts, num_words
    V, D = 128, 32             # vocab_size, embedding_dim

    key = jax.random.PRNGKey(0)
    k_emb, k_tok = jax.random.split(key)

    # Deterministic in-script parameter init (nn.Embedding weight: (V, D)).
    emb_table = jax.random.normal(k_emb, (V, D), dtype=jnp.float32)
    token_ids = jax.random.randint(k_tok, (B, P, W), 0, V, dtype=jnp.int32)

    out = word_encoder(token_ids, emb_table)
    out = jax.block_until_ready(out)

    # Reference check: plain embedding gather.
    ref = jnp.take(emb_table, token_ids, axis=0)
    assert out.shape == (B, P, W, D)
    assert out.dtype == jnp.float32
    assert jnp.allclose(out, ref), "mismatch vs reference gather"

    # TODO(synk): load_pretrained_embedding is file I/O (weight loading), not a
    # forward-pass op, so it is intentionally not translated.
    print("KERNEL_OK")
</pallas_src>

<mosaic_0001>
module attributes {stable_mosaic.version = 11 : i64} {
  func.func @word_encoder_kernel(%arg0: i32, %arg1: memref<64xi32, #tpu.memory_space<smem>>, %arg2: memref<128x32xf32, #tpu.memory_space<any>>, %arg3: memref<64x32xf32, #tpu.memory_space<vmem>>, %arg4: memref<!tpu.dma_semaphore, #tpu.memory_space<semaphore_mem>>) attributes {dimension_semantics = [#tpu.dimension_semantics<parallel>], iteration_bounds = array<i64: 1>, scalar_prefetch = 1 : i64, scratch_operands = 1 : i64, tpu.core_type = #tpu.core_type<tc>, window_params = [{}, {transform_indices = @transform_1, window_bounds = array<i64: 64, 32>}]} {
    %c64_i32 = arith.constant 64 : i32
    %0 = arith.muli %arg0, %c64_i32 : i32
    %c0_i32 = arith.constant 0 : i32
    %1 = arith.addi %0, %c0_i32 : i32
    %2 = arith.index_cast %1 : i32 to index
    %3 = memref.load %arg1[%2] : memref<64xi32, #tpu.memory_space<smem>>
    %c0_i32_0 = arith.constant 0 : i32
    %4 = tpu.memref_slice %arg2[%3, %c0_i32_0] : memref<128x32xf32, #tpu.memory_space<any>> -> memref<1x32xf32, #tpu.memory_space<any>>
    %c0_i32_1 = arith.constant 0 : i32
    %c0_i32_2 = arith.constant 0 : i32
    %5 = tpu.memref_slice %arg3[%c0_i32_1, %c0_i32_2] : memref<64x32xf32, #tpu.memory_space<vmem>> -> memref<1x32xf32, #tpu.memory_space<vmem>>
    tpu.enqueue_dma source(%4 : memref<1x32xf32, #tpu.memory_space<any>>) target(%5 : memref<1x32xf32, #tpu.memory_space<vmem>>) target_semaphore(%arg4 : memref<!tpu.dma_semaphore, #tpu.memory_space<semaphore_mem>>)
    %c1_i32 = arith.constant 1 : i32
    %6 = arith.addi %0, %c1_i32 : i32
    %7 = arith.index_cast %6 : i32 to index
    %8 = memref.load %arg1[%7] : memref<64xi32, #tpu.memory_space<smem>>
    %c0_i32_3 = arith.constant 0 : i32
    %9 = tpu.memref_slice %arg2[%8, %c0_i32_3] : memref<128x32xf32, #tpu.memory_space<any>> -> memref<1x32xf32, #tpu.memory_space<any>>
    %c1_i32_4 = arith.constant 1 : i32
    %c0_i32_5 = arith.constant 0 : i32
    %10 = tpu.memref_slice %arg3[%c1_i32_4, %c0_i32_5] : memref<64x32xf32, #tpu.memory_space<vmem>> -> memref<1x32xf32, #tpu.memory_space<vmem>>
    tpu.enqueue_dma source(%9 : memref<1x32xf32, #tpu.memory_space<any>>) target(%10 : memref<1x32xf32, #tpu.memory_space<vmem>>) target_semaphore(%arg4 : memref<!tpu.dma_semaphore, #tpu.memory_space<semaphore_mem>>)
    %c2_i32 = arith.constant 2 : i32
    %11 = arith.addi %0, %c2_i32 : i32
    %12 = arith.index_cast %11 : i32 to index
    %13 = memref.load %arg1[%12] : memref<64xi32, #tpu.memory_space<smem>>
    %c0_i32_6 = arith.constant 0 : i32
    %14 = tpu.memref_slice %arg2[%13, %c0_i32_6] : memref<128x32xf32, #tpu.memory_space<any>> -> memref<1x32xf32, #tpu.memory_space<any>>
    %c2_i32_7 = arith.constant 2 : i32
    %c0_i32_8 = arith.constant 0 : i32
    %15 = tpu.memref_slice %arg3[%c2_i32_7, %c0_i32_8] : memref<64x32xf32, #tpu.memory_space<vmem>> -> memref<1x32xf32, #tpu.memory_space<vmem>>
    tpu.enqueue_dma source(%14 : memref<1x32xf32, #tpu.memory_space<any>>) target(%15 : memref<1x32xf32, #tpu.memory_space<vmem>>) target_semaphore(%arg4 : memref<!tpu.dma_semaphore, #tpu.memory_space<semaphore_mem>>)
    %c3_i32 = arith.constant 3 : i32
    %16 = arith.addi %0, %c3_i32 : i32
    %17 = arith.index_cast %16 : i32 to index
    %18 = memref.load %arg1[%17] : memref<64xi32, #tpu.memory_space<smem>>
    %c0_i32_9 = arith.constant 0 : i32
    %19 = tpu.memref_slice %arg2[%18, %c0_i32_9] : memref<128x32xf32, #tpu.memory_space<any>> -> memref<1x32xf32, #tpu.memory_space<any>>
    %c3_i32_10 = arith.constant 3 : i32
    %c0_i32_11 = arith.constant 0 : i32
    %20 = tpu.memref_slice %arg3[%c3_i32_10, %c0_i32_11] : memref<64x32xf32, #tpu.memory_space<vmem>> -> memref<1x32xf32, #tpu.memory_space<vmem>>
    tpu.enqueue_dma source(%19 : memref<1x32xf32, #tpu.memory_space<any>>) target(%20 : memref<1x32xf32, #tpu.memory_space<vmem>>) target_semaphore(%arg4 : memref<!tpu.dma_semaphore, #tpu.memory_space<semaphore_mem>>)
    %c4_i32 = arith.constant 4 : i32
    %21 = arith.addi %0, %c4_i32 : i32
    %22 = arith.index_cast %21 : i32 to index
    %23 = memref.load %arg1[%22] : memref<64xi32, #tpu.memory_space<smem>>
    %c0_i32_12 = arith.constant 0 : i32
    %24 = tpu.memref_slice %arg2[%23, %c0_i32_12] : memref<128x32xf32, #tpu.memory_space<any>> -> memref<1x32xf32, #tpu.memory_space<any>>
    %c4_i32_13 = arith.constant 4 : i32
    %c0_i32_14 = arith.constant 0 : i32
    %25 = tpu.memref_slice %arg3[%c4_i32_13, %c0_i32_14] : memref<64x32xf32, #tpu.memory_space<vmem>> -> memref<1x32xf32, #tpu.memory_space<vmem>>
    tpu.enqueue_dma source(%24 : memref<1x32xf32, #tpu.memory_space<any>>) target(%25 : memref<1x32xf32, #tpu.memory_space<vmem>>) target_semaphore(%arg4 : memref<!tpu.dma_semaphore, #tpu.memory_space<semaphore_mem>>)
    %c5_i32 = arith.constant 5 : i32
    %26 = arith.addi %0, %c5_i32 : i32
    %27 = arith.index_cast %26 : i32 to index
    %28 = memref.load %arg1[%27] : memref<64xi32, #tpu.memory_space<smem>>
    %c0_i32_15 = arith.constant 0 : i32
    %29 = tpu.memref_slice %arg2[%28, %c0_i32_15] : memref<128x32xf32, #tpu.memory_space<any>> -> memref<1x32xf32, #tpu.memory_space<any>>
    %c5_i32_16 = arith.constant 5 : i32
    %c0_i32_17 = arith.constant 0 : i32
    %30 = tpu.memref_slice %arg3[%c5_i32_16, %c0_i32_17] : memref<64x32xf32, #tpu.memory_space<vmem>> -> memref<1x32xf32, #tpu.memory_space<vmem>>
    tpu.enqueue_dma source(%29 : memref<1x32xf32, #tpu.memory_space<any>>) target(%30 : memref<1x32xf32, #tpu.memory_space<vmem>>) target_semaphore(%arg4 : memref<!tpu.dma_semaphore, #tpu.memory_space<semaphore_mem>>)
    %c6_i32 = arith.constant 6 : i32
    %31 = arith.addi %0, %c6_i32 : i32
    %32 = arith.index_cast %31 : i32 to index
    %33 = memref.load %arg1[%32] : memref<64xi32, #tpu.memory_space<smem>>
    %c0_i32_18 = arith.constant 0 : i32
    %34 = tpu.memref_slice %arg2[%33, %c0_i32_18] : memref<128x32xf32, #tpu.memory_space<any>> -> memref<1x32xf32, #tpu.memory_space<any>>
    %c6_i32_19 = arith.constant 6 : i32
    %c0_i32_20 = arith.constant 0 : i32
    %35 = tpu.memref_slice %arg3[%c6_i32_19, %c0_i32_20] : memref<64x32xf32, #tpu.memory_space<vmem>> -> memref<1x32xf32, #tpu.memory_space<vmem>>
    tpu.enqueue_dma source(%34 : memref<1x32xf32, #tpu.memory_space<any>>) target(%35 : memref<1x32xf32, #tpu.memory_space<vmem>>) target_semaphore(%arg4 : memref<!tpu.dma_semaphore, #tpu.memory_space<semaphore_mem>>)
    %c7_i32 = arith.constant 7 : i32
    %36 = arith.addi %0, %c7_i32 : i32
    %37 = arith.index_cast %36 : i32 to index
    %38 = memref.load %arg1[%37] : memref<64xi32, #tpu.memory_space<smem>>
    %c0_i32_21 = arith.constant 0 : i32
    %39 = tpu.memref_slice %arg2[%38, %c0_i32_21] : memref<128x32xf32, #tpu.memory_space<any>> -> memref<1x32xf32, #tpu.memory_space<any>>
    %c7_i32_22 = arith.constant 7 : i32
    %c0_i32_23 = arith.constant 0 : i32
    %40 = tpu.memref_slice %arg3[%c7_i32_22, %c0_i32_23] : memref<64x32xf32, #tpu.memory_space<vmem>> -> memref<1x32xf32, #tpu.memory_space<vmem>>
    tpu.enqueue_dma source(%39 : memref<1x32xf32, #tpu.memory_space<any>>) target(%40 : memref<1x32xf32, #tpu.memory_space<vmem>>) target_semaphore(%arg4 : memref<!tpu.dma_semaphore, #tpu.memory_space<semaphore_mem>>)
    %c8_i32 = arith.constant 8 : i32
    %41 = arith.addi %0, %c8_i32 : i32
    %42 = arith.index_cast %41 : i32 to index
    %43 = memref.load %arg1[%42] : memref<64xi32, #tpu.memory_space<smem>>
    %c0_i32_24 = arith.constant 0 : i32
    %44 = tpu.memref_slice %arg2[%43, %c0_i32_24] : memref<128x32xf32, #tpu.memory_space<any>> -> memref<1x32xf32, #tpu.memory_space<any>>
    %c8_i32_25 = arith.constant 8 : i32
    %c0_i32_26 = arith.constant 0 : i32
    %45 = tpu.memref_slice %arg3[%c8_i32_25, %c0_i32_26] : memref<64x32xf32, #tpu.memory_space<vmem>> -> memref<1x32xf32, #tpu.memory_space<vmem>>
    tpu.enqueue_dma source(%44 : memref<1x32xf32, #tpu.memory_space<any>>) target(%45 : memref<1x32xf32, #tpu.memory_space<vmem>>) target_semaphore(%arg4 : memref<!tpu.dma_semaphore, #tpu.memory_space<semaphore_mem>>)
    %c9_i32 = arith.constant 9 : i32
    %46 = arith.addi %0, %c9_i32 : i32
    %47 = arith.index_cast %46 : i32 to index
    %48 = memref.load %arg1[%47] : memref<64xi32, #tpu.memory_space<smem>>
    %c0_i32_27 = arith.constant 0 : i32
    %49 = tpu.memref_slice %arg2[%48, %c0_i32_27] : memref<128x32xf32, #tpu.memory_space<any>> -> memref<1x32xf32, #tpu.memory_space<any>>
    %c9_i32_28 = arith.constant 9 : i32
    %c0_i32_29 = arith.constant 0 : i32
    %50 = tpu.memref_slice %arg3[%c9_i32_28, %c0_i32_29] : memref<64x32xf32, #tpu.memory_space<vmem>> -> memref<1x32xf32, #tpu.memory_space<vmem>>
    tpu.enqueue_dma source(%49 : memref<1x32xf32, #tpu.memory_space<any>>) target(%50 : memref<1x32xf32, #tpu.memory_space<vmem>>) target_semaphore(%arg4 : memref<!tpu.dma_semaphore, #tpu.memory_space<semaphore_mem>>)
    %c10_i32 = arith.constant 10 : i32
    %51 = arith.addi %0, %c10_i32 : i32
    %52 = arith.index_cast %51 : i32 to index
    %53 = memref.load %arg1[%52] : memref<64xi32, #tpu.memory_space<smem>>
    %c0_i32_30 = arith.constant 0 : i32
    %54 = tpu.memref_slice %arg2[%53, %c0_i32_30] : memref<128x32xf32, #tpu.memory_space<any>> -> memref<1x32xf32, #tpu.memory_space<any>>
    %c10_i32_31 = arith.constant 10 : i32
    %c0_i32_32 = arith.constant 0 : i32
    %55 = tpu.memref_slice %arg3[%c10_i32_31, %c0_i32_32] : memref<64x32xf32, #tpu.memory_space<vmem>> -> memref<1x32xf32, #tpu.memory_space<vmem>>
    tpu.enqueue_dma source(%54 : memref<1x32xf32, #tpu.memory_space<any>>) target(%55 : memref<1x32xf32, #tpu.memory_space<vmem>>) target_semaphore(%arg4 : memref<!tpu.dma_semaphore, #tpu.memory_space<semaphore_mem>>)
    %c11_i32 = arith.constant 11 : i32
    %56 = arith.addi %0, %c11_i32 : i32
    %57 = arith.index_cast %56 : i32 to index
    %58 = memref.load %arg1[%57] : memref<64xi32, #tpu.memory_space<smem>>
    %c0_i32_33 = arith.constant 0 : i32
    %59 = tpu.memref_slice %arg2[%58, %c0_i32_33] : memref<128x32xf32, #tpu.memory_space<any>> -> memref<1x32xf32, #tpu.memory_space<any>>
    %c11_i32_34 = arith.constant 11 : i32
    %c0_i32_35 = arith.constant 0 : i32
    %60 = tpu.memref_slice %arg3[%c11_i32_34, %c0_i32_35] : memref<64x32xf32, #tpu.memory_space<vmem>> -> memref<1x32xf32, #tpu.memory_space<vmem>>
    tpu.enqueue_dma source(%59 : memref<1x32xf32, #tpu.memory_space<any>>) target(%60 : memref<1x32xf32, #tpu.memory_space<vmem>>) target_semaphore(%arg4 : memref<!tpu.dma_semaphore, #tpu.memory_space<semaphore_mem>>)
    %c12_i32 = arith.constant 12 : i32
    %61 = arith.addi %0, %c12_i32 : i32
    %62 = arith.index_cast %61 : i32 to index
    %63 = memref.load %arg1[%62] : memref<64xi32, #tpu.memory_space<smem>>
    %c0_i32_36 = arith.constant 0 : i32
    %64 = tpu.memref_slice %arg2[%63, %c0_i32_36] : memref<128x32xf32, #tpu.memory_space<any>> -> memref<1x32xf32, #tpu.memory_space<any>>
    %c12_i32_37 = arith.constant 12 : i32
    %c0_i32_38 = arith.constant 0 : i32
    %65 = tpu.memref_slice %arg3[%c12_i32_37, %c0_i32_38] : memref<64x32xf32, #tpu.memory_space<vmem>> -> memref<1x32xf32, #tpu.memory_space<vmem>>
    tpu.enqueue_dma source(%64 : memref<1x32xf32, #tpu.memory_space<any>>) target(%65 : memref<1x32xf32, #tpu.memory_space<vmem>>) target_semaphore(%arg4 : memref<!tpu.dma_semaphore, #tpu.memory_space<semaphore_mem>>)
    %c13_i32 = arith.constant 13 : i32
    %66 = arith.addi %0, %c13_i32 : i32
    %67 = arith.index_cast %66 : i32 to index
    %68 = memref.load %arg1[%67] : memref<64xi32, #tpu.memory_space<smem>>
    %c0_i32_39 = arith.constant 0 : i32
    %69 = tpu.memref_slice %arg2[%68, %c0_i32_39] : memref<128x32xf32, #tpu.memory_space<any>> -> memref<1x32xf32, #tpu.memory_space<any>>
    %c13_i32_40 = arith.constant 13 : i32
    %c0_i32_41 = arith.constant 0 : i32
    %70 = tpu.memref_slice %arg3[%c13_i32_40, %c0_i32_41] : memref<64x32xf32, #tpu.memory_space<vmem>> -> memref<1x32xf32, #tpu.memory_space<vmem>>
    tpu.enqueue_dma source(%69 : memref<1x32xf32, #tpu.memory_space<any>>) target(%70 : memref<1x32xf32, #tpu.memory_space<vmem>>) target_semaphore(%arg4 : memref<!tpu.dma_semaphore, #tpu.memory_space<semaphore_mem>>)
    %c14_i32 = arith.constant 14 : i32
    %71 = arith.addi %0, %c14_i32 : i32
    %72 = arith.index_cast %71 : i32 to index
    %73 = memref.load %arg1[%72] : memref<64xi32, #tpu.memory_space<smem>>
    %c0_i32_42 = arith.constant 0 : i32
    %74 = tpu.memref_slice %arg2[%73, %c0_i32_42] : memref<128x32xf32, #tpu.memory_space<any>> -> memref<1x32xf32, #tpu.memory_space<any>>
    %c14_i32_43 = arith.constant 14 : i32
    %c0_i32_44 = arith.constant 0 : i32
    %75 = tpu.memref_slice %arg3[%c14_i32_43, %c0_i32_44] : memref<64x32xf32, #tpu.memory_space<vmem>> -> memref<1x32xf32, #tpu.memory_space<vmem>>
    tpu.enqueue_dma source(%74 : memref<1x32xf32, #tpu.memory_space<any>>) target(%75 : memref<1x32xf32, #tpu.memory_space<vmem>>) target_semaphore(%arg4 : memref<!tpu.dma_semaphore, #tpu.memory_space<semaphore_mem>>)
    %c15_i32 = arith.constant 15 : i32
    %76 = arith.addi %0, %c15_i32 : i32
    %77 = arith.index_cast %76 : i32 to index
    %78 = memref.load %arg1[%77] : memref<64xi32, #tpu.memory_space<smem>>
    %c0_i32_45 = arith.constant 0 : i32
    %79 = tpu.memref_slice %arg2[%78, %c0_i32_45] : memref<128x32xf32, #tpu.memory_space<any>> -> memref<1x32xf32, #tpu.memory_space<any>>
    %c15_i32_46 = arith.constant 15 : i32
    %c0_i32_47 = arith.constant 0 : i32
    %80 = tpu.memref_slice %arg3[%c15_i32_46, %c0_i32_47] : memref<64x32xf32, #tpu.memory_space<vmem>> -> memref<1x32xf32, #tpu.memory_space<vmem>>
    tpu.enqueue_dma source(%79 : memref<1x32xf32, #tpu.memory_space<any>>) target(%80 : memref<1x32xf32, #tpu.memory_space<vmem>>) target_semaphore(%arg4 : memref<!tpu.dma_semaphore, #tpu.memory_space<semaphore_mem>>)
    %c16_i32 = arith.constant 16 : i32
    %81 = arith.addi %0, %c16_i32 : i32
    %82 = arith.index_cast %81 : i32 to index
    %83 = memref.load %arg1[%82] : memref<64xi32, #tpu.memory_space<smem>>
    %c0_i32_48 = arith.constant 0 : i32
    %84 = tpu.memref_slice %arg2[%83, %c0_i32_48] : memref<128x32xf32, #tpu.memory_space<any>> -> memref<1x32xf32, #tpu.memory_space<any>>
    %c16_i32_49 = arith.constant 16 : i32
    %c0_i32_50 = arith.constant 0 : i32
    %85 = tpu.memref_slice %arg3[%c16_i32_49, %c0_i32_50] : memref<64x32xf32, #tpu.memory_space<vmem>> -> memref<1x32xf32, #tpu.memory_space<vmem>>
    tpu.enqueue_dma source(%84 : memref<1x32xf32, #tpu.memory_space<any>>) target(%85 : memref<1x32xf32, #tpu.memory_space<vmem>>) target_semaphore(%arg4 : memref<!tpu.dma_semaphore, #tpu.memory_space<semaphore_mem>>)
    %c17_i32 = arith.constant 17 : i32
    %86 = arith.addi %0, %c17_i32 : i32
    %87 = arith.index_cast %86 : i32 to index
    %88 = memref.load %arg1[%87] : memref<64xi32, #tpu.memory_space<smem>>
    %c0_i32_51 = arith.constant 0 : i32
    %89 = tpu.memref_slice %arg2[%88, %c0_i32_51] : memref<128x32xf32, #tpu.memory_space<any>> -> memref<1x32xf32, #tpu.memory_space<any>>
    %c17_i32_52 = arith.constant 17 : i32
    %c0_i32_53 = arith.constant 0 : i32
    %90 = tpu.memref_slice %arg3[%c17_i32_52, %c0_i32_53] : memref<64x32xf32, #tpu.memory_space<vmem>> -> memref<1x32xf32, #tpu.memory_space<vmem>>
    tpu.enqueue_dma source(%89 : memref<1x32xf32, #tpu.memory_space<any>>) target(%90 : memref<1x32xf32, #tpu.memory_space<vmem>>) target_semaphore(%arg4 : memref<!tpu.dma_semaphore, #tpu.memory_space<semaphore_mem>>)
    %c18_i32 = arith.constant 18 : i32
    %91 = arith.addi %0, %c18_i32 : i32
    %92 = arith.index_cast %91 : i32 to index
    %93 = memref.load %arg1[%92] : memref<64xi32, #tpu.memory_space<smem>>
    %c0_i32_54 = arith.constant 0 : i32
    %94 = tpu.memref_slice %arg2[%93, %c0_i32_54] : memref<128x32xf32, #tpu.memory_space<any>> -> memref<1x32xf32, #tpu.memory_space<any>>
    %c18_i32_55 = arith.constant 18 : i32
    %c0_i32_56 = arith.constant 0 : i32
    %95 = tpu.memref_slice %arg3[%c18_i32_55, %c0_i32_56] : memref<64x32xf32, #tpu.memory_space<vmem>> -> memref<1x32xf32, #tpu.memory_space<vmem>>
    tpu.enqueue_dma source(%94 : memref<1x32xf32, #tpu.memory_space<any>>) target(%95 : memref<1x32xf32, #tpu.memory_space<vmem>>) target_semaphore(%arg4 : memref<!tpu.dma_semaphore, #tpu.memory_space<semaphore_mem>>)
    %c19_i32 = arith.constant 19 : i32
    %96 = arith.addi %0, %c19_i32 : i32
    %97 = arith.index_cast %96 : i32 to index
    %98 = memref.load %arg1[%97] : memref<64xi32, #tpu.memory_space<smem>>
    %c0_i32_57 = arith.constant 0 : i32
    %99 = tpu.memref_slice %arg2[%98, %c0_i32_57] : memref<128x32xf32, #tpu.memory_space<any>> -> memref<1x32xf32, #tpu.memory_space<any>>
    %c19_i32_58 = arith.constant 19 : i32
    %c0_i32_59 = arith.constant 0 : i32
    %100 = tpu.memref_slice %arg3[%c19_i32_58, %c0_i32_59] : memref<64x32xf32, #tpu.memory_space<vmem>> -> memref<1x32xf32, #tpu.memory_space<vmem>>
    tpu.enqueue_dma source(%99 : memref<1x32xf32, #tpu.memory_space<any>>) target(%100 : memref<1x32xf32, #tpu.memory_space<vmem>>) target_semaphore(%arg4 : memref<!tpu.dma_semaphore, #tpu.memory_space<semaphore_mem>>)
    %c20_i32 = arith.constant 20 : i32
    %101 = arith.addi %0, %c20_i32 : i32
    %102 = arith.index_cast %101 : i32 to index
    %103 = memref.load %arg1[%102] : memref<64xi32, #tpu.memory_space<smem>>
    %c0_i32_60 = arith.constant 0 : i32
    %104 = tpu.memref_slice %arg2[%103, %c0_i32_60] : memref<128x32xf32, #tpu.memory_space<any>> -> memref<1x32xf32, #tpu.memory_space<any>>
    %c20_i32_61 = arith.constant 20 : i32
    %c0_i32_62 = arith.constant 0 : i32
    %105 = tpu.memref_slice %arg3[%c20_i32_61, %c0_i32_62] : memref<64x32xf32, #tpu.memory_space<vmem>> -> memref<1x32xf32, #tpu.memory_space<vmem>>
    tpu.enqueue_dma source(%104 : memref<1x32xf32, #tpu.memory_space<any>>) target(%105 : memref<1x32xf32, #tpu.memory_space<vmem>>) target_semaphore(%arg4 : memref<!tpu.dma_semaphore, #tpu.memory_space<semaphore_mem>>)
    %c21_i32 = arith.constant 21 : i32
    %106 = arith.addi %0, %c21_i32 : i32
    %107 = arith.index_cast %106 : i32 to index
    %108 = memref.load %arg1[%107] : memref<64xi32, #tpu.memory_space<smem>>
    %c0_i32_63 = arith.constant 0 : i32
    %109 = tpu.memref_slice %arg2[%108, %c0_i32_63] : memref<128x32xf32, #tpu.memory_space<any>> -> memref<1x32xf32, #tpu.memory_space<any>>
    %c21_i32_64 = arith.constant 21 : i32
    %c0_i32_65 = arith.constant 0 : i32
    %110 = tpu.memref_slice %arg3[%c21_i32_64, %c0_i32_65] : memref<64x32xf32, #tpu.memory_space<vmem>> -> memref<1x32xf32, #tpu.memory_space<vmem>>
    tpu.enqueue_dma source(%109 : memref<1x32xf32, #tpu.memory_space<any>>) target(%110 : memref<1x32xf32, #tpu.memory_space<vmem>>) target_semaphore(%arg4 : memref<!tpu.dma_semaphore, #tpu.memory_space<semaphore_mem>>)
    %c22_i32 = arith.constant 22 : i32
    %111 = arith.addi %0, %c22_i32 : i32
    %112 = arith.index_cast %111 : i32 to index
    %113 = memref.load %arg1[%112] : memref<64xi32, #tpu.memory_space<smem>>
    %c0_i32_66 = arith.constant 0 : i32
    %114 = tpu.memref_slice %arg2[%113, %c0_i32_66] : memref<128x32xf32, #tpu.memory_space<any>> -> memref<1x32xf32, #tpu.memory_space<any>>
    %c22_i32_67 = arith.constant 22 : i32
    %c0_i32_68 = arith.constant 0 : i32
    %115 = tpu.memref_slice %arg3[%c22_i32_67, %c0_i32_68] : memref<64x32xf32, #tpu.memory_space<vmem>> -> memref<1x32xf32, #tpu.memory_space<vmem>>
    tpu.enqueue_dma source(%114 : memref<1x32xf32, #tpu.memory_space<any>>) target(%115 : memref<1x32xf32, #tpu.memory_space<vmem>>) target_semaphore(%arg4 : memref<!tpu.dma_semaphore, #tpu.memory_space<semaphore_mem>>)
    %c23_i32 = arith.constant 23 : i32
    %116 = arith.addi %0, %c23_i32 : i32
    %117 = arith.index_cast %116 : i32 to index
    %118 = memref.load %arg1[%117] : memref<64xi32, #tpu.memory_space<smem>>
    %c0_i32_69 = arith.constant 0 : i32
    %119 = tpu.memref_slice %arg2[%118, %c0_i32_69] : memref<128x32xf32, #tpu.memory_space<any>> -> memref<1x32xf32, #tpu.memory_space<any>>
    %c23_i32_70 = arith.constant 23 : i32
    %c0_i32_71 = arith.constant 0 : i32
    %120 = tpu.memref_slice %arg3[%c23_i32_70, %c0_i32_71] : memref<64x32xf32, #tpu.memory_space<vmem>> -> memref<1x32xf32, #tpu.memory_space<vmem>>
    tpu.enqueue_dma source(%119 : memref<1x32xf32, #tpu.memory_space<any>>) target(%120 : memref<1x32xf32, #tpu.memory_space<vmem>>) target_semaphore(%arg4 : memref<!tpu.dma_semaphore, #tpu.memory_space<semaphore_mem>>)
    %c24_i32 = arith.constant 24 : i32
    %121 = arith.addi %0, %c24_i32 : i32
    %122 = arith.index_cast %121 : i32 to index
    %123 = memref.load %arg1[%122] : memref<64xi32, #tpu.memory_space<smem>>
    %c0_i32_72 = arith.constant 0 : i32
    %124 = tpu.memref_slice %arg2[%123, %c0_i32_72] : memref<128x32xf32, #tpu.memory_space<any>> -> memref<1x32xf32, #tpu.memory_space<any>>
    %c24_i32_73 = arith.constant 24 : i32
    %c0_i32_74 = arith.constant 0 : i32
    %125 = tpu.memref_slice %arg3[%c24_i32_73, %c0_i32_74] : memref<64x32xf32, #tpu.memory_space<vmem>> -> memref<1x32xf32, #tpu.memory_space<vmem>>
    tpu.enqueue_dma source(%124 : memref<1x32xf32, #tpu.memory_space<any>>) target(%125 : memref<1x32xf32, #tpu.memory_space<vmem>>) target_semaphore(%arg4 : memref<!tpu.dma_semaphore, #tpu.memory_space<semaphore_mem>>)
    %c25_i32 = arith.constant 25 : i32
    %126 = arith.addi %0, %c25_i32 : i32
    %127 = arith.index_cast %126 : i32 to index
    %128 = memref.load %arg1[%127] : memref<64xi32, #tpu.memory_space<smem>>
    %c0_i32_75 = arith.constant 0 : i32
    %129 = tpu.memref_slice %arg2[%128, %c0_i32_75] : memref<128x32xf32, #tpu.memory_space<any>> -> memref<1x32xf32, #tpu.memory_space<any>>
    %c25_i32_76 = arith.constant 25 : i32
    %c0_i32_77 = arith.constant 0 : i32
    %130 = tpu.memref_slice %arg3[%c25_i32_76, %c0_i32_77] : memref<64x32xf32, #tpu.memory_space<vmem>> -> memref<1x32xf32, #tpu.memory_space<vmem>>
    tpu.enqueue_dma source(%129 : memref<1x32xf32, #tpu.memory_space<any>>) target(%130 : memref<1x32xf32, #tpu.memory_space<vmem>>) target_semaphore(%arg4 : memref<!tpu.dma_semaphore, #tpu.memory_space<semaphore_mem>>)
    %c26_i32 = arith.constant 26 : i32
    %131 = arith.addi %0, %c26_i32 : i32
    %132 = arith.index_cast %131 : i32 to index
    %133 = memref.load %arg1[%132] : memref<64xi32, #tpu.memory_space<smem>>
    %c0_i32_78 = arith.constant 0 : i32
    %134 = tpu.memref_slice %arg2[%133, %c0_i32_78] : memref<128x32xf32, #tpu.memory_space<any>> -> memref<1x32xf32, #tpu.memory_space<any>>
    %c26_i32_79 = arith.constant 26 : i32
    %c0_i32_80 = arith.constant 0 : i32
    %135 = tpu.memref_slice %arg3[%c26_i32_79, %c0_i32_80] : memref<64x32xf32, #tpu.memory_space<vmem>> -> memref<1x32xf32, #tpu.memory_space<vmem>>
    tpu.enqueue_dma source(%134 : memref<1x32xf32, #tpu.memory_space<any>>) target(%135 : memref<1x32xf32, #tpu.memory_space<vmem>>) target_semaphore(%arg4 : memref<!tpu.dma_semaphore, #tpu.memory_space<semaphore_mem>>)
    %c27_i32 = arith.constant 27 : i32
    %136 = arith.addi %0, %c27_i32 : i32
    %137 = arith.index_cast %136 : i32 to index
    %138 = memref.load %arg1[%137] : memref<64xi32, #tpu.memory_space<smem>>
    %c0_i32_81 = arith.constant 0 : i32
    %139 = tpu.memref_slice %arg2[%138, %c0_i32_81] : memref<128x32xf32, #tpu.memory_space<any>> -> memref<1x32xf32, #tpu.memory_space<any>>
    %c27_i32_82 = arith.constant 27 : i32
    %c0_i32_83 = arith.constant 0 : i32
    %140 = tpu.memref_slice %arg3[%c27_i32_82, %c0_i32_83] : memref<64x32xf32, #tpu.memory_space<vmem>> -> memref<1x32xf32, #tpu.memory_space<vmem>>
    tpu.enqueue_dma source(%139 : memref<1x32xf32, #tpu.memory_space<any>>) target(%140 : memref<1x32xf32, #tpu.memory_space<vmem>>) target_semaphore(%arg4 : memref<!tpu.dma_semaphore, #tpu.memory_space<semaphore_mem>>)
    %c28_i32 = arith.constant 28 : i32
    %141 = arith.addi %0, %c28_i32 : i32
    %142 = arith.index_cast %141 : i32 to index
    %143 = memref.load %arg1[%142] : memref<64xi32, #tpu.memory_space<smem>>
    %c0_i32_84 = arith.constant 0 : i32
    %144 = tpu.memref_slice %arg2[%143, %c0_i32_84] : memref<128x32xf32, #tpu.memory_space<any>> -> memref<1x32xf32, #tpu.memory_space<any>>
    %c28_i32_85 = arith.constant 28 : i32
    %c0_i32_86 = arith.constant 0 : i32
    %145 = tpu.memref_slice %arg3[%c28_i32_85, %c0_i32_86] : memref<64x32xf32, #tpu.memory_space<vmem>> -> memref<1x32xf32, #tpu.memory_space<vmem>>
    tpu.enqueue_dma source(%144 : memref<1x32xf32, #tpu.memory_space<any>>) target(%145 : memref<1x32xf32, #tpu.memory_space<vmem>>) target_semaphore(%arg4 : memref<!tpu.dma_semaphore, #tpu.memory_space<semaphore_mem>>)
    %c29_i32 = arith.constant 29 : i32
    %146 = arith.addi %0, %c29_i32 : i32
    %147 = arith.index_cast %146 : i32 to index
    %148 = memref.load %arg1[%147] : memref<64xi32, #tpu.memory_space<smem>>
    %c0_i32_87 = arith.constant 0 : i32
    %149 = tpu.memref_slice %arg2[%148, %c0_i32_87] : memref<128x32xf32, #tpu.memory_space<any>> -> memref<1x32xf32, #tpu.memory_space<any>>
    %c29_i32_88 = arith.constant 29 : i32
    %c0_i32_89 = arith.constant 0 : i32
    %150 = tpu.memref_slice %arg3[%c29_i32_88, %c0_i32_89] : memref<64x32xf32, #tpu.memory_space<vmem>> -> memref<1x32xf32, #tpu.memory_space<vmem>>
    tpu.enqueue_dma source(%149 : memref<1x32xf32, #tpu.memory_space<any>>) target(%150 : memref<1x32xf32, #tpu.memory_space<vmem>>) target_semaphore(%arg4 : memref<!tpu.dma_semaphore, #tpu.memory_space<semaphore_mem>>)
    %c30_i32 = arith.constant 30 : i32
    %151 = arith.addi %0, %c30_i32 : i32
    %152 = arith.index_cast %151 : i32 to index
    %153 = memref.load %arg1[%152] : memref<64xi32, #tpu.memory_space<smem>>
    %c0_i32_90 = arith.constant 0 : i32
    %154 = tpu.memref_slice %arg2[%153, %c0_i32_90] : memref<128x32xf32, #tpu.memory_space<any>> -> memref<1x32xf32, #tpu.memory_space<any>>
    %c30_i32_91 = arith.constant 30 : i32
    %c0_i32_92 = arith.constant 0 : i32
    %155 = tpu.memref_slice %arg3[%c30_i32_91, %c0_i32_92] : memref<64x32xf32, #tpu.memory_space<vmem>> -> memref<1x32xf32, #tpu.memory_space<vmem>>
    tpu.enqueue_dma source(%154 : memref<1x32xf32, #tpu.memory_space<any>>) target(%155 : memref<1x32xf32, #tpu.memory_space<vmem>>) target_semaphore(%arg4 : memref<!tpu.dma_semaphore, #tpu.memory_space<semaphore_mem>>)
    %c31_i32 = arith.constant 31 : i32
    %156 = arith.addi %0, %c31_i32 : i32
    %157 = arith.index_cast %156 : i32 to index
    %158 = memref.load %arg1[%157] : memref<64xi32, #tpu.memory_space<smem>>
    %c0_i32_93 = arith.constant 0 : i32
    %159 = tpu.memref_slice %arg2[%158, %c0_i32_93] : memref<128x32xf32, #tpu.memory_space<any>> -> memref<1x32xf32, #tpu.memory_space<any>>
    %c31_i32_94 = arith.constant 31 : i32
    %c0_i32_95 = arith.constant 0 : i32
    %160 = tpu.memref_slice %arg3[%c31_i32_94, %c0_i32_95] : memref<64x32xf32, #tpu.memory_space<vmem>> -> memref<1x32xf32, #tpu.memory_space<vmem>>
    tpu.enqueue_dma source(%159 : memref<1x32xf32, #tpu.memory_space<any>>) target(%160 : memref<1x32xf32, #tpu.memory_space<vmem>>) target_semaphore(%arg4 : memref<!tpu.dma_semaphore, #tpu.memory_space<semaphore_mem>>)
    %c32_i32 = arith.constant 32 : i32
    %161 = arith.addi %0, %c32_i32 : i32
    %162 = arith.index_cast %161 : i32 to index
    %163 = memref.load %arg1[%162] : memref<64xi32, #tpu.memory_space<smem>>
    %c0_i32_96 = arith.constant 0 : i32
    %164 = tpu.memref_slice %arg2[%163, %c0_i32_96] : memref<128x32xf32, #tpu.memory_space<any>> -> memref<1x32xf32, #tpu.memory_space<any>>
    %c32_i32_97 = arith.constant 32 : i32
    %c0_i32_98 = arith.constant 0 : i32
    %165 = tpu.memref_slice %arg3[%c32_i32_97, %c0_i32_98] : memref<64x32xf32, #tpu.memory_space<vmem>> -> memref<1x32xf32, #tpu.memory_space<vmem>>
    tpu.enqueue_dma source(%164 : memref<1x32xf32, #tpu.memory_space<any>>) target(%165 : memref<1x32xf32, #tpu.memory_space<vmem>>) target_semaphore(%arg4 : memref<!tpu.dma_semaphore, #tpu.memory_space<semaphore_mem>>)
    %c33_i32 = arith.constant 33 : i32
    %166 = arith.addi %0, %c33_i32 : i32
    %167 = arith.index_cast %166 : i32 to index
    %168 = memref.load %arg1[%167] : memref<64xi32, #tpu.memory_space<smem>>
    %c0_i32_99 = arith.constant 0 : i32
    %169 = tpu.memref_slice %arg2[%168, %c0_i32_99] : memref<128x32xf32, #tpu.memory_space<any>> -> memref<1x32xf32, #tpu.memory_space<any>>
    %c33_i32_100 = arith.constant 33 : i32
    %c0_i32_101 = arith.constant 0 : i32
    %170 = tpu.memref_slice %arg3[%c33_i32_100, %c0_i32_101] : memref<64x32xf32, #tpu.memory_space<vmem>> -> memref<1x32xf32, #tpu.memory_space<vmem>>
    tpu.enqueue_dma source(%169 : memref<1x32xf32, #tpu.memory_space<any>>) target(%170 : memref<1x32xf32, #tpu.memory_space<vmem>>) target_semaphore(%arg4 : memref<!tpu.dma_semaphore, #tpu.memory_space<semaphore_mem>>)
    %c34_i32 = arith.constant 34 : i32
    %171 = arith.addi %0, %c34_i32 : i32
    %172 = arith.index_cast %171 : i32 to index
    %173 = memref.load %arg1[%172] : memref<64xi32, #tpu.memory_space<smem>>
    %c0_i32_102 = arith.constant 0 : i32
    %174 = tpu.memref_slice %arg2[%173, %c0_i32_102] : memref<128x32xf32, #tpu.memory_space<any>> -> memref<1x32xf32, #tpu.memory_space<any>>
    %c34_i32_103 = arith.constant 34 : i32
    %c0_i32_104 = arith.constant 0 : i32
    %175 = tpu.memref_slice %arg3[%c34_i32_103, %c0_i32_104] : memref<64x32xf32, #tpu.memory_space<vmem>> -> memref<1x32xf32, #tpu.memory_space<vmem>>
    tpu.enqueue_dma source(%174 : memref<1x32xf32, #tpu.memory_space<any>>) target(%175 : memref<1x32xf32, #tpu.memory_space<vmem>>) target_semaphore(%arg4 : memref<!tpu.dma_semaphore, #tpu.memory_space<semaphore_mem>>)
    %c35_i32 = arith.constant 35 : i32
    %176 = arith.addi %0, %c35_i32 : i32
    %177 = arith.index_cast %176 : i32 to index
    %178 = memref.load %arg1[%177] : memref<64xi32, #tpu.memory_space<smem>>
    %c0_i32_105 = arith.constant 0 : i32
    %179 = tpu.memref_slice %arg2[%178, %c0_i32_105] : memref<128x32xf32, #tpu.memory_space<any>> -> memref<1x32xf32, #tpu.memory_space<any>>
    %c35_i32_106 = arith.constant 35 : i32
    %c0_i32_107 = arith.constant 0 : i32
    %180 = tpu.memref_slice %arg3[%c35_i32_106, %c0_i32_107] : memref<64x32xf32, #tpu.memory_space<vmem>> -> memref<1x32xf32, #tpu.memory_space<vmem>>
    tpu.enqueue_dma source(%179 : memref<1x32xf32, #tpu.memory_space<any>>) target(%180 : memref<1x32xf32, #tpu.memory_space<vmem>>) target_semaphore(%arg4 : memref<!tpu.dma_semaphore, #tpu.memory_space<semaphore_mem>>)
    %c36_i32 = arith.constant 36 : i32
    %181 = arith.addi %0, %c36_i32 : i32
    %182 = arith.index_cast %181 : i32 to index
    %183 = memref.load %arg1[%182] : memref<64xi32, #tpu.memory_space<smem>>
    %c0_i32_108 = arith.constant 0 : i32
    %184 = tpu.memref_slice %arg2[%183, %c0_i32_108] : memref<128x32xf32, #tpu.memory_space<any>> -> memref<1x32xf32, #tpu.memory_space<any>>
    %c36_i32_109 = arith.constant 36 : i32
    %c0_i32_110 = arith.constant 0 : i32
    %185 = tpu.memref_slice %arg3[%c36_i32_109, %c0_i32_110] : memref<64x32xf32, #tpu.memory_space<vmem>> -> memref<1x32xf32, #tpu.memory_space<vmem>>
    tpu.enqueue_dma source(%184 : memref<1x32xf32, #tpu.memory_space<any>>) target(%185 : memref<1x32xf32, #tpu.memory_space<vmem>>) target_semaphore(%arg4 : memref<!tpu.dma_semaphore, #tpu.memory_space<semaphore_mem>>)
    %c37_i32 = arith.constant 37 : i32
    %186 = arith.addi %0, %c37_i32 : i32
    %187 = arith.index_cast %186 : i32 to index
    %188 = memref.load %arg1[%187] : memref<64xi32, #tpu.memory_space<smem>>
    %c0_i32_111 = arith.constant 0 : i32
    %189 = tpu.memref_slice %arg2[%188, %c0_i32_111] : memref<128x32xf32, #tpu.memory_space<any>> -> memref<1x32xf32, #tpu.memory_space<any>>
    %c37_i32_112 = arith.constant 37 : i32
    %c0_i32_113 = arith.constant 0 : i32
    %190 = tpu.memref_slice %arg3[%c37_i32_112, %c0_i32_113] : memref<64x32xf32, #tpu.memory_space<vmem>> -> memref<1x32xf32, #tpu.memory_space<vmem>>
    tpu.enqueue_dma source(%189 : memref<1x32xf32, #tpu.memory_space<any>>) target(%190 : memref<1x32xf32, #tpu.memory_space<vmem>>) target_semaphore(%arg4 : memref<!tpu.dma_semaphore, #tpu.memory_space<semaphore_mem>>)
    %c38_i32 = arith.constant 38 : i32
    %191 = arith.addi %0, %c38_i32 : i32
    %192 = arith.index_cast %191 : i32 to index
    %193 = memref.load %arg1[%192] : memref<64xi32, #tpu.memory_space<smem>>
    %c0_i32_114 = arith.constant 0 : i32
    %194 = tpu.memref_slice %arg2[%193, %c0_i32_114] : memref<128x32xf32, #tpu.memory_space<any>> -> memref<1x32xf32, #tpu.memory_space<any>>
    %c38_i32_115 = arith.constant 38 : i32
    %c0_i32_116 = arith.constant 0 : i32
    %195 = tpu.memref_slice %arg3[%c38_i32_115, %c0_i32_116] : memref<64x32xf32, #tpu.memory_space<vmem>> -> memref<1x32xf32, #tpu.memory_space<vmem>>
    tpu.enqueue_dma source(%194 : memref<1x32xf32, #tpu.memory_space<any>>) target(%195 : memref<1x32xf32, #tpu.memory_space<vmem>>) target_semaphore(%arg4 : memref<!tpu.dma_semaphore, #tpu.memory_space<semaphore_mem>>)
    %c39_i32 = arith.constant 39 : i32
    %196 = arith.addi %0, %c39_i32 : i32
    %197 = arith.index_cast %196 : i32 to index
    %198 = memref.load %arg1[%197] : memref<64xi32, #tpu.memory_space<smem>>
    %c0_i32_117 = arith.constant 0 : i32
    %199 = tpu.memref_slice %arg2[%198, %c0_i32_117] : memref<128x32xf32, #tpu.memory_space<any>> -> memref<1x32xf32, #tpu.memory_space<any>>
    %c39_i32_118 = arith.constant 39 : i32
    %c0_i32_119 = arith.constant 0 : i32
    %200 = tpu.memref_slice %arg3[%c39_i32_118, %c0_i32_119] : memref<64x32xf32, #tpu.memory_space<vmem>> -> memref<1x32xf32, #tpu.memory_space<vmem>>
    tpu.enqueue_dma source(%199 : memref<1x32xf32, #tpu.memory_space<any>>) target(%200 : memref<1x32xf32, #tpu.memory_space<vmem>>) target_semaphore(%arg4 : memref<!tpu.dma_semaphore, #tpu.memory_space<semaphore_mem>>)
    %c40_i32 = arith.constant 40 : i32
    %201 = arith.addi %0, %c40_i32 : i32
    %202 = arith.index_cast %201 : i32 to index
    %203 = memref.load %arg1[%202] : memref<64xi32, #tpu.memory_space<smem>>
    %c0_i32_120 = arith.constant 0 : i32
    %204 = tpu.memref_slice %arg2[%203, %c0_i32_120] : memref<128x32xf32, #tpu.memory_space<any>> -> memref<1x32xf32, #tpu.memory_space<any>>
    %c40_i32_121 = arith.constant 40 : i32
    %c0_i32_122 = arith.constant 0 : i32
    %205 = tpu.memref_slice %arg3[%c40_i32_121, %c0_i32_122] : memref<64x32xf32, #tpu.memory_space<vmem>> -> memref<1x32xf32, #tpu.memory_space<vmem>>
    tpu.enqueue_dma source(%204 : memref<1x32xf32, #tpu.memory_space<any>>) target(%205 : memref<1x32xf32, #tpu.memory_space<vmem>>) target_semaphore(%arg4 : memref<!tpu.dma_semaphore, #tpu.memory_space<semaphore_mem>>)
    %c41_i32 = arith.constant 41 : i32
    %206 = arith.addi %0, %c41_i32 : i32
    %207 = arith.index_cast %206 : i32 to index
    %208 = memref.load %arg1[%207] : memref<64xi32, #tpu.memory_space<smem>>
    %c0_i32_123 = arith.constant 0 : i32
    %209 = tpu.memref_slice %arg2[%208, %c0_i32_123] : memref<128x32xf32, #tpu.memory_space<any>> -> memref<1x32xf32, #tpu.memory_space<any>>
    %c41_i32_124 = arith.constant 41 : i32
    %c0_i32_125 = arith.constant 0 : i32
    %210 = tpu.memref_slice %arg3[%c41_i32_124, %c0_i32_125] : memref<64x32xf32, #tpu.memory_space<vmem>> -> memref<1x32xf32, #tpu.memory_space<vmem>>
    tpu.enqueue_dma source(%209 : memref<1x32xf32, #tpu.memory_space<any>>) target(%210 : memref<1x32xf32, #tpu.memory_space<vmem>>) target_semaphore(%arg4 : memref<!tpu.dma_semaphore, #tpu.memory_space<semaphore_mem>>)
    %c42_i32 = arith.constant 42 : i32
    %211 = arith.addi %0, %c42_i32 : i32
    %212 = arith.index_cast %211 : i32 to index
    %213 = memref.load %arg1[%212] : memref<64xi32, #tpu.memory_space<smem>>
    %c0_i32_126 = arith.constant 0 : i32
    %214 = tpu.memref_slice %arg2[%213, %c0_i32_126] : memref<128x32xf32, #tpu.memory_space<any>> -> memref<1x32xf32, #tpu.memory_space<any>>
    %c42_i32_127 = arith.constant 42 : i32
    %c0_i32_128 = arith.constant 0 : i32
    %215 = tpu.memref_slice %arg3[%c42_i32_127, %c0_i32_128] : memref<64x32xf32, #tpu.memory_space<vmem>> -> memref<1x32xf32, #tpu.memory_space<vmem>>
    tpu.enqueue_dma source(%214 : memref<1x32xf32, #tpu.memory_space<any>>) target(%215 : memref<1x32xf32, #tpu.memory_space<vmem>>) target_semaphore(%arg4 : memref<!tpu.dma_semaphore, #tpu.memory_space<semaphore_mem>>)
    %c43_i32 = arith.constant 43 : i32
    %216 = arith.addi %0, %c43_i32 : i32
    %217 = arith.index_cast %216 : i32 to index
    %218 = memref.load %arg1[%217] : memref<64xi32, #tpu.memory_space<smem>>
    %c0_i32_129 = arith.constant 0 : i32
    %219 = tpu.memref_slice %arg2[%218, %c0_i32_129] : memref<128x32xf32, #tpu.memory_space<any>> -> memref<1x32xf32, #tpu.memory_space<any>>
    %c43_i32_130 = arith.constant 43 : i32
    %c0_i32_131 = arith.constant 0 : i32
    %220 = tpu.memref_slice %arg3[%c43_i32_130, %c0_i32_131] : memref<64x32xf32, #tpu.memory_space<vmem>> -> memref<1x32xf32, #tpu.memory_space<vmem>>
    tpu.enqueue_dma source(%219 : memref<1x32xf32, #tpu.memory_space<any>>) target(%220 : memref<1x32xf32, #tpu.memory_space<vmem>>) target_semaphore(%arg4 : memref<!tpu.dma_semaphore, #tpu.memory_space<semaphore_mem>>)
    %c44_i32 = arith.constant 44 : i32
    %221 = arith.addi %0, %c44_i32 : i32
    %222 = arith.index_cast %221 : i32 to index
    %223 = memref.load %arg1[%222] : memref<64xi32, #tpu.memory_space<smem>>
    %c0_i32_132 = arith.constant 0 : i32
    %224 = tpu.memref_slice %arg2[%223, %c0_i32_132] : memref<128x32xf32, #tpu.memory_space<any>> -> memref<1x32xf32, #tpu.memory_space<any>>
    %c44_i32_133 = arith.constant 44 : i32
    %c0_i32_134 = arith.constant 0 : i32
    %225 = tpu.memref_slice %arg3[%c44_i32_133, %c0_i32_134] : memref<64x32xf32, #tpu.memory_space<vmem>> -> memref<1x32xf32, #tpu.memory_space<vmem>>
    tpu.enqueue_dma source(%224 : memref<1x32xf32, #tpu.memory_space<any>>) target(%225 : memref<1x32xf32, #tpu.memory_space<vmem>>) target_semaphore(%arg4 : memref<!tpu.dma_semaphore, #tpu.memory_space<semaphore_mem>>)
    %c45_i32 = arith.constant 45 : i32
    %226 = arith.addi %0, %c45_i32 : i32
    %227 = arith.index_cast %226 : i32 to index
    %228 = memref.load %arg1[%227] : memref<64xi32, #tpu.memory_space<smem>>
    %c0_i32_135 = arith.constant 0 : i32
    %229 = tpu.memref_slice %arg2[%228, %c0_i32_135] : memref<128x32xf32, #tpu.memory_space<any>> -> memref<1x32xf32, #tpu.memory_space<any>>
    %c45_i32_136 = arith.constant 45 : i32
    %c0_i32_137 = arith.constant 0 : i32
    %230 = tpu.memref_slice %arg3[%c45_i32_136, %c0_i32_137] : memref<64x32xf32, #tpu.memory_space<vmem>> -> memref<1x32xf32, #tpu.memory_space<vmem>>
    tpu.enqueue_dma source(%229 : memref<1x32xf32, #tpu.memory_space<any>>) target(%230 : memref<1x32xf32, #tpu.memory_space<vmem>>) target_semaphore(%arg4 : memref<!tpu.dma_semaphore, #tpu.memory_space<semaphore_mem>>)
    %c46_i32 = arith.constant 46 : i32
    %231 = arith.addi %0, %c46_i32 : i32
    %232 = arith.index_cast %231 : i32 to index
    %233 = memref.load %arg1[%232] : memref<64xi32, #tpu.memory_space<smem>>
    %c0_i32_138 = arith.constant 0 : i32
    %234 = tpu.memref_slice %arg2[%233, %c0_i32_138] : memref<128x32xf32, #tpu.memory_space<any>> -> memref<1x32xf32, #tpu.memory_space<any>>
    %c46_i32_139 = arith.constant 46 : i32
    %c0_i32_140 = arith.constant 0 : i32
    %235 = tpu.memref_slice %arg3[%c46_i32_139, %c0_i32_140] : memref<64x32xf32, #tpu.memory_space<vmem>> -> memref<1x32xf32, #tpu.memory_space<vmem>>
    tpu.enqueue_dma source(%234 : memref<1x32xf32, #tpu.memory_space<any>>) target(%235 : memref<1x32xf32, #tpu.memory_space<vmem>>) target_semaphore(%arg4 : memref<!tpu.dma_semaphore, #tpu.memory_space<semaphore_mem>>)
    %c47_i32 = arith.constant 47 : i32
    %236 = arith.addi %0, %c47_i32 : i32
    %237 = arith.index_cast %236 : i32 to index
    %238 = memref.load %arg1[%237] : memref<64xi32, #tpu.memory_space<smem>>
    %c0_i32_141 = arith.constant 0 : i32
    %239 = tpu.memref_slice %arg2[%238, %c0_i32_141] : memref<128x32xf32, #tpu.memory_space<any>> -> memref<1x32xf32, #tpu.memory_space<any>>
    %c47_i32_142 = arith.constant 47 : i32
    %c0_i32_143 = arith.constant 0 : i32
    %240 = tpu.memref_slice %arg3[%c47_i32_142, %c0_i32_143] : memref<64x32xf32, #tpu.memory_space<vmem>> -> memref<1x32xf32, #tpu.memory_space<vmem>>
    tpu.enqueue_dma source(%239 : memref<1x32xf32, #tpu.memory_space<any>>) target(%240 : memref<1x32xf32, #tpu.memory_space<vmem>>) target_semaphore(%arg4 : memref<!tpu.dma_semaphore, #tpu.memory_space<semaphore_mem>>)
    %c48_i32 = arith.constant 48 : i32
    %241 = arith.addi %0, %c48_i32 : i32
    %242 = arith.index_cast %241 : i32 to index
    %243 = memref.load %arg1[%242] : memref<64xi32, #tpu.memory_space<smem>>
    %c0_i32_144 = arith.constant 0 : i32
    %244 = tpu.memref_slice %arg2[%243, %c0_i32_144] : memref<128x32xf32, #tpu.memory_space<any>> -> memref<1x32xf32, #tpu.memory_space<any>>
    %c48_i32_145 = arith.constant 48 : i32
    %c0_i32_146 = arith.constant 0 : i32
    %245 = tpu.memref_slice %arg3[%c48_i32_145, %c0_i32_146] : memref<64x32xf32, #tpu.memory_space<vmem>> -> memref<1x32xf32, #tpu.memory_space<vmem>>
    tpu.enqueue_dma source(%244 : memref<1x32xf32, #tpu.memory_space<any>>) target(%245 : memref<1x32xf32, #tpu.memory_space<vmem>>) target_semaphore(%arg4 : memref<!tpu.dma_semaphore, #tpu.memory_space<semaphore_mem>>)
    %c49_i32 = arith.constant 49 : i32
    %246 = arith.addi %0, %c49_i32 : i32
    %247 = arith.index_cast %246 : i32 to index
    %248 = memref.load %arg1[%247] : memref<64xi32, #tpu.memory_space<smem>>
    %c0_i32_147 = arith.constant 0 : i32
    %249 = tpu.memref_slice %arg2[%248, %c0_i32_147] : memref<128x32xf32, #tpu.memory_space<any>> -> memref<1x32xf32, #tpu.memory_space<any>>
    %c49_i32_148 = arith.constant 49 : i32
    %c0_i32_149 = arith.constant 0 : i32
    %250 = tpu.memref_slice %arg3[%c49_i32_148, %c0_i32_149] : memref<64x32xf32, #tpu.memory_space<vmem>> -> memref<1x32xf32, #tpu.memory_space<vmem>>
    tpu.enqueue_dma source(%249 : memref<1x32xf32, #tpu.memory_space<any>>) target(%250 : memref<1x32xf32, #tpu.memory_space<vmem>>) target_semaphore(%arg4 : memref<!tpu.dma_semaphore, #tpu.memory_space<semaphore_mem>>)
    %c50_i32 = arith.constant 50 : i32
    %251 = arith.addi %0, %c50_i32 : i32
    %252 = arith.index_cast %251 : i32 to index
    %253 = memref.load %arg1[%252] : memref<64xi32, #tpu.memory_space<smem>>
    %c0_i32_150 = arith.constant 0 : i32
    %254 = tpu.memref_slice %arg2[%253, %c0_i32_150] : memref<128x32xf32, #tpu.memory_space<any>> -> memref<1x32xf32, #tpu.memory_space<any>>
    %c50_i32_151 = arith.constant 50 : i32
    %c0_i32_152 = arith.constant 0 : i32
    %255 = tpu.memref_slice %arg3[%c50_i32_151, %c0_i32_152] : memref<64x32xf32, #tpu.memory_space<vmem>> -> memref<1x32xf32, #tpu.memory_space<vmem>>
    tpu.enqueue_dma source(%254 : memref<1x32xf32, #tpu.memory_space<any>>) target(%255 : memref<1x32xf32, #tpu.memory_space<vmem>>) target_semaphore(%arg4 : memref<!tpu.dma_semaphore, #tpu.memory_space<semaphore_mem>>)
    %c51_i32 = arith.constant 51 : i32
    %256 = arith.addi %0, %c51_i32 : i32
    %257 = arith.index_cast %256 : i32 to index
    %258 = memref.load %arg1[%257] : memref<64xi32, #tpu.memory_space<smem>>
    %c0_i32_153 = arith.constant 0 : i32
    %259 = tpu.memref_slice %arg2[%258, %c0_i32_153] : memref<128x32xf32, #tpu.memory_space<any>> -> memref<1x32xf32, #tpu.memory_space<any>>
    %c51_i32_154 = arith.constant 51 : i32
    %c0_i32_155 = arith.constant 0 : i32
    %260 = tpu.memref_slice %arg3[%c51_i32_154, %c0_i32_155] : memref<64x32xf32, #tpu.memory_space<vmem>> -> memref<1x32xf32, #tpu.memory_space<vmem>>
    tpu.enqueue_dma source(%259 : memref<1x32xf32, #tpu.memory_space<any>>) target(%260 : memref<1x32xf32, #tpu.memory_space<vmem>>) target_semaphore(%arg4 : memref<!tpu.dma_semaphore, #tpu.memory_space<semaphore_mem>>)
    %c52_i32 = arith.constant 52 : i32
    %261 = arith.addi %0, %c52_i32 : i32
    %262 = arith.index_cast %261 : i32 to index
    %263 = memref.load %arg1[%262] : memref<64xi32, #tpu.memory_space<smem>>
    %c0_i32_156 = arith.constant 0 : i32
    %264 = tpu.memref_slice %arg2[%263, %c0_i32_156] : memref<128x32xf32, #tpu.memory_space<any>> -> memref<1x32xf32, #tpu.memory_space<any>>
    %c52_i32_157 = arith.constant 52 : i32
    %c0_i32_158 = arith.constant 0 : i32
    %265 = tpu.memref_slice %arg3[%c52_i32_157, %c0_i32_158] : memref<64x32xf32, #tpu.memory_space<vmem>> -> memref<1x32xf32, #tpu.memory_space<vmem>>
    tpu.enqueue_dma source(%264 : memref<1x32xf32, #tpu.memory_space<any>>) target(%265 : memref<1x32xf32, #tpu.memory_space<vmem>>) target_semaphore(%arg4 : memref<!tpu.dma_semaphore, #tpu.memory_space<semaphore_mem>>)
    %c53_i32 = arith.constant 53 : i32
    %266 = arith.addi %0, %c53_i32 : i32
    %267 = arith.index_cast %266 : i32 to index
    %268 = memref.load %arg1[%267] : memref<64xi32, #tpu.memory_space<smem>>
    %c0_i32_159 = arith.constant 0 : i32
    %269 = tpu.memref_slice %arg2[%268, %c0_i32_159] : memref<128x32xf32, #tpu.memory_space<any>> -> memref<1x32xf32, #tpu.memory_space<any>>
    %c53_i32_160 = arith.constant 53 : i32
    %c0_i32_161 = arith.constant 0 : i32
    %270 = tpu.memref_slice %arg3[%c53_i32_160, %c0_i32_161] : memref<64x32xf32, #tpu.memory_space<vmem>> -> memref<1x32xf32, #tpu.memory_space<vmem>>
    tpu.enqueue_dma source(%269 : memref<1x32xf32, #tpu.memory_space<any>>) target(%270 : memref<1x32xf32, #tpu.memory_space<vmem>>) target_semaphore(%arg4 : memref<!tpu.dma_semaphore, #tpu.memory_space<semaphore_mem>>)
    %c54_i32 = arith.constant 54 : i32
    %271 = arith.addi %0, %c54_i32 : i32
    %272 = arith.index_cast %271 : i32 to index
    %273 = memref.load %arg1[%272] : memref<64xi32, #tpu.memory_space<smem>>
    %c0_i32_162 = arith.constant 0 : i32
    %274 = tpu.memref_slice %arg2[%273, %c0_i32_162] : memref<128x32xf32, #tpu.memory_space<any>> -> memref<1x32xf32, #tpu.memory_space<any>>
    %c54_i32_163 = arith.constant 54 : i32
    %c0_i32_164 = arith.constant 0 : i32
    %275 = tpu.memref_slice %arg3[%c54_i32_163, %c0_i32_164] : memref<64x32xf32, #tpu.memory_space<vmem>> -> memref<1x32xf32, #tpu.memory_space<vmem>>
    tpu.enqueue_dma source(%274 : memref<1x32xf32, #tpu.memory_space<any>>) target(%275 : memref<1x32xf32, #tpu.memory_space<vmem>>) target_semaphore(%arg4 : memref<!tpu.dma_semaphore, #tpu.memory_space<semaphore_mem>>)
    %c55_i32 = arith.constant 55 : i32
    %276 = arith.addi %0, %c55_i32 : i32
    %277 = arith.index_cast %276 : i32 to index
    %278 = memref.load %arg1[%277] : memref<64xi32, #tpu.memory_space<smem>>
    %c0_i32_165 = arith.constant 0 : i32
    %279 = tpu.memref_slice %arg2[%278, %c0_i32_165] : memref<128x32xf32, #tpu.memory_space<any>> -> memref<1x32xf32, #tpu.memory_space<any>>
    %c55_i32_166 = arith.constant 55 : i32
    %c0_i32_167 = arith.constant 0 : i32
    %280 = tpu.memref_slice %arg3[%c55_i32_166, %c0_i32_167] : memref<64x32xf32, #tpu.memory_space<vmem>> -> memref<1x32xf32, #tpu.memory_space<vmem>>
    tpu.enqueue_dma source(%279 : memref<1x32xf32, #tpu.memory_space<any>>) target(%280 : memref<1x32xf32, #tpu.memory_space<vmem>>) target_semaphore(%arg4 : memref<!tpu.dma_semaphore, #tpu.memory_space<semaphore_mem>>)
    %c56_i32 = arith.constant 56 : i32
    %281 = arith.addi %0, %c56_i32 : i32
    %282 = arith.index_cast %281 : i32 to index
    %283 = memref.load %arg1[%282] : memref<64xi32, #tpu.memory_space<smem>>
    %c0_i32_168 = arith.constant 0 : i32
    %284 = tpu.memref_slice %arg2[%283, %c0_i32_168] : memref<128x32xf32, #tpu.memory_space<any>> -> memref<1x32xf32, #tpu.memory_space<any>>
    %c56_i32_169 = arith.constant 56 : i32
    %c0_i32_170 = arith.constant 0 : i32
    %285 = tpu.memref_slice %arg3[%c56_i32_169, %c0_i32_170] : memref<64x32xf32, #tpu.memory_space<vmem>> -> memref<1x32xf32, #tpu.memory_space<vmem>>
    tpu.enqueue_dma source(%284 : memref<1x32xf32, #tpu.memory_space<any>>) target(%285 : memref<1x32xf32, #tpu.memory_space<vmem>>) target_semaphore(%arg4 : memref<!tpu.dma_semaphore, #tpu.memory_space<semaphore_mem>>)
    %c57_i32 = arith.constant 57 : i32
    %286 = arith.addi %0, %c57_i32 : i32
    %287 = arith.index_cast %286 : i32 to index
    %288 = memref.load %arg1[%287] : memref<64xi32, #tpu.memory_space<smem>>
    %c0_i32_171 = arith.constant 0 : i32
    %289 = tpu.memref_slice %arg2[%288, %c0_i32_171] : memref<128x32xf32, #tpu.memory_space<any>> -> memref<1x32xf32, #tpu.memory_space<any>>
    %c57_i32_172 = arith.constant 57 : i32
    %c0_i32_173 = arith.constant 0 : i32
    %290 = tpu.memref_slice %arg3[%c57_i32_172, %c0_i32_173] : memref<64x32xf32, #tpu.memory_space<vmem>> -> memref<1x32xf32, #tpu.memory_space<vmem>>
    tpu.enqueue_dma source(%289 : memref<1x32xf32, #tpu.memory_space<any>>) target(%290 : memref<1x32xf32, #tpu.memory_space<vmem>>) target_semaphore(%arg4 : memref<!tpu.dma_semaphore, #tpu.memory_space<semaphore_mem>>)
    %c58_i32 = arith.constant 58 : i32
    %291 = arith.addi %0, %c58_i32 : i32
    %292 = arith.index_cast %291 : i32 to index
    %293 = memref.load %arg1[%292] : memref<64xi32, #tpu.memory_space<smem>>
    %c0_i32_174 = arith.constant 0 : i32
    %294 = tpu.memref_slice %arg2[%293, %c0_i32_174] : memref<128x32xf32, #tpu.memory_space<any>> -> memref<1x32xf32, #tpu.memory_space<any>>
    %c58_i32_175 = arith.constant 58 : i32
    %c0_i32_176 = arith.constant 0 : i32
    %295 = tpu.memref_slice %arg3[%c58_i32_175, %c0_i32_176] : memref<64x32xf32, #tpu.memory_space<vmem>> -> memref<1x32xf32, #tpu.memory_space<vmem>>
    tpu.enqueue_dma source(%294 : memref<1x32xf32, #tpu.memory_space<any>>) target(%295 : memref<1x32xf32, #tpu.memory_space<vmem>>) target_semaphore(%arg4 : memref<!tpu.dma_semaphore, #tpu.memory_space<semaphore_mem>>)
    %c59_i32 = arith.constant 59 : i32
    %296 = arith.addi %0, %c59_i32 : i32
    %297 = arith.index_cast %296 : i32 to index
    %298 = memref.load %arg1[%297] : memref<64xi32, #tpu.memory_space<smem>>
    %c0_i32_177 = arith.constant 0 : i32
    %299 = tpu.memref_slice %arg2[%298, %c0_i32_177] : memref<128x32xf32, #tpu.memory_space<any>> -> memref<1x32xf32, #tpu.memory_space<any>>
    %c59_i32_178 = arith.constant 59 : i32
    %c0_i32_179 = arith.constant 0 : i32
    %300 = tpu.memref_slice %arg3[%c59_i32_178, %c0_i32_179] : memref<64x32xf32, #tpu.memory_space<vmem>> -> memref<1x32xf32, #tpu.memory_space<vmem>>
    tpu.enqueue_dma source(%299 : memref<1x32xf32, #tpu.memory_space<any>>) target(%300 : memref<1x32xf32, #tpu.memory_space<vmem>>) target_semaphore(%arg4 : memref<!tpu.dma_semaphore, #tpu.memory_space<semaphore_mem>>)
    %c60_i32 = arith.constant 60 : i32
    %301 = arith.addi %0, %c60_i32 : i32
    %302 = arith.index_cast %301 : i32 to index
    %303 = memref.load %arg1[%302] : memref<64xi32, #tpu.memory_space<smem>>
    %c0_i32_180 = arith.constant 0 : i32
    %304 = tpu.memref_slice %arg2[%303, %c0_i32_180] : memref<128x32xf32, #tpu.memory_space<any>> -> memref<1x32xf32, #tpu.memory_space<any>>
    %c60_i32_181 = arith.constant 60 : i32
    %c0_i32_182 = arith.constant 0 : i32
    %305 = tpu.memref_slice %arg3[%c60_i32_181, %c0_i32_182] : memref<64x32xf32, #tpu.memory_space<vmem>> -> memref<1x32xf32, #tpu.memory_space<vmem>>
    tpu.enqueue_dma source(%304 : memref<1x32xf32, #tpu.memory_space<any>>) target(%305 : memref<1x32xf32, #tpu.memory_space<vmem>>) target_semaphore(%arg4 : memref<!tpu.dma_semaphore, #tpu.memory_space<semaphore_mem>>)
    %c61_i32 = arith.constant 61 : i32
    %306 = arith.addi %0, %c61_i32 : i32
    %307 = arith.index_cast %306 : i32 to index
    %308 = memref.load %arg1[%307] : memref<64xi32, #tpu.memory_space<smem>>
    %c0_i32_183 = arith.constant 0 : i32
    %309 = tpu.memref_slice %arg2[%308, %c0_i32_183] : memref<128x32xf32, #tpu.memory_space<any>> -> memref<1x32xf32, #tpu.memory_space<any>>
    %c61_i32_184 = arith.constant 61 : i32
    %c0_i32_185 = arith.constant 0 : i32
    %310 = tpu.memref_slice %arg3[%c61_i32_184, %c0_i32_185] : memref<64x32xf32, #tpu.memory_space<vmem>> -> memref<1x32xf32, #tpu.memory_space<vmem>>
    tpu.enqueue_dma source(%309 : memref<1x32xf32, #tpu.memory_space<any>>) target(%310 : memref<1x32xf32, #tpu.memory_space<vmem>>) target_semaphore(%arg4 : memref<!tpu.dma_semaphore, #tpu.memory_space<semaphore_mem>>)
    %c62_i32 = arith.constant 62 : i32
    %311 = arith.addi %0, %c62_i32 : i32
    %312 = arith.index_cast %311 : i32 to index
    %313 = memref.load %arg1[%312] : memref<64xi32, #tpu.memory_space<smem>>
    %c0_i32_186 = arith.constant 0 : i32
    %314 = tpu.memref_slice %arg2[%313, %c0_i32_186] : memref<128x32xf32, #tpu.memory_space<any>> -> memref<1x32xf32, #tpu.memory_space<any>>
    %c62_i32_187 = arith.constant 62 : i32
    %c0_i32_188 = arith.constant 0 : i32
    %315 = tpu.memref_slice %arg3[%c62_i32_187, %c0_i32_188] : memref<64x32xf32, #tpu.memory_space<vmem>> -> memref<1x32xf32, #tpu.memory_space<vmem>>
    tpu.enqueue_dma source(%314 : memref<1x32xf32, #tpu.memory_space<any>>) target(%315 : memref<1x32xf32, #tpu.memory_space<vmem>>) target_semaphore(%arg4 : memref<!tpu.dma_semaphore, #tpu.memory_space<semaphore_mem>>)
    %c63_i32 = arith.constant 63 : i32
    %316 = arith.addi %0, %c63_i32 : i32
    %317 = arith.index_cast %316 : i32 to index
    %318 = memref.load %arg1[%317] : memref<64xi32, #tpu.memory_space<smem>>
    %c0_i32_189 = arith.constant 0 : i32
    %319 = tpu.memref_slice %arg2[%318, %c0_i32_189] : memref<128x32xf32, #tpu.memory_space<any>> -> memref<1x32xf32, #tpu.memory_space<any>>
    %c63_i32_190 = arith.constant 63 : i32
    %c0_i32_191 = arith.constant 0 : i32
    %320 = tpu.memref_slice %arg3[%c63_i32_190, %c0_i32_191] : memref<64x32xf32, #tpu.memory_space<vmem>> -> memref<1x32xf32, #tpu.memory_space<vmem>>
    tpu.enqueue_dma source(%319 : memref<1x32xf32, #tpu.memory_space<any>>) target(%320 : memref<1x32xf32, #tpu.memory_space<vmem>>) target_semaphore(%arg4 : memref<!tpu.dma_semaphore, #tpu.memory_space<semaphore_mem>>)
    %c0_i32_192 = arith.constant 0 : i32
    %c0_i32_193 = arith.constant 0 : i32
    %321 = tpu.memref_slice %arg2[%c0_i32_192, %c0_i32_193] : memref<128x32xf32, #tpu.memory_space<any>> -> memref<1x32xf32, #tpu.memory_space<any>>
    %c0_i32_194 = arith.constant 0 : i32
    %c0_i32_195 = arith.constant 0 : i32
    %322 = tpu.memref_slice %arg3[%c0_i32_194, %c0_i32_195] : memref<64x32xf32, #tpu.memory_space<vmem>> -> memref<1x32xf32, #tpu.memory_space<vmem>>
    tpu.wait_dma2 semaphore(%arg4 : memref<!tpu.dma_semaphore, #tpu.memory_space<semaphore_mem>>) src(%321 : memref<1x32xf32, #tpu.memory_space<any>>) dst(%322 : memref<1x32xf32, #tpu.memory_space<vmem>>)
    %c0_i32_196 = arith.constant 0 : i32
    %c0_i32_197 = arith.constant 0 : i32
    %323 = tpu.memref_slice %arg2[%c0_i32_196, %c0_i32_197] : memref<128x32xf32, #tpu.memory_space<any>> -> memref<1x32xf32, #tpu.memory_space<any>>
    %c1_i32_198 = arith.constant 1 : i32
    %c0_i32_199 = arith.constant 0 : i32
    %324 = tpu.memref_slice %arg3[%c1_i32_198, %c0_i32_199] : memref<64x32xf32, #tpu.memory_space<vmem>> -> memref<1x32xf32, #tpu.memory_space<vmem>>
    tpu.wait_dma2 semaphore(%arg4 : memref<!tpu.dma_semaphore, #tpu.memory_space<semaphore_mem>>) src(%323 : memref<1x32xf32, #tpu.memory_space<any>>) dst(%324 : memref<1x32xf32, #tpu.memory_space<vmem>>)
    %c0_i32_200 = arith.constant 0 : i32
    %c0_i32_201 = arith.constant 0 : i32
    %325 = tpu.memref_slice %arg2[%c0_i32_200, %c0_i32_201] : memref<128x32xf32, #tpu.memory_space<any>> -> memref<1x32xf32, #tpu.memory_space<any>>
    %c2_i32_202 = arith.constant 2 : i32
    %c0_i32_203 = arith.constant 0 : i32
    %326 = tpu.memref_slice %arg3[%c2_i32_202, %c0_i32_203] : memref<64x32xf32, #tpu.memory_space<vmem>> -> memref<1x32xf32, #tpu.memory_space<vmem>>
    tpu.wait_dma2 semaphore(%arg4 : memref<!tpu.dma_semaphore, #tpu.memory_space<semaphore_mem>>) src(%325 : memref<1x32xf32, #tpu.memory_space<any>>) dst(%326 : memref<1x32xf32, #tpu.memory_space<vmem>>)
    %c0_i32_204 = arith.constant 0 : i32
    %c0_i32_205 = arith.constant 0 : i32
    %327 = tpu.memref_slice %arg2[%c0_i32_204, %c0_i32_205] : memref<128x32xf32, #tpu.memory_space<any>> -> memref<1x32xf32, #tpu.memory_space<any>>
    %c3_i32_206 = arith.constant 3 : i32
    %c0_i32_207 = arith.constant 0 : i32
    %328 = tpu.memref_slice %arg3[%c3_i32_206, %c0_i32_207] : memref<64x32xf32, #tpu.memory_space<vmem>> -> memref<1x32xf32, #tpu.memory_space<vmem>>
    tpu.wait_dma2 semaphore(%arg4 : memref<!tpu.dma_semaphore, #tpu.memory_space<semaphore_mem>>) src(%327 : memref<1x32xf32, #tpu.memory_space<any>>) dst(%328 : memref<1x32xf32, #tpu.memory_space<vmem>>)
    %c0_i32_208 = arith.constant 0 : i32
    %c0_i32_209 = arith.constant 0 : i32
    %329 = tpu.memref_slice %arg2[%c0_i32_208, %c0_i32_209] : memref<128x32xf32, #tpu.memory_space<any>> -> memref<1x32xf32, #tpu.memory_space<any>>
    %c4_i32_210 = arith.constant 4 : i32
    %c0_i32_211 = arith.constant 0 : i32
    %330 = tpu.memref_slice %arg3[%c4_i32_210, %c0_i32_211] : memref<64x32xf32, #tpu.memory_space<vmem>> -> memref<1x32xf32, #tpu.memory_space<vmem>>
    tpu.wait_dma2 semaphore(%arg4 : memref<!tpu.dma_semaphore, #tpu.memory_space<semaphore_mem>>) src(%329 : memref<1x32xf32, #tpu.memory_space<any>>) dst(%330 : memref<1x32xf32, #tpu.memory_space<vmem>>)
    %c0_i32_212 = arith.constant 0 : i32
    %c0_i32_213 = arith.constant 0 : i32
    %331 = tpu.memref_slice %arg2[%c0_i32_212, %c0_i32_213] : memref<128x32xf32, #tpu.memory_space<any>> -> memref<1x32xf32, #tpu.memory_space<any>>
    %c5_i32_214 = arith.constant 5 : i32
    %c0_i32_215 = arith.constant 0 : i32
    %332 = tpu.memref_slice %arg3[%c5_i32_214, %c0_i32_215] : memref<64x32xf32, #tpu.memory_space<vmem>> -> memref<1x32xf32, #tpu.memory_space<vmem>>
    tpu.wait_dma2 semaphore(%arg4 : memref<!tpu.dma_semaphore, #tpu.memory_space<semaphore_mem>>) src(%331 : memref<1x32xf32, #tpu.memory_space<any>>) dst(%332 : memref<1x32xf32, #tpu.memory_space<vmem>>)
    %c0_i32_216 = arith.constant 0 : i32
    %c0_i32_217 = arith.constant 0 : i32
    %333 = tpu.memref_slice %arg2[%c0_i32_216, %c0_i32_217] : memref<128x32xf32, #tpu.memory_space<any>> -> memref<1x32xf32, #tpu.memory_space<any>>
    %c6_i32_218 = arith.constant 6 : i32
    %c0_i32_219 = arith.constant 0 : i32
    %334 = tpu.memref_slice %arg3[%c6_i32_218, %c0_i32_219] : memref<64x32xf32, #tpu.memory_space<vmem>> -> memref<1x32xf32, #tpu.memory_space<vmem>>
    tpu.wait_dma2 semaphore(%arg4 : memref<!tpu.dma_semaphore, #tpu.memory_space<semaphore_mem>>) src(%333 : memref<1x32xf32, #tpu.memory_space<any>>) dst(%334 : memref<1x32xf32, #tpu.memory_space<vmem>>)
    %c0_i32_220 = arith.constant 0 : i32
    %c0_i32_221 = arith.constant 0 : i32
    %335 = tpu.memref_slice %arg2[%c0_i32_220, %c0_i32_221] : memref<128x32xf32, #tpu.memory_space<any>> -> memref<1x32xf32, #tpu.memory_space<any>>
    %c7_i32_222 = arith.constant 7 : i32
    %c0_i32_223 = arith.constant 0 : i32
    %336 = tpu.memref_slice %arg3[%c7_i32_222, %c0_i32_223] : memref<64x32xf32, #tpu.memory_space<vmem>> -> memref<1x32xf32, #tpu.memory_space<vmem>>
    tpu.wait_dma2 semaphore(%arg4 : memref<!tpu.dma_semaphore, #tpu.memory_space<semaphore_mem>>) src(%335 : memref<1x32xf32, #tpu.memory_space<any>>) dst(%336 : memref<1x32xf32, #tpu.memory_space<vmem>>)
    %c0_i32_224 = arith.constant 0 : i32
    %c0_i32_225 = arith.constant 0 : i32
    %337 = tpu.memref_slice %arg2[%c0_i32_224, %c0_i32_225] : memref<128x32xf32, #tpu.memory_space<any>> -> memref<1x32xf32, #tpu.memory_space<any>>
    %c8_i32_226 = arith.constant 8 : i32
    %c0_i32_227 = arith.constant 0 : i32
    %338 = tpu.memref_slice %arg3[%c8_i32_226, %c0_i32_227] : memref<64x32xf32, #tpu.memory_space<vmem>> -> memref<1x32xf32, #tpu.memory_space<vmem>>
    tpu.wait_dma2 semaphore(%arg4 : memref<!tpu.dma_semaphore, #tpu.memory_space<semaphore_mem>>) src(%337 : memref<1x32xf32, #tpu.memory_space<any>>) dst(%338 : memref<1x32xf32, #tpu.memory_space<vmem>>)
    %c0_i32_228 = arith.constant 0 : i32
    %c0_i32_229 = arith.constant 0 : i32
    %339 = tpu.memref_slice %arg2[%c0_i32_228, %c0_i32_229] : memref<128x32xf32, #tpu.memory_space<any>> -> memref<1x32xf32, #tpu.memory_space<any>>
    %c9_i32_230 = arith.constant 9 : i32
    %c0_i32_231 = arith.constant 0 : i32
    %340 = tpu.memref_slice %arg3[%c9_i32_230, %c0_i32_231] : memref<64x32xf32, #tpu.memory_space<vmem>> -> memref<1x32xf32, #tpu.memory_space<vmem>>
    tpu.wait_dma2 semaphore(%arg4 : memref<!tpu.dma_semaphore, #tpu.memory_space<semaphore_mem>>) src(%339 : memref<1x32xf32, #tpu.memory_space<any>>) dst(%340 : memref<1x32xf32, #tpu.memory_space<vmem>>)
    %c0_i32_232 = arith.constant 0 : i32
    %c0_i32_233 = arith.constant 0 : i32
    %341 = tpu.memref_slice %arg2[%c0_i32_232, %c0_i32_233] : memref<128x32xf32, #tpu.memory_space<any>> -> memref<1x32xf32, #tpu.memory_space<any>>
    %c10_i32_234 = arith.constant 10 : i32
    %c0_i32_235 = arith.constant 0 : i32
    %342 = tpu.memref_slice %arg3[%c10_i32_234, %c0_i32_235] : memref<64x32xf32, #tpu.memory_space<vmem>> -> memref<1x32xf32, #tpu.memory_space<vmem>>
    tpu.wait_dma2 semaphore(%arg4 : memref<!tpu.dma_semaphore, #tpu.memory_space<semaphore_mem>>) src(%341 : memref<1x32xf32, #tpu.memory_space<any>>) dst(%342 : memref<1x32xf32, #tpu.memory_space<vmem>>)
    %c0_i32_236 = arith.constant 0 : i32
    %c0_i32_237 = arith.constant 0 : i32
    %343 = tpu.memref_slice %arg2[%c0_i32_236, %c0_i32_237] : memref<128x32xf32, #tpu.memory_space<any>> -> memref<1x32xf32, #tpu.memory_space<any>>
    %c11_i32_238 = arith.constant 11 : i32
    %c0_i32_239 = arith.constant 0 : i32
    %344 = tpu.memref_slice %arg3[%c11_i32_238, %c0_i32_239] : memref<64x32xf32, #tpu.memory_space<vmem>> -> memref<1x32xf32, #tpu.memory_space<vmem>>
    tpu.wait_dma2 semaphore(%arg4 : memref<!tpu.dma_semaphore, #tpu.memory_space<semaphore_mem>>) src(%343 : memref<1x32xf32, #tpu.memory_space<any>>) dst(%344 : memref<1x32xf32, #tpu.memory_space<vmem>>)
    %c0_i32_240 = arith.constant 0 : i32
    %c0_i32_241 = arith.constant 0 : i32
    %345 = tpu.memref_slice %arg2[%c0_i32_240, %c0_i32_241] : memref<128x32xf32, #tpu.memory_space<any>> -> memref<1x32xf32, #tpu.memory_space<any>>
    %c12_i32_242 = arith.constant 12 : i32
    %c0_i32_243 = arith.constant 0 : i32
    %346 = tpu.memref_slice %arg3[%c12_i32_242, %c0_i32_243] : memref<64x32xf32, #tpu.memory_space<vmem>> -> memref<1x32xf32, #tpu.memory_space<vmem>>
    tpu.wait_dma2 semaphore(%arg4 : memref<!tpu.dma_semaphore, #tpu.memory_space<semaphore_mem>>) src(%345 : memref<1x32xf32, #tpu.memory_space<any>>) dst(%346 : memref<1x32xf32, #tpu.memory_space<vmem>>)
    %c0_i32_244 = arith.constant 0 : i32
    %c0_i32_245 = arith.constant 0 : i32
    %347 = tpu.memref_slice %arg2[%c0_i32_244, %c0_i32_245] : memref<128x32xf32, #tpu.memory_space<any>> -> memref<1x32xf32, #tpu.memory_space<any>>
    %c13_i32_246 = arith.constant 13 : i32
    %c0_i32_247 = arith.constant 0 : i32
    %348 = tpu.memref_slice %arg3[%c13_i32_246, %c0_i32_247] : memref<64x32xf32, #tpu.memory_space<vmem>> -> memref<1x32xf32, #tpu.memory_space<vmem>>
    tpu.wait_dma2 semaphore(%arg4 : memref<!tpu.dma_semaphore, #tpu.memory_space<semaphore_mem>>) src(%347 : memref<1x32xf32, #tpu.memory_space<any>>) dst(%348 : memref<1x32xf32, #tpu.memory_space<vmem>>)
    %c0_i32_248 = arith.constant 0 : i32
    %c0_i32_249 = arith.constant 0 : i32
    %349 = tpu.memref_slice %arg2[%c0_i32_248, %c0_i32_249] : memref<128x32xf32, #tpu.memory_space<any>> -> memref<1x32xf32, #tpu.memory_space<any>>
    %c14_i32_250 = arith.constant 14 : i32
    %c0_i32_251 = arith.constant 0 : i32
    %350 = tpu.memref_slice %arg3[%c14_i32_250, %c0_i32_251] : memref<64x32xf32, #tpu.memory_space<vmem>> -> memref<1x32xf32, #tpu.memory_space<vmem>>
    tpu.wait_dma2 semaphore(%arg4 : memref<!tpu.dma_semaphore, #tpu.memory_space<semaphore_mem>>) src(%349 : memref<1x32xf32, #tpu.memory_space<any>>) dst(%350 : memref<1x32xf32, #tpu.memory_space<vmem>>)
    %c0_i32_252 = arith.constant 0 : i32
    %c0_i32_253 = arith.constant 0 : i32
    %351 = tpu.memref_slice %arg2[%c0_i32_252, %c0_i32_253] : memref<128x32xf32, #tpu.memory_space<any>> -> memref<1x32xf32, #tpu.memory_space<any>>
    %c15_i32_254 = arith.constant 15 : i32
    %c0_i32_255 = arith.constant 0 : i32
    %352 = tpu.memref_slice %arg3[%c15_i32_254, %c0_i32_255] : memref<64x32xf32, #tpu.memory_space<vmem>> -> memref<1x32xf32, #tpu.memory_space<vmem>>
    tpu.wait_dma2 semaphore(%arg4 : memref<!tpu.dma_semaphore, #tpu.memory_space<semaphore_mem>>) src(%351 : memref<1x32xf32, #tpu.memory_space<any>>) dst(%352 : memref<1x32xf32, #tpu.memory_space<vmem>>)
    %c0_i32_256 = arith.constant 0 : i32
    %c0_i32_257 = arith.constant 0 : i32
    %353 = tpu.memref_slice %arg2[%c0_i32_256, %c0_i32_257] : memref<128x32xf32, #tpu.memory_space<any>> -> memref<1x32xf32, #tpu.memory_space<any>>
    %c16_i32_258 = arith.constant 16 : i32
    %c0_i32_259 = arith.constant 0 : i32
    %354 = tpu.memref_slice %arg3[%c16_i32_258, %c0_i32_259] : memref<64x32xf32, #tpu.memory_space<vmem>> -> memref<1x32xf32, #tpu.memory_space<vmem>>
    tpu.wait_dma2 semaphore(%arg4 : memref<!tpu.dma_semaphore, #tpu.memory_space<semaphore_mem>>) src(%353 : memref<1x32xf32, #tpu.memory_space<any>>) dst(%354 : memref<1x32xf32, #tpu.memory_space<vmem>>)
    %c0_i32_260 = arith.constant 0 : i32
    %c0_i32_261 = arith.constant 0 : i32
    %355 = tpu.memref_slice %arg2[%c0_i32_260, %c0_i32_261] : memref<128x32xf32, #tpu.memory_space<any>> -> memref<1x32xf32, #tpu.memory_space<any>>
    %c17_i32_262 = arith.constant 17 : i32
    %c0_i32_263 = arith.constant 0 : i32
    %356 = tpu.memref_slice %arg3[%c17_i32_262, %c0_i32_263] : memref<64x32xf32, #tpu.memory_space<vmem>> -> memref<1x32xf32, #tpu.memory_space<vmem>>
    tpu.wait_dma2 semaphore(%arg4 : memref<!tpu.dma_semaphore, #tpu.memory_space<semaphore_mem>>) src(%355 : memref<1x32xf32, #tpu.memory_space<any>>) dst(%356 : memref<1x32xf32, #tpu.memory_space<vmem>>)
    %c0_i32_264 = arith.constant 0 : i32
    %c0_i32_265 = arith.constant 0 : i32
    %357 = tpu.memref_slice %arg2[%c0_i32_264, %c0_i32_265] : memref<128x32xf32, #tpu.memory_space<any>> -> memref<1x32xf32, #tpu.memory_space<any>>
    %c18_i32_266 = arith.constant 18 : i32
    %c0_i32_267 = arith.constant 0 : i32
    %358 = tpu.memref_slice %arg3[%c18_i32_266, %c0_i32_267] : memref<64x32xf32, #tpu.memory_space<vmem>> -> memref<1x32xf32, #tpu.memory_space<vmem>>
    tpu.wait_dma2 semaphore(%arg4 : memref<!tpu.dma_semaphore, #tpu.memory_space<semaphore_mem>>) src(%357 : memref<1x32xf32, #tpu.memory_space<any>>) dst(%358 : memref<1x32xf32, #tpu.memory_space<vmem>>)
    %c0_i32_268 = arith.constant 0 : i32
    %c0_i32_269 = arith.constant 0 : i32
    %359 = tpu.memref_slice %arg2[%c0_i32_268, %c0_i32_269] : memref<128x32xf32, #tpu.memory_space<any>> -> memref<1x32xf32, #tpu.memory_space<any>>
    %c19_i32_270 = arith.constant 19 : i32
    %c0_i32_271 = arith.constant 0 : i32
    %360 = tpu.memref_slice %arg3[%c19_i32_270, %c0_i32_271] : memref<64x32xf32, #tpu.memory_space<vmem>> -> memref<1x32xf32, #tpu.memory_space<vmem>>
    tpu.wait_dma2 semaphore(%arg4 : memref<!tpu.dma_semaphore, #tpu.memory_space<semaphore_mem>>) src(%359 : memref<1x32xf32, #tpu.memory_space<any>>) dst(%360 : memref<1x32xf32, #tpu.memory_space<vmem>>)
    %c0_i32_272 = arith.constant 0 : i32
    %c0_i32_273 = arith.constant 0 : i32
    %361 = tpu.memref_slice %arg2[%c0_i32_272, %c0_i32_273] : memref<128x32xf32, #tpu.memory_space<any>> -> memref<1x32xf32, #tpu.memory_space<any>>
    %c20_i32_274 = arith.constant 20 : i32
    %c0_i32_275 = arith.constant 0 : i32
    %362 = tpu.memref_slice %arg3[%c20_i32_274, %c0_i32_275] : memref<64x32xf32, #tpu.memory_space<vmem>> -> memref<1x32xf32, #tpu.memory_space<vmem>>
    tpu.wait_dma2 semaphore(%arg4 : memref<!tpu.dma_semaphore, #tpu.memory_space<semaphore_mem>>) src(%361 : memref<1x32xf32, #tpu.memory_space<any>>) dst(%362 : memref<1x32xf32, #tpu.memory_space<vmem>>)
    %c0_i32_276 = arith.constant 0 : i32
    %c0_i32_277 = arith.constant 0 : i32
    %363 = tpu.memref_slice %arg2[%c0_i32_276, %c0_i32_277] : memref<128x32xf32, #tpu.memory_space<any>> -> memref<1x32xf32, #tpu.memory_space<any>>
    %c21_i32_278 = arith.constant 21 : i32
    %c0_i32_279 = arith.constant 0 : i32
    %364 = tpu.memref_slice %arg3[%c21_i32_278, %c0_i32_279] : memref<64x32xf32, #tpu.memory_space<vmem>> -> memref<1x32xf32, #tpu.memory_space<vmem>>
    tpu.wait_dma2 semaphore(%arg4 : memref<!tpu.dma_semaphore, #tpu.memory_space<semaphore_mem>>) src(%363 : memref<1x32xf32, #tpu.memory_space<any>>) dst(%364 : memref<1x32xf32, #tpu.memory_space<vmem>>)
    %c0_i32_280 = arith.constant 0 : i32
    %c0_i32_281 = arith.constant 0 : i32
    %365 = tpu.memref_slice %arg2[%c0_i32_280, %c0_i32_281] : memref<128x32xf32, #tpu.memory_space<any>> -> memref<1x32xf32, #tpu.memory_space<any>>
    %c22_i32_282 = arith.constant 22 : i32
    %c0_i32_283 = arith.constant 0 : i32
    %366 = tpu.memref_slice %arg3[%c22_i32_282, %c0_i32_283] : memref<64x32xf32, #tpu.memory_space<vmem>> -> memref<1x32xf32, #tpu.memory_space<vmem>>
    tpu.wait_dma2 semaphore(%arg4 : memref<!tpu.dma_semaphore, #tpu.memory_space<semaphore_mem>>) src(%365 : memref<1x32xf32, #tpu.memory_space<any>>) dst(%366 : memref<1x32xf32, #tpu.memory_space<vmem>>)
    %c0_i32_284 = arith.constant 0 : i32
    %c0_i32_285 = arith.constant 0 : i32
    %367 = tpu.memref_slice %arg2[%c0_i32_284, %c0_i32_285] : memref<128x32xf32, #tpu.memory_space<any>> -> memref<1x32xf32, #tpu.memory_space<any>>
    %c23_i32_286 = arith.constant 23 : i32
    %c0_i32_287 = arith.constant 0 : i32
    %368 = tpu.memref_slice %arg3[%c23_i32_286, %c0_i32_287] : memref<64x32xf32, #tpu.memory_space<vmem>> -> memref<1x32xf32, #tpu.memory_space<vmem>>
    tpu.wait_dma2 semaphore(%arg4 : memref<!tpu.dma_semaphore, #tpu.memory_space<semaphore_mem>>) src(%367 : memref<1x32xf32, #tpu.memory_space<any>>) dst(%368 : memref<1x32xf32, #tpu.memory_space<vmem>>)
    %c0_i32_288 = arith.constant 0 : i32
    %c0_i32_289 = arith.constant 0 : i32
    %369 = tpu.memref_slice %arg2[%c0_i32_288, %c0_i32_289] : memref<128x32xf32, #tpu.memory_space<any>> -> memref<1x32xf32, #tpu.memory_space<any>>
    %c24_i32_290 = arith.constant 24 : i32
    %c0_i32_291 = arith.constant 0 : i32
    %370 = tpu.memref_slice %arg3[%c24_i32_290, %c0_i32_291] : memref<64x32xf32, #tpu.memory_space<vmem>> -> memref<1x32xf32, #tpu.memory_space<vmem>>
    tpu.wait_dma2 semaphore(%arg4 : memref<!tpu.dma_semaphore, #tpu.memory_space<semaphore_mem>>) src(%369 : memref<1x32xf32, #tpu.memory_space<any>>) dst(%370 : memref<1x32xf32, #tpu.memory_space<vmem>>)
    %c0_i32_292 = arith.constant 0 : i32
    %c0_i32_293 = arith.constant 0 : i32
    %371 = tpu.memref_slice %arg2[%c0_i32_292, %c0_i32_293] : memref<128x32xf32, #tpu.memory_space<any>> -> memref<1x32xf32, #tpu.memory_space<any>>
    %c25_i32_294 = arith.constant 25 : i32
    %c0_i32_295 = arith.constant 0 : i32
    %372 = tpu.memref_slice %arg3[%c25_i32_294, %c0_i32_295] : memref<64x32xf32, #tpu.memory_space<vmem>> -> memref<1x32xf32, #tpu.memory_space<vmem>>
    tpu.wait_dma2 semaphore(%arg4 : memref<!tpu.dma_semaphore, #tpu.memory_space<semaphore_mem>>) src(%371 : memref<1x32xf32, #tpu.memory_space<any>>) dst(%372 : memref<1x32xf32, #tpu.memory_space<vmem>>)
    %c0_i32_296 = arith.constant 0 : i32
    %c0_i32_297 = arith.constant 0 : i32
    %373 = tpu.memref_slice %arg2[%c0_i32_296, %c0_i32_297] : memref<128x32xf32, #tpu.memory_space<any>> -> memref<1x32xf32, #tpu.memory_space<any>>
    %c26_i32_298 = arith.constant 26 : i32
    %c0_i32_299 = arith.constant 0 : i32
    %374 = tpu.memref_slice %arg3[%c26_i32_298, %c0_i32_299] : memref<64x32xf32, #tpu.memory_space<vmem>> -> memref<1x32xf32, #tpu.memory_space<vmem>>
    tpu.wait_dma2 semaphore(%arg4 : memref<!tpu.dma_semaphore, #tpu.memory_space<semaphore_mem>>) src(%373 : memref<1x32xf32, #tpu.memory_space<any>>) dst(%374 : memref<1x32xf32, #tpu.memory_space<vmem>>)
    %c0_i32_300 = arith.constant 0 : i32
    %c0_i32_301 = arith.constant 0 : i32
    %375 = tpu.memref_slice %arg2[%c0_i32_300, %c0_i32_301] : memref<128x32xf32, #tpu.memory_space<any>> -> memref<1x32xf32, #tpu.memory_space<any>>
    %c27_i32_302 = arith.constant 27 : i32
    %c0_i32_303 = arith.constant 0 : i32
    %376 = tpu.memref_slice %arg3[%c27_i32_302, %c0_i32_303] : memref<64x32xf32, #tpu.memory_space<vmem>> -> memref<1x32xf32, #tpu.memory_space<vmem>>
    tpu.wait_dma2 semaphore(%arg4 : memref<!tpu.dma_semaphore, #tpu.memory_space<semaphore_mem>>) src(%375 : memref<1x32xf32, #tpu.memory_space<any>>) dst(%376 : memref<1x32xf32, #tpu.memory_space<vmem>>)
    %c0_i32_304 = arith.constant 0 : i32
    %c0_i32_305 = arith.constant 0 : i32
    %377 = tpu.memref_slice %arg2[%c0_i32_304, %c0_i32_305] : memref<128x32xf32, #tpu.memory_space<any>> -> memref<1x32xf32, #tpu.memory_space<any>>
    %c28_i32_306 = arith.constant 28 : i32
    %c0_i32_307 = arith.constant 0 : i32
    %378 = tpu.memref_slice %arg3[%c28_i32_306, %c0_i32_307] : memref<64x32xf32, #tpu.memory_space<vmem>> -> memref<1x32xf32, #tpu.memory_space<vmem>>
    tpu.wait_dma2 semaphore(%arg4 : memref<!tpu.dma_semaphore, #tpu.memory_space<semaphore_mem>>) src(%377 : memref<1x32xf32, #tpu.memory_space<any>>) dst(%378 : memref<1x32xf32, #tpu.memory_space<vmem>>)
    %c0_i32_308 = arith.constant 0 : i32
    %c0_i32_309 = arith.constant 0 : i32
    %379 = tpu.memref_slice %arg2[%c0_i32_308, %c0_i32_309] : memref<128x32xf32, #tpu.memory_space<any>> -> memref<1x32xf32, #tpu.memory_space<any>>
    %c29_i32_310 = arith.constant 29 : i32
    %c0_i32_311 = arith.constant 0 : i32
    %380 = tpu.memref_slice %arg3[%c29_i32_310, %c0_i32_311] : memref<64x32xf32, #tpu.memory_space<vmem>> -> memref<1x32xf32, #tpu.memory_space<vmem>>
    tpu.wait_dma2 semaphore(%arg4 : memref<!tpu.dma_semaphore, #tpu.memory_space<semaphore_mem>>) src(%379 : memref<1x32xf32, #tpu.memory_space<any>>) dst(%380 : memref<1x32xf32, #tpu.memory_space<vmem>>)
    %c0_i32_312 = arith.constant 0 : i32
    %c0_i32_313 = arith.constant 0 : i32
    %381 = tpu.memref_slice %arg2[%c0_i32_312, %c0_i32_313] : memref<128x32xf32, #tpu.memory_space<any>> -> memref<1x32xf32, #tpu.memory_space<any>>
    %c30_i32_314 = arith.constant 30 : i32
    %c0_i32_315 = arith.constant 0 : i32
    %382 = tpu.memref_slice %arg3[%c30_i32_314, %c0_i32_315] : memref<64x32xf32, #tpu.memory_space<vmem>> -> memref<1x32xf32, #tpu.memory_space<vmem>>
    tpu.wait_dma2 semaphore(%arg4 : memref<!tpu.dma_semaphore, #tpu.memory_space<semaphore_mem>>) src(%381 : memref<1x32xf32, #tpu.memory_space<any>>) dst(%382 : memref<1x32xf32, #tpu.memory_space<vmem>>)
    %c0_i32_316 = arith.constant 0 : i32
    %c0_i32_317 = arith.constant 0 : i32
    %383 = tpu.memref_slice %arg2[%c0_i32_316, %c0_i32_317] : memref<128x32xf32, #tpu.memory_space<any>> -> memref<1x32xf32, #tpu.memory_space<any>>
    %c31_i32_318 = arith.constant 31 : i32
    %c0_i32_319 = arith.constant 0 : i32
    %384 = tpu.memref_slice %arg3[%c31_i32_318, %c0_i32_319] : memref<64x32xf32, #tpu.memory_space<vmem>> -> memref<1x32xf32, #tpu.memory_space<vmem>>
    tpu.wait_dma2 semaphore(%arg4 : memref<!tpu.dma_semaphore, #tpu.memory_space<semaphore_mem>>) src(%383 : memref<1x32xf32, #tpu.memory_space<any>>) dst(%384 : memref<1x32xf32, #tpu.memory_space<vmem>>)
    %c0_i32_320 = arith.constant 0 : i32
    %c0_i32_321 = arith.constant 0 : i32
    %385 = tpu.memref_slice %arg2[%c0_i32_320, %c0_i32_321] : memref<128x32xf32, #tpu.memory_space<any>> -> memref<1x32xf32, #tpu.memory_space<any>>
    %c32_i32_322 = arith.constant 32 : i32
    %c0_i32_323 = arith.constant 0 : i32
    %386 = tpu.memref_slice %arg3[%c32_i32_322, %c0_i32_323] : memref<64x32xf32, #tpu.memory_space<vmem>> -> memref<1x32xf32, #tpu.memory_space<vmem>>
    tpu.wait_dma2 semaphore(%arg4 : memref<!tpu.dma_semaphore, #tpu.memory_space<semaphore_mem>>) src(%385 : memref<1x32xf32, #tpu.memory_space<any>>) dst(%386 : memref<1x32xf32, #tpu.memory_space<vmem>>)
    %c0_i32_324 = arith.constant 0 : i32
    %c0_i32_325 = arith.constant 0 : i32
    %387 = tpu.memref_slice %arg2[%c0_i32_324, %c0_i32_325] : memref<128x32xf32, #tpu.memory_space<any>> -> memref<1x32xf32, #tpu.memory_space<any>>
    %c33_i32_326 = arith.constant 33 : i32
    %c0_i32_327 = arith.constant 0 : i32
    %388 = tpu.memref_slice %arg3[%c33_i32_326, %c0_i32_327] : memref<64x32xf32, #tpu.memory_space<vmem>> -> memref<1x32xf32, #tpu.memory_space<vmem>>
    tpu.wait_dma2 semaphore(%arg4 : memref<!tpu.dma_semaphore, #tpu.memory_space<semaphore_mem>>) src(%387 : memref<1x32xf32, #tpu.memory_space<any>>) dst(%388 : memref<1x32xf32, #tpu.memory_space<vmem>>)
    %c0_i32_328 = arith.constant 0 : i32
    %c0_i32_329 = arith.constant 0 : i32
    %389 = tpu.memref_slice %arg2[%c0_i32_328, %c0_i32_329] : memref<128x32xf32, #tpu.memory_space<any>> -> memref<1x32xf32, #tpu.memory_space<any>>
    %c34_i32_330 = arith.constant 34 : i32
    %c0_i32_331 = arith.constant 0 : i32
    %390 = tpu.memref_slice %arg3[%c34_i32_330, %c0_i32_331] : memref<64x32xf32, #tpu.memory_space<vmem>> -> memref<1x32xf32, #tpu.memory_space<vmem>>
    tpu.wait_dma2 semaphore(%arg4 : memref<!tpu.dma_semaphore, #tpu.memory_space<semaphore_mem>>) src(%389 : memref<1x32xf32, #tpu.memory_space<any>>) dst(%390 : memref<1x32xf32, #tpu.memory_space<vmem>>)
    %c0_i32_332 = arith.constant 0 : i32
    %c0_i32_333 = arith.constant 0 : i32
    %391 = tpu.memref_slice %arg2[%c0_i32_332, %c0_i32_333] : memref<128x32xf32, #tpu.memory_space<any>> -> memref<1x32xf32, #tpu.memory_space<any>>
    %c35_i32_334 = arith.constant 35 : i32
    %c0_i32_335 = arith.constant 0 : i32
    %392 = tpu.memref_slice %arg3[%c35_i32_334, %c0_i32_335] : memref<64x32xf32, #tpu.memory_space<vmem>> -> memref<1x32xf32, #tpu.memory_space<vmem>>
    tpu.wait_dma2 semaphore(%arg4 : memref<!tpu.dma_semaphore, #tpu.memory_space<semaphore_mem>>) src(%391 : memref<1x32xf32, #tpu.memory_space<any>>) dst(%392 : memref<1x32xf32, #tpu.memory_space<vmem>>)
    %c0_i32_336 = arith.constant 0 : i32
    %c0_i32_337 = arith.constant 0 : i32
    %393 = tpu.memref_slice %arg2[%c0_i32_336, %c0_i32_337] : memref<128x32xf32, #tpu.memory_space<any>> -> memref<1x32xf32, #tpu.memory_space<any>>
    %c36_i32_338 = arith.constant 36 : i32
    %c0_i32_339 = arith.constant 0 : i32
    %394 = tpu.memref_slice %arg3[%c36_i32_338, %c0_i32_339] : memref<64x32xf32, #tpu.memory_space<vmem>> -> memref<1x32xf32, #tpu.memory_space<vmem>>
    tpu.wait_dma2 semaphore(%arg4 : memref<!tpu.dma_semaphore, #tpu.memory_space<semaphore_mem>>) src(%393 : memref<1x32xf32, #tpu.memory_space<any>>) dst(%394 : memref<1x32xf32, #tpu.memory_space<vmem>>)
    %c0_i32_340 = arith.constant 0 : i32
    %c0_i32_341 = arith.constant 0 : i32
    %395 = tpu.memref_slice %arg2[%c0_i32_340, %c0_i32_341] : memref<128x32xf32, #tpu.memory_space<any>> -> memref<1x32xf32, #tpu.memory_space<any>>
    %c37_i32_342 = arith.constant 37 : i32
    %c0_i32_343 = arith.constant 0 : i32
    %396 = tpu.memref_slice %arg3[%c37_i32_342, %c0_i32_343] : memref<64x32xf32, #tpu.memory_space<vmem>> -> memref<1x32xf32, #tpu.memory_space<vmem>>
    tpu.wait_dma2 semaphore(%arg4 : memref<!tpu.dma_semaphore, #tpu.memory_space<semaphore_mem>>) src(%395 : memref<1x32xf32, #tpu.memory_space<any>>) dst(%396 : memref<1x32xf32, #tpu.memory_space<vmem>>)
    %c0_i32_344 = arith.constant 0 : i32
    %c0_i32_345 = arith.constant 0 : i32
    %397 = tpu.memref_slice %arg2[%c0_i32_344, %c0_i32_345] : memref<128x32xf32, #tpu.memory_space<any>> -> memref<1x32xf32, #tpu.memory_space<any>>
    %c38_i32_346 = arith.constant 38 : i32
    %c0_i32_347 = arith.constant 0 : i32
    %398 = tpu.memref_slice %arg3[%c38_i32_346, %c0_i32_347] : memref<64x32xf32, #tpu.memory_space<vmem>> -> memref<1x32xf32, #tpu.memory_space<vmem>>
    tpu.wait_dma2 semaphore(%arg4 : memref<!tpu.dma_semaphore, #tpu.memory_space<semaphore_mem>>) src(%397 : memref<1x32xf32, #tpu.memory_space<any>>) dst(%398 : memref<1x32xf32, #tpu.memory_space<vmem>>)
    %c0_i32_348 = arith.constant 0 : i32
    %c0_i32_349 = arith.constant 0 : i32
    %399 = tpu.memref_slice %arg2[%c0_i32_348, %c0_i32_349] : memref<128x32xf32, #tpu.memory_space<any>> -> memref<1x32xf32, #tpu.memory_space<any>>
    %c39_i32_350 = arith.constant 39 : i32
    %c0_i32_351 = arith.constant 0 : i32
    %400 = tpu.memref_slice %arg3[%c39_i32_350, %c0_i32_351] : memref<64x32xf32, #tpu.memory_space<vmem>> -> memref<1x32xf32, #tpu.memory_space<vmem>>
    tpu.wait_dma2 semaphore(%arg4 : memref<!tpu.dma_semaphore, #tpu.memory_space<semaphore_mem>>) src(%399 : memref<1x32xf32, #tpu.memory_space<any>>) dst(%400 : memref<1x32xf32, #tpu.memory_space<vmem>>)
    %c0_i32_352 = arith.constant 0 : i32
    %c0_i32_353 = arith.constant 0 : i32
    %401 = tpu.memref_slice %arg2[%c0_i32_352, %c0_i32_353] : memref<128x32xf32, #tpu.memory_space<any>> -> memref<1x32xf32, #tpu.memory_space<any>>
    %c40_i32_354 = arith.constant 40 : i32
    %c0_i32_355 = arith.constant 0 : i32
    %402 = tpu.memref_slice %arg3[%c40_i32_354, %c0_i32_355] : memref<64x32xf32, #tpu.memory_space<vmem>> -> memref<1x32xf32, #tpu.memory_space<vmem>>
    tpu.wait_dma2 semaphore(%arg4 : memref<!tpu.dma_semaphore, #tpu.memory_space<semaphore_mem>>) src(%401 : memref<1x32xf32, #tpu.memory_space<any>>) dst(%402 : memref<1x32xf32, #tpu.memory_space<vmem>>)
    %c0_i32_356 = arith.constant 0 : i32
    %c0_i32_357 = arith.constant 0 : i32
    %403 = tpu.memref_slice %arg2[%c0_i32_356, %c0_i32_357] : memref<128x32xf32, #tpu.memory_space<any>> -> memref<1x32xf32, #tpu.memory_space<any>>
    %c41_i32_358 = arith.constant 41 : i32
    %c0_i32_359 = arith.constant 0 : i32
    %404 = tpu.memref_slice %arg3[%c41_i32_358, %c0_i32_359] : memref<64x32xf32, #tpu.memory_space<vmem>> -> memref<1x32xf32, #tpu.memory_space<vmem>>
    tpu.wait_dma2 semaphore(%arg4 : memref<!tpu.dma_semaphore, #tpu.memory_space<semaphore_mem>>) src(%403 : memref<1x32xf32, #tpu.memory_space<any>>) dst(%404 : memref<1x32xf32, #tpu.memory_space<vmem>>)
    %c0_i32_360 = arith.constant 0 : i32
    %c0_i32_361 = arith.constant 0 : i32
    %405 = tpu.memref_slice %arg2[%c0_i32_360, %c0_i32_361] : memref<128x32xf32, #tpu.memory_space<any>> -> memref<1x32xf32, #tpu.memory_space<any>>
    %c42_i32_362 = arith.constant 42 : i32
    %c0_i32_363 = arith.constant 0 : i32
    %406 = tpu.memref_slice %arg3[%c42_i32_362, %c0_i32_363] : memref<64x32xf32, #tpu.memory_space<vmem>> -> memref<1x32xf32, #tpu.memory_space<vmem>>
    tpu.wait_dma2 semaphore(%arg4 : memref<!tpu.dma_semaphore, #tpu.memory_space<semaphore_mem>>) src(%405 : memref<1x32xf32, #tpu.memory_space<any>>) dst(%406 : memref<1x32xf32, #tpu.memory_space<vmem>>)
    %c0_i32_364 = arith.constant 0 : i32
    %c0_i32_365 = arith.constant 0 : i32
    %407 = tpu.memref_slice %arg2[%c0_i32_364, %c0_i32_365] : memref<128x32xf32, #tpu.memory_space<any>> -> memref<1x32xf32, #tpu.memory_space<any>>
    %c43_i32_366 = arith.constant 43 : i32
    %c0_i32_367 = arith.constant 0 : i32
    %408 = tpu.memref_slice %arg3[%c43_i32_366, %c0_i32_367] : memref<64x32xf32, #tpu.memory_space<vmem>> -> memref<1x32xf32, #tpu.memory_space<vmem>>
    tpu.wait_dma2 semaphore(%arg4 : memref<!tpu.dma_semaphore, #tpu.memory_space<semaphore_mem>>) src(%407 : memref<1x32xf32, #tpu.memory_space<any>>) dst(%408 : memref<1x32xf32, #tpu.memory_space<vmem>>)
    %c0_i32_368 = arith.constant 0 : i32
    %c0_i32_369 = arith.constant 0 : i32
    %409 = tpu.memref_slice %arg2[%c0_i32_368, %c0_i32_369] : memref<128x32xf32, #tpu.memory_space<any>> -> memref<1x32xf32, #tpu.memory_space<any>>
    %c44_i32_370 = arith.constant 44 : i32
    %c0_i32_371 = arith.constant 0 : i32
    %410 = tpu.memref_slice %arg3[%c44_i32_370, %c0_i32_371] : memref<64x32xf32, #tpu.memory_space<vmem>> -> memref<1x32xf32, #tpu.memory_space<vmem>>
    tpu.wait_dma2 semaphore(%arg4 : memref<!tpu.dma_semaphore, #tpu.memory_space<semaphore_mem>>) src(%409 : memref<1x32xf32, #tpu.memory_space<any>>) dst(%410 : memref<1x32xf32, #tpu.memory_space<vmem>>)
    %c0_i32_372 = arith.constant 0 : i32
    %c0_i32_373 = arith.constant 0 : i32
    %411 = tpu.memref_slice %arg2[%c0_i32_372, %c0_i32_373] : memref<128x32xf32, #tpu.memory_space<any>> -> memref<1x32xf32, #tpu.memory_space<any>>
    %c45_i32_374 = arith.constant 45 : i32
    %c0_i32_375 = arith.constant 0 : i32
    %412 = tpu.memref_slice %arg3[%c45_i32_374, %c0_i32_375] : memref<64x32xf32, #tpu.memory_space<vmem>> -> memref<1x32xf32, #tpu.memory_space<vmem>>
    tpu.wait_dma2 semaphore(%arg4 : memref<!tpu.dma_semaphore, #tpu.memory_space<semaphore_mem>>) src(%411 : memref<1x32xf32, #tpu.memory_space<any>>) dst(%412 : memref<1x32xf32, #tpu.memory_space<vmem>>)
    %c0_i32_376 = arith.constant 0 : i32
    %c0_i32_377 = arith.constant 0 : i32
    %413 = tpu.memref_slice %arg2[%c0_i32_376, %c0_i32_377] : memref<128x32xf32, #tpu.memory_space<any>> -> memref<1x32xf32, #tpu.memory_space<any>>
    %c46_i32_378 = arith.constant 46 : i32
    %c0_i32_379 = arith.constant 0 : i32
    %414 = tpu.memref_slice %arg3[%c46_i32_378, %c0_i32_379] : memref<64x32xf32, #tpu.memory_space<vmem>> -> memref<1x32xf32, #tpu.memory_space<vmem>>
    tpu.wait_dma2 semaphore(%arg4 : memref<!tpu.dma_semaphore, #tpu.memory_space<semaphore_mem>>) src(%413 : memref<1x32xf32, #tpu.memory_space<any>>) dst(%414 : memref<1x32xf32, #tpu.memory_space<vmem>>)
    %c0_i32_380 = arith.constant 0 : i32
    %c0_i32_381 = arith.constant 0 : i32
    %415 = tpu.memref_slice %arg2[%c0_i32_380, %c0_i32_381] : memref<128x32xf32, #tpu.memory_space<any>> -> memref<1x32xf32, #tpu.memory_space<any>>
    %c47_i32_382 = arith.constant 47 : i32
    %c0_i32_383 = arith.constant 0 : i32
    %416 = tpu.memref_slice %arg3[%c47_i32_382, %c0_i32_383] : memref<64x32xf32, #tpu.memory_space<vmem>> -> memref<1x32xf32, #tpu.memory_space<vmem>>
    tpu.wait_dma2 semaphore(%arg4 : memref<!tpu.dma_semaphore, #tpu.memory_space<semaphore_mem>>) src(%415 : memref<1x32xf32, #tpu.memory_space<any>>) dst(%416 : memref<1x32xf32, #tpu.memory_space<vmem>>)
    %c0_i32_384 = arith.constant 0 : i32
    %c0_i32_385 = arith.constant 0 : i32
    %417 = tpu.memref_slice %arg2[%c0_i32_384, %c0_i32_385] : memref<128x32xf32, #tpu.memory_space<any>> -> memref<1x32xf32, #tpu.memory_space<any>>
    %c48_i32_386 = arith.constant 48 : i32
    %c0_i32_387 = arith.constant 0 : i32
    %418 = tpu.memref_slice %arg3[%c48_i32_386, %c0_i32_387] : memref<64x32xf32, #tpu.memory_space<vmem>> -> memref<1x32xf32, #tpu.memory_space<vmem>>
    tpu.wait_dma2 semaphore(%arg4 : memref<!tpu.dma_semaphore, #tpu.memory_space<semaphore_mem>>) src(%417 : memref<1x32xf32, #tpu.memory_space<any>>) dst(%418 : memref<1x32xf32, #tpu.memory_space<vmem>>)
    %c0_i32_388 = arith.constant 0 : i32
    %c0_i32_389 = arith.constant 0 : i32
    %419 = tpu.memref_slice %arg2[%c0_i32_388, %c0_i32_389] : memref<128x32xf32, #tpu.memory_space<any>> -> memref<1x32xf32, #tpu.memory_space<any>>
    %c49_i32_390 = arith.constant 49 : i32
    %c0_i32_391 = arith.constant 0 : i32
    %420 = tpu.memref_slice %arg3[%c49_i32_390, %c0_i32_391] : memref<64x32xf32, #tpu.memory_space<vmem>> -> memref<1x32xf32, #tpu.memory_space<vmem>>
    tpu.wait_dma2 semaphore(%arg4 : memref<!tpu.dma_semaphore, #tpu.memory_space<semaphore_mem>>) src(%419 : memref<1x32xf32, #tpu.memory_space<any>>) dst(%420 : memref<1x32xf32, #tpu.memory_space<vmem>>)
    %c0_i32_392 = arith.constant 0 : i32
    %c0_i32_393 = arith.constant 0 : i32
    %421 = tpu.memref_slice %arg2[%c0_i32_392, %c0_i32_393] : memref<128x32xf32, #tpu.memory_space<any>> -> memref<1x32xf32, #tpu.memory_space<any>>
    %c50_i32_394 = arith.constant 50 : i32
    %c0_i32_395 = arith.constant 0 : i32
    %422 = tpu.memref_slice %arg3[%c50_i32_394, %c0_i32_395] : memref<64x32xf32, #tpu.memory_space<vmem>> -> memref<1x32xf32, #tpu.memory_space<vmem>>
    tpu.wait_dma2 semaphore(%arg4 : memref<!tpu.dma_semaphore, #tpu.memory_space<semaphore_mem>>) src(%421 : memref<1x32xf32, #tpu.memory_space<any>>) dst(%422 : memref<1x32xf32, #tpu.memory_space<vmem>>)
    %c0_i32_396 = arith.constant 0 : i32
    %c0_i32_397 = arith.constant 0 : i32
    %423 = tpu.memref_slice %arg2[%c0_i32_396, %c0_i32_397] : memref<128x32xf32, #tpu.memory_space<any>> -> memref<1x32xf32, #tpu.memory_space<any>>
    %c51_i32_398 = arith.constant 51 : i32
    %c0_i32_399 = arith.constant 0 : i32
    %424 = tpu.memref_slice %arg3[%c51_i32_398, %c0_i32_399] : memref<64x32xf32, #tpu.memory_space<vmem>> -> memref<1x32xf32, #tpu.memory_space<vmem>>
    tpu.wait_dma2 semaphore(%arg4 : memref<!tpu.dma_semaphore, #tpu.memory_space<semaphore_mem>>) src(%423 : memref<1x32xf32, #tpu.memory_space<any>>) dst(%424 : memref<1x32xf32, #tpu.memory_space<vmem>>)
    %c0_i32_400 = arith.constant 0 : i32
    %c0_i32_401 = arith.constant 0 : i32
    %425 = tpu.memref_slice %arg2[%c0_i32_400, %c0_i32_401] : memref<128x32xf32, #tpu.memory_space<any>> -> memref<1x32xf32, #tpu.memory_space<any>>
    %c52_i32_402 = arith.constant 52 : i32
    %c0_i32_403 = arith.constant 0 : i32
    %426 = tpu.memref_slice %arg3[%c52_i32_402, %c0_i32_403] : memref<64x32xf32, #tpu.memory_space<vmem>> -> memref<1x32xf32, #tpu.memory_space<vmem>>
    tpu.wait_dma2 semaphore(%arg4 : memref<!tpu.dma_semaphore, #tpu.memory_space<semaphore_mem>>) src(%425 : memref<1x32xf32, #tpu.memory_space<any>>) dst(%426 : memref<1x32xf32, #tpu.memory_space<vmem>>)
    %c0_i32_404 = arith.constant 0 : i32
    %c0_i32_405 = arith.constant 0 : i32
    %427 = tpu.memref_slice %arg2[%c0_i32_404, %c0_i32_405] : memref<128x32xf32, #tpu.memory_space<any>> -> memref<1x32xf32, #tpu.memory_space<any>>
    %c53_i32_406 = arith.constant 53 : i32
    %c0_i32_407 = arith.constant 0 : i32
    %428 = tpu.memref_slice %arg3[%c53_i32_406, %c0_i32_407] : memref<64x32xf32, #tpu.memory_space<vmem>> -> memref<1x32xf32, #tpu.memory_space<vmem>>
    tpu.wait_dma2 semaphore(%arg4 : memref<!tpu.dma_semaphore, #tpu.memory_space<semaphore_mem>>) src(%427 : memref<1x32xf32, #tpu.memory_space<any>>) dst(%428 : memref<1x32xf32, #tpu.memory_space<vmem>>)
    %c0_i32_408 = arith.constant 0 : i32
    %c0_i32_409 = arith.constant 0 : i32
    %429 = tpu.memref_slice %arg2[%c0_i32_408, %c0_i32_409] : memref<128x32xf32, #tpu.memory_space<any>> -> memref<1x32xf32, #tpu.memory_space<any>>
    %c54_i32_410 = arith.constant 54 : i32
    %c0_i32_411 = arith.constant 0 : i32
    %430 = tpu.memref_slice %arg3[%c54_i32_410, %c0_i32_411] : memref<64x32xf32, #tpu.memory_space<vmem>> -> memref<1x32xf32, #tpu.memory_space<vmem>>
    tpu.wait_dma2 semaphore(%arg4 : memref<!tpu.dma_semaphore, #tpu.memory_space<semaphore_mem>>) src(%429 : memref<1x32xf32, #tpu.memory_space<any>>) dst(%430 : memref<1x32xf32, #tpu.memory_space<vmem>>)
    %c0_i32_412 = arith.constant 0 : i32
    %c0_i32_413 = arith.constant 0 : i32
    %431 = tpu.memref_slice %arg2[%c0_i32_412, %c0_i32_413] : memref<128x32xf32, #tpu.memory_space<any>> -> memref<1x32xf32, #tpu.memory_space<any>>
    %c55_i32_414 = arith.constant 55 : i32
    %c0_i32_415 = arith.constant 0 : i32
    %432 = tpu.memref_slice %arg3[%c55_i32_414, %c0_i32_415] : memref<64x32xf32, #tpu.memory_space<vmem>> -> memref<1x32xf32, #tpu.memory_space<vmem>>
    tpu.wait_dma2 semaphore(%arg4 : memref<!tpu.dma_semaphore, #tpu.memory_space<semaphore_mem>>) src(%431 : memref<1x32xf32, #tpu.memory_space<any>>) dst(%432 : memref<1x32xf32, #tpu.memory_space<vmem>>)
    %c0_i32_416 = arith.constant 0 : i32
    %c0_i32_417 = arith.constant 0 : i32
    %433 = tpu.memref_slice %arg2[%c0_i32_416, %c0_i32_417] : memref<128x32xf32, #tpu.memory_space<any>> -> memref<1x32xf32, #tpu.memory_space<any>>
    %c56_i32_418 = arith.constant 56 : i32
    %c0_i32_419 = arith.constant 0 : i32
    %434 = tpu.memref_slice %arg3[%c56_i32_418, %c0_i32_419] : memref<64x32xf32, #tpu.memory_space<vmem>> -> memref<1x32xf32, #tpu.memory_space<vmem>>
    tpu.wait_dma2 semaphore(%arg4 : memref<!tpu.dma_semaphore, #tpu.memory_space<semaphore_mem>>) src(%433 : memref<1x32xf32, #tpu.memory_space<any>>) dst(%434 : memref<1x32xf32, #tpu.memory_space<vmem>>)
    %c0_i32_420 = arith.constant 0 : i32
    %c0_i32_421 = arith.constant 0 : i32
    %435 = tpu.memref_slice %arg2[%c0_i32_420, %c0_i32_421] : memref<128x32xf32, #tpu.memory_space<any>> -> memref<1x32xf32, #tpu.memory_space<any>>
    %c57_i32_422 = arith.constant 57 : i32
    %c0_i32_423 = arith.constant 0 : i32
    %436 = tpu.memref_slice %arg3[%c57_i32_422, %c0_i32_423] : memref<64x32xf32, #tpu.memory_space<vmem>> -> memref<1x32xf32, #tpu.memory_space<vmem>>
    tpu.wait_dma2 semaphore(%arg4 : memref<!tpu.dma_semaphore, #tpu.memory_space<semaphore_mem>>) src(%435 : memref<1x32xf32, #tpu.memory_space<any>>) dst(%436 : memref<1x32xf32, #tpu.memory_space<vmem>>)
    %c0_i32_424 = arith.constant 0 : i32
    %c0_i32_425 = arith.constant 0 : i32
    %437 = tpu.memref_slice %arg2[%c0_i32_424, %c0_i32_425] : memref<128x32xf32, #tpu.memory_space<any>> -> memref<1x32xf32, #tpu.memory_space<any>>
    %c58_i32_426 = arith.constant 58 : i32
    %c0_i32_427 = arith.constant 0 : i32
    %438 = tpu.memref_slice %arg3[%c58_i32_426, %c0_i32_427] : memref<64x32xf32, #tpu.memory_space<vmem>> -> memref<1x32xf32, #tpu.memory_space<vmem>>
    tpu.wait_dma2 semaphore(%arg4 : memref<!tpu.dma_semaphore, #tpu.memory_space<semaphore_mem>>) src(%437 : memref<1x32xf32, #tpu.memory_space<any>>) dst(%438 : memref<1x32xf32, #tpu.memory_space<vmem>>)
    %c0_i32_428 = arith.constant 0 : i32
    %c0_i32_429 = arith.constant 0 : i32
    %439 = tpu.memref_slice %arg2[%c0_i32_428, %c0_i32_429] : memref<128x32xf32, #tpu.memory_space<any>> -> memref<1x32xf32, #tpu.memory_space<any>>
    %c59_i32_430 = arith.constant 59 : i32
    %c0_i32_431 = arith.constant 0 : i32
    %440 = tpu.memref_slice %arg3[%c59_i32_430, %c0_i32_431] : memref<64x32xf32, #tpu.memory_space<vmem>> -> memref<1x32xf32, #tpu.memory_space<vmem>>
    tpu.wait_dma2 semaphore(%arg4 : memref<!tpu.dma_semaphore, #tpu.memory_space<semaphore_mem>>) src(%439 : memref<1x32xf32, #tpu.memory_space<any>>) dst(%440 : memref<1x32xf32, #tpu.memory_space<vmem>>)
    %c0_i32_432 = arith.constant 0 : i32
    %c0_i32_433 = arith.constant 0 : i32
    %441 = tpu.memref_slice %arg2[%c0_i32_432, %c0_i32_433] : memref<128x32xf32, #tpu.memory_space<any>> -> memref<1x32xf32, #tpu.memory_space<any>>
    %c60_i32_434 = arith.constant 60 : i32
    %c0_i32_435 = arith.constant 0 : i32
    %442 = tpu.memref_slice %arg3[%c60_i32_434, %c0_i32_435] : memref<64x32xf32, #tpu.memory_space<vmem>> -> memref<1x32xf32, #tpu.memory_space<vmem>>
    tpu.wait_dma2 semaphore(%arg4 : memref<!tpu.dma_semaphore, #tpu.memory_space<semaphore_mem>>) src(%441 : memref<1x32xf32, #tpu.memory_space<any>>) dst(%442 : memref<1x32xf32, #tpu.memory_space<vmem>>)
    %c0_i32_436 = arith.constant 0 : i32
    %c0_i32_437 = arith.constant 0 : i32
    %443 = tpu.memref_slice %arg2[%c0_i32_436, %c0_i32_437] : memref<128x32xf32, #tpu.memory_space<any>> -> memref<1x32xf32, #tpu.memory_space<any>>
    %c61_i32_438 = arith.constant 61 : i32
    %c0_i32_439 = arith.constant 0 : i32
    %444 = tpu.memref_slice %arg3[%c61_i32_438, %c0_i32_439] : memref<64x32xf32, #tpu.memory_space<vmem>> -> memref<1x32xf32, #tpu.memory_space<vmem>>
    tpu.wait_dma2 semaphore(%arg4 : memref<!tpu.dma_semaphore, #tpu.memory_space<semaphore_mem>>) src(%443 : memref<1x32xf32, #tpu.memory_space<any>>) dst(%444 : memref<1x32xf32, #tpu.memory_space<vmem>>)
    %c0_i32_440 = arith.constant 0 : i32
    %c0_i32_441 = arith.constant 0 : i32
    %445 = tpu.memref_slice %arg2[%c0_i32_440, %c0_i32_441] : memref<128x32xf32, #tpu.memory_space<any>> -> memref<1x32xf32, #tpu.memory_space<any>>
    %c62_i32_442 = arith.constant 62 : i32
    %c0_i32_443 = arith.constant 0 : i32
    %446 = tpu.memref_slice %arg3[%c62_i32_442, %c0_i32_443] : memref<64x32xf32, #tpu.memory_space<vmem>> -> memref<1x32xf32, #tpu.memory_space<vmem>>
    tpu.wait_dma2 semaphore(%arg4 : memref<!tpu.dma_semaphore, #tpu.memory_space<semaphore_mem>>) src(%445 : memref<1x32xf32, #tpu.memory_space<any>>) dst(%446 : memref<1x32xf32, #tpu.memory_space<vmem>>)
    %c0_i32_444 = arith.constant 0 : i32
    %c0_i32_445 = arith.constant 0 : i32
    %447 = tpu.memref_slice %arg2[%c0_i32_444, %c0_i32_445] : memref<128x32xf32, #tpu.memory_space<any>> -> memref<1x32xf32, #tpu.memory_space<any>>
    %c63_i32_446 = arith.constant 63 : i32
    %c0_i32_447 = arith.constant 0 : i32
    %448 = tpu.memref_slice %arg3[%c63_i32_446, %c0_i32_447] : memref<64x32xf32, #tpu.memory_space<vmem>> -> memref<1x32xf32, #tpu.memory_space<vmem>>
    tpu.wait_dma2 semaphore(%arg4 : memref<!tpu.dma_semaphore, #tpu.memory_space<semaphore_mem>>) src(%447 : memref<1x32xf32, #tpu.memory_space<any>>) dst(%448 : memref<1x32xf32, #tpu.memory_space<vmem>>)
    return
  }
  func.func @transform_1(%arg0: i32, %arg1: memref<64xi32, #tpu.memory_space<smem>>) -> (i32, i32) {
    %c0_i32 = arith.constant 0 : i32
    %c0_i32_0 = arith.constant 0 : i32
    return %arg0, %c0_i32 : i32, i32
  }
}

</mosaic_0001>

<llo_original>
// kernel: tpu_custom_call.1
$region0: #{tpu_custom_call.1}
  #allocation0 [shape = 'u32[]', space=smem, size = 0x4, offset = 0x4, fixed_abs, tag = 'smem constant byte address 0x4 - core index']
  #allocation1 [shape = 'u32[144,128]{1,0:T(1,128)}', space=vmem, size = 0x12000, scoped, tag = 'internal scratch']
  #allocation2 [shape = 's32[1]{0}', space=sflag, size = 0x4, scoped, tag = 'scratch operand']
  #allocation3 [shape = 's32[1]{0}', space=sflag, size = 0x4, scoped, tag = 'scoped memory for tpu_custom_call.1']
  #allocation4 [shape = 'u8[512]{0}', space=smem, size = 0x200, scoped, tag = 'prefetched SMEM operand 0']
  #allocation5 [shape = 's32[]', space=sflag, size = 0x4, offset = 0, fixed_abs, tag = 'sflag constant byte address 0x0 - dummy sync flag']
  #allocation6 [shape = 's32[]', space=sflag, size = 0x4, offset = 0, fixed_abs, tag = 'sflag constant byte address 0x0 - dummy sync flag']
  #allocation7 [shape = 's32[]', space=sflag, size = 0x4, offset = 0, fixed_abs, tag = 'sflag constant byte address 0x0 - dummy sync flag']
  #allocation8 [shape = 's32[]', space=sflag, size = 0x4, offset = 0, fixed_abs, tag = 'sflag constant byte address 0x0 - dummy sync flag']
  #allocation9 [shape = 's32[]', space=sflag, size = 0x4, offset = 0, fixed_abs, tag = 'sflag constant byte address 0x0 - dummy sync flag']
  #allocation10 [shape = 's32[]', space=sflag, size = 0x4, offset = 0, fixed_abs, tag = 'sflag constant byte address 0x0 - dummy sync flag']
  #allocation11 [shape = 's32[]', space=sflag, size = 0x4, offset = 0, fixed_abs, tag = 'sflag constant byte address 0x0 - dummy sync flag']
  #allocation12 [shape = 's32[]', space=sflag, size = 0x4, offset = 0, fixed_abs, tag = 'sflag constant byte address 0x0 - dummy sync flag']
  #allocation13 [shape = 's32[]', space=sflag, size = 0x4, offset = 0, fixed_abs, tag = 'sflag constant byte address 0x0 - dummy sync flag']
  #allocation14 [shape = 's32[]', space=sflag, size = 0x4, offset = 0, fixed_abs, tag = 'sflag constant byte address 0x0 - dummy sync flag']
  #allocation15 [shape = 's32[]', space=sflag, size = 0x4, offset = 0, fixed_abs, tag = 'sflag constant byte address 0x0 - dummy sync flag']
  #allocation16 [shape = 's32[]', space=sflag, size = 0x4, offset = 0, fixed_abs, tag = 'sflag constant byte address 0x0 - dummy sync flag']
  #allocation17 [shape = 's32[]', space=sflag, size = 0x4, offset = 0, fixed_abs, tag = 'sflag constant byte address 0x0 - dummy sync flag']
  #allocation18 [shape = 's32[]', space=sflag, size = 0x4, offset = 0, fixed_abs, tag = 'sflag constant byte address 0x0 - dummy sync flag']
  #allocation19 [shape = 's32[]', space=sflag, size = 0x4, offset = 0, fixed_abs, tag = 'sflag constant byte address 0x0 - dummy sync flag']
  #allocation20 [shape = 's32[]', space=sflag, size = 0x4, offset = 0, fixed_abs, tag = 'sflag constant byte address 0x0 - dummy sync flag']
  #allocation21 [shape = 's32[]', space=sflag, size = 0x4, offset = 0, fixed_abs, tag = 'sflag constant byte address 0x0 - dummy sync flag']
  #allocation22 [shape = 's32[]', space=sflag, size = 0x4, offset = 0, fixed_abs, tag = 'sflag constant byte address 0x0 - dummy sync flag']
  #allocation23 [shape = 's32[]', space=sflag, size = 0x4, offset = 0, fixed_abs, tag = 'sflag constant byte address 0x0 - dummy sync flag']
  #allocation24 [shape = 's32[]', space=sflag, size = 0x4, offset = 0, fixed_abs, tag = 'sflag constant byte address 0x0 - dummy sync flag']
  #allocation25 [shape = 's32[]', space=sflag, size = 0x4, offset = 0, fixed_abs, tag = 'sflag constant byte address 0x0 - dummy sync flag']
  #allocation26 [shape = 's32[]', space=sflag, size = 0x4, offset = 0, fixed_abs, tag = 'sflag constant byte address 0x0 - dummy sync flag']
  #allocation27 [shape = 's32[]', space=sflag, size = 0x4, offset = 0, fixed_abs, tag = 'sflag constant byte address 0x0 - dummy sync flag']
  #allocation28 [shape = 's32[]', space=sflag, size = 0x4, offset = 0, fixed_abs, tag = 'sflag constant byte address 0x0 - dummy sync flag']
  #allocation29 [shape = 's32[]', space=sflag, size = 0x4, offset = 0, fixed_abs, tag = 'sflag constant byte address 0x0 - dummy sync flag']
  #allocation30 [shape = 's32[]', space=sflag, size = 0x4, offset = 0, fixed_abs, tag = 'sflag constant byte address 0x0 - dummy sync flag']
  #allocation31 [shape = 's32[]', space=sflag, size = 0x4, offset = 0, fixed_abs, tag = 'sflag constant byte address 0x0 - dummy sync flag']
  #allocation32 [shape = 's32[]', space=sflag, size = 0x4, offset = 0, fixed_abs, tag = 'sflag constant byte address 0x0 - dummy sync flag']
  #allocation33 [shape = 's32[]', space=sflag, size = 0x4, offset = 0, fixed_abs, tag = 'sflag constant byte address 0x0 - dummy sync flag']
  #allocation34 [shape = 's32[]', space=sflag, size = 0x4, offset = 0, fixed_abs, tag = 'sflag constant byte address 0x0 - dummy sync flag']
  #allocation35 [shape = 's32[]', space=sflag, size = 0x4, offset = 0, fixed_abs, tag = 'sflag constant byte address 0x0 - dummy sync flag']
  #allocation36 [shape = 's32[]', space=sflag, size = 0x4, offset = 0, fixed_abs, tag = 'sflag constant byte address 0x0 - dummy sync flag']
  #allocation37 [shape = 's32[]', space=sflag, size = 0x4, offset = 0, fixed_abs, tag = 'sflag constant byte address 0x0 - dummy sync flag']
  #allocation38 [shape = 's32[]', space=sflag, size = 0x4, offset = 0, fixed_abs, tag = 'sflag constant byte address 0x0 - dummy sync flag']
  #allocation39 [shape = 's32[]', space=sflag, size = 0x4, offset = 0, fixed_abs, tag = 'sflag constant byte address 0x0 - dummy sync flag']
  #allocation40 [shape = 's32[]', space=sflag, size = 0x4, offset = 0, fixed_abs, tag = 'sflag constant byte address 0x0 - dummy sync flag']
  #allocation41 [shape = 's32[]', space=sflag, size = 0x4, offset = 0, fixed_abs, tag = 'sflag constant byte address 0x0 - dummy sync flag']
  #allocation42 [shape = 's32[]', space=sflag, size = 0x4, offset = 0, fixed_abs, tag = 'sflag constant byte address 0x0 - dummy sync flag']
  #allocation43 [shape = 's32[]', space=sflag, size = 0x4, offset = 0, fixed_abs, tag = 'sflag constant byte address 0x0 - dummy sync flag']
  #allocation44 [shape = 's32[]', space=sflag, size = 0x4, offset = 0, fixed_abs, tag = 'sflag constant byte address 0x0 - dummy sync flag']
  #allocation45 [shape = 's32[]', space=sflag, size = 0x4, offset = 0, fixed_abs, tag = 'sflag constant byte address 0x0 - dummy sync flag']
  #allocation46 [shape = 's32[]', space=sflag, size = 0x4, offset = 0, fixed_abs, tag = 'sflag constant byte address 0x0 - dummy sync flag']
  #allocation47 [shape = 's32[]', space=sflag, size = 0x4, offset = 0, fixed_abs, tag = 'sflag constant byte address 0x0 - dummy sync flag']
  #allocation48 [shape = 's32[]', space=sflag, size = 0x4, offset = 0, fixed_abs, tag = 'sflag constant byte address 0x0 - dummy sync flag']
  #allocation49 [shape = 's32[]', space=sflag, size = 0x4, offset = 0, fixed_abs, tag = 'sflag constant byte address 0x0 - dummy sync flag']
  #allocation50 [shape = 's32[]', space=sflag, size = 0x4, offset = 0, fixed_abs, tag = 'sflag constant byte address 0x0 - dummy sync flag']
  #allocation51 [shape = 's32[]', space=sflag, size = 0x4, offset = 0, fixed_abs, tag = 'sflag constant byte address 0x0 - dummy sync flag']
  #allocation52 [shape = 's32[]', space=sflag, size = 0x4, offset = 0, fixed_abs, tag = 'sflag constant byte address 0x0 - dummy sync flag']
  #allocation53 [shape = 's32[]', space=sflag, size = 0x4, offset = 0, fixed_abs, tag = 'sflag constant byte address 0x0 - dummy sync flag']
  #allocation54 [shape = 's32[]', space=sflag, size = 0x4, offset = 0, fixed_abs, tag = 'sflag constant byte address 0x0 - dummy sync flag']
  #allocation55 [shape = 's32[]', space=sflag, size = 0x4, offset = 0, fixed_abs, tag = 'sflag constant byte address 0x0 - dummy sync flag']
  #allocation56 [shape = 's32[]', space=sflag, size = 0x4, offset = 0, fixed_abs, tag = 'sflag constant byte address 0x0 - dummy sync flag']
  #allocation57 [shape = 's32[]', space=sflag, size = 0x4, offset = 0, fixed_abs, tag = 'sflag constant byte address 0x0 - dummy sync flag']
  #allocation58 [shape = 's32[]', space=sflag, size = 0x4, offset = 0, fixed_abs, tag = 'sflag constant byte address 0x0 - dummy sync flag']
  #allocation59 [shape = 's32[]', space=sflag, size = 0x4, offset = 0, fixed_abs, tag = 'sflag constant byte address 0x0 - dummy sync flag']
  #allocation60 [shape = 's32[]', space=sflag, size = 0x4, offset = 0, fixed_abs, tag = 'sflag constant byte address 0x0 - dummy sync flag']
  #allocation61 [shape = 's32[]', space=sflag, size = 0x4, offset = 0, fixed_abs, tag = 'sflag constant byte address 0x0 - dummy sync flag']
  #allocation62 [shape = 's32[]', space=sflag, size = 0x4, offset = 0, fixed_abs, tag = 'sflag constant byte address 0x0 - dummy sync flag']
  #allocation63 [shape = 's32[]', space=sflag, size = 0x4, offset = 0, fixed_abs, tag = 'sflag constant byte address 0x0 - dummy sync flag']
  #allocation64 [shape = 's32[]', space=sflag, size = 0x4, offset = 0, fixed_abs, tag = 'sflag constant byte address 0x0 - dummy sync flag']
  #allocation65 [shape = 's32[]', space=sflag, size = 0x4, offset = 0, fixed_abs, tag = 'sflag constant byte address 0x0 - dummy sync flag']
  #allocation66 [shape = 's32[]', space=sflag, size = 0x4, offset = 0, fixed_abs, tag = 'sflag constant byte address 0x0 - dummy sync flag']
  #allocation67 [shape = 's32[]', space=sflag, size = 0x4, offset = 0, fixed_abs, tag = 'sflag constant byte address 0x0 - dummy sync flag']
  #allocation68 [shape = 's32[]', space=sflag, size = 0x4, offset = 0, fixed_abs, tag = 'sflag constant byte address 0x0 - dummy sync flag']
  %s0 = inlined_call_operand.vmem [shape: s32[64], index: 0, kind: input, shape index: {}]
  %s1 = inlined_call_operand.vmem [shape: f32[128,32], index: 1, kind: input, shape index: {}]
  %s2 = inlined_call_operand.vmem [shape: f32[64,32], index: 2, kind: output, shape index: {}]
  %s3 = sld [smem:[#allocation0]]
  $region1930: #{tpu_custom_call.1} parent=0
    _
  %s5 = ssub.s32 1, %s3
  %s6 = scalar_select 0, %s5, %s3
  %s7 = sshll.u32 %s0, 4
  %s8 = int_to_ptr.vmem [resolvable:$true] %s7
  %10 = dma.vmem_to_smem %s8, 16, [#allocation4], [#allocation3]
  %11 = dma.done [#allocation3], 16
  %12 = sfence
  %s13 = smul.u32 0, 64
  %s14 = sld [smem:[#allocation4 + %s13]]
  %s15 = scalar_lea.vmem %s1, %s14
  %p17 = scmp.lt.u32.totalorder 1, 8
  %p18 = pneg %p17
  // Predicated region
  $region2: #{tpu_custom_call.1} parent=0 // pred_check
    _
  $region3: #{tpu_custom_call.1} parent=0 // pred_check_branch
    %20 = sbr.rel (%p17) target = $region5
  $region4: #{tpu_custom_call.1} parent=0 // pred_region
    %s35 = sand.u32 1, 7
    %p36 = scmp.eq.s32.totalorder %s35, 0
    %p37 = pneg %p36
    // Predicated region
    $region17: #{tpu_custom_call.1} parent=4 // pred_check
      _
    $region18: #{tpu_custom_call.1} parent=4 // pred_check_branch
      %39 = sbr.rel (%p36) target = $region20
    $region19: #{tpu_custom_call.1} parent=4 // pred_region
      %s40 = sand.u32 1, 7
      %s41 = ssub.s32 1, %s40
      %s42 = scalar_lea.vmem %s15, %s41
      %s43 = ssub.s32 1, %s40
      %s44 = scalar_lea.vmem %s2, %s43
      %s45 = sshllo.u32 0, %s40
      loop: start=0, step=1, limit=1
      $region21: #{tpu_custom_call.1} parent=19 // loop_pre_header
        _
      $region22: #{tpu_custom_call.1} parent=19 // loop_header
        %s47 = sphi 0, %s51
        %p48 = scmp.ge.s32.totalorder %s47, 1
        %s52 = sphi %s42, %s42
        %s53 = sphi %s44, %s44
      $region23: #{tpu_custom_call.1} parent=19 // loop_header_branch
        %50 = sbr.rel (%p48) target = $region27
      $region24: #{tpu_custom_call.1} parent=19 // loop_body
        %v54 = vld [vmem:[%s52] sm:%s45]
        %55 = vst [vmem:[%s53] sm:%s45] %v54
      $region25: #{tpu_custom_call.1} parent=19 // loop_footer
        %s51 = sadd.s32 1, %s47
      $region26: #{tpu_custom_call.1} parent=19 // loop_footer_branch
        %46 = sbr.rel target = $region22
      $region27: #{tpu_custom_call.1} parent=19 // loop_exit
        _
    $region20: #{tpu_custom_call.1} parent=4 // pred_fallthru
      _
  $region5: #{tpu_custom_call.1} parent=0 // pred_fallthru
    _
  // Predicated region
  $region6: #{tpu_custom_call.1} parent=0 // pred_check
    %p21 = pneg %p17
  $region7: #{tpu_custom_call.1} parent=0 // pred_check_branch
    %23 = sbr.rel (%p21) target = $region9
  $region8: #{tpu_custom_call.1} parent=0 // pred_region
    %s24 = sshllo.u32 0, 1
    loop: start=0, step=1, limit=1
    $region10: #{tpu_custom_call.1} parent=8 // loop_pre_header
      _
    $region11: #{tpu_custom_call.1} parent=8 // loop_header
      %s26 = sphi 0, %s30
      %p27 = scmp.ge.s32.totalorder %s26, 1
      %s31 = sphi %s15, %s15
      %s32 = sphi %s2, %s2
    $region12: #{tpu_custom_call.1} parent=8 // loop_header_branch
      %29 = sbr.rel (%p27) target = $region16
    $region13: #{tpu_custom_call.1} parent=8 // loop_body
      %v33 = vld [vmem:[%s31] sm:%s24]
      %34 = vst [vmem:[%s32] sm:%s24] %v33
    $region14: #{tpu_custom_call.1} parent=8 // loop_footer
      %s30 = sadd.s32 1, %s26
    $region15: #{tpu_custom_call.1} parent=8 // loop_footer_branch
      %25 = sbr.rel target = $region11
    $region16: #{tpu_custom_call.1} parent=8 // loop_exit
      _
  $region9: #{tpu_custom_call.1} parent=0 // pred_fallthru
    _
  // Predicated region
  $region28: #{tpu_custom_call.1} parent=0 // pred_check
    _
  $region29: #{tpu_custom_call.1} parent=0 // pred_check_branch
    %58 = sbr.rel (0) target = $region31
  $region30: #{tpu_custom_call.1} parent=0 // pred_region
    %59 = vsyncadd [#allocation2], 16
  $region31: #{tpu_custom_call.1} parent=0 // pred_fallthru
    _
  %s60 = sadd.s32 %s13, 1
  %s61 = sld [smem:[#allocation4 + %s60]]
  %s62 = scalar_lea.vmem %s1, %s61
  %s63 = scalar_lea.vmem %s2, 1
  %p65 = scmp.lt.u32.totalorder 1, 8
  %p66 = pneg %p65
  // Predicated region
  $region32: #{tpu_custom_call.1} parent=0 // pred_check
    _
  $region33: #{tpu_custom_call.1} parent=0 // pred_check_branch
    %68 = sbr.rel (%p65) target = $region35
  $region34: #{tpu_custom_call.1} parent=0 // pred_region
    %s83 = sand.u32 1, 7
    %p84 = scmp.eq.s32.totalorder %s83, 0
    %p85 = pneg %p84
    // Predicated region
    $region47: #{tpu_custom_call.1} parent=34 // pred_check
      _
    $region48: #{tpu_custom_call.1} parent=34 // pred_check_branch
      %87 = sbr.rel (%p84) target = $region50
    $region49: #{tpu_custom_call.1} parent=34 // pred_region
      %s88 = sand.u32 1, 7
      %s89 = ssub.s32 1, %s88
      %s90 = scalar_lea.vmem %s62, %s89
      %s91 = ssub.s32 1, %s88
      %s92 = scalar_lea.vmem %s63, %s91
      %s93 = sshllo.u32 0, %s88
      loop: start=0, step=1, limit=1
      $region51: #{tpu_custom_call.1} parent=49 // loop_pre_header
        _
      $region52: #{tpu_custom_call.1} parent=49 // loop_header
        %s95 = sphi 0, %s99
        %p96 = scmp.ge.s32.totalorder %s95, 1
        %s100 = sphi %s90, %s90
        %s101 = sphi %s92, %s92
      $region53: #{tpu_custom_call.1} parent=49 // loop_header_branch
        %98 = sbr.rel (%p96) target = $region57
      $region54: #{tpu_custom_call.1} parent=49 // loop_body
        %v102 = vld [vmem:[%s100] sm:%s93]
        %103 = vst [vmem:[%s101] sm:%s93] %v102
      $region55: #{tpu_custom_call.1} parent=49 // loop_footer
        %s99 = sadd.s32 1, %s95
      $region56: #{tpu_custom_call.1} parent=49 // loop_footer_branch
        %94 = sbr.rel target = $region52
      $region57: #{tpu_custom_call.1} parent=49 // loop_exit
        _
    $region50: #{tpu_custom_call.1} parent=34 // pred_fallthru
      _
  $region35: #{tpu_custom_call.1} parent=0 // pred_fallthru
    _
  // Predicated region
  $region36: #{tpu_custom_call.1} parent=0 // pred_check
    %p69 = pneg %p65
  $region37: #{tpu_custom_call.1} parent=0 // pred_check_branch
    %71 = sbr.rel (%p69) target = $region39
  $region38: #{tpu_custom_call.1} parent=0 // pred_region
    %s72 = sshllo.u32 0, 1
    loop: start=0, step=1, limit=1
    $region40: #{tpu_custom_call.1} parent=38 // loop_pre_header
      _
    $region41: #{tpu_custom_call.1} parent=38 // loop_header
      %s74 = sphi 0, %s78
      %p75 = scmp.ge.s32.totalorder %s74, 1
      %s79 = sphi %s62, %s62
      %s80 = sphi %s63, %s63
    $region42: #{tpu_custom_call.1} parent=38 // loop_header_branch
      %77 = sbr.rel (%p75) target = $region46
    $region43: #{tpu_custom_call.1} parent=38 // loop_body
      %v81 = vld [vmem:[%s79] sm:%s72]
      %82 = vst [vmem:[%s80] sm:%s72] %v81
    $region44: #{tpu_custom_call.1} parent=38 // loop_footer
      %s78 = sadd.s32 1, %s74
    $region45: #{tpu_custom_call.1} parent=38 // loop_footer_branch
      %73 = sbr.rel target = $region41
    $region46: #{tpu_custom_call.1} parent=38 // loop_exit
      _
  $region39: #{tpu_custom_call.1} parent=0 // pred_fallthru
    _
  // Predicated region
  $region58: #{tpu_custom_call.1} parent=0 // pred_check
    _
  $region59: #{tpu_custom_call.1} parent=0 // pred_check_branch
    %106 = sbr.rel (0) target = $region61
  $region60: #{tpu_custom_call.1} parent=0 // pred_region
    %107 = vsyncadd [#allocation2], 16
  $region61: #{tpu_custom_call.1} parent=0 // pred_fallthru
    _
  %s108 = sadd.s32 %s13, 2
  %s109 = sld [smem:[#allocation4 + %s108]]
  %s110 = scalar_lea.vmem %s1, %s109
  %s111 = scalar_lea.vmem %s2, 2
  %p113 = scmp.lt.u32.totalorder 1, 8
  %p114 = pneg %p113
  // Predicated region
  $region62: #{tpu_custom_call.1} parent=0 // pred_check
    _
  $region63: #{tpu_custom_call.1} parent=0 // pred_check_branch
    %116 = sbr.rel (%p113) target = $region65
  $region64: #{tpu_custom_call.1} parent=0 // pred_region
    %s131 = sand.u32 1, 7
    %p132 = scmp.eq.s32.totalorder %s131, 0
    %p133 = pneg %p132
    // Predicated region
    $region77: #{tpu_custom_call.1} parent=64 // pred_check
      _
    $region78: #{tpu_custom_call.1} parent=64 // pred_check_branch
      %135 = sbr.rel (%p132) target = $region80
    $region79: #{tpu_custom_call.1} parent=64 // pred_region
      %s136 = sand.u32 1, 7
      %s137 = ssub.s32 1, %s136
      %s138 = scalar_lea.vmem %s110, %s137
      %s139 = ssub.s32 1, %s136
      %s140 = scalar_lea.vmem %s111, %s139
      %s141 = sshllo.u32 0, %s136
      loop: start=0, step=1, limit=1
      $region81: #{tpu_custom_call.1} parent=79 // loop_pre_header
        _
      $region82: #{tpu_custom_call.1} parent=79 // loop_header
        %s143 = sphi 0, %s147
        %p144 = scmp.ge.s32.totalorder %s143, 1
        %s148 = sphi %s138, %s138
        %s149 = sphi %s140, %s140
      $region83: #{tpu_custom_call.1} parent=79 // loop_header_branch
        %146 = sbr.rel (%p144) target = $region87
      $region84: #{tpu_custom_call.1} parent=79 // loop_body
        %v150 = vld [vmem:[%s148] sm:%s141]
        %151 = vst [vmem:[%s149] sm:%s141] %v150
      $region85: #{tpu_custom_call.1} parent=79 // loop_footer
        %s147 = sadd.s32 1, %s143
      $region86: #{tpu_custom_call.1} parent=79 // loop_footer_branch
        %142 = sbr.rel target = $region82
      $region87: #{tpu_custom_call.1} parent=79 // loop_exit
        _
    $region80: #{tpu_custom_call.1} parent=64 // pred_fallthru
      _
  $region65: #{tpu_custom_call.1} parent=0 // pred_fallthru
    _
  // Predicated region
  $region66: #{tpu_custom_call.1} parent=0 // pred_check
    %p117 = pneg %p113
  $region67: #{tpu_custom_call.1} parent=0 // pred_check_branch
    %119 = sbr.rel (%p117) target = $region69
  $region68: #{tpu_custom_call.1} parent=0 // pred_region
    %s120 = sshllo.u32 0, 1
    loop: start=0, step=1, limit=1
    $region70: #{tpu_custom_call.1} parent=68 // loop_pre_header
      _
    $region71: #{tpu_custom_call.1} parent=68 // loop_header
      %s122 = sphi 0, %s126
      %p123 = scmp.ge.s32.totalorder %s122, 1
      %s127 = sphi %s110, %s110
      %s128 = sphi %s111, %s111
    $region72: #{tpu_custom_call.1} parent=68 // loop_header_branch
      %125 = sbr.rel (%p123) target = $region76
    $region73: #{tpu_custom_call.1} parent=68 // loop_body
      %v129 = vld [vmem:[%s127] sm:%s120]
      %130 = vst [vmem:[%s128] sm:%s120] %v129
    $region74: #{tpu_custom_call.1} parent=68 // loop_footer
      %s126 = sadd.s32 1, %s122
    $region75: #{tpu_custom_call.1} parent=68 // loop_footer_branch
      %121 = sbr.rel target = $region71
    $region76: #{tpu_custom_call.1} parent=68 // loop_exit
      _
  $region69: #{tpu_custom_call.1} parent=0 // pred_fallthru
    _
  // Predicated region
  $region88: #{tpu_custom_call.1} parent=0 // pred_check
    _
  $region89: #{tpu_custom_call.1} parent=0 // pred_check_branch
    %154 = sbr.rel (0) target = $region91
  $region90: #{tpu_custom_call.1} parent=0 // pred_region
    %155 = vsyncadd [#allocation2], 16
  $region91: #{tpu_custom_call.1} parent=0 // pred_fallthru
    _
  %s156 = sadd.s32 %s13, 3
  %s157 = sld [smem:[#allocation4 + %s156]]
  %s158 = scalar_lea.vmem %s1, %s157
  %s159 = scalar_lea.vmem %s2, 3
  %p161 = scmp.lt.u32.totalorder 1, 8
  %p162 = pneg %p161
  // Predicated region
  $region92: #{tpu_custom_call.1} parent=0 // pred_check
    _
  $region93: #{tpu_custom_call.1} parent=0 // pred_check_branch
    %164 = sbr.rel (%p161) target = $region95
  $region94: #{tpu_custom_call.1} parent=0 // pred_region
    %s179 = sand.u32 1, 7
    %p180 = scmp.eq.s32.totalorder %s179, 0
    %p181 = pneg %p180
    // Predicated region
    $region107: #{tpu_custom_call.1} parent=94 // pred_check
      _
    $region108: #{tpu_custom_call.1} parent=94 // pred_check_branch
      %183 = sbr.rel (%p180) target = $region110
    $region109: #{tpu_custom_call.1} parent=94 // pred_region
      %s184 = sand.u32 1, 7
      %s185 = ssub.s32 1, %s184
      %s186 = scalar_lea.vmem %s158, %s185
      %s187 = ssub.s32 1, %s184
      %s188 = scalar_lea.vmem %s159, %s187
      %s189 = sshllo.u32 0, %s184
      loop: start=0, step=1, limit=1
      $region111: #{tpu_custom_call.1} parent=109 // loop_pre_header
        _
      $region112: #{tpu_custom_call.1} parent=109 // loop_header
        %s191 = sphi 0, %s195
        %p192 = scmp.ge.s32.totalorder %s191, 1
        %s196 = sphi %s186, %s186
        %s197 = sphi %s188, %s188
      $region113: #{tpu_custom_call.1} parent=109 // loop_header_branch
        %194 = sbr.rel (%p192) target = $region117
      $region114: #{tpu_custom_call.1} parent=109 // loop_body
        %v198 = vld [vmem:[%s196] sm:%s189]
        %199 = vst [vmem:[%s197] sm:%s189] %v198
      $region115: #{tpu_custom_call.1} parent=109 // loop_footer
        %s195 = sadd.s32 1, %s191
      $region116: #{tpu_custom_call.1} parent=109 // loop_footer_branch
        %190 = sbr.rel target = $region112
      $region117: #{tpu_custom_call.1} parent=109 // loop_exit
        _
    $region110: #{tpu_custom_call.1} parent=94 // pred_fallthru
      _
  $region95: #{tpu_custom_call.1} parent=0 // pred_fallthru
    _
  // Predicated region
  $region96: #{tpu_custom_call.1} parent=0 // pred_check
    %p165 = pneg %p161
  $region97: #{tpu_custom_call.1} parent=0 // pred_check_branch
    %167 = sbr.rel (%p165) target = $region99
  $region98: #{tpu_custom_call.1} parent=0 // pred_region
    %s168 = sshllo.u32 0, 1
    loop: start=0, step=1, limit=1
    $region100: #{tpu_custom_call.1} parent=98 // loop_pre_header
      _
    $region101: #{tpu_custom_call.1} parent=98 // loop_header
      %s170 = sphi 0, %s174
      %p171 = scmp.ge.s32.totalorder %s170, 1
      %s175 = sphi %s158, %s158
      %s176 = sphi %s159, %s159
    $region102: #{tpu_custom_call.1} parent=98 // loop_header_branch
      %173 = sbr.rel (%p171) target = $region106
    $region103: #{tpu_custom_call.1} parent=98 // loop_body
      %v177 = vld [vmem:[%s175] sm:%s168]
      %178 = vst [vmem:[%s176] sm:%s168] %v177
    $region104: #{tpu_custom_call.1} parent=98 // loop_footer
      %s174 = sadd.s32 1, %s170
    $region105: #{tpu_custom_call.1} parent=98 // loop_footer_branch
      %169 = sbr.rel target = $region101
    $region106: #{tpu_custom_call.1} parent=98 // loop_exit
      _
  $region99: #{tpu_custom_call.1} parent=0 // pred_fallthru
    _
  // Predicated region
  $region118: #{tpu_custom_call.1} parent=0 // pred_check
    _
  $region119: #{tpu_custom_call.1} parent=0 // pred_check_branch
    %202 = sbr.rel (0) target = $region121
  $region120: #{tpu_custom_call.1} parent=0 // pred_region
    %203 = vsyncadd [#allocation2], 16
  $region121: #{tpu_custom_call.1} parent=0 // pred_fallthru
    _
  %s204 = sadd.s32 %s13, 4
  %s205 = sld [smem:[#allocation4 + %s204]]
  %s206 = scalar_lea.vmem %s1, %s205
  %s207 = scalar_lea.vmem %s2, 4
  %p209 = scmp.lt.u32.totalorder 1, 8
  %p210 = pneg %p209
  // Predicated region
  $region122: #{tpu_custom_call.1} parent=0 // pred_check
    _
  $region123: #{tpu_custom_call.1} parent=0 // pred_check_branch
    %212 = sbr.rel (%p209) target = $region125
  $region124: #{tpu_custom_call.1} parent=0 // pred_region
    %s227 = sand.u32 1, 7
    %p228 = scmp.eq.s32.totalorder %s227, 0
    %p229 = pneg %p228
    // Predicated region
    $region137: #{tpu_custom_call.1} parent=124 // pred_check
      _
    $region138: #{tpu_custom_call.1} parent=124 // pred_check_branch
      %231 = sbr.rel (%p228) target = $region140
    $region139: #{tpu_custom_call.1} parent=124 // pred_region
      %s232 = sand.u32 1, 7
      %s233 = ssub.s32 1, %s232
      %s234 = scalar_lea.vmem %s206, %s233
      %s235 = ssub.s32 1, %s232
      %s236 = scalar_lea.vmem %s207, %s235
      %s237 = sshllo.u32 0, %s232
      loop: start=0, step=1, limit=1
      $region141: #{tpu_custom_call.1} parent=139 // loop_pre_header
        _
      $region142: #{tpu_custom_call.1} parent=139 // loop_header
        %s239 = sphi 0, %s243
        %p240 = scmp.ge.s32.totalorder %s239, 1
        %s244 = sphi %s234, %s234
        %s245 = sphi %s236, %s236
      $region143: #{tpu_custom_call.1} parent=139 // loop_header_branch
        %242 = sbr.rel (%p240) target = $region147
      $region144: #{tpu_custom_call.1} parent=139 // loop_body
        %v246 = vld [vmem:[%s244] sm:%s237]
        %247 = vst [vmem:[%s245] sm:%s237] %v246
      $region145: #{tpu_custom_call.1} parent=139 // loop_footer
        %s243 = sadd.s32 1, %s239
      $region146: #{tpu_custom_call.1} parent=139 // loop_footer_branch
        %238 = sbr.rel target = $region142
      $region147: #{tpu_custom_call.1} parent=139 // loop_exit
        _
    $region140: #{tpu_custom_call.1} parent=124 // pred_fallthru
      _
  $region125: #{tpu_custom_call.1} parent=0 // pred_fallthru
    _
  // Predicated region
  $region126: #{tpu_custom_call.1} parent=0 // pred_check
    %p213 = pneg %p209
  $region127: #{tpu_custom_call.1} parent=0 // pred_check_branch
    %215 = sbr.rel (%p213) target = $region129
  $region128: #{tpu_custom_call.1} parent=0 // pred_region
    %s216 = sshllo.u32 0, 1
    loop: start=0, step=1, limit=1
    $region130: #{tpu_custom_call.1} parent=128 // loop_pre_header
      _
    $region131: #{tpu_custom_call.1} parent=128 // loop_header
      %s218 = sphi 0, %s222
      %p219 = scmp.ge.s32.totalorder %s218, 1
      %s223 = sphi %s206, %s206
      %s224 = sphi %s207, %s207
    $region132: #{tpu_custom_call.1} parent=128 // loop_header_branch
      %221 = sbr.rel (%p219) target = $region136
    $region133: #{tpu_custom_call.1} parent=128 // loop_body
      %v225 = vld [vmem:[%s223] sm:%s216]
      %226 = vst [vmem:[%s224] sm:%s216] %v225
    $region134: #{tpu_custom_call.1} parent=128 // loop_footer
      %s222 = sadd.s32 1, %s218
    $region135: #{tpu_custom_call.1} parent=128 // loop_footer_branch
      %217 = sbr.rel target = $region131
    $region136: #{tpu_custom_call.1} parent=128 // loop_exit
      _
  $region129: #{tpu_custom_call.1} parent=0 // pred_fallthru
    _
  // Predicated region
  $region148: #{tpu_custom_call.1} parent=0 // pred_check
    _
  $region149: #{tpu_custom_call.1} parent=0 // pred_check_branch
    %250 = sbr.rel (0) target = $region151
  $region150: #{tpu_custom_call.1} parent=0 // pred_region
    %251 = vsyncadd [#allocation2], 16
  $region151: #{tpu_custom_call.1} parent=0 // pred_fallthru
    _
  %s252 = sadd.s32 %s13, 5
  %s253 = sld [smem:[#allocation4 + %s252]]
  %s254 = scalar_lea.vmem %s1, %s253
  %s255 = scalar_lea.vmem %s2, 5
  %p257 = scmp.lt.u32.totalorder 1, 8
  %p258 = pneg %p257
  // Predicated region
  $region152: #{tpu_custom_call.1} parent=0 // pred_check
    _
  $region153: #{tpu_custom_call.1} parent=0 // pred_check_branch
    %260 = sbr.rel (%p257) target = $region155
  $region154: #{tpu_custom_call.1} parent=0 // pred_region
    %s275 = sand.u32 1, 7
    %p276 = scmp.eq.s32.totalorder %s275, 0
    %p277 = pneg %p276
    // Predicated region
    $region167: #{tpu_custom_call.1} parent=154 // pred_check
      _
    $region168: #{tpu_custom_call.1} parent=154 // pred_check_branch
      %279 = sbr.rel (%p276) target = $region170
    $region169: #{tpu_custom_call.1} parent=154 // pred_region
      %s280 = sand.u32 1, 7
      %s281 = ssub.s32 1, %s280
      %s282 = scalar_lea.vmem %s254, %s281
      %s283 = ssub.s32 1, %s280
      %s284 = scalar_lea.vmem %s255, %s283
      %s285 = sshllo.u32 0, %s280
      loop: start=0, step=1, limit=1
      $region171: #{tpu_custom_call.1} parent=169 // loop_pre_header
        _
      $region172: #{tpu_custom_call.1} parent=169 // loop_header
        %s287 = sphi 0, %s291
        %p288 = scmp.ge.s32.totalorder %s287, 1
        %s292 = sphi %s282, %s282
        %s293 = sphi %s284, %s284
      $region173: #{tpu_custom_call.1} parent=169 // loop_header_branch
        %290 = sbr.rel (%p288) target = $region177
      $region174: #{tpu_custom_call.1} parent=169 // loop_body
        %v294 = vld [vmem:[%s292] sm:%s285]
        %295 = vst [vmem:[%s293] sm:%s285] %v294
      $region175: #{tpu_custom_call.1} parent=169 // loop_footer
        %s291 = sadd.s32 1, %s287
      $region176: #{tpu_custom_call.1} parent=169 // loop_footer_branch
        %286 = sbr.rel target = $region172
      $region177: #{tpu_custom_call.1} parent=169 // loop_exit
        _
    $region170: #{tpu_custom_call.1} parent=154 // pred_fallthru
      _
  $region155: #{tpu_custom_call.1} parent=0 // pred_fallthru
    _
  // Predicated region
  $region156: #{tpu_custom_call.1} parent=0 // pred_check
    %p261 = pneg %p257
  $region157: #{tpu_custom_call.1} parent=0 // pred_check_branch
    %263 = sbr.rel (%p261) target = $region159
  $region158: #{tpu_custom_call.1} parent=0 // pred_region
    %s264 = sshllo.u32 0, 1
    loop: start=0, step=1, limit=1
    $region160: #{tpu_custom_call.1} parent=158 // loop_pre_header
      _
    $region161: #{tpu_custom_call.1} parent=158 // loop_header
      %s266 = sphi 0, %s270
      %p267 = scmp.ge.s32.totalorder %s266, 1
      %s271 = sphi %s254, %s254
      %s272 = sphi %s255, %s255
    $region162: #{tpu_custom_call.1} parent=158 // loop_header_branch
      %269 = sbr.rel (%p267) target = $region166
    $region163: #{tpu_custom_call.1} parent=158 // loop_body
      %v273 = vld [vmem:[%s271] sm:%s264]
      %274 = vst [vmem:[%s272] sm:%s264] %v273
    $region164: #{tpu_custom_call.1} parent=158 // loop_footer
      %s270 = sadd.s32 1, %s266
    $region165: #{tpu_custom_call.1} parent=158 // loop_footer_branch
      %265 = sbr.rel target = $region161
    $region166: #{tpu_custom_call.1} parent=158 // loop_exit
      _
  $region159: #{tpu_custom_call.1} parent=0 // pred_fallthru
    _
  // Predicated region
  $region178: #{tpu_custom_call.1} parent=0 // pred_check
    _
  $region179: #{tpu_custom_call.1} parent=0 // pred_check_branch
    %298 = sbr.rel (0) target = $region181
  $region180: #{tpu_custom_call.1} parent=0 // pred_region
    %299 = vsyncadd [#allocation2], 16
  $region181: #{tpu_custom_call.1} parent=0 // pred_fallthru
    _
  %s300 = sadd.s32 %s13, 6
  %s301 = sld [smem:[#allocation4 + %s300]]
  %s302 = scalar_lea.vmem %s1, %s301
  %s303 = scalar_lea.vmem %s2, 6
  %p305 = scmp.lt.u32.totalorder 1, 8
  %p306 = pneg %p305
  // Predicated region
  $region182: #{tpu_custom_call.1} parent=0 // pred_check
    _
  $region183: #{tpu_custom_call.1} parent=0 // pred_check_branch
    %308 = sbr.rel (%p305) target = $region185
  $region184: #{tpu_custom_call.1} parent=0 // pred_region
    %s323 = sand.u32 1, 7
    %p324 = scmp.eq.s32.totalorder %s323, 0
    %p325 = pneg %p324
    // Predicated region
    $region197: #{tpu_custom_call.1} parent=184 // pred_check
      _
    $region198: #{tpu_custom_call.1} parent=184 // pred_check_branch
      %327 = sbr.rel (%p324) target = $region200
    $region199: #{tpu_custom_call.1} parent=184 // pred_region
      %s328 = sand.u32 1, 7
      %s329 = ssub.s32 1, %s328
      %s330 = scalar_lea.vmem %s302, %s329
      %s331 = ssub.s32 1, %s328
      %s332 = scalar_lea.vmem %s303, %s331
      %s333 = sshllo.u32 0, %s328
      loop: start=0, step=1, limit=1
      $region201: #{tpu_custom_call.1} parent=199 // loop_pre_header
        _
      $region202: #{tpu_custom_call.1} parent=199 // loop_header
        %s335 = sphi 0, %s339
        %p336 = scmp.ge.s32.totalorder %s335, 1
        %s340 = sphi %s330, %s330
        %s341 = sphi %s332, %s332
      $region203: #{tpu_custom_call.1} parent=199 // loop_header_branch
        %338 = sbr.rel (%p336) target = $region207
      $region204: #{tpu_custom_call.1} parent=199 // loop_body
        %v342 = vld [vmem:[%s340] sm:%s333]
        %343 = vst [vmem:[%s341] sm:%s333] %v342
      $region205: #{tpu_custom_call.1} parent=199 // loop_footer
        %s339 = sadd.s32 1, %s335
      $region206: #{tpu_custom_call.1} parent=199 // loop_footer_branch
        %334 = sbr.rel target = $region202
      $region207: #{tpu_custom_call.1} parent=199 // loop_exit
        _
    $region200: #{tpu_custom_call.1} parent=184 // pred_fallthru
      _
  $region185: #{tpu_custom_call.1} parent=0 // pred_fallthru
    _
  // Predicated region
  $region186: #{tpu_custom_call.1} parent=0 // pred_check
    %p309 = pneg %p305
  $region187: #{tpu_custom_call.1} parent=0 // pred_check_branch
    %311 = sbr.rel (%p309) target = $region189
  $region188: #{tpu_custom_call.1} parent=0 // pred_region
    %s312 = sshllo.u32 0, 1
    loop: start=0, step=1, limit=1
    $region190: #{tpu_custom_call.1} parent=188 // loop_pre_header
      _
    $region191: #{tpu_custom_call.1} parent=188 // loop_header
      %s314 = sphi 0, %s318
      %p315 = scmp.ge.s32.totalorder %s314, 1
      %s319 = sphi %s302, %s302
      %s320 = sphi %s303, %s303
    $region192: #{tpu_custom_call.1} parent=188 // loop_header_branch
      %317 = sbr.rel (%p315) target = $region196
    $region193: #{tpu_custom_call.1} parent=188 // loop_body
      %v321 = vld [vmem:[%s319] sm:%s312]
      %322 = vst [vmem:[%s320] sm:%s312] %v321
    $region194: #{tpu_custom_call.1} parent=188 // loop_footer
      %s318 = sadd.s32 1, %s314
    $region195: #{tpu_custom_call.1} parent=188 // loop_footer_branch
      %313 = sbr.rel target = $region191
    $region196: #{tpu_custom_call.1} parent=188 // loop_exit
      _
  $region189: #{tpu_custom_call.1} parent=0 // pred_fallthru
    _
  // Predicated region
  $region208: #{tpu_custom_call.1} parent=0 // pred_check
    _
  $region209: #{tpu_custom_call.1} parent=0 // pred_check_branch
    %346 = sbr.rel (0) target = $region211
  $region210: #{tpu_custom_call.1} parent=0 // pred_region
    %347 = vsyncadd [#allocation2], 16
  $region211: #{tpu_custom_call.1} parent=0 // pred_fallthru
    _
  %s348 = sadd.s32 %s13, 7
  %s349 = sld [smem:[#allocation4 + %s348]]
  %s350 = scalar_lea.vmem %s1, %s349
  %s351 = scalar_lea.vmem %s2, 7
  %p353 = scmp.lt.u32.totalorder 1, 8
  %p354 = pneg %p353
  // Predicated region
  $region212: #{tpu_custom_call.1} parent=0 // pred_check
    _
  $region213: #{tpu_custom_call.1} parent=0 // pred_check_branch
    %356 = sbr.rel (%p353) target = $region215
  $region214: #{tpu_custom_call.1} parent=0 // pred_region
    %s371 = sand.u32 1, 7
    %p372 = scmp.eq.s32.totalorder %s371, 0
    %p373 = pneg %p372
    // Predicated region
    $region227: #{tpu_custom_call.1} parent=214 // pred_check
      _
    $region228: #{tpu_custom_call.1} parent=214 // pred_check_branch
      %375 = sbr.rel (%p372) target = $region230
    $region229: #{tpu_custom_call.1} parent=214 // pred_region
      %s376 = sand.u32 1, 7
      %s377 = ssub.s32 1, %s376
      %s378 = scalar_lea.vmem %s350, %s377
      %s379 = ssub.s32 1, %s376
      %s380 = scalar_lea.vmem %s351, %s379
      %s381 = sshllo.u32 0, %s376
      loop: start=0, step=1, limit=1
      $region231: #{tpu_custom_call.1} parent=229 // loop_pre_header
        _
      $region232: #{tpu_custom_call.1} parent=229 // loop_header
        %s383 = sphi 0, %s387
        %p384 = scmp.ge.s32.totalorder %s383, 1
        %s388 = sphi %s378, %s378
        %s389 = sphi %s380, %s380
      $region233: #{tpu_custom_call.1} parent=229 // loop_header_branch
        %386 = sbr.rel (%p384) target = $region237
      $region234: #{tpu_custom_call.1} parent=229 // loop_body
        %v390 = vld [vmem:[%s388] sm:%s381]
        %391 = vst [vmem:[%s389] sm:%s381] %v390
      $region235: #{tpu_custom_call.1} parent=229 // loop_footer
        %s387 = sadd.s32 1, %s383
      $region236: #{tpu_custom_call.1} parent=229 // loop_footer_branch
        %382 = sbr.rel target = $region232
      $region237: #{tpu_custom_call.1} parent=229 // loop_exit
        _
    $region230: #{tpu_custom_call.1} parent=214 // pred_fallthru
      _
  $region215: #{tpu_custom_call.1} parent=0 // pred_fallthru
    _
  // Predicated region
  $region216: #{tpu_custom_call.1} parent=0 // pred_check
    %p357 = pneg %p353
  $region217: #{tpu_custom_call.1} parent=0 // pred_check_branch
    %359 = sbr.rel (%p357) target = $region219
  $region218: #{tpu_custom_call.1} parent=0 // pred_region
    %s360 = sshllo.u32 0, 1
    loop: start=0, step=1, limit=1
    $region220: #{tpu_custom_call.1} parent=218 // loop_pre_header
      _
    $region221: #{tpu_custom_call.1} parent=218 // loop_header
      %s362 = sphi 0, %s366
      %p363 = scmp.ge.s32.totalorder %s362, 1
      %s367 = sphi %s350, %s350
      %s368 = sphi %s351, %s351
    $region222: #{tpu_custom_call.1} parent=218 // loop_header_branch
      %365 = sbr.rel (%p363) target = $region226
    $region223: #{tpu_custom_call.1} parent=218 // loop_body
      %v369 = vld [vmem:[%s367] sm:%s360]
      %370 = vst [vmem:[%s368] sm:%s360] %v369
    $region224: #{tpu_custom_call.1} parent=218 // loop_footer
      %s366 = sadd.s32 1, %s362
    $region225: #{tpu_custom_call.1} parent=218 // loop_footer_branch
      %361 = sbr.rel target = $region221
    $region226: #{tpu_custom_call.1} parent=218 // loop_exit
      _
  $region219: #{tpu_custom_call.1} parent=0 // pred_fallthru
    _
  // Predicated region
  $region238: #{tpu_custom_call.1} parent=0 // pred_check
    _
  $region239: #{tpu_custom_call.1} parent=0 // pred_check_branch
    %394 = sbr.rel (0) target = $region241
  $region240: #{tpu_custom_call.1} parent=0 // pred_region
    %395 = vsyncadd [#allocation2], 16
  $region241: #{tpu_custom_call.1} parent=0 // pred_fallthru
    _
  %s396 = sadd.s32 %s13, 8
  %s397 = sld [smem:[#allocation4 + %s396]]
  %s398 = scalar_lea.vmem %s1, %s397
  %s399 = scalar_lea.vmem %s2, 8
  %p401 = scmp.lt.u32.totalorder 1, 8
  %p402 = pneg %p401
  // Predicated region
  $region242: #{tpu_custom_call.1} parent=0 // pred_check
    _
  $region243: #{tpu_custom_call.1} parent=0 // pred_check_branch
    %404 = sbr.rel (%p401) target = $region245
  $region244: #{tpu_custom_call.1} parent=0 // pred_region
    %s419 = sand.u32 1, 7
    %p420 = scmp.eq.s32.totalorder %s419, 0
    %p421 = pneg %p420
    // Predicated region
    $region257: #{tpu_custom_call.1} parent=244 // pred_check
      _
    $region258: #{tpu_custom_call.1} parent=244 // pred_check_branch
      %423 = sbr.rel (%p420) target = $region260
    $region259: #{tpu_custom_call.1} parent=244 // pred_region
      %s424 = sand.u32 1, 7
      %s425 = ssub.s32 1, %s424
      %s426 = scalar_lea.vmem %s398, %s425
      %s427 = ssub.s32 1, %s424
      %s428 = scalar_lea.vmem %s399, %s427
      %s429 = sshllo.u32 0, %s424
      loop: start=0, step=1, limit=1
      $region261: #{tpu_custom_call.1} parent=259 // loop_pre_header
        _
      $region262: #{tpu_custom_call.1} parent=259 // loop_header
        %s431 = sphi 0, %s435
        %p432 = scmp.ge.s32.totalorder %s431, 1
        %s436 = sphi %s426, %s426
        %s437 = sphi %s428, %s428
      $region263: #{tpu_custom_call.1} parent=259 // loop_header_branch
        %434 = sbr.rel (%p432) target = $region267
      $region264: #{tpu_custom_call.1} parent=259 // loop_body
        %v438 = vld [vmem:[%s436] sm:%s429]
        %439 = vst [vmem:[%s437] sm:%s429] %v438
      $region265: #{tpu_custom_call.1} parent=259 // loop_footer
        %s435 = sadd.s32 1, %s431
      $region266: #{tpu_custom_call.1} parent=259 // loop_footer_branch
        %430 = sbr.rel target = $region262
      $region267: #{tpu_custom_call.1} parent=259 // loop_exit
        _
    $region260: #{tpu_custom_call.1} parent=244 // pred_fallthru
      _
  $region245: #{tpu_custom_call.1} parent=0 // pred_fallthru
    _
  // Predicated region
  $region246: #{tpu_custom_call.1} parent=0 // pred_check
    %p405 = pneg %p401
  $region247: #{tpu_custom_call.1} parent=0 // pred_check_branch
    %407 = sbr.rel (%p405) target = $region249
  $region248: #{tpu_custom_call.1} parent=0 // pred_region
    %s408 = sshllo.u32 0, 1
    loop: start=0, step=1, limit=1
    $region250: #{tpu_custom_call.1} parent=248 // loop_pre_header
      _
    $region251: #{tpu_custom_call.1} parent=248 // loop_header
      %s410 = sphi 0, %s414
      %p411 = scmp.ge.s32.totalorder %s410, 1
      %s415 = sphi %s398, %s398
      %s416 = sphi %s399, %s399
    $region252: #{tpu_custom_call.1} parent=248 // loop_header_branch
      %413 = sbr.rel (%p411) target = $region256
    $region253: #{tpu_custom_call.1} parent=248 // loop_body
      %v417 = vld [vmem:[%s415] sm:%s408]
      %418 = vst [vmem:[%s416] sm:%s408] %v417
    $region254: #{tpu_custom_call.1} parent=248 // loop_footer
      %s414 = sadd.s32 1, %s410
    $region255: #{tpu_custom_call.1} parent=248 // loop_footer_branch
      %409 = sbr.rel target = $region251
    $region256: #{tpu_custom_call.1} parent=248 // loop_exit
      _
  $region249: #{tpu_custom_call.1} parent=0 // pred_fallthru
    _
  // Predicated region
  $region268: #{tpu_custom_call.1} parent=0 // pred_check
    _
  $region269: #{tpu_custom_call.1} parent=0 // pred_check_branch
    %442 = sbr.rel (0) target = $region271
  $region270: #{tpu_custom_call.1} parent=0 // pred_region
    %443 = vsyncadd [#allocation2], 16
  $region271: #{tpu_custom_call.1} parent=0 // pred_fallthru
    _
  %s444 = sadd.s32 %s13, 9
  %s445 = sld [smem:[#allocation4 + %s444]]
  %s446 = scalar_lea.vmem %s1, %s445
  %s447 = scalar_lea.vmem %s2, 9
  %p449 = scmp.lt.u32.totalorder 1, 8
  %p450 = pneg %p449
  // Predicated region
  $region272: #{tpu_custom_call.1} parent=0 // pred_check
    _
  $region273: #{tpu_custom_call.1} parent=0 // pred_check_branch
    %452 = sbr.rel (%p449) target = $region275
  $region274: #{tpu_custom_call.1} parent=0 // pred_region
    %s467 = sand.u32 1, 7
    %p468 = scmp.eq.s32.totalorder %s467, 0
    %p469 = pneg %p468
    // Predicated region
    $region287: #{tpu_custom_call.1} parent=274 // pred_check
      _
    $region288: #{tpu_custom_call.1} parent=274 // pred_check_branch
      %471 = sbr.rel (%p468) target = $region290
    $region289: #{tpu_custom_call.1} parent=274 // pred_region
      %s472 = sand.u32 1, 7
      %s473 = ssub.s32 1, %s472
      %s474 = scalar_lea.vmem %s446, %s473
      %s475 = ssub.s32 1, %s472
      %s476 = scalar_lea.vmem %s447, %s475
      %s477 = sshllo.u32 0, %s472
      loop: start=0, step=1, limit=1
      $region291: #{tpu_custom_call.1} parent=289 // loop_pre_header
        _
      $region292: #{tpu_custom_call.1} parent=289 // loop_header
        %s479 = sphi 0, %s483
        %p480 = scmp.ge.s32.totalorder %s479, 1
        %s484 = sphi %s474, %s474
        %s485 = sphi %s476, %s476
      $region293: #{tpu_custom_call.1} parent=289 // loop_header_branch
        %482 = sbr.rel (%p480) target = $region297
      $region294: #{tpu_custom_call.1} parent=289 // loop_body
        %v486 = vld [vmem:[%s484] sm:%s477]
        %487 = vst [vmem:[%s485] sm:%s477] %v486
      $region295: #{tpu_custom_call.1} parent=289 // loop_footer
        %s483 = sadd.s32 1, %s479
      $region296: #{tpu_custom_call.1} parent=289 // loop_footer_branch
        %478 = sbr.rel target = $region292
      $region297: #{tpu_custom_call.1} parent=289 // loop_exit
        _
    $region290: #{tpu_custom_call.1} parent=274 // pred_fallthru
      _
  $region275: #{tpu_custom_call.1} parent=0 // pred_fallthru
    _
  // Predicated region
  $region276: #{tpu_custom_call.1} parent=0 // pred_check
    %p453 = pneg %p449
  $region277: #{tpu_custom_call.1} parent=0 // pred_check_branch
    %455 = sbr.rel (%p453) target = $region279
  $region278: #{tpu_custom_call.1} parent=0 // pred_region
    %s456 = sshllo.u32 0, 1
    loop: start=0, step=1, limit=1
    $region280: #{tpu_custom_call.1} parent=278 // loop_pre_header
      _
    $region281: #{tpu_custom_call.1} parent=278 // loop_header
      %s458 = sphi 0, %s462
      %p459 = scmp.ge.s32.totalorder %s458, 1
      %s463 = sphi %s446, %s446
      %s464 = sphi %s447, %s447
    $region282: #{tpu_custom_call.1} parent=278 // loop_header_branch
      %461 = sbr.rel (%p459) target = $region286
    $region283: #{tpu_custom_call.1} parent=278 // loop_body
      %v465 = vld [vmem:[%s463] sm:%s456]
      %466 = vst [vmem:[%s464] sm:%s456] %v465
    $region284: #{tpu_custom_call.1} parent=278 // loop_footer
      %s462 = sadd.s32 1, %s458
    $region285: #{tpu_custom_call.1} parent=278 // loop_footer_branch
      %457 = sbr.rel target = $region281
    $region286: #{tpu_custom_call.1} parent=278 // loop_exit
      _
  $region279: #{tpu_custom_call.1} parent=0 // pred_fallthru
    _
  // Predicated region
  $region298: #{tpu_custom_call.1} parent=0 // pred_check
    _
  $region299: #{tpu_custom_call.1} parent=0 // pred_check_branch
    %490 = sbr.rel (0) target = $region301
  $region300: #{tpu_custom_call.1} parent=0 // pred_region
    %491 = vsyncadd [#allocation2], 16
  $region301: #{tpu_custom_call.1} parent=0 // pred_fallthru
    _
  %s492 = sadd.s32 %s13, 10
  %s493 = sld [smem:[#allocation4 + %s492]]
  %s494 = scalar_lea.vmem %s1, %s493
  %s495 = scalar_lea.vmem %s2, 10
  %p497 = scmp.lt.u32.totalorder 1, 8
  %p498 = pneg %p497
  // Predicated region
  $region302: #{tpu_custom_call.1} parent=0 // pred_check
    _
  $region303: #{tpu_custom_call.1} parent=0 // pred_check_branch
    %500 = sbr.rel (%p497) target = $region305
  $region304: #{tpu_custom_call.1} parent=0 // pred_region
    %s515 = sand.u32 1, 7
    %p516 = scmp.eq.s32.totalorder %s515, 0
    %p517 = pneg %p516
    // Predicated region
    $region317: #{tpu_custom_call.1} parent=304 // pred_check
      _
    $region318: #{tpu_custom_call.1} parent=304 // pred_check_branch
      %519 = sbr.rel (%p516) target = $region320
    $region319: #{tpu_custom_call.1} parent=304 // pred_region
      %s520 = sand.u32 1, 7
      %s521 = ssub.s32 1, %s520
      %s522 = scalar_lea.vmem %s494, %s521
      %s523 = ssub.s32 1, %s520
      %s524 = scalar_lea.vmem %s495, %s523
      %s525 = sshllo.u32 0, %s520
      loop: start=0, step=1, limit=1
      $region321: #{tpu_custom_call.1} parent=319 // loop_pre_header
        _
      $region322: #{tpu_custom_call.1} parent=319 // loop_header
        %s527 = sphi 0, %s531
        %p528 = scmp.ge.s32.totalorder %s527, 1
        %s532 = sphi %s522, %s522
        %s533 = sphi %s524, %s524
      $region323: #{tpu_custom_call.1} parent=319 // loop_header_branch
        %530 = sbr.rel (%p528) target = $region327
      $region324: #{tpu_custom_call.1} parent=319 // loop_body
        %v534 = vld [vmem:[%s532] sm:%s525]
        %535 = vst [vmem:[%s533] sm:%s525] %v534
      $region325: #{tpu_custom_call.1} parent=319 // loop_footer
        %s531 = sadd.s32 1, %s527
      $region326: #{tpu_custom_call.1} parent=319 // loop_footer_branch
        %526 = sbr.rel target = $region322
      $region327: #{tpu_custom_call.1} parent=319 // loop_exit
        _
    $region320: #{tpu_custom_call.1} parent=304 // pred_fallthru
      _
  $region305: #{tpu_custom_call.1} parent=0 // pred_fallthru
    _
  // Predicated region
  $region306: #{tpu_custom_call.1} parent=0 // pred_check
    %p501 = pneg %p497
  $region307: #{tpu_custom_call.1} parent=0 // pred_check_branch
    %503 = sbr.rel (%p501) target = $region309
  $region308: #{tpu_custom_call.1} parent=0 // pred_region
    %s504 = sshllo.u32 0, 1
    loop: start=0, step=1, limit=1
    $region310: #{tpu_custom_call.1} parent=308 // loop_pre_header
      _
    $region311: #{tpu_custom_call.1} parent=308 // loop_header
      %s506 = sphi 0, %s510
      %p507 = scmp.ge.s32.totalorder %s506, 1
      %s511 = sphi %s494, %s494
      %s512 = sphi %s495, %s495
    $region312: #{tpu_custom_call.1} parent=308 // loop_header_branch
      %509 = sbr.rel (%p507) target = $region316
    $region313: #{tpu_custom_call.1} parent=308 // loop_body
      %v513 = vld [vmem:[%s511] sm:%s504]
      %514 = vst [vmem:[%s512] sm:%s504] %v513
    $region314: #{tpu_custom_call.1} parent=308 // loop_footer
      %s510 = sadd.s32 1, %s506
    $region315: #{tpu_custom_call.1} parent=308 // loop_footer_branch
      %505 = sbr.rel target = $region311
    $region316: #{tpu_custom_call.1} parent=308 // loop_exit
      _
  $region309: #{tpu_custom_call.1} parent=0 // pred_fallthru
    _
  // Predicated region
  $region328: #{tpu_custom_call.1} parent=0 // pred_check
    _
  $region329: #{tpu_custom_call.1} parent=0 // pred_check_branch
    %538 = sbr.rel (0) target = $region331
  $region330: #{tpu_custom_call.1} parent=0 // pred_region
    %539 = vsyncadd [#allocation2], 16
  $region331: #{tpu_custom_call.1} parent=0 // pred_fallthru
    _
  %s540 = sadd.s32 %s13, 11
  %s541 = sld [smem:[#allocation4 + %s540]]
  %s542 = scalar_lea.vmem %s1, %s541
  %s543 = scalar_lea.vmem %s2, 11
  %p545 = scmp.lt.u32.totalorder 1, 8
  %p546 = pneg %p545
  // Predicated region
  $region332: #{tpu_custom_call.1} parent=0 // pred_check
    _
  $region333: #{tpu_custom_call.1} parent=0 // pred_check_branch
    %548 = sbr.rel (%p545) target = $region335
  $region334: #{tpu_custom_call.1} parent=0 // pred_region
    %s563 = sand.u32 1, 7
    %p564 = scmp.eq.s32.totalorder %s563, 0
    %p565 = pneg %p564
    // Predicated region
    $region347: #{tpu_custom_call.1} parent=334 // pred_check
      _
    $region348: #{tpu_custom_call.1} parent=334 // pred_check_branch
      %567 = sbr.rel (%p564) target = $region350
    $region349: #{tpu_custom_call.1} parent=334 // pred_region
      %s568 = sand.u32 1, 7
      %s569 = ssub.s32 1, %s568
      %s570 = scalar_lea.vmem %s542, %s569
      %s571 = ssub.s32 1, %s568
      %s572 = scalar_lea.vmem %s543, %s571
      %s573 = sshllo.u32 0, %s568
      loop: start=0, step=1, limit=1
      $region351: #{tpu_custom_call.1} parent=349 // loop_pre_header
        _
      $region352: #{tpu_custom_call.1} parent=349 // loop_header
        %s575 = sphi 0, %s579
        %p576 = scmp.ge.s32.totalorder %s575, 1
        %s580 = sphi %s570, %s570
        %s581 = sphi %s572, %s572
      $region353: #{tpu_custom_call.1} parent=349 // loop_header_branch
        %578 = sbr.rel (%p576) target = $region357
      $region354: #{tpu_custom_call.1} parent=349 // loop_body
        %v582 = vld [vmem:[%s580] sm:%s573]
        %583 = vst [vmem:[%s581] sm:%s573] %v582
      $region355: #{tpu_custom_call.1} parent=349 // loop_footer
        %s579 = sadd.s32 1, %s575
      $region356: #{tpu_custom_call.1} parent=349 // loop_footer_branch
        %574 = sbr.rel target = $region352
      $region357: #{tpu_custom_call.1} parent=349 // loop_exit
        _
    $region350: #{tpu_custom_call.1} parent=334 // pred_fallthru
      _
  $region335: #{tpu_custom_call.1} parent=0 // pred_fallthru
    _
  // Predicated region
  $region336: #{tpu_custom_call.1} parent=0 // pred_check
    %p549 = pneg %p545
  $region337: #{tpu_custom_call.1} parent=0 // pred_check_branch
    %551 = sbr.rel (%p549) target = $region339
  $region338: #{tpu_custom_call.1} parent=0 // pred_region
    %s552 = sshllo.u32 0, 1
    loop: start=0, step=1, limit=1
    $region340: #{tpu_custom_call.1} parent=338 // loop_pre_header
      _
    $region341: #{tpu_custom_call.1} parent=338 // loop_header
      %s554 = sphi 0, %s558
      %p555 = scmp.ge.s32.totalorder %s554, 1
      %s559 = sphi %s542, %s542
      %s560 = sphi %s543, %s543
    $region342: #{tpu_custom_call.1} parent=338 // loop_header_branch
      %557 = sbr.rel (%p555) target = $region346
    $region343: #{tpu_custom_call.1} parent=338 // loop_body
      %v561 = vld [vmem:[%s559] sm:%s552]
      %562 = vst [vmem:[%s560] sm:%s552] %v561
    $region344: #{tpu_custom_call.1} parent=338 // loop_footer
      %s558 = sadd.s32 1, %s554
    $region345: #{tpu_custom_call.1} parent=338 // loop_footer_branch
      %553 = sbr.rel target = $region341
    $region346: #{tpu_custom_call.1} parent=338 // loop_exit
      _
  $region339: #{tpu_custom_call.1} parent=0 // pred_fallthru
    _
  // Predicated region
  $region358: #{tpu_custom_call.1} parent=0 // pred_check
    _
  $region359: #{tpu_custom_call.1} parent=0 // pred_check_branch
    %586 = sbr.rel (0) target = $region361
  $region360: #{tpu_custom_call.1} parent=0 // pred_region
    %587 = vsyncadd [#allocation2], 16
  $region361: #{tpu_custom_call.1} parent=0 // pred_fallthru
    _
  %s588 = sadd.s32 %s13, 12
  %s589 = sld [smem:[#allocation4 + %s588]]
  %s590 = scalar_lea.vmem %s1, %s589
  %s591 = scalar_lea.vmem %s2, 12
  %p593 = scmp.lt.u32.totalorder 1, 8
  %p594 = pneg %p593
  // Predicated region
  $region362: #{tpu_custom_call.1} parent=0 // pred_check
    _
  $region363: #{tpu_custom_call.1} parent=0 // pred_check_branch
    %596 = sbr.rel (%p593) target = $region365
  $region364: #{tpu_custom_call.1} parent=0 // pred_region
    %s611 = sand.u32 1, 7
    %p612 = scmp.eq.s32.totalorder %s611, 0
    %p613 = pneg %p612
    // Predicated region
    $region377: #{tpu_custom_call.1} parent=364 // pred_check
      _
    $region378: #{tpu_custom_call.1} parent=364 // pred_check_branch
      %615 = sbr.rel (%p612) target = $region380
    $region379: #{tpu_custom_call.1} parent=364 // pred_region
      %s616 = sand.u32 1, 7
      %s617 = ssub.s32 1, %s616
      %s618 = scalar_lea.vmem %s590, %s617
      %s619 = ssub.s32 1, %s616
      %s620 = scalar_lea.vmem %s591, %s619
      %s621 = sshllo.u32 0, %s616
      loop: start=0, step=1, limit=1
      $region381: #{tpu_custom_call.1} parent=379 // loop_pre_header
        _
      $region382: #{tpu_custom_call.1} parent=379 // loop_header
        %s623 = sphi 0, %s627
        %p624 = scmp.ge.s32.totalorder %s623, 1
        %s628 = sphi %s618, %s618
        %s629 = sphi %s620, %s620
      $region383: #{tpu_custom_call.1} parent=379 // loop_header_branch
        %626 = sbr.rel (%p624) target = $region387
      $region384: #{tpu_custom_call.1} parent=379 // loop_body
        %v630 = vld [vmem:[%s628] sm:%s621]
        %631 = vst [vmem:[%s629] sm:%s621] %v630
      $region385: #{tpu_custom_call.1} parent=379 // loop_footer
        %s627 = sadd.s32 1, %s623
      $region386: #{tpu_custom_call.1} parent=379 // loop_footer_branch
        %622 = sbr.rel target = $region382
      $region387: #{tpu_custom_call.1} parent=379 // loop_exit
        _
    $region380: #{tpu_custom_call.1} parent=364 // pred_fallthru
      _
  $region365: #{tpu_custom_call.1} parent=0 // pred_fallthru
    _
  // Predicated region
  $region366: #{tpu_custom_call.1} parent=0 // pred_check
    %p597 = pneg %p593
  $region367: #{tpu_custom_call.1} parent=0 // pred_check_branch
    %599 = sbr.rel (%p597) target = $region369
  $region368: #{tpu_custom_call.1} parent=0 // pred_region
    %s600 = sshllo.u32 0, 1
    loop: start=0, step=1, limit=1
    $region370: #{tpu_custom_call.1} parent=368 // loop_pre_header
      _
    $region371: #{tpu_custom_call.1} parent=368 // loop_header
      %s602 = sphi 0, %s606
      %p603 = scmp.ge.s32.totalorder %s602, 1
      %s607 = sphi %s590, %s590
      %s608 = sphi %s591, %s591
    $region372: #{tpu_custom_call.1} parent=368 // loop_header_branch
      %605 = sbr.rel (%p603) target = $region376
    $region373: #{tpu_custom_call.1} parent=368 // loop_body
      %v609 = vld [vmem:[%s607] sm:%s600]
      %610 = vst [vmem:[%s608] sm:%s600] %v609
    $region374: #{tpu_custom_call.1} parent=368 // loop_footer
      %s606 = sadd.s32 1, %s602
    $region375: #{tpu_custom_call.1} parent=368 // loop_footer_branch
      %601 = sbr.rel target = $region371
    $region376: #{tpu_custom_call.1} parent=368 // loop_exit
      _
  $region369: #{tpu_custom_call.1} parent=0 // pred_fallthru
    _
  // Predicated region
  $region388: #{tpu_custom_call.1} parent=0 // pred_check
    _
  $region389: #{tpu_custom_call.1} parent=0 // pred_check_branch
    %634 = sbr.rel (0) target = $region391
  $region390: #{tpu_custom_call.1} parent=0 // pred_region
    %635 = vsyncadd [#allocation2], 16
  $region391: #{tpu_custom_call.1} parent=0 // pred_fallthru
    _
  %s636 = sadd.s32 %s13, 13
  %s637 = sld [smem:[#allocation4 + %s636]]
  %s638 = scalar_lea.vmem %s1, %s637
  %s639 = scalar_lea.vmem %s2, 13
  %p641 = scmp.lt.u32.totalorder 1, 8
  %p642 = pneg %p641
  // Predicated region
  $region392: #{tpu_custom_call.1} parent=0 // pred_check
    _
  $region393: #{tpu_custom_call.1} parent=0 // pred_check_branch
    %644 = sbr.rel (%p641) target = $region395
  $region394: #{tpu_custom_call.1} parent=0 // pred_region
    %s659 = sand.u32 1, 7
    %p660 = scmp.eq.s32.totalorder %s659, 0
    %p661 = pneg %p660
    // Predicated region
    $region407: #{tpu_custom_call.1} parent=394 // pred_check
      _
    $region408: #{tpu_custom_call.1} parent=394 // pred_check_branch
      %663 = sbr.rel (%p660) target = $region410
    $region409: #{tpu_custom_call.1} parent=394 // pred_region
      %s664 = sand.u32 1, 7
      %s665 = ssub.s32 1, %s664
      %s666 = scalar_lea.vmem %s638, %s665
      %s667 = ssub.s32 1, %s664
      %s668 = scalar_lea.vmem %s639, %s667
      %s669 = sshllo.u32 0, %s664
      loop: start=0, step=1, limit=1
      $region411: #{tpu_custom_call.1} parent=409 // loop_pre_header
        _
      $region412: #{tpu_custom_call.1} parent=409 // loop_header
        %s671 = sphi 0, %s675
        %p672 = scmp.ge.s32.totalorder %s671, 1
        %s676 = sphi %s666, %s666
        %s677 = sphi %s668, %s668
      $region413: #{tpu_custom_call.1} parent=409 // loop_header_branch
        %674 = sbr.rel (%p672) target = $region417
      $region414: #{tpu_custom_call.1} parent=409 // loop_body
        %v678 = vld [vmem:[%s676] sm:%s669]
        %679 = vst [vmem:[%s677] sm:%s669] %v678
      $region415: #{tpu_custom_call.1} parent=409 // loop_footer
        %s675 = sadd.s32 1, %s671
      $region416: #{tpu_custom_call.1} parent=409 // loop_footer_branch
        %670 = sbr.rel target = $region412
      $region417: #{tpu_custom_call.1} parent=409 // loop_exit
        _
    $region410: #{tpu_custom_call.1} parent=394 // pred_fallthru
      _
  $region395: #{tpu_custom_call.1} parent=0 // pred_fallthru
    _
  // Predicated region
  $region396: #{tpu_custom_call.1} parent=0 // pred_check
    %p645 = pneg %p641
  $region397: #{tpu_custom_call.1} parent=0 // pred_check_branch
    %647 = sbr.rel (%p645) target = $region399
  $region398: #{tpu_custom_call.1} parent=0 // pred_region
    %s648 = sshllo.u32 0, 1
    loop: start=0, step=1, limit=1
    $region400: #{tpu_custom_call.1} parent=398 // loop_pre_header
      _
    $region401: #{tpu_custom_call.1} parent=398 // loop_header
      %s650 = sphi 0, %s654
      %p651 = scmp.ge.s32.totalorder %s650, 1
      %s655 = sphi %s638, %s638
      %s656 = sphi %s639, %s639
    $region402: #{tpu_custom_call.1} parent=398 // loop_header_branch
      %653 = sbr.rel (%p651) target = $region406
    $region403: #{tpu_custom_call.1} parent=398 // loop_body
      %v657 = vld [vmem:[%s655] sm:%s648]
      %658 = vst [vmem:[%s656] sm:%s648] %v657
    $region404: #{tpu_custom_call.1} parent=398 // loop_footer
      %s654 = sadd.s32 1, %s650
    $region405: #{tpu_custom_call.1} parent=398 // loop_footer_branch
      %649 = sbr.rel target = $region401
    $region406: #{tpu_custom_call.1} parent=398 // loop_exit
      _
  $region399: #{tpu_custom_call.1} parent=0 // pred_fallthru
    _
  // Predicated region
  $region418: #{tpu_custom_call.1} parent=0 // pred_check
    _
  $region419: #{tpu_custom_call.1} parent=0 // pred_check_branch
    %682 = sbr.rel (0) target = $region421
  $region420: #{tpu_custom_call.1} parent=0 // pred_region
    %683 = vsyncadd [#allocation2], 16
  $region421: #{tpu_custom_call.1} parent=0 // pred_fallthru
    _
  %s684 = sadd.s32 %s13, 14
  %s685 = sld [smem:[#allocation4 + %s684]]
  %s686 = scalar_lea.vmem %s1, %s685
  %s687 = scalar_lea.vmem %s2, 14
  %p689 = scmp.lt.u32.totalorder 1, 8
  %p690 = pneg %p689
  // Predicated region
  $region422: #{tpu_custom_call.1} parent=0 // pred_check
    _
  $region423: #{tpu_custom_call.1} parent=0 // pred_check_branch
    %692 = sbr.rel (%p689) target = $region425
  $region424: #{tpu_custom_call.1} parent=0 // pred_region
    %s707 = sand.u32 1, 7
    %p708 = scmp.eq.s32.totalorder %s707, 0
    %p709 = pneg %p708
    // Predicated region
    $region437: #{tpu_custom_call.1} parent=424 // pred_check
      _
    $region438: #{tpu_custom_call.1} parent=424 // pred_check_branch
      %711 = sbr.rel (%p708) target = $region440
    $region439: #{tpu_custom_call.1} parent=424 // pred_region
      %s712 = sand.u32 1, 7
      %s713 = ssub.s32 1, %s712
      %s714 = scalar_lea.vmem %s686, %s713
      %s715 = ssub.s32 1, %s712
      %s716 = scalar_lea.vmem %s687, %s715
      %s717 = sshllo.u32 0, %s712
      loop: start=0, step=1, limit=1
      $region441: #{tpu_custom_call.1} parent=439 // loop_pre_header
        _
      $region442: #{tpu_custom_call.1} parent=439 // loop_header
        %s719 = sphi 0, %s723
        %p720 = scmp.ge.s32.totalorder %s719, 1
        %s724 = sphi %s714, %s714
        %s725 = sphi %s716, %s716
      $region443: #{tpu_custom_call.1} parent=439 // loop_header_branch
        %722 = sbr.rel (%p720) target = $region447
      $region444: #{tpu_custom_call.1} parent=439 // loop_body
        %v726 = vld [vmem:[%s724] sm:%s717]
        %727 = vst [vmem:[%s725] sm:%s717] %v726
      $region445: #{tpu_custom_call.1} parent=439 // loop_footer
        %s723 = sadd.s32 1, %s719
      $region446: #{tpu_custom_call.1} parent=439 // loop_footer_branch
        %718 = sbr.rel target = $region442
      $region447: #{tpu_custom_call.1} parent=439 // loop_exit
        _
    $region440: #{tpu_custom_call.1} parent=424 // pred_fallthru
      _
  $region425: #{tpu_custom_call.1} parent=0 // pred_fallthru
    _
  // Predicated region
  $region426: #{tpu_custom_call.1} parent=0 // pred_check
    %p693 = pneg %p689
  $region427: #{tpu_custom_call.1} parent=0 // pred_check_branch
    %695 = sbr.rel (%p693) target = $region429
  $region428: #{tpu_custom_call.1} parent=0 // pred_region
    %s696 = sshllo.u32 0, 1
    loop: start=0, step=1, limit=1
    $region430: #{tpu_custom_call.1} parent=428 // loop_pre_header
      _
    $region431: #{tpu_custom_call.1} parent=428 // loop_header
      %s698 = sphi 0, %s702
      %p699 = scmp.ge.s32.totalorder %s698, 1
      %s703 = sphi %s686, %s686
      %s704 = sphi %s687, %s687
    $region432: #{tpu_custom_call.1} parent=428 // loop_header_branch
      %701 = sbr.rel (%p699) target = $region436
    $region433: #{tpu_custom_call.1} parent=428 // loop_body
      %v705 = vld [vmem:[%s703] sm:%s696]
      %706 = vst [vmem:[%s704] sm:%s696] %v705
    $region434: #{tpu_custom_call.1} parent=428 // loop_footer
      %s702 = sadd.s32 1, %s698
    $region435: #{tpu_custom_call.1} parent=428 // loop_footer_branch
      %697 = sbr.rel target = $region431
    $region436: #{tpu_custom_call.1} parent=428 // loop_exit
      _
  $region429: #{tpu_custom_call.1} parent=0 // pred_fallthru
    _
  // Predicated region
  $region448: #{tpu_custom_call.1} parent=0 // pred_check
    _
  $region449: #{tpu_custom_call.1} parent=0 // pred_check_branch
    %730 = sbr.rel (0) target = $region451
  $region450: #{tpu_custom_call.1} parent=0 // pred_region
    %731 = vsyncadd [#allocation2], 16
  $region451: #{tpu_custom_call.1} parent=0 // pred_fallthru
    _
  %s732 = sadd.s32 %s13, 15
  %s733 = sld [smem:[#allocation4 + %s732]]
  %s734 = scalar_lea.vmem %s1, %s733
  %s735 = scalar_lea.vmem %s2, 15
  %p737 = scmp.lt.u32.totalorder 1, 8
  %p738 = pneg %p737
  // Predicated region
  $region452: #{tpu_custom_call.1} parent=0 // pred_check
    _
  $region453: #{tpu_custom_call.1} parent=0 // pred_check_branch
    %740 = sbr.rel (%p737) target = $region455
  $region454: #{tpu_custom_call.1} parent=0 // pred_region
    %s755 = sand.u32 1, 7
    %p756 = scmp.eq.s32.totalorder %s755, 0
    %p757 = pneg %p756
    // Predicated region
    $region467: #{tpu_custom_call.1} parent=454 // pred_check
      _
    $region468: #{tpu_custom_call.1} parent=454 // pred_check_branch
      %759 = sbr.rel (%p756) target = $region470
    $region469: #{tpu_custom_call.1} parent=454 // pred_region
      %s760 = sand.u32 1, 7
      %s761 = ssub.s32 1, %s760
      %s762 = scalar_lea.vmem %s734, %s761
      %s763 = ssub.s32 1, %s760
      %s764 = scalar_lea.vmem %s735, %s763
      %s765 = sshllo.u32 0, %s760
      loop: start=0, step=1, limit=1
      $region471: #{tpu_custom_call.1} parent=469 // loop_pre_header
        _
      $region472: #{tpu_custom_call.1} parent=469 // loop_header
        %s767 = sphi 0, %s771
        %p768 = scmp.ge.s32.totalorder %s767, 1
        %s772 = sphi %s762, %s762
        %s773 = sphi %s764, %s764
      $region473: #{tpu_custom_call.1} parent=469 // loop_header_branch
        %770 = sbr.rel (%p768) target = $region477
      $region474: #{tpu_custom_call.1} parent=469 // loop_body
        %v774 = vld [vmem:[%s772] sm:%s765]
        %775 = vst [vmem:[%s773] sm:%s765] %v774
      $region475: #{tpu_custom_call.1} parent=469 // loop_footer
        %s771 = sadd.s32 1, %s767
      $region476: #{tpu_custom_call.1} parent=469 // loop_footer_branch
        %766 = sbr.rel target = $region472
      $region477: #{tpu_custom_call.1} parent=469 // loop_exit
        _
    $region470: #{tpu_custom_call.1} parent=454 // pred_fallthru
      _
  $region455: #{tpu_custom_call.1} parent=0 // pred_fallthru
    _
  // Predicated region
  $region456: #{tpu_custom_call.1} parent=0 // pred_check
    %p741 = pneg %p737
  $region457: #{tpu_custom_call.1} parent=0 // pred_check_branch
    %743 = sbr.rel (%p741) target = $region459
  $region458: #{tpu_custom_call.1} parent=0 // pred_region
    %s744 = sshllo.u32 0, 1
    loop: start=0, step=1, limit=1
    $region460: #{tpu_custom_call.1} parent=458 // loop_pre_header
      _
    $region461: #{tpu_custom_call.1} parent=458 // loop_header
      %s746 = sphi 0, %s750
      %p747 = scmp.ge.s32.totalorder %s746, 1
      %s751 = sphi %s734, %s734
      %s752 = sphi %s735, %s735
    $region462: #{tpu_custom_call.1} parent=458 // loop_header_branch
      %749 = sbr.rel (%p747) target = $region466
    $region463: #{tpu_custom_call.1} parent=458 // loop_body
      %v753 = vld [vmem:[%s751] sm:%s744]
      %754 = vst [vmem:[%s752] sm:%s744] %v753
    $region464: #{tpu_custom_call.1} parent=458 // loop_footer
      %s750 = sadd.s32 1, %s746
    $region465: #{tpu_custom_call.1} parent=458 // loop_footer_branch
      %745 = sbr.rel target = $region461
    $region466: #{tpu_custom_call.1} parent=458 // loop_exit
      _
  $region459: #{tpu_custom_call.1} parent=0 // pred_fallthru
    _
  // Predicated region
  $region478: #{tpu_custom_call.1} parent=0 // pred_check
    _
  $region479: #{tpu_custom_call.1} parent=0 // pred_check_branch
    %778 = sbr.rel (0) target = $region481
  $region480: #{tpu_custom_call.1} parent=0 // pred_region
    %779 = vsyncadd [#allocation2], 16
  $region481: #{tpu_custom_call.1} parent=0 // pred_fallthru
    _
  %s780 = sadd.s32 %s13, 16
  %s781 = sld [smem:[#allocation4 + %s780]]
  %s782 = scalar_lea.vmem %s1, %s781
  %s783 = scalar_lea.vmem %s2, 16
  %p785 = scmp.lt.u32.totalorder 1, 8
  %p786 = pneg %p785
  // Predicated region
  $region482: #{tpu_custom_call.1} parent=0 // pred_check
    _
  $region483: #{tpu_custom_call.1} parent=0 // pred_check_branch
    %788 = sbr.rel (%p785) target = $region485
  $region484: #{tpu_custom_call.1} parent=0 // pred_region
    %s803 = sand.u32 1, 7
    %p804 = scmp.eq.s32.totalorder %s803, 0
    %p805 = pneg %p804
    // Predicated region
    $region497: #{tpu_custom_call.1} parent=484 // pred_check
      _
    $region498: #{tpu_custom_call.1} parent=484 // pred_check_branch
      %807 = sbr.rel (%p804) target = $region500
    $region499: #{tpu_custom_call.1} parent=484 // pred_region
      %s808 = sand.u32 1, 7
      %s809 = ssub.s32 1, %s808
      %s810 = scalar_lea.vmem %s782, %s809
      %s811 = ssub.s32 1, %s808
      %s812 = scalar_lea.vmem %s783, %s811
      %s813 = sshllo.u32 0, %s808
      loop: start=0, step=1, limit=1
      $region501: #{tpu_custom_call.1} parent=499 // loop_pre_header
        _
      $region502: #{tpu_custom_call.1} parent=499 // loop_header
        %s815 = sphi 0, %s819
        %p816 = scmp.ge.s32.totalorder %s815, 1
        %s820 = sphi %s810, %s810
        %s821 = sphi %s812, %s812
      $region503: #{tpu_custom_call.1} parent=499 // loop_header_branch
        %818 = sbr.rel (%p816) target = $region507
      $region504: #{tpu_custom_call.1} parent=499 // loop_body
        %v822 = vld [vmem:[%s820] sm:%s813]
        %823 = vst [vmem:[%s821] sm:%s813] %v822
      $region505: #{tpu_custom_call.1} parent=499 // loop_footer
        %s819 = sadd.s32 1, %s815
      $region506: #{tpu_custom_call.1} parent=499 // loop_footer_branch
        %814 = sbr.rel target = $region502
      $region507: #{tpu_custom_call.1} parent=499 // loop_exit
        _
    $region500: #{tpu_custom_call.1} parent=484 // pred_fallthru
      _
  $region485: #{tpu_custom_call.1} parent=0 // pred_fallthru
    _
  // Predicated region
  $region486: #{tpu_custom_call.1} parent=0 // pred_check
    %p789 = pneg %p785
  $region487: #{tpu_custom_call.1} parent=0 // pred_check_branch
    %791 = sbr.rel (%p789) target = $region489
  $region488: #{tpu_custom_call.1} parent=0 // pred_region
    %s792 = sshllo.u32 0, 1
    loop: start=0, step=1, limit=1
    $region490: #{tpu_custom_call.1} parent=488 // loop_pre_header
      _
    $region491: #{tpu_custom_call.1} parent=488 // loop_header
      %s794 = sphi 0, %s798
      %p795 = scmp.ge.s32.totalorder %s794, 1
      %s799 = sphi %s782, %s782
      %s800 = sphi %s783, %s783
    $region492: #{tpu_custom_call.1} parent=488 // loop_header_branch
      %797 = sbr.rel (%p795) target = $region496
    $region493: #{tpu_custom_call.1} parent=488 // loop_body
      %v801 = vld [vmem:[%s799] sm:%s792]
      %802 = vst [vmem:[%s800] sm:%s792] %v801
    $region494: #{tpu_custom_call.1} parent=488 // loop_footer
      %s798 = sadd.s32 1, %s794
    $region495: #{tpu_custom_call.1} parent=488 // loop_footer_branch
      %793 = sbr.rel target = $region491
    $region496: #{tpu_custom_call.1} parent=488 // loop_exit
      _
  $region489: #{tpu_custom_call.1} parent=0 // pred_fallthru
    _
  // Predicated region
  $region508: #{tpu_custom_call.1} parent=0 // pred_check
    _
  $region509: #{tpu_custom_call.1} parent=0 // pred_check_branch
    %826 = sbr.rel (0) target = $region511
  $region510: #{tpu_custom_call.1} parent=0 // pred_region
    %827 = vsyncadd [#allocation2], 16
  $region511: #{tpu_custom_call.1} parent=0 // pred_fallthru
    _
  %s828 = sadd.s32 %s13, 17
  %s829 = sld [smem:[#allocation4 + %s828]]
  %s830 = scalar_lea.vmem %s1, %s829
  %s831 = scalar_lea.vmem %s2, 17
  %p833 = scmp.lt.u32.totalorder 1, 8
  %p834 = pneg %p833
  // Predicated region
  $region512: #{tpu_custom_call.1} parent=0 // pred_check
    _
  $region513: #{tpu_custom_call.1} parent=0 // pred_check_branch
    %836 = sbr.rel (%p833) target = $region515
  $region514: #{tpu_custom_call.1} parent=0 // pred_region
    %s851 = sand.u32 1, 7
    %p852 = scmp.eq.s32.totalorder %s851, 0
    %p853 = pneg %p852
    // Predicated region
    $region527: #{tpu_custom_call.1} parent=514 // pred_check
      _
    $region528: #{tpu_custom_call.1} parent=514 // pred_check_branch
      %855 = sbr.rel (%p852) target = $region530
    $region529: #{tpu_custom_call.1} parent=514 // pred_region
      %s856 = sand.u32 1, 7
      %s857 = ssub.s32 1, %s856
      %s858 = scalar_lea.vmem %s830, %s857
      %s859 = ssub.s32 1, %s856
      %s860 = scalar_lea.vmem %s831, %s859
      %s861 = sshllo.u32 0, %s856
      loop: start=0, step=1, limit=1
      $region531: #{tpu_custom_call.1} parent=529 // loop_pre_header
        _
      $region532: #{tpu_custom_call.1} parent=529 // loop_header
        %s863 = sphi 0, %s867
        %p864 = scmp.ge.s32.totalorder %s863, 1
        %s868 = sphi %s858, %s858
        %s869 = sphi %s860, %s860
      $region533: #{tpu_custom_call.1} parent=529 // loop_header_branch
        %866 = sbr.rel (%p864) target = $region537
      $region534: #{tpu_custom_call.1} parent=529 // loop_body
        %v870 = vld [vmem:[%s868] sm:%s861]
        %871 = vst [vmem:[%s869] sm:%s861] %v870
      $region535: #{tpu_custom_call.1} parent=529 // loop_footer
        %s867 = sadd.s32 1, %s863
      $region536: #{tpu_custom_call.1} parent=529 // loop_footer_branch
        %862 = sbr.rel target = $region532
      $region537: #{tpu_custom_call.1} parent=529 // loop_exit
        _
    $region530: #{tpu_custom_call.1} parent=514 // pred_fallthru
      _
  $region515: #{tpu_custom_call.1} parent=0 // pred_fallthru
    _
  // Predicated region
  $region516: #{tpu_custom_call.1} parent=0 // pred_check
    %p837 = pneg %p833
  $region517: #{tpu_custom_call.1} parent=0 // pred_check_branch
    %839 = sbr.rel (%p837) target = $region519
  $region518: #{tpu_custom_call.1} parent=0 // pred_region
    %s840 = sshllo.u32 0, 1
    loop: start=0, step=1, limit=1
    $region520: #{tpu_custom_call.1} parent=518 // loop_pre_header
      _
    $region521: #{tpu_custom_call.1} parent=518 // loop_header
      %s842 = sphi 0, %s846
      %p843 = scmp.ge.s32.totalorder %s842, 1
      %s847 = sphi %s830, %s830
      %s848 = sphi %s831, %s831
    $region522: #{tpu_custom_call.1} parent=518 // loop_header_branch
      %845 = sbr.rel (%p843) target = $region526
    $region523: #{tpu_custom_call.1} parent=518 // loop_body
      %v849 = vld [vmem:[%s847] sm:%s840]
      %850 = vst [vmem:[%s848] sm:%s840] %v849
    $region524: #{tpu_custom_call.1} parent=518 // loop_footer
      %s846 = sadd.s32 1, %s842
    $region525: #{tpu_custom_call.1} parent=518 // loop_footer_branch
      %841 = sbr.rel target = $region521
    $region526: #{tpu_custom_call.1} parent=518 // loop_exit
      _
  $region519: #{tpu_custom_call.1} parent=0 // pred_fallthru
    _
  // Predicated region
  $region538: #{tpu_custom_call.1} parent=0 // pred_check
    _
  $region539: #{tpu_custom_call.1} parent=0 // pred_check_branch
    %874 = sbr.rel (0) target = $region541
  $region540: #{tpu_custom_call.1} parent=0 // pred_region
    %875 = vsyncadd [#allocation2], 16
  $region541: #{tpu_custom_call.1} parent=0 // pred_fallthru
    _
  %s876 = sadd.s32 %s13, 18
  %s877 = sld [smem:[#allocation4 + %s876]]
  %s878 = scalar_lea.vmem %s1, %s877
  %s879 = scalar_lea.vmem %s2, 18
  %p881 = scmp.lt.u32.totalorder 1, 8
  %p882 = pneg %p881
  // Predicated region
  $region542: #{tpu_custom_call.1} parent=0 // pred_check
    _
  $region543: #{tpu_custom_call.1} parent=0 // pred_check_branch
    %884 = sbr.rel (%p881) target = $region545
  $region544: #{tpu_custom_call.1} parent=0 // pred_region
    %s899 = sand.u32 1, 7
    %p900 = scmp.eq.s32.totalorder %s899, 0
    %p901 = pneg %p900
    // Predicated region
    $region557: #{tpu_custom_call.1} parent=544 // pred_check
      _
    $region558: #{tpu_custom_call.1} parent=544 // pred_check_branch
      %903 = sbr.rel (%p900) target = $region560
    $region559: #{tpu_custom_call.1} parent=544 // pred_region
      %s904 = sand.u32 1, 7
      %s905 = ssub.s32 1, %s904
      %s906 = scalar_lea.vmem %s878, %s905
      %s907 = ssub.s32 1, %s904
      %s908 = scalar_lea.vmem %s879, %s907
      %s909 = sshllo.u32 0, %s904
      loop: start=0, step=1, limit=1
      $region561: #{tpu_custom_call.1} parent=559 // loop_pre_header
        _
      $region562: #{tpu_custom_call.1} parent=559 // loop_header
        %s911 = sphi 0, %s915
        %p912 = scmp.ge.s32.totalorder %s911, 1
        %s916 = sphi %s906, %s906
        %s917 = sphi %s908, %s908
      $region563: #{tpu_custom_call.1} parent=559 // loop_header_branch
        %914 = sbr.rel (%p912) target = $region567
      $region564: #{tpu_custom_call.1} parent=559 // loop_body
        %v918 = vld [vmem:[%s916] sm:%s909]
        %919 = vst [vmem:[%s917] sm:%s909] %v918
      $region565: #{tpu_custom_call.1} parent=559 // loop_footer
        %s915 = sadd.s32 1, %s911
      $region566: #{tpu_custom_call.1} parent=559 // loop_footer_branch
        %910 = sbr.rel target = $region562
      $region567: #{tpu_custom_call.1} parent=559 // loop_exit
        _
    $region560: #{tpu_custom_call.1} parent=544 // pred_fallthru
      _
  $region545: #{tpu_custom_call.1} parent=0 // pred_fallthru
    _
  // Predicated region
  $region546: #{tpu_custom_call.1} parent=0 // pred_check
    %p885 = pneg %p881
  $region547: #{tpu_custom_call.1} parent=0 // pred_check_branch
    %887 = sbr.rel (%p885) target = $region549
  $region548: #{tpu_custom_call.1} parent=0 // pred_region
    %s888 = sshllo.u32 0, 1
    loop: start=0, step=1, limit=1
    $region550: #{tpu_custom_call.1} parent=548 // loop_pre_header
      _
    $region551: #{tpu_custom_call.1} parent=548 // loop_header
      %s890 = sphi 0, %s894
      %p891 = scmp.ge.s32.totalorder %s890, 1
      %s895 = sphi %s878, %s878
      %s896 = sphi %s879, %s879
    $region552: #{tpu_custom_call.1} parent=548 // loop_header_branch
      %893 = sbr.rel (%p891) target = $region556
    $region553: #{tpu_custom_call.1} parent=548 // loop_body
      %v897 = vld [vmem:[%s895] sm:%s888]
      %898 = vst [vmem:[%s896] sm:%s888] %v897
    $region554: #{tpu_custom_call.1} parent=548 // loop_footer
      %s894 = sadd.s32 1, %s890
    $region555: #{tpu_custom_call.1} parent=548 // loop_footer_branch
      %889 = sbr.rel target = $region551
    $region556: #{tpu_custom_call.1} parent=548 // loop_exit
      _
  $region549: #{tpu_custom_call.1} parent=0 // pred_fallthru
    _
  // Predicated region
  $region568: #{tpu_custom_call.1} parent=0 // pred_check
    _
  $region569: #{tpu_custom_call.1} parent=0 // pred_check_branch
    %922 = sbr.rel (0) target = $region571
  $region570: #{tpu_custom_call.1} parent=0 // pred_region
    %923 = vsyncadd [#allocation2], 16
  $region571: #{tpu_custom_call.1} parent=0 // pred_fallthru
    _
  %s924 = sadd.s32 %s13, 19
  %s925 = sld [smem:[#allocation4 + %s924]]
  %s926 = scalar_lea.vmem %s1, %s925
  %s927 = scalar_lea.vmem %s2, 19
  %p929 = scmp.lt.u32.totalorder 1, 8
  %p930 = pneg %p929
  // Predicated region
  $region572: #{tpu_custom_call.1} parent=0 // pred_check
    _
  $region573: #{tpu_custom_call.1} parent=0 // pred_check_branch
    %932 = sbr.rel (%p929) target = $region575
  $region574: #{tpu_custom_call.1} parent=0 // pred_region
    %s947 = sand.u32 1, 7
    %p948 = scmp.eq.s32.totalorder %s947, 0
    %p949 = pneg %p948
    // Predicated region
    $region587: #{tpu_custom_call.1} parent=574 // pred_check
      _
    $region588: #{tpu_custom_call.1} parent=574 // pred_check_branch
      %951 = sbr.rel (%p948) target = $region590
    $region589: #{tpu_custom_call.1} parent=574 // pred_region
      %s952 = sand.u32 1, 7
      %s953 = ssub.s32 1, %s952
      %s954 = scalar_lea.vmem %s926, %s953
      %s955 = ssub.s32 1, %s952
      %s956 = scalar_lea.vmem %s927, %s955
      %s957 = sshllo.u32 0, %s952
      loop: start=0, step=1, limit=1
      $region591: #{tpu_custom_call.1} parent=589 // loop_pre_header
        _
      $region592: #{tpu_custom_call.1} parent=589 // loop_header
        %s959 = sphi 0, %s963
        %p960 = scmp.ge.s32.totalorder %s959, 1
        %s964 = sphi %s954, %s954
        %s965 = sphi %s956, %s956
      $region593: #{tpu_custom_call.1} parent=589 // loop_header_branch
        %962 = sbr.rel (%p960) target = $region597
      $region594: #{tpu_custom_call.1} parent=589 // loop_body
        %v966 = vld [vmem:[%s964] sm:%s957]
        %967 = vst [vmem:[%s965] sm:%s957] %v966
      $region595: #{tpu_custom_call.1} parent=589 // loop_footer
        %s963 = sadd.s32 1, %s959
      $region596: #{tpu_custom_call.1} parent=589 // loop_footer_branch
        %958 = sbr.rel target = $region592
      $region597: #{tpu_custom_call.1} parent=589 // loop_exit
        _
    $region590: #{tpu_custom_call.1} parent=574 // pred_fallthru
      _
  $region575: #{tpu_custom_call.1} parent=0 // pred_fallthru
    _
  // Predicated region
  $region576: #{tpu_custom_call.1} parent=0 // pred_check
    %p933 = pneg %p929
  $region577: #{tpu_custom_call.1} parent=0 // pred_check_branch
    %935 = sbr.rel (%p933) target = $region579
  $region578: #{tpu_custom_call.1} parent=0 // pred_region
    %s936 = sshllo.u32 0, 1
    loop: start=0, step=1, limit=1
    $region580: #{tpu_custom_call.1} parent=578 // loop_pre_header
      _
    $region581: #{tpu_custom_call.1} parent=578 // loop_header
      %s938 = sphi 0, %s942
      %p939 = scmp.ge.s32.totalorder %s938, 1
      %s943 = sphi %s926, %s926
      %s944 = sphi %s927, %s927
    $region582: #{tpu_custom_call.1} parent=578 // loop_header_branch
      %941 = sbr.rel (%p939) target = $region586
    $region583: #{tpu_custom_call.1} parent=578 // loop_body
      %v945 = vld [vmem:[%s943] sm:%s936]
      %946 = vst [vmem:[%s944] sm:%s936] %v945
    $region584: #{tpu_custom_call.1} parent=578 // loop_footer
      %s942 = sadd.s32 1, %s938
    $region585: #{tpu_custom_call.1} parent=578 // loop_footer_branch
      %937 = sbr.rel target = $region581
    $region586: #{tpu_custom_call.1} parent=578 // loop_exit
      _
  $region579: #{tpu_custom_call.1} parent=0 // pred_fallthru
    _
  // Predicated region
  $region598: #{tpu_custom_call.1} parent=0 // pred_check
    _
  $region599: #{tpu_custom_call.1} parent=0 // pred_check_branch
    %970 = sbr.rel (0) target = $region601
  $region600: #{tpu_custom_call.1} parent=0 // pred_region
    %971 = vsyncadd [#allocation2], 16
  $region601: #{tpu_custom_call.1} parent=0 // pred_fallthru
    _
  %s972 = sadd.s32 %s13, 20
  %s973 = sld [smem:[#allocation4 + %s972]]
  %s974 = scalar_lea.vmem %s1, %s973
  %s975 = scalar_lea.vmem %s2, 20
  %p977 = scmp.lt.u32.totalorder 1, 8
  %p978 = pneg %p977
  // Predicated region
  $region602: #{tpu_custom_call.1} parent=0 // pred_check
    _
  $region603: #{tpu_custom_call.1} parent=0 // pred_check_branch
    %980 = sbr.rel (%p977) target = $region605
  $region604: #{tpu_custom_call.1} parent=0 // pred_region
    %s995 = sand.u32 1, 7
    %p996 = scmp.eq.s32.totalorder %s995, 0
    %p997 = pneg %p996
    // Predicated region
    $region617: #{tpu_custom_call.1} parent=604 // pred_check
      _
    $region618: #{tpu_custom_call.1} parent=604 // pred_check_branch
      %999 = sbr.rel (%p996) target = $region620
    $region619: #{tpu_custom_call.1} parent=604 // pred_region
      %s1000 = sand.u32 1, 7
      %s1001 = ssub.s32 1, %s1000
      %s1002 = scalar_lea.vmem %s974, %s1001
      %s1003 = ssub.s32 1, %s1000
      %s1004 = scalar_lea.vmem %s975, %s1003
      %s1005 = sshllo.u32 0, %s1000
      loop: start=0, step=1, limit=1
      $region621: #{tpu_custom_call.1} parent=619 // loop_pre_header
        _
      $region622: #{tpu_custom_call.1} parent=619 // loop_header
        %s1007 = sphi 0, %s1011
        %p1008 = scmp.ge.s32.totalorder %s1007, 1
        %s1012 = sphi %s1002, %s1002
        %s1013 = sphi %s1004, %s1004
      $region623: #{tpu_custom_call.1} parent=619 // loop_header_branch
        %1010 = sbr.rel (%p1008) target = $region627
      $region624: #{tpu_custom_call.1} parent=619 // loop_body
        %v1014 = vld [vmem:[%s1012] sm:%s1005]
        %1015 = vst [vmem:[%s1013] sm:%s1005] %v1014
      $region625: #{tpu_custom_call.1} parent=619 // loop_footer
        %s1011 = sadd.s32 1, %s1007
      $region626: #{tpu_custom_call.1} parent=619 // loop_footer_branch
        %1006 = sbr.rel target = $region622
      $region627: #{tpu_custom_call.1} parent=619 // loop_exit
        _
    $region620: #{tpu_custom_call.1} parent=604 // pred_fallthru
      _
  $region605: #{tpu_custom_call.1} parent=0 // pred_fallthru
    _
  // Predicated region
  $region606: #{tpu_custom_call.1} parent=0 // pred_check
    %p981 = pneg %p977
  $region607: #{tpu_custom_call.1} parent=0 // pred_check_branch
    %983 = sbr.rel (%p981) target = $region609
  $region608: #{tpu_custom_call.1} parent=0 // pred_region
    %s984 = sshllo.u32 0, 1
    loop: start=0, step=1, limit=1
    $region610: #{tpu_custom_call.1} parent=608 // loop_pre_header
      _
    $region611: #{tpu_custom_call.1} parent=608 // loop_header
      %s986 = sphi 0, %s990
      %p987 = scmp.ge.s32.totalorder %s986, 1
      %s991 = sphi %s974, %s974
      %s992 = sphi %s975, %s975
    $region612: #{tpu_custom_call.1} parent=608 // loop_header_branch
      %989 = sbr.rel (%p987) target = $region616
    $region613: #{tpu_custom_call.1} parent=608 // loop_body
      %v993 = vld [vmem:[%s991] sm:%s984]
      %994 = vst [vmem:[%s992] sm:%s984] %v993
    $region614: #{tpu_custom_call.1} parent=608 // loop_footer
      %s990 = sadd.s32 1, %s986
    $region615: #{tpu_custom_call.1} parent=608 // loop_footer_branch
      %985 = sbr.rel target = $region611
    $region616: #{tpu_custom_call.1} parent=608 // loop_exit
      _
  $region609: #{tpu_custom_call.1} parent=0 // pred_fallthru
    _
  // Predicated region
  $region628: #{tpu_custom_call.1} parent=0 // pred_check
    _
  $region629: #{tpu_custom_call.1} parent=0 // pred_check_branch
    %1018 = sbr.rel (0) target = $region631
  $region630: #{tpu_custom_call.1} parent=0 // pred_region
    %1019 = vsyncadd [#allocation2], 16
  $region631: #{tpu_custom_call.1} parent=0 // pred_fallthru
    _
  %s1020 = sadd.s32 %s13, 21
  %s1021 = sld [smem:[#allocation4 + %s1020]]
  %s1022 = scalar_lea.vmem %s1, %s1021
  %s1023 = scalar_lea.vmem %s2, 21
  %p1025 = scmp.lt.u32.totalorder 1, 8
  %p1026 = pneg %p1025
  // Predicated region
  $region632: #{tpu_custom_call.1} parent=0 // pred_check
    _
  $region633: #{tpu_custom_call.1} parent=0 // pred_check_branch
    %1028 = sbr.rel (%p1025) target = $region635
  $region634: #{tpu_custom_call.1} parent=0 // pred_region
    %s1043 = sand.u32 1, 7
    %p1044 = scmp.eq.s32.totalorder %s1043, 0
    %p1045 = pneg %p1044
    // Predicated region
    $region647: #{tpu_custom_call.1} parent=634 // pred_check
      _
    $region648: #{tpu_custom_call.1} parent=634 // pred_check_branch
      %1047 = sbr.rel (%p1044) target = $region650
    $region649: #{tpu_custom_call.1} parent=634 // pred_region
      %s1048 = sand.u32 1, 7
      %s1049 = ssub.s32 1, %s1048
      %s1050 = scalar_lea.vmem %s1022, %s1049
      %s1051 = ssub.s32 1, %s1048
      %s1052 = scalar_lea.vmem %s1023, %s1051
      %s1053 = sshllo.u32 0, %s1048
      loop: start=0, step=1, limit=1
      $region651: #{tpu_custom_call.1} parent=649 // loop_pre_header
        _
      $region652: #{tpu_custom_call.1} parent=649 // loop_header
        %s1055 = sphi 0, %s1059
        %p1056 = scmp.ge.s32.totalorder %s1055, 1
        %s1060 = sphi %s1050, %s1050
        %s1061 = sphi %s1052, %s1052
      $region653: #{tpu_custom_call.1} parent=649 // loop_header_branch
        %1058 = sbr.rel (%p1056) target = $region657
      $region654: #{tpu_custom_call.1} parent=649 // loop_body
        %v1062 = vld [vmem:[%s1060] sm:%s1053]
        %1063 = vst [vmem:[%s1061] sm:%s1053] %v1062
      $region655: #{tpu_custom_call.1} parent=649 // loop_footer
        %s1059 = sadd.s32 1, %s1055
      $region656: #{tpu_custom_call.1} parent=649 // loop_footer_branch
        %1054 = sbr.rel target = $region652
      $region657: #{tpu_custom_call.1} parent=649 // loop_exit
        _
    $region650: #{tpu_custom_call.1} parent=634 // pred_fallthru
      _
  $region635: #{tpu_custom_call.1} parent=0 // pred_fallthru
    _
  // Predicated region
  $region636: #{tpu_custom_call.1} parent=0 // pred_check
    %p1029 = pneg %p1025
  $region637: #{tpu_custom_call.1} parent=0 // pred_check_branch
    %1031 = sbr.rel (%p1029) target = $region639
  $region638: #{tpu_custom_call.1} parent=0 // pred_region
    %s1032 = sshllo.u32 0, 1
    loop: start=0, step=1, limit=1
    $region640: #{tpu_custom_call.1} parent=638 // loop_pre_header
      _
    $region641: #{tpu_custom_call.1} parent=638 // loop_header
      %s1034 = sphi 0, %s1038
      %p1035 = scmp.ge.s32.totalorder %s1034, 1
      %s1039 = sphi %s1022, %s1022
      %s1040 = sphi %s1023, %s1023
    $region642: #{tpu_custom_call.1} parent=638 // loop_header_branch
      %1037 = sbr.rel (%p1035) target = $region646
    $region643: #{tpu_custom_call.1} parent=638 // loop_body
      %v1041 = vld [vmem:[%s1039] sm:%s1032]
      %1042 = vst [vmem:[%s1040] sm:%s1032] %v1041
    $region644: #{tpu_custom_call.1} parent=638 // loop_footer
      %s1038 = sadd.s32 1, %s1034
    $region645: #{tpu_custom_call.1} parent=638 // loop_footer_branch
      %1033 = sbr.rel target = $region641
    $region646: #{tpu_custom_call.1} parent=638 // loop_exit
      _
  $region639: #{tpu_custom_call.1} parent=0 // pred_fallthru
    _
  // Predicated region
  $region658: #{tpu_custom_call.1} parent=0 // pred_check
    _
  $region659: #{tpu_custom_call.1} parent=0 // pred_check_branch
    %1066 = sbr.rel (0) target = $region661
  $region660: #{tpu_custom_call.1} parent=0 // pred_region
    %1067 = vsyncadd [#allocation2], 16
  $region661: #{tpu_custom_call.1} parent=0 // pred_fallthru
    _
  %s1068 = sadd.s32 %s13, 22
  %s1069 = sld [smem:[#allocation4 + %s1068]]
  %s1070 = scalar_lea.vmem %s1, %s1069
  %s1071 = scalar_lea.vmem %s2, 22
  %p1073 = scmp.lt.u32.totalorder 1, 8
  %p1074 = pneg %p1073
  // Predicated region
  $region662: #{tpu_custom_call.1} parent=0 // pred_check
    _
  $region663: #{tpu_custom_call.1} parent=0 // pred_check_branch
    %1076 = sbr.rel (%p1073) target = $region665
  $region664: #{tpu_custom_call.1} parent=0 // pred_region
    %s1091 = sand.u32 1, 7
    %p1092 = scmp.eq.s32.totalorder %s1091, 0
    %p1093 = pneg %p1092
    // Predicated region
    $region677: #{tpu_custom_call.1} parent=664 // pred_check
      _
    $region678: #{tpu_custom_call.1} parent=664 // pred_check_branch
      %1095 = sbr.rel (%p1092) target = $region680
    $region679: #{tpu_custom_call.1} parent=664 // pred_region
      %s1096 = sand.u32 1, 7
      %s1097 = ssub.s32 1, %s1096
      %s1098 = scalar_lea.vmem %s1070, %s1097
      %s1099 = ssub.s32 1, %s1096
      %s1100 = scalar_lea.vmem %s1071, %s1099
      %s1101 = sshllo.u32 0, %s1096
      loop: start=0, step=1, limit=1
      $region681: #{tpu_custom_call.1} parent=679 // loop_pre_header
        _
      $region682: #{tpu_custom_call.1} parent=679 // loop_header
        %s1103 = sphi 0, %s1107
        %p1104 = scmp.ge.s32.totalorder %s1103, 1
        %s1108 = sphi %s1098, %s1098
        %s1109 = sphi %s1100, %s1100
      $region683: #{tpu_custom_call.1} parent=679 // loop_header_branch
        %1106 = sbr.rel (%p1104) target = $region687
      $region684: #{tpu_custom_call.1} parent=679 // loop_body
        %v1110 = vld [vmem:[%s1108] sm:%s1101]
        %1111 = vst [vmem:[%s1109] sm:%s1101] %v1110
      $region685: #{tpu_custom_call.1} parent=679 // loop_footer
        %s1107 = sadd.s32 1, %s1103
      $region686: #{tpu_custom_call.1} parent=679 // loop_footer_branch
        %1102 = sbr.rel target = $region682
      $region687: #{tpu_custom_call.1} parent=679 // loop_exit
        _
    $region680: #{tpu_custom_call.1} parent=664 // pred_fallthru
      _
  $region665: #{tpu_custom_call.1} parent=0 // pred_fallthru
    _
  // Predicated region
  $region666: #{tpu_custom_call.1} parent=0 // pred_check
    %p1077 = pneg %p1073
  $region667: #{tpu_custom_call.1} parent=0 // pred_check_branch
    %1079 = sbr.rel (%p1077) target = $region669
  $region668: #{tpu_custom_call.1} parent=0 // pred_region
    %s1080 = sshllo.u32 0, 1
    loop: start=0, step=1, limit=1
    $region670: #{tpu_custom_call.1} parent=668 // loop_pre_header
      _
    $region671: #{tpu_custom_call.1} parent=668 // loop_header
      %s1082 = sphi 0, %s1086
      %p1083 = scmp.ge.s32.totalorder %s1082, 1
      %s1087 = sphi %s1070, %s1070
      %s1088 = sphi %s1071, %s1071
    $region672: #{tpu_custom_call.1} parent=668 // loop_header_branch
      %1085 = sbr.rel (%p1083) target = $region676
    $region673: #{tpu_custom_call.1} parent=668 // loop_body
      %v1089 = vld [vmem:[%s1087] sm:%s1080]
      %1090 = vst [vmem:[%s1088] sm:%s1080] %v1089
    $region674: #{tpu_custom_call.1} parent=668 // loop_footer
      %s1086 = sadd.s32 1, %s1082
    $region675: #{tpu_custom_call.1} parent=668 // loop_footer_branch
      %1081 = sbr.rel target = $region671
    $region676: #{tpu_custom_call.1} parent=668 // loop_exit
      _
  $region669: #{tpu_custom_call.1} parent=0 // pred_fallthru
    _
  // Predicated region
  $region688: #{tpu_custom_call.1} parent=0 // pred_check
    _
  $region689: #{tpu_custom_call.1} parent=0 // pred_check_branch
    %1114 = sbr.rel (0) target = $region691
  $region690: #{tpu_custom_call.1} parent=0 // pred_region
    %1115 = vsyncadd [#allocation2], 16
  $region691: #{tpu_custom_call.1} parent=0 // pred_fallthru
    _
  %s1116 = sadd.s32 %s13, 23
  %s1117 = sld [smem:[#allocation4 + %s1116]]
  %s1118 = scalar_lea.vmem %s1, %s1117
  %s1119 = scalar_lea.vmem %s2, 23
  %p1121 = scmp.lt.u32.totalorder 1, 8
  %p1122 = pneg %p1121
  // Predicated region
  $region692: #{tpu_custom_call.1} parent=0 // pred_check
    _
  $region693: #{tpu_custom_call.1} parent=0 // pred_check_branch
    %1124 = sbr.rel (%p1121) target = $region695
  $region694: #{tpu_custom_call.1} parent=0 // pred_region
    %s1139 = sand.u32 1, 7
    %p1140 = scmp.eq.s32.totalorder %s1139, 0
    %p1141 = pneg %p1140
    // Predicated region
    $region707: #{tpu_custom_call.1} parent=694 // pred_check
      _
    $region708: #{tpu_custom_call.1} parent=694 // pred_check_branch
      %1143 = sbr.rel (%p1140) target = $region710
    $region709: #{tpu_custom_call.1} parent=694 // pred_region
      %s1144 = sand.u32 1, 7
      %s1145 = ssub.s32 1, %s1144
      %s1146 = scalar_lea.vmem %s1118, %s1145
      %s1147 = ssub.s32 1, %s1144
      %s1148 = scalar_lea.vmem %s1119, %s1147
      %s1149 = sshllo.u32 0, %s1144
      loop: start=0, step=1, limit=1
      $region711: #{tpu_custom_call.1} parent=709 // loop_pre_header
        _
      $region712: #{tpu_custom_call.1} parent=709 // loop_header
        %s1151 = sphi 0, %s1155
        %p1152 = scmp.ge.s32.totalorder %s1151, 1
        %s1156 = sphi %s1146, %s1146
        %s1157 = sphi %s1148, %s1148
      $region713: #{tpu_custom_call.1} parent=709 // loop_header_branch
        %1154 = sbr.rel (%p1152) target = $region717
      $region714: #{tpu_custom_call.1} parent=709 // loop_body
        %v1158 = vld [vmem:[%s1156] sm:%s1149]
        %1159 = vst [vmem:[%s1157] sm:%s1149] %v1158
      $region715: #{tpu_custom_call.1} parent=709 // loop_footer
        %s1155 = sadd.s32 1, %s1151
      $region716: #{tpu_custom_call.1} parent=709 // loop_footer_branch
        %1150 = sbr.rel target = $region712
      $region717: #{tpu_custom_call.1} parent=709 // loop_exit
        _
    $region710: #{tpu_custom_call.1} parent=694 // pred_fallthru
      _
  $region695: #{tpu_custom_call.1} parent=0 // pred_fallthru
    _
  // Predicated region
  $region696: #{tpu_custom_call.1} parent=0 // pred_check
    %p1125 = pneg %p1121
  $region697: #{tpu_custom_call.1} parent=0 // pred_check_branch
    %1127 = sbr.rel (%p1125) target = $region699
  $region698: #{tpu_custom_call.1} parent=0 // pred_region
    %s1128 = sshllo.u32 0, 1
    loop: start=0, step=1, limit=1
    $region700: #{tpu_custom_call.1} parent=698 // loop_pre_header
      _
    $region701: #{tpu_custom_call.1} parent=698 // loop_header
      %s1130 = sphi 0, %s1134
      %p1131 = scmp.ge.s32.totalorder %s1130, 1
      %s1135 = sphi %s1118, %s1118
      %s1136 = sphi %s1119, %s1119
    $region702: #{tpu_custom_call.1} parent=698 // loop_header_branch
      %1133 = sbr.rel (%p1131) target = $region706
    $region703: #{tpu_custom_call.1} parent=698 // loop_body
      %v1137 = vld [vmem:[%s1135] sm:%s1128]
      %1138 = vst [vmem:[%s1136] sm:%s1128] %v1137
    $region704: #{tpu_custom_call.1} parent=698 // loop_footer
      %s1134 = sadd.s32 1, %s1130
    $region705: #{tpu_custom_call.1} parent=698 // loop_footer_branch
      %1129 = sbr.rel target = $region701
    $region706: #{tpu_custom_call.1} parent=698 // loop_exit
      _
  $region699: #{tpu_custom_call.1} parent=0 // pred_fallthru
    _
  // Predicated region
  $region718: #{tpu_custom_call.1} parent=0 // pred_check
    _
  $region719: #{tpu_custom_call.1} parent=0 // pred_check_branch
    %1162 = sbr.rel (0) target = $region721
  $region720: #{tpu_custom_call.1} parent=0 // pred_region
    %1163 = vsyncadd [#allocation2], 16
  $region721: #{tpu_custom_call.1} parent=0 // pred_fallthru
    _
  %s1164 = sadd.s32 %s13, 24
  %s1165 = sld [smem:[#allocation4 + %s1164]]
  %s1166 = scalar_lea.vmem %s1, %s1165
  %s1167 = scalar_lea.vmem %s2, 24
  %p1169 = scmp.lt.u32.totalorder 1, 8
  %p1170 = pneg %p1169
  // Predicated region
  $region722: #{tpu_custom_call.1} parent=0 // pred_check
    _
  $region723: #{tpu_custom_call.1} parent=0 // pred_check_branch
    %1172 = sbr.rel (%p1169) target = $region725
  $region724: #{tpu_custom_call.1} parent=0 // pred_region
    %s1187 = sand.u32 1, 7
    %p1188 = scmp.eq.s32.totalorder %s1187, 0
    %p1189 = pneg %p1188
    // Predicated region
    $region737: #{tpu_custom_call.1} parent=724 // pred_check
      _
    $region738: #{tpu_custom_call.1} parent=724 // pred_check_branch
      %1191 = sbr.rel (%p1188) target = $region740
    $region739: #{tpu_custom_call.1} parent=724 // pred_region
      %s1192 = sand.u32 1, 7
      %s1193 = ssub.s32 1, %s1192
      %s1194 = scalar_lea.vmem %s1166, %s1193
      %s1195 = ssub.s32 1, %s1192
      %s1196 = scalar_lea.vmem %s1167, %s1195
      %s1197 = sshllo.u32 0, %s1192
      loop: start=0, step=1, limit=1
      $region741: #{tpu_custom_call.1} parent=739 // loop_pre_header
        _
      $region742: #{tpu_custom_call.1} parent=739 // loop_header
        %s1199 = sphi 0, %s1203
        %p1200 = scmp.ge.s32.totalorder %s1199, 1
        %s1204 = sphi %s1194, %s1194
        %s1205 = sphi %s1196, %s1196
      $region743: #{tpu_custom_call.1} parent=739 // loop_header_branch
        %1202 = sbr.rel (%p1200) target = $region747
      $region744: #{tpu_custom_call.1} parent=739 // loop_body
        %v1206 = vld [vmem:[%s1204] sm:%s1197]
        %1207 = vst [vmem:[%s1205] sm:%s1197] %v1206
      $region745: #{tpu_custom_call.1} parent=739 // loop_footer
        %s1203 = sadd.s32 1, %s1199
      $region746: #{tpu_custom_call.1} parent=739 // loop_footer_branch
        %1198 = sbr.rel target = $region742
      $region747: #{tpu_custom_call.1} parent=739 // loop_exit
        _
    $region740: #{tpu_custom_call.1} parent=724 // pred_fallthru
      _
  $region725: #{tpu_custom_call.1} parent=0 // pred_fallthru
    _
  // Predicated region
  $region726: #{tpu_custom_call.1} parent=0 // pred_check
    %p1173 = pneg %p1169
  $region727: #{tpu_custom_call.1} parent=0 // pred_check_branch
    %1175 = sbr.rel (%p1173) target = $region729
  $region728: #{tpu_custom_call.1} parent=0 // pred_region
    %s1176 = sshllo.u32 0, 1
    loop: start=0, step=1, limit=1
    $region730: #{tpu_custom_call.1} parent=728 // loop_pre_header
      _
    $region731: #{tpu_custom_call.1} parent=728 // loop_header
      %s1178 = sphi 0, %s1182
      %p1179 = scmp.ge.s32.totalorder %s1178, 1
      %s1183 = sphi %s1166, %s1166
      %s1184 = sphi %s1167, %s1167
    $region732: #{tpu_custom_call.1} parent=728 // loop_header_branch
      %1181 = sbr.rel (%p1179) target = $region736
    $region733: #{tpu_custom_call.1} parent=728 // loop_body
      %v1185 = vld [vmem:[%s1183] sm:%s1176]
      %1186 = vst [vmem:[%s1184] sm:%s1176] %v1185
    $region734: #{tpu_custom_call.1} parent=728 // loop_footer
      %s1182 = sadd.s32 1, %s1178
    $region735: #{tpu_custom_call.1} parent=728 // loop_footer_branch
      %1177 = sbr.rel target = $region731
    $region736: #{tpu_custom_call.1} parent=728 // loop_exit
      _
  $region729: #{tpu_custom_call.1} parent=0 // pred_fallthru
    _
  // Predicated region
  $region748: #{tpu_custom_call.1} parent=0 // pred_check
    _
  $region749: #{tpu_custom_call.1} parent=0 // pred_check_branch
    %1210 = sbr.rel (0) target = $region751
  $region750: #{tpu_custom_call.1} parent=0 // pred_region
    %1211 = vsyncadd [#allocation2], 16
  $region751: #{tpu_custom_call.1} parent=0 // pred_fallthru
    _
  %s1212 = sadd.s32 %s13, 25
  %s1213 = sld [smem:[#allocation4 + %s1212]]
  %s1214 = scalar_lea.vmem %s1, %s1213
  %s1215 = scalar_lea.vmem %s2, 25
  %p1217 = scmp.lt.u32.totalorder 1, 8
  %p1218 = pneg %p1217
  // Predicated region
  $region752: #{tpu_custom_call.1} parent=0 // pred_check
    _
  $region753: #{tpu_custom_call.1} parent=0 // pred_check_branch
    %1220 = sbr.rel (%p1217) target = $region755
  $region754: #{tpu_custom_call.1} parent=0 // pred_region
    %s1235 = sand.u32 1, 7
    %p1236 = scmp.eq.s32.totalorder %s1235, 0
    %p1237 = pneg %p1236
    // Predicated region
    $region767: #{tpu_custom_call.1} parent=754 // pred_check
      _
    $region768: #{tpu_custom_call.1} parent=754 // pred_check_branch
      %1239 = sbr.rel (%p1236) target = $region770
    $region769: #{tpu_custom_call.1} parent=754 // pred_region
      %s1240 = sand.u32 1, 7
      %s1241 = ssub.s32 1, %s1240
      %s1242 = scalar_lea.vmem %s1214, %s1241
      %s1243 = ssub.s32 1, %s1240
      %s1244 = scalar_lea.vmem %s1215, %s1243
      %s1245 = sshllo.u32 0, %s1240
      loop: start=0, step=1, limit=1
      $region771: #{tpu_custom_call.1} parent=769 // loop_pre_header
        _
      $region772: #{tpu_custom_call.1} parent=769 // loop_header
        %s1247 = sphi 0, %s1251
        %p1248 = scmp.ge.s32.totalorder %s1247, 1
        %s1252 = sphi %s1242, %s1242
        %s1253 = sphi %s1244, %s1244
      $region773: #{tpu_custom_call.1} parent=769 // loop_header_branch
        %1250 = sbr.rel (%p1248) target = $region777
      $region774: #{tpu_custom_call.1} parent=769 // loop_body
        %v1254 = vld [vmem:[%s1252] sm:%s1245]
        %1255 = vst [vmem:[%s1253] sm:%s1245] %v1254
      $region775: #{tpu_custom_call.1} parent=769 // loop_footer
        %s1251 = sadd.s32 1, %s1247
      $region776: #{tpu_custom_call.1} parent=769 // loop_footer_branch
        %1246 = sbr.rel target = $region772
      $region777: #{tpu_custom_call.1} parent=769 // loop_exit
        _
    $region770: #{tpu_custom_call.1} parent=754 // pred_fallthru
      _
  $region755: #{tpu_custom_call.1} parent=0 // pred_fallthru
    _
  // Predicated region
  $region756: #{tpu_custom_call.1} parent=0 // pred_check
    %p1221 = pneg %p1217
  $region757: #{tpu_custom_call.1} parent=0 // pred_check_branch
    %1223 = sbr.rel (%p1221) target = $region759
  $region758: #{tpu_custom_call.1} parent=0 // pred_region
    %s1224 = sshllo.u32 0, 1
    loop: start=0, step=1, limit=1
    $region760: #{tpu_custom_call.1} parent=758 // loop_pre_header
      _
    $region761: #{tpu_custom_call.1} parent=758 // loop_header
      %s1226 = sphi 0, %s1230
      %p1227 = scmp.ge.s32.totalorder %s1226, 1
      %s1231 = sphi %s1214, %s1214
      %s1232 = sphi %s1215, %s1215
    $region762: #{tpu_custom_call.1} parent=758 // loop_header_branch
      %1229 = sbr.rel (%p1227) target = $region766
    $region763: #{tpu_custom_call.1} parent=758 // loop_body
      %v1233 = vld [vmem:[%s1231] sm:%s1224]
      %1234 = vst [vmem:[%s1232] sm:%s1224] %v1233
    $region764: #{tpu_custom_call.1} parent=758 // loop_footer
      %s1230 = sadd.s32 1, %s1226
    $region765: #{tpu_custom_call.1} parent=758 // loop_footer_branch
      %1225 = sbr.rel target = $region761
    $region766: #{tpu_custom_call.1} parent=758 // loop_exit
      _
  $region759: #{tpu_custom_call.1} parent=0 // pred_fallthru
    _
  // Predicated region
  $region778: #{tpu_custom_call.1} parent=0 // pred_check
    _
  $region779: #{tpu_custom_call.1} parent=0 // pred_check_branch
    %1258 = sbr.rel (0) target = $region781
  $region780: #{tpu_custom_call.1} parent=0 // pred_region
    %1259 = vsyncadd [#allocation2], 16
  $region781: #{tpu_custom_call.1} parent=0 // pred_fallthru
    _
  %s1260 = sadd.s32 %s13, 26
  %s1261 = sld [smem:[#allocation4 + %s1260]]
  %s1262 = scalar_lea.vmem %s1, %s1261
  %s1263 = scalar_lea.vmem %s2, 26
  %p1265 = scmp.lt.u32.totalorder 1, 8
  %p1266 = pneg %p1265
  // Predicated region
  $region782: #{tpu_custom_call.1} parent=0 // pred_check
    _
  $region783: #{tpu_custom_call.1} parent=0 // pred_check_branch
    %1268 = sbr.rel (%p1265) target = $region785
  $region784: #{tpu_custom_call.1} parent=0 // pred_region
    %s1283 = sand.u32 1, 7
    %p1284 = scmp.eq.s32.totalorder %s1283, 0
    %p1285 = pneg %p1284
    // Predicated region
    $region797: #{tpu_custom_call.1} parent=784 // pred_check
      _
    $region798: #{tpu_custom_call.1} parent=784 // pred_check_branch
      %1287 = sbr.rel (%p1284) target = $region800
    $region799: #{tpu_custom_call.1} parent=784 // pred_region
      %s1288 = sand.u32 1, 7
      %s1289 = ssub.s32 1, %s1288
      %s1290 = scalar_lea.vmem %s1262, %s1289
      %s1291 = ssub.s32 1, %s1288
      %s1292 = scalar_lea.vmem %s1263, %s1291
      %s1293 = sshllo.u32 0, %s1288
      loop: start=0, step=1, limit=1
      $region801: #{tpu_custom_call.1} parent=799 // loop_pre_header
        _
      $region802: #{tpu_custom_call.1} parent=799 // loop_header
        %s1295 = sphi 0, %s1299
        %p1296 = scmp.ge.s32.totalorder %s1295, 1
        %s1300 = sphi %s1290, %s1290
        %s1301 = sphi %s1292, %s1292
      $region803: #{tpu_custom_call.1} parent=799 // loop_header_branch
        %1298 = sbr.rel (%p1296) target = $region807
      $region804: #{tpu_custom_call.1} parent=799 // loop_body
        %v1302 = vld [vmem:[%s1300] sm:%s1293]
        %1303 = vst [vmem:[%s1301] sm:%s1293] %v1302
      $region805: #{tpu_custom_call.1} parent=799 // loop_footer
        %s1299 = sadd.s32 1, %s1295
      $region806: #{tpu_custom_call.1} parent=799 // loop_footer_branch
        %1294 = sbr.rel target = $region802
      $region807: #{tpu_custom_call.1} parent=799 // loop_exit
        _
    $region800: #{tpu_custom_call.1} parent=784 // pred_fallthru
      _
  $region785: #{tpu_custom_call.1} parent=0 // pred_fallthru
    _
  // Predicated region
  $region786: #{tpu_custom_call.1} parent=0 // pred_check
    %p1269 = pneg %p1265
  $region787: #{tpu_custom_call.1} parent=0 // pred_check_branch
    %1271 = sbr.rel (%p1269) target = $region789
  $region788: #{tpu_custom_call.1} parent=0 // pred_region
    %s1272 = sshllo.u32 0, 1
    loop: start=0, step=1, limit=1
    $region790: #{tpu_custom_call.1} parent=788 // loop_pre_header
      _
    $region791: #{tpu_custom_call.1} parent=788 // loop_header
      %s1274 = sphi 0, %s1278
      %p1275 = scmp.ge.s32.totalorder %s1274, 1
      %s1279 = sphi %s1262, %s1262
      %s1280 = sphi %s1263, %s1263
    $region792: #{tpu_custom_call.1} parent=788 // loop_header_branch
      %1277 = sbr.rel (%p1275) target = $region796
    $region793: #{tpu_custom_call.1} parent=788 // loop_body
      %v1281 = vld [vmem:[%s1279] sm:%s1272]
      %1282 = vst [vmem:[%s1280] sm:%s1272] %v1281
    $region794: #{tpu_custom_call.1} parent=788 // loop_footer
      %s1278 = sadd.s32 1, %s1274
    $region795: #{tpu_custom_call.1} parent=788 // loop_footer_branch
      %1273 = sbr.rel target = $region791
    $region796: #{tpu_custom_call.1} parent=788 // loop_exit
      _
  $region789: #{tpu_custom_call.1} parent=0 // pred_fallthru
    _
  // Predicated region
  $region808: #{tpu_custom_call.1} parent=0 // pred_check
    _
  $region809: #{tpu_custom_call.1} parent=0 // pred_check_branch
    %1306 = sbr.rel (0) target = $region811
  $region810: #{tpu_custom_call.1} parent=0 // pred_region
    %1307 = vsyncadd [#allocation2], 16
  $region811: #{tpu_custom_call.1} parent=0 // pred_fallthru
    _
  %s1308 = sadd.s32 %s13, 27
  %s1309 = sld [smem:[#allocation4 + %s1308]]
  %s1310 = scalar_lea.vmem %s1, %s1309
  %s1311 = scalar_lea.vmem %s2, 27
  %p1313 = scmp.lt.u32.totalorder 1, 8
  %p1314 = pneg %p1313
  // Predicated region
  $region812: #{tpu_custom_call.1} parent=0 // pred_check
    _
  $region813: #{tpu_custom_call.1} parent=0 // pred_check_branch
    %1316 = sbr.rel (%p1313) target = $region815
  $region814: #{tpu_custom_call.1} parent=0 // pred_region
    %s1331 = sand.u32 1, 7
    %p1332 = scmp.eq.s32.totalorder %s1331, 0
    %p1333 = pneg %p1332
    // Predicated region
    $region827: #{tpu_custom_call.1} parent=814 // pred_check
      _
    $region828: #{tpu_custom_call.1} parent=814 // pred_check_branch
      %1335 = sbr.rel (%p1332) target = $region830
    $region829: #{tpu_custom_call.1} parent=814 // pred_region
      %s1336 = sand.u32 1, 7
      %s1337 = ssub.s32 1, %s1336
      %s1338 = scalar_lea.vmem %s1310, %s1337
      %s1339 = ssub.s32 1, %s1336
      %s1340 = scalar_lea.vmem %s1311, %s1339
      %s1341 = sshllo.u32 0, %s1336
      loop: start=0, step=1, limit=1
      $region831: #{tpu_custom_call.1} parent=829 // loop_pre_header
        _
      $region832: #{tpu_custom_call.1} parent=829 // loop_header
        %s1343 = sphi 0, %s1347
        %p1344 = scmp.ge.s32.totalorder %s1343, 1
        %s1348 = sphi %s1338, %s1338
        %s1349 = sphi %s1340, %s1340
      $region833: #{tpu_custom_call.1} parent=829 // loop_header_branch
        %1346 = sbr.rel (%p1344) target = $region837
      $region834: #{tpu_custom_call.1} parent=829 // loop_body
        %v1350 = vld [vmem:[%s1348] sm:%s1341]
        %1351 = vst [vmem:[%s1349] sm:%s1341] %v1350
      $region835: #{tpu_custom_call.1} parent=829 // loop_footer
        %s1347 = sadd.s32 1, %s1343
      $region836: #{tpu_custom_call.1} parent=829 // loop_footer_branch
        %1342 = sbr.rel target = $region832
      $region837: #{tpu_custom_call.1} parent=829 // loop_exit
        _
    $region830: #{tpu_custom_call.1} parent=814 // pred_fallthru
      _
  $region815: #{tpu_custom_call.1} parent=0 // pred_fallthru
    _
  // Predicated region
  $region816: #{tpu_custom_call.1} parent=0 // pred_check
    %p1317 = pneg %p1313
  $region817: #{tpu_custom_call.1} parent=0 // pred_check_branch
    %1319 = sbr.rel (%p1317) target = $region819
  $region818: #{tpu_custom_call.1} parent=0 // pred_region
    %s1320 = sshllo.u32 0, 1
    loop: start=0, step=1, limit=1
    $region820: #{tpu_custom_call.1} parent=818 // loop_pre_header
      _
    $region821: #{tpu_custom_call.1} parent=818 // loop_header
      %s1322 = sphi 0, %s1326
      %p1323 = scmp.ge.s32.totalorder %s1322, 1
      %s1327 = sphi %s1310, %s1310
      %s1328 = sphi %s1311, %s1311
    $region822: #{tpu_custom_call.1} parent=818 // loop_header_branch
      %1325 = sbr.rel (%p1323) target = $region826
    $region823: #{tpu_custom_call.1} parent=818 // loop_body
      %v1329 = vld [vmem:[%s1327] sm:%s1320]
      %1330 = vst [vmem:[%s1328] sm:%s1320] %v1329
    $region824: #{tpu_custom_call.1} parent=818 // loop_footer
      %s1326 = sadd.s32 1, %s1322
    $region825: #{tpu_custom_call.1} parent=818 // loop_footer_branch
      %1321 = sbr.rel target = $region821
    $region826: #{tpu_custom_call.1} parent=818 // loop_exit
      _
  $region819: #{tpu_custom_call.1} parent=0 // pred_fallthru
    _
  // Predicated region
  $region838: #{tpu_custom_call.1} parent=0 // pred_check
    _
  $region839: #{tpu_custom_call.1} parent=0 // pred_check_branch
    %1354 = sbr.rel (0) target = $region841
  $region840: #{tpu_custom_call.1} parent=0 // pred_region
    %1355 = vsyncadd [#allocation2], 16
  $region841: #{tpu_custom_call.1} parent=0 // pred_fallthru
    _
  %s1356 = sadd.s32 %s13, 28
  %s1357 = sld [smem:[#allocation4 + %s1356]]
  %s1358 = scalar_lea.vmem %s1, %s1357
  %s1359 = scalar_lea.vmem %s2, 28
  %p1361 = scmp.lt.u32.totalorder 1, 8
  %p1362 = pneg %p1361
  // Predicated region
  $region842: #{tpu_custom_call.1} parent=0 // pred_check
    _
  $region843: #{tpu_custom_call.1} parent=0 // pred_check_branch
    %1364 = sbr.rel (%p1361) target = $region845
  $region844: #{tpu_custom_call.1} parent=0 // pred_region
    %s1379 = sand.u32 1, 7
    %p1380 = scmp.eq.s32.totalorder %s1379, 0
    %p1381 = pneg %p1380
    // Predicated region
    $region857: #{tpu_custom_call.1} parent=844 // pred_check
      _
    $region858: #{tpu_custom_call.1} parent=844 // pred_check_branch
      %1383 = sbr.rel (%p1380) target = $region860
    $region859: #{tpu_custom_call.1} parent=844 // pred_region
      %s1384 = sand.u32 1, 7
      %s1385 = ssub.s32 1, %s1384
      %s1386 = scalar_lea.vmem %s1358, %s1385
      %s1387 = ssub.s32 1, %s1384
      %s1388 = scalar_lea.vmem %s1359, %s1387
      %s1389 = sshllo.u32 0, %s1384
      loop: start=0, step=1, limit=1
      $region861: #{tpu_custom_call.1} parent=859 // loop_pre_header
        _
      $region862: #{tpu_custom_call.1} parent=859 // loop_header
        %s1391 = sphi 0, %s1395
        %p1392 = scmp.ge.s32.totalorder %s1391, 1
        %s1396 = sphi %s1386, %s1386
        %s1397 = sphi %s1388, %s1388
      $region863: #{tpu_custom_call.1} parent=859 // loop_header_branch
        %1394 = sbr.rel (%p1392) target = $region867
      $region864: #{tpu_custom_call.1} parent=859 // loop_body
        %v1398 = vld [vmem:[%s1396] sm:%s1389]
        %1399 = vst [vmem:[%s1397] sm:%s1389] %v1398
      $region865: #{tpu_custom_call.1} parent=859 // loop_footer
        %s1395 = sadd.s32 1, %s1391
      $region866: #{tpu_custom_call.1} parent=859 // loop_footer_branch
        %1390 = sbr.rel target = $region862
      $region867: #{tpu_custom_call.1} parent=859 // loop_exit
        _
    $region860: #{tpu_custom_call.1} parent=844 // pred_fallthru
      _
  $region845: #{tpu_custom_call.1} parent=0 // pred_fallthru
    _
  // Predicated region
  $region846: #{tpu_custom_call.1} parent=0 // pred_check
    %p1365 = pneg %p1361
  $region847: #{tpu_custom_call.1} parent=0 // pred_check_branch
    %1367 = sbr.rel (%p1365) target = $region849
  $region848: #{tpu_custom_call.1} parent=0 // pred_region
    %s1368 = sshllo.u32 0, 1
    loop: start=0, step=1, limit=1
    $region850: #{tpu_custom_call.1} parent=848 // loop_pre_header
      _
    $region851: #{tpu_custom_call.1} parent=848 // loop_header
      %s1370 = sphi 0, %s1374
      %p1371 = scmp.ge.s32.totalorder %s1370, 1
      %s1375 = sphi %s1358, %s1358
      %s1376 = sphi %s1359, %s1359
    $region852: #{tpu_custom_call.1} parent=848 // loop_header_branch
      %1373 = sbr.rel (%p1371) target = $region856
    $region853: #{tpu_custom_call.1} parent=848 // loop_body
      %v1377 = vld [vmem:[%s1375] sm:%s1368]
      %1378 = vst [vmem:[%s1376] sm:%s1368] %v1377
    $region854: #{tpu_custom_call.1} parent=848 // loop_footer
      %s1374 = sadd.s32 1, %s1370
    $region855: #{tpu_custom_call.1} parent=848 // loop_footer_branch
      %1369 = sbr.rel target = $region851
    $region856: #{tpu_custom_call.1} parent=848 // loop_exit
      _
  $region849: #{tpu_custom_call.1} parent=0 // pred_fallthru
    _
  // Predicated region
  $region868: #{tpu_custom_call.1} parent=0 // pred_check
    _
  $region869: #{tpu_custom_call.1} parent=0 // pred_check_branch
    %1402 = sbr.rel (0) target = $region871
  $region870: #{tpu_custom_call.1} parent=0 // pred_region
    %1403 = vsyncadd [#allocation2], 16
  $region871: #{tpu_custom_call.1} parent=0 // pred_fallthru
    _
  %s1404 = sadd.s32 %s13, 29
  %s1405 = sld [smem:[#allocation4 + %s1404]]
  %s1406 = scalar_lea.vmem %s1, %s1405
  %s1407 = scalar_lea.vmem %s2, 29
  %p1409 = scmp.lt.u32.totalorder 1, 8
  %p1410 = pneg %p1409
  // Predicated region
  $region872: #{tpu_custom_call.1} parent=0 // pred_check
    _
  $region873: #{tpu_custom_call.1} parent=0 // pred_check_branch
    %1412 = sbr.rel (%p1409) target = $region875
  $region874: #{tpu_custom_call.1} parent=0 // pred_region
    %s1427 = sand.u32 1, 7
    %p1428 = scmp.eq.s32.totalorder %s1427, 0
    %p1429 = pneg %p1428
    // Predicated region
    $region887: #{tpu_custom_call.1} parent=874 // pred_check
      _
    $region888: #{tpu_custom_call.1} parent=874 // pred_check_branch
      %1431 = sbr.rel (%p1428) target = $region890
    $region889: #{tpu_custom_call.1} parent=874 // pred_region
      %s1432 = sand.u32 1, 7
      %s1433 = ssub.s32 1, %s1432
      %s1434 = scalar_lea.vmem %s1406, %s1433
      %s1435 = ssub.s32 1, %s1432
      %s1436 = scalar_lea.vmem %s1407, %s1435
      %s1437 = sshllo.u32 0, %s1432
      loop: start=0, step=1, limit=1
      $region891: #{tpu_custom_call.1} parent=889 // loop_pre_header
        _
      $region892: #{tpu_custom_call.1} parent=889 // loop_header
        %s1439 = sphi 0, %s1443
        %p1440 = scmp.ge.s32.totalorder %s1439, 1
        %s1444 = sphi %s1434, %s1434
        %s1445 = sphi %s1436, %s1436
      $region893: #{tpu_custom_call.1} parent=889 // loop_header_branch
        %1442 = sbr.rel (%p1440) target = $region897
      $region894: #{tpu_custom_call.1} parent=889 // loop_body
        %v1446 = vld [vmem:[%s1444] sm:%s1437]
        %1447 = vst [vmem:[%s1445] sm:%s1437] %v1446
      $region895: #{tpu_custom_call.1} parent=889 // loop_footer
        %s1443 = sadd.s32 1, %s1439
      $region896: #{tpu_custom_call.1} parent=889 // loop_footer_branch
        %1438 = sbr.rel target = $region892
      $region897: #{tpu_custom_call.1} parent=889 // loop_exit
        _
    $region890: #{tpu_custom_call.1} parent=874 // pred_fallthru
      _
  $region875: #{tpu_custom_call.1} parent=0 // pred_fallthru
    _
  // Predicated region
  $region876: #{tpu_custom_call.1} parent=0 // pred_check
    %p1413 = pneg %p1409
  $region877: #{tpu_custom_call.1} parent=0 // pred_check_branch
    %1415 = sbr.rel (%p1413) target = $region879
  $region878: #{tpu_custom_call.1} parent=0 // pred_region
    %s1416 = sshllo.u32 0, 1
    loop: start=0, step=1, limit=1
    $region880: #{tpu_custom_call.1} parent=878 // loop_pre_header
      _
    $region881: #{tpu_custom_call.1} parent=878 // loop_header
      %s1418 = sphi 0, %s1422
      %p1419 = scmp.ge.s32.totalorder %s1418, 1
      %s1423 = sphi %s1406, %s1406
      %s1424 = sphi %s1407, %s1407
    $region882: #{tpu_custom_call.1} parent=878 // loop_header_branch
      %1421 = sbr.rel (%p1419) target = $region886
    $region883: #{tpu_custom_call.1} parent=878 // loop_body
      %v1425 = vld [vmem:[%s1423] sm:%s1416]
      %1426 = vst [vmem:[%s1424] sm:%s1416] %v1425
    $region884: #{tpu_custom_call.1} parent=878 // loop_footer
      %s1422 = sadd.s32 1, %s1418
    $region885: #{tpu_custom_call.1} parent=878 // loop_footer_branch
      %1417 = sbr.rel target = $region881
    $region886: #{tpu_custom_call.1} parent=878 // loop_exit
      _
  $region879: #{tpu_custom_call.1} parent=0 // pred_fallthru
    _
  // Predicated region
  $region898: #{tpu_custom_call.1} parent=0 // pred_check
    _
  $region899: #{tpu_custom_call.1} parent=0 // pred_check_branch
    %1450 = sbr.rel (0) target = $region901
  $region900: #{tpu_custom_call.1} parent=0 // pred_region
    %1451 = vsyncadd [#allocation2], 16
  $region901: #{tpu_custom_call.1} parent=0 // pred_fallthru
    _
  %s1452 = sadd.s32 %s13, 30
  %s1453 = sld [smem:[#allocation4 + %s1452]]
  %s1454 = scalar_lea.vmem %s1, %s1453
  %s1455 = scalar_lea.vmem %s2, 30
  %p1457 = scmp.lt.u32.totalorder 1, 8
  %p1458 = pneg %p1457
  // Predicated region
  $region902: #{tpu_custom_call.1} parent=0 // pred_check
    _
  $region903: #{tpu_custom_call.1} parent=0 // pred_check_branch
    %1460 = sbr.rel (%p1457) target = $region905
  $region904: #{tpu_custom_call.1} parent=0 // pred_region
    %s1475 = sand.u32 1, 7
    %p1476 = scmp.eq.s32.totalorder %s1475, 0
    %p1477 = pneg %p1476
    // Predicated region
    $region917: #{tpu_custom_call.1} parent=904 // pred_check
      _
    $region918: #{tpu_custom_call.1} parent=904 // pred_check_branch
      %1479 = sbr.rel (%p1476) target = $region920
    $region919: #{tpu_custom_call.1} parent=904 // pred_region
      %s1480 = sand.u32 1, 7
      %s1481 = ssub.s32 1, %s1480
      %s1482 = scalar_lea.vmem %s1454, %s1481
      %s1483 = ssub.s32 1, %s1480
      %s1484 = scalar_lea.vmem %s1455, %s1483
      %s1485 = sshllo.u32 0, %s1480
      loop: start=0, step=1, limit=1
      $region921: #{tpu_custom_call.1} parent=919 // loop_pre_header
        _
      $region922: #{tpu_custom_call.1} parent=919 // loop_header
        %s1487 = sphi 0, %s1491
        %p1488 = scmp.ge.s32.totalorder %s1487, 1
        %s1492 = sphi %s1482, %s1482
        %s1493 = sphi %s1484, %s1484
      $region923: #{tpu_custom_call.1} parent=919 // loop_header_branch
        %1490 = sbr.rel (%p1488) target = $region927
      $region924: #{tpu_custom_call.1} parent=919 // loop_body
        %v1494 = vld [vmem:[%s1492] sm:%s1485]
        %1495 = vst [vmem:[%s1493] sm:%s1485] %v1494
      $region925: #{tpu_custom_call.1} parent=919 // loop_footer
        %s1491 = sadd.s32 1, %s1487
      $region926: #{tpu_custom_call.1} parent=919 // loop_footer_branch
        %1486 = sbr.rel target = $region922
      $region927: #{tpu_custom_call.1} parent=919 // loop_exit
        _
    $region920: #{tpu_custom_call.1} parent=904 // pred_fallthru
      _
  $region905: #{tpu_custom_call.1} parent=0 // pred_fallthru
    _
  // Predicated region
  $region906: #{tpu_custom_call.1} parent=0 // pred_check
    %p1461 = pneg %p1457
  $region907: #{tpu_custom_call.1} parent=0 // pred_check_branch
    %1463 = sbr.rel (%p1461) target = $region909
  $region908: #{tpu_custom_call.1} parent=0 // pred_region
    %s1464 = sshllo.u32 0, 1
    loop: start=0, step=1, limit=1
    $region910: #{tpu_custom_call.1} parent=908 // loop_pre_header
      _
    $region911: #{tpu_custom_call.1} parent=908 // loop_header
      %s1466 = sphi 0, %s1470
      %p1467 = scmp.ge.s32.totalorder %s1466, 1
      %s1471 = sphi %s1454, %s1454
      %s1472 = sphi %s1455, %s1455
    $region912: #{tpu_custom_call.1} parent=908 // loop_header_branch
      %1469 = sbr.rel (%p1467) target = $region916
    $region913: #{tpu_custom_call.1} parent=908 // loop_body
      %v1473 = vld [vmem:[%s1471] sm:%s1464]
      %1474 = vst [vmem:[%s1472] sm:%s1464] %v1473
    $region914: #{tpu_custom_call.1} parent=908 // loop_footer
      %s1470 = sadd.s32 1, %s1466
    $region915: #{tpu_custom_call.1} parent=908 // loop_footer_branch
      %1465 = sbr.rel target = $region911
    $region916: #{tpu_custom_call.1} parent=908 // loop_exit
      _
  $region909: #{tpu_custom_call.1} parent=0 // pred_fallthru
    _
  // Predicated region
  $region928: #{tpu_custom_call.1} parent=0 // pred_check
    _
  $region929: #{tpu_custom_call.1} parent=0 // pred_check_branch
    %1498 = sbr.rel (0) target = $region931
  $region930: #{tpu_custom_call.1} parent=0 // pred_region
    %1499 = vsyncadd [#allocation2], 16
  $region931: #{tpu_custom_call.1} parent=0 // pred_fallthru
    _
  %s1500 = sadd.s32 %s13, 31
  %s1501 = sld [smem:[#allocation4 + %s1500]]
  %s1502 = scalar_lea.vmem %s1, %s1501
  %s1503 = scalar_lea.vmem %s2, 31
  %p1505 = scmp.lt.u32.totalorder 1, 8
  %p1506 = pneg %p1505
  // Predicated region
  $region932: #{tpu_custom_call.1} parent=0 // pred_check
    _
  $region933: #{tpu_custom_call.1} parent=0 // pred_check_branch
    %1508 = sbr.rel (%p1505) target = $region935
  $region934: #{tpu_custom_call.1} parent=0 // pred_region
    %s1523 = sand.u32 1, 7
    %p1524 = scmp.eq.s32.totalorder %s1523, 0
    %p1525 = pneg %p1524
    // Predicated region
    $region947: #{tpu_custom_call.1} parent=934 // pred_check
      _
    $region948: #{tpu_custom_call.1} parent=934 // pred_check_branch
      %1527 = sbr.rel (%p1524) target = $region950
    $region949: #{tpu_custom_call.1} parent=934 // pred_region
      %s1528 = sand.u32 1, 7
      %s1529 = ssub.s32 1, %s1528
      %s1530 = scalar_lea.vmem %s1502, %s1529
      %s1531 = ssub.s32 1, %s1528
      %s1532 = scalar_lea.vmem %s1503, %s1531
      %s1533 = sshllo.u32 0, %s1528
      loop: start=0, step=1, limit=1
      $region951: #{tpu_custom_call.1} parent=949 // loop_pre_header
        _
      $region952: #{tpu_custom_call.1} parent=949 // loop_header
        %s1535 = sphi 0, %s1539
        %p1536 = scmp.ge.s32.totalorder %s1535, 1
        %s1540 = sphi %s1530, %s1530
        %s1541 = sphi %s1532, %s1532
      $region953: #{tpu_custom_call.1} parent=949 // loop_header_branch
        %1538 = sbr.rel (%p1536) target = $region957
      $region954: #{tpu_custom_call.1} parent=949 // loop_body
        %v1542 = vld [vmem:[%s1540] sm:%s1533]
        %1543 = vst [vmem:[%s1541] sm:%s1533] %v1542
      $region955: #{tpu_custom_call.1} parent=949 // loop_footer
        %s1539 = sadd.s32 1, %s1535
      $region956: #{tpu_custom_call.1} parent=949 // loop_footer_branch
        %1534 = sbr.rel target = $region952
      $region957: #{tpu_custom_call.1} parent=949 // loop_exit
        _
    $region950: #{tpu_custom_call.1} parent=934 // pred_fallthru
      _
  $region935: #{tpu_custom_call.1} parent=0 // pred_fallthru
    _
  // Predicated region
  $region936: #{tpu_custom_call.1} parent=0 // pred_check
    %p1509 = pneg %p1505
  $region937: #{tpu_custom_call.1} parent=0 // pred_check_branch
    %1511 = sbr.rel (%p1509) target = $region939
  $region938: #{tpu_custom_call.1} parent=0 // pred_region
    %s1512 = sshllo.u32 0, 1
    loop: start=0, step=1, limit=1
    $region940: #{tpu_custom_call.1} parent=938 // loop_pre_header
      _
    $region941: #{tpu_custom_call.1} parent=938 // loop_header
      %s1514 = sphi 0, %s1518
      %p1515 = scmp.ge.s32.totalorder %s1514, 1
      %s1519 = sphi %s1502, %s1502
      %s1520 = sphi %s1503, %s1503
    $region942: #{tpu_custom_call.1} parent=938 // loop_header_branch
      %1517 = sbr.rel (%p1515) target = $region946
    $region943: #{tpu_custom_call.1} parent=938 // loop_body
      %v1521 = vld [vmem:[%s1519] sm:%s1512]
      %1522 = vst [vmem:[%s1520] sm:%s1512] %v1521
    $region944: #{tpu_custom_call.1} parent=938 // loop_footer
      %s1518 = sadd.s32 1, %s1514
    $region945: #{tpu_custom_call.1} parent=938 // loop_footer_branch
      %1513 = sbr.rel target = $region941
    $region946: #{tpu_custom_call.1} parent=938 // loop_exit
      _
  $region939: #{tpu_custom_call.1} parent=0 // pred_fallthru
    _
  // Predicated region
  $region958: #{tpu_custom_call.1} parent=0 // pred_check
    _
  $region959: #{tpu_custom_call.1} parent=0 // pred_check_branch
    %1546 = sbr.rel (0) target = $region961
  $region960: #{tpu_custom_call.1} parent=0 // pred_region
    %1547 = vsyncadd [#allocation2], 16
  $region961: #{tpu_custom_call.1} parent=0 // pred_fallthru
    _
  %s1548 = sadd.s32 %s13, 32
  %s1549 = sld [smem:[#allocation4 + %s1548]]
  %s1550 = scalar_lea.vmem %s1, %s1549
  %s1551 = scalar_lea.vmem %s2, 32
  %p1553 = scmp.lt.u32.totalorder 1, 8
  %p1554 = pneg %p1553
  // Predicated region
  $region962: #{tpu_custom_call.1} parent=0 // pred_check
    _
  $region963: #{tpu_custom_call.1} parent=0 // pred_check_branch
    %1556 = sbr.rel (%p1553) target = $region965
  $region964: #{tpu_custom_call.1} parent=0 // pred_region
    %s1571 = sand.u32 1, 7
    %p1572 = scmp.eq.s32.totalorder %s1571, 0
    %p1573 = pneg %p1572
    // Predicated region
    $region977: #{tpu_custom_call.1} parent=964 // pred_check
      _
    $region978: #{tpu_custom_call.1} parent=964 // pred_check_branch
      %1575 = sbr.rel (%p1572) target = $region980
    $region979: #{tpu_custom_call.1} parent=964 // pred_region
      %s1576 = sand.u32 1, 7
      %s1577 = ssub.s32 1, %s1576
      %s1578 = scalar_lea.vmem %s1550, %s1577
      %s1579 = ssub.s32 1, %s1576
      %s1580 = scalar_lea.vmem %s1551, %s1579
      %s1581 = sshllo.u32 0, %s1576
      loop: start=0, step=1, limit=1
      $region981: #{tpu_custom_call.1} parent=979 // loop_pre_header
        _
      $region982: #{tpu_custom_call.1} parent=979 // loop_header
        %s1583 = sphi 0, %s1587
        %p1584 = scmp.ge.s32.totalorder %s1583, 1
        %s1588 = sphi %s1578, %s1578
        %s1589 = sphi %s1580, %s1580
      $region983: #{tpu_custom_call.1} parent=979 // loop_header_branch
        %1586 = sbr.rel (%p1584) target = $region987
      $region984: #{tpu_custom_call.1} parent=979 // loop_body
        %v1590 = vld [vmem:[%s1588] sm:%s1581]
        %1591 = vst [vmem:[%s1589] sm:%s1581] %v1590
      $region985: #{tpu_custom_call.1} parent=979 // loop_footer
        %s1587 = sadd.s32 1, %s1583
      $region986: #{tpu_custom_call.1} parent=979 // loop_footer_branch
        %1582 = sbr.rel target = $region982
      $region987: #{tpu_custom_call.1} parent=979 // loop_exit
        _
    $region980: #{tpu_custom_call.1} parent=964 // pred_fallthru
      _
  $region965: #{tpu_custom_call.1} parent=0 // pred_fallthru
    _
  // Predicated region
  $region966: #{tpu_custom_call.1} parent=0 // pred_check
    %p1557 = pneg %p1553
  $region967: #{tpu_custom_call.1} parent=0 // pred_check_branch
    %1559 = sbr.rel (%p1557) target = $region969
  $region968: #{tpu_custom_call.1} parent=0 // pred_region
    %s1560 = sshllo.u32 0, 1
    loop: start=0, step=1, limit=1
    $region970: #{tpu_custom_call.1} parent=968 // loop_pre_header
      _
    $region971: #{tpu_custom_call.1} parent=968 // loop_header
      %s1562 = sphi 0, %s1566
      %p1563 = scmp.ge.s32.totalorder %s1562, 1
      %s1567 = sphi %s1550, %s1550
      %s1568 = sphi %s1551, %s1551
    $region972: #{tpu_custom_call.1} parent=968 // loop_header_branch
      %1565 = sbr.rel (%p1563) target = $region976
    $region973: #{tpu_custom_call.1} parent=968 // loop_body
      %v1569 = vld [vmem:[%s1567] sm:%s1560]
      %1570 = vst [vmem:[%s1568] sm:%s1560] %v1569
    $region974: #{tpu_custom_call.1} parent=968 // loop_footer
      %s1566 = sadd.s32 1, %s1562
    $region975: #{tpu_custom_call.1} parent=968 // loop_footer_branch
      %1561 = sbr.rel target = $region971
    $region976: #{tpu_custom_call.1} parent=968 // loop_exit
      _
  $region969: #{tpu_custom_call.1} parent=0 // pred_fallthru
    _
  // Predicated region
  $region988: #{tpu_custom_call.1} parent=0 // pred_check
    _
  $region989: #{tpu_custom_call.1} parent=0 // pred_check_branch
    %1594 = sbr.rel (0) target = $region991
  $region990: #{tpu_custom_call.1} parent=0 // pred_region
    %1595 = vsyncadd [#allocation2], 16
  $region991: #{tpu_custom_call.1} parent=0 // pred_fallthru
    _
  %s1596 = sadd.s32 %s13, 33
  %s1597 = sld [smem:[#allocation4 + %s1596]]
  %s1598 = scalar_lea.vmem %s1, %s1597
  %s1599 = scalar_lea.vmem %s2, 33
  %p1601 = scmp.lt.u32.totalorder 1, 8
  %p1602 = pneg %p1601
  // Predicated region
  $region992: #{tpu_custom_call.1} parent=0 // pred_check
    _
  $region993: #{tpu_custom_call.1} parent=0 // pred_check_branch
    %1604 = sbr.rel (%p1601) target = $region995
  $region994: #{tpu_custom_call.1} parent=0 // pred_region
    %s1619 = sand.u32 1, 7
    %p1620 = scmp.eq.s32.totalorder %s1619, 0
    %p1621 = pneg %p1620
    // Predicated region
    $region1007: #{tpu_custom_call.1} parent=994 // pred_check
      _
    $region1008: #{tpu_custom_call.1} parent=994 // pred_check_branch
      %1623 = sbr.rel (%p1620) target = $region1010
    $region1009: #{tpu_custom_call.1} parent=994 // pred_region
      %s1624 = sand.u32 1, 7
      %s1625 = ssub.s32 1, %s1624
      %s1626 = scalar_lea.vmem %s1598, %s1625
      %s1627 = ssub.s32 1, %s1624
      %s1628 = scalar_lea.vmem %s1599, %s1627
      %s1629 = sshllo.u32 0, %s1624
      loop: start=0, step=1, limit=1
      $region1011: #{tpu_custom_call.1} parent=1009 // loop_pre_header
        _
      $region1012: #{tpu_custom_call.1} parent=1009 // loop_header
        %s1631 = sphi 0, %s1635
        %p1632 = scmp.ge.s32.totalorder %s1631, 1
        %s1636 = sphi %s1626, %s1626
        %s1637 = sphi %s1628, %s1628
      $region1013: #{tpu_custom_call.1} parent=1009 // loop_header_branch
        %1634 = sbr.rel (%p1632) target = $region1017
      $region1014: #{tpu_custom_call.1} parent=1009 // loop_body
        %v1638 = vld [vmem:[%s1636] sm:%s1629]
        %1639 = vst [vmem:[%s1637] sm:%s1629] %v1638
      $region1015: #{tpu_custom_call.1} parent=1009 // loop_footer
        %s1635 = sadd.s32 1, %s1631
      $region1016: #{tpu_custom_call.1} parent=1009 // loop_footer_branch
        %1630 = sbr.rel target = $region1012
      $region1017: #{tpu_custom_call.1} parent=1009 // loop_exit
        _
    $region1010: #{tpu_custom_call.1} parent=994 // pred_fallthru
      _
  $region995: #{tpu_custom_call.1} parent=0 // pred_fallthru
    _
  // Predicated region
  $region996: #{tpu_custom_call.1} parent=0 // pred_check
    %p1605 = pneg %p1601
  $region997: #{tpu_custom_call.1} parent=0 // pred_check_branch
    %1607 = sbr.rel (%p1605) target = $region999
  $region998: #{tpu_custom_call.1} parent=0 // pred_region
    %s1608 = sshllo.u32 0, 1
    loop: start=0, step=1, limit=1
    $region1000: #{tpu_custom_call.1} parent=998 // loop_pre_header
      _
    $region1001: #{tpu_custom_call.1} parent=998 // loop_header
      %s1610 = sphi 0, %s1614
      %p1611 = scmp.ge.s32.totalorder %s1610, 1
      %s1615 = sphi %s1598, %s1598
      %s1616 = sphi %s1599, %s1599
    $region1002: #{tpu_custom_call.1} parent=998 // loop_header_branch
      %1613 = sbr.rel (%p1611) target = $region1006
    $region1003: #{tpu_custom_call.1} parent=998 // loop_body
      %v1617 = vld [vmem:[%s1615] sm:%s1608]
      %1618 = vst [vmem:[%s1616] sm:%s1608] %v1617
    $region1004: #{tpu_custom_call.1} parent=998 // loop_footer
      %s1614 = sadd.s32 1, %s1610
    $region1005: #{tpu_custom_call.1} parent=998 // loop_footer_branch
      %1609 = sbr.rel target = $region1001
    $region1006: #{tpu_custom_call.1} parent=998 // loop_exit
      _
  $region999: #{tpu_custom_call.1} parent=0 // pred_fallthru
    _
  // Predicated region
  $region1018: #{tpu_custom_call.1} parent=0 // pred_check
    _
  $region1019: #{tpu_custom_call.1} parent=0 // pred_check_branch
    %1642 = sbr.rel (0) target = $region1021
  $region1020: #{tpu_custom_call.1} parent=0 // pred_region
    %1643 = vsyncadd [#allocation2], 16
  $region1021: #{tpu_custom_call.1} parent=0 // pred_fallthru
    _
  %s1644 = sadd.s32 %s13, 34
  %s1645 = sld [smem:[#allocation4 + %s1644]]
  %s1646 = scalar_lea.vmem %s1, %s1645
  %s1647 = scalar_lea.vmem %s2, 34
  %p1649 = scmp.lt.u32.totalorder 1, 8
  %p1650 = pneg %p1649
  // Predicated region
  $region1022: #{tpu_custom_call.1} parent=0 // pred_check
    _
  $region1023: #{tpu_custom_call.1} parent=0 // pred_check_branch
    %1652 = sbr.rel (%p1649) target = $region1025
  $region1024: #{tpu_custom_call.1} parent=0 // pred_region
    %s1667 = sand.u32 1, 7
    %p1668 = scmp.eq.s32.totalorder %s1667, 0
    %p1669 = pneg %p1668
    // Predicated region
    $region1037: #{tpu_custom_call.1} parent=1024 // pred_check
      _
    $region1038: #{tpu_custom_call.1} parent=1024 // pred_check_branch
      %1671 = sbr.rel (%p1668) target = $region1040
    $region1039: #{tpu_custom_call.1} parent=1024 // pred_region
      %s1672 = sand.u32 1, 7
      %s1673 = ssub.s32 1, %s1672
      %s1674 = scalar_lea.vmem %s1646, %s1673
      %s1675 = ssub.s32 1, %s1672
      %s1676 = scalar_lea.vmem %s1647, %s1675
      %s1677 = sshllo.u32 0, %s1672
      loop: start=0, step=1, limit=1
      $region1041: #{tpu_custom_call.1} parent=1039 // loop_pre_header
        _
      $region1042: #{tpu_custom_call.1} parent=1039 // loop_header
        %s1679 = sphi 0, %s1683
        %p1680 = scmp.ge.s32.totalorder %s1679, 1
        %s1684 = sphi %s1674, %s1674
        %s1685 = sphi %s1676, %s1676
      $region1043: #{tpu_custom_call.1} parent=1039 // loop_header_branch
        %1682 = sbr.rel (%p1680) target = $region1047
      $region1044: #{tpu_custom_call.1} parent=1039 // loop_body
        %v1686 = vld [vmem:[%s1684] sm:%s1677]
        %1687 = vst [vmem:[%s1685] sm:%s1677] %v1686
      $region1045: #{tpu_custom_call.1} parent=1039 // loop_footer
        %s1683 = sadd.s32 1, %s1679
      $region1046: #{tpu_custom_call.1} parent=1039 // loop_footer_branch
        %1678 = sbr.rel target = $region1042
      $region1047: #{tpu_custom_call.1} parent=1039 // loop_exit
        _
    $region1040: #{tpu_custom_call.1} parent=1024 // pred_fallthru
      _
  $region1025: #{tpu_custom_call.1} parent=0 // pred_fallthru
    _
  // Predicated region
  $region1026: #{tpu_custom_call.1} parent=0 // pred_check
    %p1653 = pneg %p1649
  $region1027: #{tpu_custom_call.1} parent=0 // pred_check_branch
    %1655 = sbr.rel (%p1653) target = $region1029
  $region1028: #{tpu_custom_call.1} parent=0 // pred_region
    %s1656 = sshllo.u32 0, 1
    loop: start=0, step=1, limit=1
    $region1030: #{tpu_custom_call.1} parent=1028 // loop_pre_header
      _
    $region1031: #{tpu_custom_call.1} parent=1028 // loop_header
      %s1658 = sphi 0, %s1662
      %p1659 = scmp.ge.s32.totalorder %s1658, 1
      %s1663 = sphi %s1646, %s1646
      %s1664 = sphi %s1647, %s1647
    $region1032: #{tpu_custom_call.1} parent=1028 // loop_header_branch
      %1661 = sbr.rel (%p1659) target = $region1036
    $region1033: #{tpu_custom_call.1} parent=1028 // loop_body
      %v1665 = vld [vmem:[%s1663] sm:%s1656]
      %1666 = vst [vmem:[%s1664] sm:%s1656] %v1665
    $region1034: #{tpu_custom_call.1} parent=1028 // loop_footer
      %s1662 = sadd.s32 1, %s1658
    $region1035: #{tpu_custom_call.1} parent=1028 // loop_footer_branch
      %1657 = sbr.rel target = $region1031
    $region1036: #{tpu_custom_call.1} parent=1028 // loop_exit
      _
  $region1029: #{tpu_custom_call.1} parent=0 // pred_fallthru
    _
  // Predicated region
  $region1048: #{tpu_custom_call.1} parent=0 // pred_check
    _
  $region1049: #{tpu_custom_call.1} parent=0 // pred_check_branch
    %1690 = sbr.rel (0) target = $region1051
  $region1050: #{tpu_custom_call.1} parent=0 // pred_region
    %1691 = vsyncadd [#allocation2], 16
  $region1051: #{tpu_custom_call.1} parent=0 // pred_fallthru
    _
  %s1692 = sadd.s32 %s13, 35
  %s1693 = sld [smem:[#allocation4 + %s1692]]
  %s1694 = scalar_lea.vmem %s1, %s1693
  %s1695 = scalar_lea.vmem %s2, 35
  %p1697 = scmp.lt.u32.totalorder 1, 8
  %p1698 = pneg %p1697
  // Predicated region
  $region1052: #{tpu_custom_call.1} parent=0 // pred_check
    _
  $region1053: #{tpu_custom_call.1} parent=0 // pred_check_branch
    %1700 = sbr.rel (%p1697) target = $region1055
  $region1054: #{tpu_custom_call.1} parent=0 // pred_region
    %s1715 = sand.u32 1, 7
    %p1716 = scmp.eq.s32.totalorder %s1715, 0
    %p1717 = pneg %p1716
    // Predicated region
    $region1067: #{tpu_custom_call.1} parent=1054 // pred_check
      _
    $region1068: #{tpu_custom_call.1} parent=1054 // pred_check_branch
      %1719 = sbr.rel (%p1716) target = $region1070
    $region1069: #{tpu_custom_call.1} parent=1054 // pred_region
      %s1720 = sand.u32 1, 7
      %s1721 = ssub.s32 1, %s1720
      %s1722 = scalar_lea.vmem %s1694, %s1721
      %s1723 = ssub.s32 1, %s1720
      %s1724 = scalar_lea.vmem %s1695, %s1723
      %s1725 = sshllo.u32 0, %s1720
      loop: start=0, step=1, limit=1
      $region1071: #{tpu_custom_call.1} parent=1069 // loop_pre_header
        _
      $region1072: #{tpu_custom_call.1} parent=1069 // loop_header
        %s1727 = sphi 0, %s1731
        %p1728 = scmp.ge.s32.totalorder %s1727, 1
        %s1732 = sphi %s1722, %s1722
        %s1733 = sphi %s1724, %s1724
      $region1073: #{tpu_custom_call.1} parent=1069 // loop_header_branch
        %1730 = sbr.rel (%p1728) target = $region1077
      $region1074: #{tpu_custom_call.1} parent=1069 // loop_body
        %v1734 = vld [vmem:[%s1732] sm:%s1725]
        %1735 = vst [vmem:[%s1733] sm:%s1725] %v1734
      $region1075: #{tpu_custom_call.1} parent=1069 // loop_footer
        %s1731 = sadd.s32 1, %s1727
      $region1076: #{tpu_custom_call.1} parent=1069 // loop_footer_branch
        %1726 = sbr.rel target = $region1072
      $region1077: #{tpu_custom_call.1} parent=1069 // loop_exit
        _
    $region1070: #{tpu_custom_call.1} parent=1054 // pred_fallthru
      _
  $region1055: #{tpu_custom_call.1} parent=0 // pred_fallthru
    _
  // Predicated region
  $region1056: #{tpu_custom_call.1} parent=0 // pred_check
    %p1701 = pneg %p1697
  $region1057: #{tpu_custom_call.1} parent=0 // pred_check_branch
    %1703 = sbr.rel (%p1701) target = $region1059
  $region1058: #{tpu_custom_call.1} parent=0 // pred_region
    %s1704 = sshllo.u32 0, 1
    loop: start=0, step=1, limit=1
    $region1060: #{tpu_custom_call.1} parent=1058 // loop_pre_header
      _
    $region1061: #{tpu_custom_call.1} parent=1058 // loop_header
      %s1706 = sphi 0, %s1710
      %p1707 = scmp.ge.s32.totalorder %s1706, 1
      %s1711 = sphi %s1694, %s1694
      %s1712 = sphi %s1695, %s1695
    $region1062: #{tpu_custom_call.1} parent=1058 // loop_header_branch
      %1709 = sbr.rel (%p1707) target = $region1066
    $region1063: #{tpu_custom_call.1} parent=1058 // loop_body
      %v1713 = vld [vmem:[%s1711] sm:%s1704]
      %1714 = vst [vmem:[%s1712] sm:%s1704] %v1713
    $region1064: #{tpu_custom_call.1} parent=1058 // loop_footer
      %s1710 = sadd.s32 1, %s1706
    $region1065: #{tpu_custom_call.1} parent=1058 // loop_footer_branch
      %1705 = sbr.rel target = $region1061
    $region1066: #{tpu_custom_call.1} parent=1058 // loop_exit
      _
  $region1059: #{tpu_custom_call.1} parent=0 // pred_fallthru
    _
  // Predicated region
  $region1078: #{tpu_custom_call.1} parent=0 // pred_check
    _
  $region1079: #{tpu_custom_call.1} parent=0 // pred_check_branch
    %1738 = sbr.rel (0) target = $region1081
  $region1080: #{tpu_custom_call.1} parent=0 // pred_region
    %1739 = vsyncadd [#allocation2], 16
  $region1081: #{tpu_custom_call.1} parent=0 // pred_fallthru
    _
  %s1740 = sadd.s32 %s13, 36
  %s1741 = sld [smem:[#allocation4 + %s1740]]
  %s1742 = scalar_lea.vmem %s1, %s1741
  %s1743 = scalar_lea.vmem %s2, 36
  %p1745 = scmp.lt.u32.totalorder 1, 8
  %p1746 = pneg %p1745
  // Predicated region
  $region1082: #{tpu_custom_call.1} parent=0 // pred_check
    _
  $region1083: #{tpu_custom_call.1} parent=0 // pred_check_branch
    %1748 = sbr.rel (%p1745) target = $region1085
  $region1084: #{tpu_custom_call.1} parent=0 // pred_region
    %s1763 = sand.u32 1, 7
    %p1764 = scmp.eq.s32.totalorder %s1763, 0
    %p1765 = pneg %p1764
    // Predicated region
    $region1097: #{tpu_custom_call.1} parent=1084 // pred_check
      _
    $region1098: #{tpu_custom_call.1} parent=1084 // pred_check_branch
      %1767 = sbr.rel (%p1764) target = $region1100
    $region1099: #{tpu_custom_call.1} parent=1084 // pred_region
      %s1768 = sand.u32 1, 7
      %s1769 = ssub.s32 1, %s1768
      %s1770 = scalar_lea.vmem %s1742, %s1769
      %s1771 = ssub.s32 1, %s1768
      %s1772 = scalar_lea.vmem %s1743, %s1771
      %s1773 = sshllo.u32 0, %s1768
      loop: start=0, step=1, limit=1
      $region1101: #{tpu_custom_call.1} parent=1099 // loop_pre_header
        _
      $region1102: #{tpu_custom_call.1} parent=1099 // loop_header
        %s1775 = sphi 0, %s1779
        %p1776 = scmp.ge.s32.totalorder %s1775, 1
        %s1780 = sphi %s1770, %s1770
        %s1781 = sphi %s1772, %s1772
      $region1103: #{tpu_custom_call.1} parent=1099 // loop_header_branch
        %1778 = sbr.rel (%p1776) target = $region1107
      $region1104: #{tpu_custom_call.1} parent=1099 // loop_body
        %v1782 = vld [vmem:[%s1780] sm:%s1773]
        %1783 = vst [vmem:[%s1781] sm:%s1773] %v1782
      $region1105: #{tpu_custom_call.1} parent=1099 // loop_footer
        %s1779 = sadd.s32 1, %s1775
      $region1106: #{tpu_custom_call.1} parent=1099 // loop_footer_branch
        %1774 = sbr.rel target = $region1102
      $region1107: #{tpu_custom_call.1} parent=1099 // loop_exit
        _
    $region1100: #{tpu_custom_call.1} parent=1084 // pred_fallthru
      _
  $region1085: #{tpu_custom_call.1} parent=0 // pred_fallthru
    _
  // Predicated region
  $region1086: #{tpu_custom_call.1} parent=0 // pred_check
    %p1749 = pneg %p1745
  $region1087: #{tpu_custom_call.1} parent=0 // pred_check_branch
    %1751 = sbr.rel (%p1749) target = $region1089
  $region1088: #{tpu_custom_call.1} parent=0 // pred_region
    %s1752 = sshllo.u32 0, 1
    loop: start=0, step=1, limit=1
    $region1090: #{tpu_custom_call.1} parent=1088 // loop_pre_header
      _
    $region1091: #{tpu_custom_call.1} parent=1088 // loop_header
      %s1754 = sphi 0, %s1758
      %p1755 = scmp.ge.s32.totalorder %s1754, 1
      %s1759 = sphi %s1742, %s1742
      %s1760 = sphi %s1743, %s1743
    $region1092: #{tpu_custom_call.1} parent=1088 // loop_header_branch
      %1757 = sbr.rel (%p1755) target = $region1096
    $region1093: #{tpu_custom_call.1} parent=1088 // loop_body
      %v1761 = vld [vmem:[%s1759] sm:%s1752]
      %1762 = vst [vmem:[%s1760] sm:%s1752] %v1761
    $region1094: #{tpu_custom_call.1} parent=1088 // loop_footer
      %s1758 = sadd.s32 1, %s1754
    $region1095: #{tpu_custom_call.1} parent=1088 // loop_footer_branch
      %1753 = sbr.rel target = $region1091
    $region1096: #{tpu_custom_call.1} parent=1088 // loop_exit
      _
  $region1089: #{tpu_custom_call.1} parent=0 // pred_fallthru
    _
  // Predicated region
  $region1108: #{tpu_custom_call.1} parent=0 // pred_check
    _
  $region1109: #{tpu_custom_call.1} parent=0 // pred_check_branch
    %1786 = sbr.rel (0) target = $region1111
  $region1110: #{tpu_custom_call.1} parent=0 // pred_region
    %1787 = vsyncadd [#allocation2], 16
  $region1111: #{tpu_custom_call.1} parent=0 // pred_fallthru
    _
  %s1788 = sadd.s32 %s13, 37
  %s1789 = sld [smem:[#allocation4 + %s1788]]
  %s1790 = scalar_lea.vmem %s1, %s1789
  %s1791 = scalar_lea.vmem %s2, 37
  %p1793 = scmp.lt.u32.totalorder 1, 8
  %p1794 = pneg %p1793
  // Predicated region
  $region1112: #{tpu_custom_call.1} parent=0 // pred_check
    _
  $region1113: #{tpu_custom_call.1} parent=0 // pred_check_branch
    %1796 = sbr.rel (%p1793) target = $region1115
  $region1114: #{tpu_custom_call.1} parent=0 // pred_region
    %s1811 = sand.u32 1, 7
    %p1812 = scmp.eq.s32.totalorder %s1811, 0
    %p1813 = pneg %p1812
    // Predicated region
    $region1127: #{tpu_custom_call.1} parent=1114 // pred_check
      _
    $region1128: #{tpu_custom_call.1} parent=1114 // pred_check_branch
      %1815 = sbr.rel (%p1812) target = $region1130
    $region1129: #{tpu_custom_call.1} parent=1114 // pred_region
      %s1816 = sand.u32 1, 7
      %s1817 = ssub.s32 1, %s1816
      %s1818 = scalar_lea.vmem %s1790, %s1817
      %s1819 = ssub.s32 1, %s1816
      %s1820 = scalar_lea.vmem %s1791, %s1819
      %s1821 = sshllo.u32 0, %s1816
      loop: start=0, step=1, limit=1
      $region1131: #{tpu_custom_call.1} parent=1129 // loop_pre_header
        _
      $region1132: #{tpu_custom_call.1} parent=1129 // loop_header
        %s1823 = sphi 0, %s1827
        %p1824 = scmp.ge.s32.totalorder %s1823, 1
        %s1828 = sphi %s1818, %s1818
        %s1829 = sphi %s1820, %s1820
      $region1133: #{tpu_custom_call.1} parent=1129 // loop_header_branch
        %1826 = sbr.rel (%p1824) target = $region1137
      $region1134: #{tpu_custom_call.1} parent=1129 // loop_body
        %v1830 = vld [vmem:[%s1828] sm:%s1821]
        %1831 = vst [vmem:[%s1829] sm:%s1821] %v1830
      $region1135: #{tpu_custom_call.1} parent=1129 // loop_footer
        %s1827 = sadd.s32 1, %s1823
      $region1136: #{tpu_custom_call.1} parent=1129 // loop_footer_branch
        %1822 = sbr.rel target = $region1132
      $region1137: #{tpu_custom_call.1} parent=1129 // loop_exit
        _
    $region1130: #{tpu_custom_call.1} parent=1114 // pred_fallthru
      _
  $region1115: #{tpu_custom_call.1} parent=0 // pred_fallthru
    _
  // Predicated region
  $region1116: #{tpu_custom_call.1} parent=0 // pred_check
    %p1797 = pneg %p1793
  $region1117: #{tpu_custom_call.1} parent=0 // pred_check_branch
    %1799 = sbr.rel (%p1797) target = $region1119
  $region1118: #{tpu_custom_call.1} parent=0 // pred_region
    %s1800 = sshllo.u32 0, 1
    loop: start=0, step=1, limit=1
    $region1120: #{tpu_custom_call.1} parent=1118 // loop_pre_header
      _
    $region1121: #{tpu_custom_call.1} parent=1118 // loop_header
      %s1802 = sphi 0, %s1806
      %p1803 = scmp.ge.s32.totalorder %s1802, 1
      %s1807 = sphi %s1790, %s1790
      %s1808 = sphi %s1791, %s1791
    $region1122: #{tpu_custom_call.1} parent=1118 // loop_header_branch
      %1805 = sbr.rel (%p1803) target = $region1126
    $region1123: #{tpu_custom_call.1} parent=1118 // loop_body
      %v1809 = vld [vmem:[%s1807] sm:%s1800]
      %1810 = vst [vmem:[%s1808] sm:%s1800] %v1809
    $region1124: #{tpu_custom_call.1} parent=1118 // loop_footer
      %s1806 = sadd.s32 1, %s1802
    $region1125: #{tpu_custom_call.1} parent=1118 // loop_footer_branch
      %1801 = sbr.rel target = $region1121
    $region1126: #{tpu_custom_call.1} parent=1118 // loop_exit
      _
  $region1119: #{tpu_custom_call.1} parent=0 // pred_fallthru
    _
  // Predicated region
  $region1138: #{tpu_custom_call.1} parent=0 // pred_check
    _
  $region1139: #{tpu_custom_call.1} parent=0 // pred_check_branch
    %1834 = sbr.rel (0) target = $region1141
  $region1140: #{tpu_custom_call.1} parent=0 // pred_region
    %1835 = vsyncadd [#allocation2], 16
  $region1141: #{tpu_custom_call.1} parent=0 // pred_fallthru
    _
  %s1836 = sadd.s32 %s13, 38
  %s1837 = sld [smem:[#allocation4 + %s1836]]
  %s1838 = scalar_lea.vmem %s1, %s1837
  %s1839 = scalar_lea.vmem %s2, 38
  %p1841 = scmp.lt.u32.totalorder 1, 8
  %p1842 = pneg %p1841
  // Predicated region
  $region1142: #{tpu_custom_call.1} parent=0 // pred_check
    _
  $region1143: #{tpu_custom_call.1} parent=0 // pred_check_branch
    %1844 = sbr.rel (%p1841) target = $region1145
  $region1144: #{tpu_custom_call.1} parent=0 // pred_region
    %s1859 = sand.u32 1, 7
    %p1860 = scmp.eq.s32.totalorder %s1859, 0
    %p1861 = pneg %p1860
    // Predicated region
    $region1157: #{tpu_custom_call.1} parent=1144 // pred_check
      _
    $region1158: #{tpu_custom_call.1} parent=1144 // pred_check_branch
      %1863 = sbr.rel (%p1860) target = $region1160
    $region1159: #{tpu_custom_call.1} parent=1144 // pred_region
      %s1864 = sand.u32 1, 7
      %s1865 = ssub.s32 1, %s1864
      %s1866 = scalar_lea.vmem %s1838, %s1865
      %s1867 = ssub.s32 1, %s1864
      %s1868 = scalar_lea.vmem %s1839, %s1867
      %s1869 = sshllo.u32 0, %s1864
      loop: start=0, step=1, limit=1
      $region1161: #{tpu_custom_call.1} parent=1159 // loop_pre_header
        _
      $region1162: #{tpu_custom_call.1} parent=1159 // loop_header
        %s1871 = sphi 0, %s1875
        %p1872 = scmp.ge.s32.totalorder %s1871, 1
        %s1876 = sphi %s1866, %s1866
        %s1877 = sphi %s1868, %s1868
      $region1163: #{tpu_custom_call.1} parent=1159 // loop_header_branch
        %1874 = sbr.rel (%p1872) target = $region1167
      $region1164: #{tpu_custom_call.1} parent=1159 // loop_body
        %v1878 = vld [vmem:[%s1876] sm:%s1869]
        %1879 = vst [vmem:[%s1877] sm:%s1869] %v1878
      $region1165: #{tpu_custom_call.1} parent=1159 // loop_footer
        %s1875 = sadd.s32 1, %s1871
      $region1166: #{tpu_custom_call.1} parent=1159 // loop_footer_branch
        %1870 = sbr.rel target = $region1162
      $region1167: #{tpu_custom_call.1} parent=1159 // loop_exit
        _
    $region1160: #{tpu_custom_call.1} parent=1144 // pred_fallthru
      _
  $region1145: #{tpu_custom_call.1} parent=0 // pred_fallthru
    _
  // Predicated region
  $region1146: #{tpu_custom_call.1} parent=0 // pred_check
    %p1845 = pneg %p1841
  $region1147: #{tpu_custom_call.1} parent=0 // pred_check_branch
    %1847 = sbr.rel (%p1845) target = $region1149
  $region1148: #{tpu_custom_call.1} parent=0 // pred_region
    %s1848 = sshllo.u32 0, 1
    loop: start=0, step=1, limit=1
    $region1150: #{tpu_custom_call.1} parent=1148 // loop_pre_header
      _
    $region1151: #{tpu_custom_call.1} parent=1148 // loop_header
      %s1850 = sphi 0, %s1854
      %p1851 = scmp.ge.s32.totalorder %s1850, 1
      %s1855 = sphi %s1838, %s1838
      %s1856 = sphi %s1839, %s1839
    $region1152: #{tpu_custom_call.1} parent=1148 // loop_header_branch
      %1853 = sbr.rel (%p1851) target = $region1156
    $region1153: #{tpu_custom_call.1} parent=1148 // loop_body
      %v1857 = vld [vmem:[%s1855] sm:%s1848]
      %1858 = vst [vmem:[%s1856] sm:%s1848] %v1857
    $region1154: #{tpu_custom_call.1} parent=1148 // loop_footer
      %s1854 = sadd.s32 1, %s1850
    $region1155: #{tpu_custom_call.1} parent=1148 // loop_footer_branch
      %1849 = sbr.rel target = $region1151
    $region1156: #{tpu_custom_call.1} parent=1148 // loop_exit
      _
  $region1149: #{tpu_custom_call.1} parent=0 // pred_fallthru
    _
  // Predicated region
  $region1168: #{tpu_custom_call.1} parent=0 // pred_check
    _
  $region1169: #{tpu_custom_call.1} parent=0 // pred_check_branch
    %1882 = sbr.rel (0) target = $region1171
  $region1170: #{tpu_custom_call.1} parent=0 // pred_region
    %1883 = vsyncadd [#allocation2], 16
  $region1171: #{tpu_custom_call.1} parent=0 // pred_fallthru
    _
  %s1884 = sadd.s32 %s13, 39
  %s1885 = sld [smem:[#allocation4 + %s1884]]
  %s1886 = scalar_lea.vmem %s1, %s1885
  %s1887 = scalar_lea.vmem %s2, 39
  %p1889 = scmp.lt.u32.totalorder 1, 8
  %p1890 = pneg %p1889
  // Predicated region
  $region1172: #{tpu_custom_call.1} parent=0 // pred_check
    _
  $region1173: #{tpu_custom_call.1} parent=0 // pred_check_branch
    %1892 = sbr.rel (%p1889) target = $region1175
  $region1174: #{tpu_custom_call.1} parent=0 // pred_region
    %s1907 = sand.u32 1, 7
    %p1908 = scmp.eq.s32.totalorder %s1907, 0
    %p1909 = pneg %p1908
    // Predicated region
    $region1187: #{tpu_custom_call.1} parent=1174 // pred_check
      _
    $region1188: #{tpu_custom_call.1} parent=1174 // pred_check_branch
      %1911 = sbr.rel (%p1908) target = $region1190
    $region1189: #{tpu_custom_call.1} parent=1174 // pred_region
      %s1912 = sand.u32 1, 7
      %s1913 = ssub.s32 1, %s1912
      %s1914 = scalar_lea.vmem %s1886, %s1913
      %s1915 = ssub.s32 1, %s1912
      %s1916 = scalar_lea.vmem %s1887, %s1915
      %s1917 = sshllo.u32 0, %s1912
      loop: start=0, step=1, limit=1
      $region1191: #{tpu_custom_call.1} parent=1189 // loop_pre_header
        _
      $region1192: #{tpu_custom_call.1} parent=1189 // loop_header
        %s1919 = sphi 0, %s1923
        %p1920 = scmp.ge.s32.totalorder %s1919, 1
        %s1924 = sphi %s1914, %s1914
        %s1925 = sphi %s1916, %s1916
      $region1193: #{tpu_custom_call.1} parent=1189 // loop_header_branch
        %1922 = sbr.rel (%p1920) target = $region1197
      $region1194: #{tpu_custom_call.1} parent=1189 // loop_body
        %v1926 = vld [vmem:[%s1924] sm:%s1917]
        %1927 = vst [vmem:[%s1925] sm:%s1917] %v1926
      $region1195: #{tpu_custom_call.1} parent=1189 // loop_footer
        %s1923 = sadd.s32 1, %s1919
      $region1196: #{tpu_custom_call.1} parent=1189 // loop_footer_branch
        %1918 = sbr.rel target = $region1192
      $region1197: #{tpu_custom_call.1} parent=1189 // loop_exit
        _
    $region1190: #{tpu_custom_call.1} parent=1174 // pred_fallthru
      _
  $region1175: #{tpu_custom_call.1} parent=0 // pred_fallthru
    _
  // Predicated region
  $region1176: #{tpu_custom_call.1} parent=0 // pred_check
    %p1893 = pneg %p1889
  $region1177: #{tpu_custom_call.1} parent=0 // pred_check_branch
    %1895 = sbr.rel (%p1893) target = $region1179
  $region1178: #{tpu_custom_call.1} parent=0 // pred_region
    %s1896 = sshllo.u32 0, 1
    loop: start=0, step=1, limit=1
    $region1180: #{tpu_custom_call.1} parent=1178 // loop_pre_header
      _
    $region1181: #{tpu_custom_call.1} parent=1178 // loop_header
      %s1898 = sphi 0, %s1902
      %p1899 = scmp.ge.s32.totalorder %s1898, 1
      %s1903 = sphi %s1886, %s1886
      %s1904 = sphi %s1887, %s1887
    $region1182: #{tpu_custom_call.1} parent=1178 // loop_header_branch
      %1901 = sbr.rel (%p1899) target = $region1186
    $region1183: #{tpu_custom_call.1} parent=1178 // loop_body
      %v1905 = vld [vmem:[%s1903] sm:%s1896]
      %1906 = vst [vmem:[%s1904] sm:%s1896] %v1905
    $region1184: #{tpu_custom_call.1} parent=1178 // loop_footer
      %s1902 = sadd.s32 1, %s1898
    $region1185: #{tpu_custom_call.1} parent=1178 // loop_footer_branch
      %1897 = sbr.rel target = $region1181
    $region1186: #{tpu_custom_call.1} parent=1178 // loop_exit
      _
  $region1179: #{tpu_custom_call.1} parent=0 // pred_fallthru
    _
  // Predicated region
  $region1198: #{tpu_custom_call.1} parent=0 // pred_check
    _
  $region1199: #{tpu_custom_call.1} parent=0 // pred_check_branch
    %1930 = sbr.rel (0) target = $region1201
  $region1200: #{tpu_custom_call.1} parent=0 // pred_region
    %1931 = vsyncadd [#allocation2], 16
  $region1201: #{tpu_custom_call.1} parent=0 // pred_fallthru
    _
  %s1932 = sadd.s32 %s13, 40
  %s1933 = sld [smem:[#allocation4 + %s1932]]
  %s1934 = scalar_lea.vmem %s1, %s1933
  %s1935 = scalar_lea.vmem %s2, 40
  %p1937 = scmp.lt.u32.totalorder 1, 8
  %p1938 = pneg %p1937
  // Predicated region
  $region1202: #{tpu_custom_call.1} parent=0 // pred_check
    _
  $region1203: #{tpu_custom_call.1} parent=0 // pred_check_branch
    %1940 = sbr.rel (%p1937) target = $region1205
  $region1204: #{tpu_custom_call.1} parent=0 // pred_region
    %s1955 = sand.u32 1, 7
    %p1956 = scmp.eq.s32.totalorder %s1955, 0
    %p1957 = pneg %p1956
    // Predicated region
    $region1217: #{tpu_custom_call.1} parent=1204 // pred_check
      _
    $region1218: #{tpu_custom_call.1} parent=1204 // pred_check_branch
      %1959 = sbr.rel (%p1956) target = $region1220
    $region1219: #{tpu_custom_call.1} parent=1204 // pred_region
      %s1960 = sand.u32 1, 7
      %s1961 = ssub.s32 1, %s1960
      %s1962 = scalar_lea.vmem %s1934, %s1961
      %s1963 = ssub.s32 1, %s1960
      %s1964 = scalar_lea.vmem %s1935, %s1963
      %s1965 = sshllo.u32 0, %s1960
      loop: start=0, step=1, limit=1
      $region1221: #{tpu_custom_call.1} parent=1219 // loop_pre_header
        _
      $region1222: #{tpu_custom_call.1} parent=1219 // loop_header
        %s1967 = sphi 0, %s1971
        %p1968 = scmp.ge.s32.totalorder %s1967, 1
        %s1972 = sphi %s1962, %s1962
        %s1973 = sphi %s1964, %s1964
      $region1223: #{tpu_custom_call.1} parent=1219 // loop_header_branch
        %1970 = sbr.rel (%p1968) target = $region1227
      $region1224: #{tpu_custom_call.1} parent=1219 // loop_body
        %v1974 = vld [vmem:[%s1972] sm:%s1965]
        %1975 = vst [vmem:[%s1973] sm:%s1965] %v1974
      $region1225: #{tpu_custom_call.1} parent=1219 // loop_footer
        %s1971 = sadd.s32 1, %s1967
      $region1226: #{tpu_custom_call.1} parent=1219 // loop_footer_branch
        %1966 = sbr.rel target = $region1222
      $region1227: #{tpu_custom_call.1} parent=1219 // loop_exit
        _
    $region1220: #{tpu_custom_call.1} parent=1204 // pred_fallthru
      _
  $region1205: #{tpu_custom_call.1} parent=0 // pred_fallthru
    _
  // Predicated region
  $region1206: #{tpu_custom_call.1} parent=0 // pred_check
    %p1941 = pneg %p1937
  $region1207: #{tpu_custom_call.1} parent=0 // pred_check_branch
    %1943 = sbr.rel (%p1941) target = $region1209
  $region1208: #{tpu_custom_call.1} parent=0 // pred_region
    %s1944 = sshllo.u32 0, 1
    loop: start=0, step=1, limit=1
    $region1210: #{tpu_custom_call.1} parent=1208 // loop_pre_header
      _
    $region1211: #{tpu_custom_call.1} parent=1208 // loop_header
      %s1946 = sphi 0, %s1950
      %p1947 = scmp.ge.s32.totalorder %s1946, 1
      %s1951 = sphi %s1934, %s1934
      %s1952 = sphi %s1935, %s1935
    $region1212: #{tpu_custom_call.1} parent=1208 // loop_header_branch
      %1949 = sbr.rel (%p1947) target = $region1216
    $region1213: #{tpu_custom_call.1} parent=1208 // loop_body
      %v1953 = vld [vmem:[%s1951] sm:%s1944]
      %1954 = vst [vmem:[%s1952] sm:%s1944] %v1953
    $region1214: #{tpu_custom_call.1} parent=1208 // loop_footer
      %s1950 = sadd.s32 1, %s1946
    $region1215: #{tpu_custom_call.1} parent=1208 // loop_footer_branch
      %1945 = sbr.rel target = $region1211
    $region1216: #{tpu_custom_call.1} parent=1208 // loop_exit
      _
  $region1209: #{tpu_custom_call.1} parent=0 // pred_fallthru
    _
  // Predicated region
  $region1228: #{tpu_custom_call.1} parent=0 // pred_check
    _
  $region1229: #{tpu_custom_call.1} parent=0 // pred_check_branch
    %1978 = sbr.rel (0) target = $region1231
  $region1230: #{tpu_custom_call.1} parent=0 // pred_region
    %1979 = vsyncadd [#allocation2], 16
  $region1231: #{tpu_custom_call.1} parent=0 // pred_fallthru
    _
  %s1980 = sadd.s32 %s13, 41
  %s1981 = sld [smem:[#allocation4 + %s1980]]
  %s1982 = scalar_lea.vmem %s1, %s1981
  %s1983 = scalar_lea.vmem %s2, 41
  %p1985 = scmp.lt.u32.totalorder 1, 8
  %p1986 = pneg %p1985
  // Predicated region
  $region1232: #{tpu_custom_call.1} parent=0 // pred_check
    _
  $region1233: #{tpu_custom_call.1} parent=0 // pred_check_branch
    %1988 = sbr.rel (%p1985) target = $region1235
  $region1234: #{tpu_custom_call.1} parent=0 // pred_region
    %s2003 = sand.u32 1, 7
    %p2004 = scmp.eq.s32.totalorder %s2003, 0
    %p2005 = pneg %p2004
    // Predicated region
    $region1247: #{tpu_custom_call.1} parent=1234 // pred_check
      _
    $region1248: #{tpu_custom_call.1} parent=1234 // pred_check_branch
      %2007 = sbr.rel (%p2004) target = $region1250
    $region1249: #{tpu_custom_call.1} parent=1234 // pred_region
      %s2008 = sand.u32 1, 7
      %s2009 = ssub.s32 1, %s2008
      %s2010 = scalar_lea.vmem %s1982, %s2009
      %s2011 = ssub.s32 1, %s2008
      %s2012 = scalar_lea.vmem %s1983, %s2011
      %s2013 = sshllo.u32 0, %s2008
      loop: start=0, step=1, limit=1
      $region1251: #{tpu_custom_call.1} parent=1249 // loop_pre_header
        _
      $region1252: #{tpu_custom_call.1} parent=1249 // loop_header
        %s2015 = sphi 0, %s2019
        %p2016 = scmp.ge.s32.totalorder %s2015, 1
        %s2020 = sphi %s2010, %s2010
        %s2021 = sphi %s2012, %s2012
      $region1253: #{tpu_custom_call.1} parent=1249 // loop_header_branch
        %2018 = sbr.rel (%p2016) target = $region1257
      $region1254: #{tpu_custom_call.1} parent=1249 // loop_body
        %v2022 = vld [vmem:[%s2020] sm:%s2013]
        %2023 = vst [vmem:[%s2021] sm:%s2013] %v2022
      $region1255: #{tpu_custom_call.1} parent=1249 // loop_footer
        %s2019 = sadd.s32 1, %s2015
      $region1256: #{tpu_custom_call.1} parent=1249 // loop_footer_branch
        %2014 = sbr.rel target = $region1252
      $region1257: #{tpu_custom_call.1} parent=1249 // loop_exit
        _
    $region1250: #{tpu_custom_call.1} parent=1234 // pred_fallthru
      _
  $region1235: #{tpu_custom_call.1} parent=0 // pred_fallthru
    _
  // Predicated region
  $region1236: #{tpu_custom_call.1} parent=0 // pred_check
    %p1989 = pneg %p1985
  $region1237: #{tpu_custom_call.1} parent=0 // pred_check_branch
    %1991 = sbr.rel (%p1989) target = $region1239
  $region1238: #{tpu_custom_call.1} parent=0 // pred_region
    %s1992 = sshllo.u32 0, 1
    loop: start=0, step=1, limit=1
    $region1240: #{tpu_custom_call.1} parent=1238 // loop_pre_header
      _
    $region1241: #{tpu_custom_call.1} parent=1238 // loop_header
      %s1994 = sphi 0, %s1998
      %p1995 = scmp.ge.s32.totalorder %s1994, 1
      %s1999 = sphi %s1982, %s1982
      %s2000 = sphi %s1983, %s1983
    $region1242: #{tpu_custom_call.1} parent=1238 // loop_header_branch
      %1997 = sbr.rel (%p1995) target = $region1246
    $region1243: #{tpu_custom_call.1} parent=1238 // loop_body
      %v2001 = vld [vmem:[%s1999] sm:%s1992]
      %2002 = vst [vmem:[%s2000] sm:%s1992] %v2001
    $region1244: #{tpu_custom_call.1} parent=1238 // loop_footer
      %s1998 = sadd.s32 1, %s1994
    $region1245: #{tpu_custom_call.1} parent=1238 // loop_footer_branch
      %1993 = sbr.rel target = $region1241
    $region1246: #{tpu_custom_call.1} parent=1238 // loop_exit
      _
  $region1239: #{tpu_custom_call.1} parent=0 // pred_fallthru
    _
  // Predicated region
  $region1258: #{tpu_custom_call.1} parent=0 // pred_check
    _
  $region1259: #{tpu_custom_call.1} parent=0 // pred_check_branch
    %2026 = sbr.rel (0) target = $region1261
  $region1260: #{tpu_custom_call.1} parent=0 // pred_region
    %2027 = vsyncadd [#allocation2], 16
  $region1261: #{tpu_custom_call.1} parent=0 // pred_fallthru
    _
  %s2028 = sadd.s32 %s13, 42
  %s2029 = sld [smem:[#allocation4 + %s2028]]
  %s2030 = scalar_lea.vmem %s1, %s2029
  %s2031 = scalar_lea.vmem %s2, 42
  %p2033 = scmp.lt.u32.totalorder 1, 8
  %p2034 = pneg %p2033
  // Predicated region
  $region1262: #{tpu_custom_call.1} parent=0 // pred_check
    _
  $region1263: #{tpu_custom_call.1} parent=0 // pred_check_branch
    %2036 = sbr.rel (%p2033) target = $region1265
  $region1264: #{tpu_custom_call.1} parent=0 // pred_region
    %s2051 = sand.u32 1, 7
    %p2052 = scmp.eq.s32.totalorder %s2051, 0
    %p2053 = pneg %p2052
    // Predicated region
    $region1277: #{tpu_custom_call.1} parent=1264 // pred_check
      _
    $region1278: #{tpu_custom_call.1} parent=1264 // pred_check_branch
      %2055 = sbr.rel (%p2052) target = $region1280
    $region1279: #{tpu_custom_call.1} parent=1264 // pred_region
      %s2056 = sand.u32 1, 7
      %s2057 = ssub.s32 1, %s2056
      %s2058 = scalar_lea.vmem %s2030, %s2057
      %s2059 = ssub.s32 1, %s2056
      %s2060 = scalar_lea.vmem %s2031, %s2059
      %s2061 = sshllo.u32 0, %s2056
      loop: start=0, step=1, limit=1
      $region1281: #{tpu_custom_call.1} parent=1279 // loop_pre_header
        _
      $region1282: #{tpu_custom_call.1} parent=1279 // loop_header
        %s2063 = sphi 0, %s2067
        %p2064 = scmp.ge.s32.totalorder %s2063, 1
        %s2068 = sphi %s2058, %s2058
        %s2069 = sphi %s2060, %s2060
      $region1283: #{tpu_custom_call.1} parent=1279 // loop_header_branch
        %2066 = sbr.rel (%p2064) target = $region1287
      $region1284: #{tpu_custom_call.1} parent=1279 // loop_body
        %v2070 = vld [vmem:[%s2068] sm:%s2061]
        %2071 = vst [vmem:[%s2069] sm:%s2061] %v2070
      $region1285: #{tpu_custom_call.1} parent=1279 // loop_footer
        %s2067 = sadd.s32 1, %s2063
      $region1286: #{tpu_custom_call.1} parent=1279 // loop_footer_branch
        %2062 = sbr.rel target = $region1282
      $region1287: #{tpu_custom_call.1} parent=1279 // loop_exit
        _
    $region1280: #{tpu_custom_call.1} parent=1264 // pred_fallthru
      _
  $region1265: #{tpu_custom_call.1} parent=0 // pred_fallthru
    _
  // Predicated region
  $region1266: #{tpu_custom_call.1} parent=0 // pred_check
    %p2037 = pneg %p2033
  $region1267: #{tpu_custom_call.1} parent=0 // pred_check_branch
    %2039 = sbr.rel (%p2037) target = $region1269
  $region1268: #{tpu_custom_call.1} parent=0 // pred_region
    %s2040 = sshllo.u32 0, 1
    loop: start=0, step=1, limit=1
    $region1270: #{tpu_custom_call.1} parent=1268 // loop_pre_header
      _
    $region1271: #{tpu_custom_call.1} parent=1268 // loop_header
      %s2042 = sphi 0, %s2046
      %p2043 = scmp.ge.s32.totalorder %s2042, 1
      %s2047 = sphi %s2030, %s2030
      %s2048 = sphi %s2031, %s2031
    $region1272: #{tpu_custom_call.1} parent=1268 // loop_header_branch
      %2045 = sbr.rel (%p2043) target = $region1276
    $region1273: #{tpu_custom_call.1} parent=1268 // loop_body
      %v2049 = vld [vmem:[%s2047] sm:%s2040]
      %2050 = vst [vmem:[%s2048] sm:%s2040] %v2049
    $region1274: #{tpu_custom_call.1} parent=1268 // loop_footer
      %s2046 = sadd.s32 1, %s2042
    $region1275: #{tpu_custom_call.1} parent=1268 // loop_footer_branch
      %2041 = sbr.rel target = $region1271
    $region1276: #{tpu_custom_call.1} parent=1268 // loop_exit
      _
  $region1269: #{tpu_custom_call.1} parent=0 // pred_fallthru
    _
  // Predicated region
  $region1288: #{tpu_custom_call.1} parent=0 // pred_check
    _
  $region1289: #{tpu_custom_call.1} parent=0 // pred_check_branch
    %2074 = sbr.rel (0) target = $region1291
  $region1290: #{tpu_custom_call.1} parent=0 // pred_region
    %2075 = vsyncadd [#allocation2], 16
  $region1291: #{tpu_custom_call.1} parent=0 // pred_fallthru
    _
  %s2076 = sadd.s32 %s13, 43
  %s2077 = sld [smem:[#allocation4 + %s2076]]
  %s2078 = scalar_lea.vmem %s1, %s2077
  %s2079 = scalar_lea.vmem %s2, 43
  %p2081 = scmp.lt.u32.totalorder 1, 8
  %p2082 = pneg %p2081
  // Predicated region
  $region1292: #{tpu_custom_call.1} parent=0 // pred_check
    _
  $region1293: #{tpu_custom_call.1} parent=0 // pred_check_branch
    %2084 = sbr.rel (%p2081) target = $region1295
  $region1294: #{tpu_custom_call.1} parent=0 // pred_region
    %s2099 = sand.u32 1, 7
    %p2100 = scmp.eq.s32.totalorder %s2099, 0
    %p2101 = pneg %p2100
    // Predicated region
    $region1307: #{tpu_custom_call.1} parent=1294 // pred_check
      _
    $region1308: #{tpu_custom_call.1} parent=1294 // pred_check_branch
      %2103 = sbr.rel (%p2100) target = $region1310
    $region1309: #{tpu_custom_call.1} parent=1294 // pred_region
      %s2104 = sand.u32 1, 7
      %s2105 = ssub.s32 1, %s2104
      %s2106 = scalar_lea.vmem %s2078, %s2105
      %s2107 = ssub.s32 1, %s2104
      %s2108 = scalar_lea.vmem %s2079, %s2107
      %s2109 = sshllo.u32 0, %s2104
      loop: start=0, step=1, limit=1
      $region1311: #{tpu_custom_call.1} parent=1309 // loop_pre_header
        _
      $region1312: #{tpu_custom_call.1} parent=1309 // loop_header
        %s2111 = sphi 0, %s2115
        %p2112 = scmp.ge.s32.totalorder %s2111, 1
        %s2116 = sphi %s2106, %s2106
        %s2117 = sphi %s2108, %s2108
      $region1313: #{tpu_custom_call.1} parent=1309 // loop_header_branch
        %2114 = sbr.rel (%p2112) target = $region1317
      $region1314: #{tpu_custom_call.1} parent=1309 // loop_body
        %v2118 = vld [vmem:[%s2116] sm:%s2109]
        %2119 = vst [vmem:[%s2117] sm:%s2109] %v2118
      $region1315: #{tpu_custom_call.1} parent=1309 // loop_footer
        %s2115 = sadd.s32 1, %s2111
      $region1316: #{tpu_custom_call.1} parent=1309 // loop_footer_branch
        %2110 = sbr.rel target = $region1312
      $region1317: #{tpu_custom_call.1} parent=1309 // loop_exit
        _
    $region1310: #{tpu_custom_call.1} parent=1294 // pred_fallthru
      _
  $region1295: #{tpu_custom_call.1} parent=0 // pred_fallthru
    _
  // Predicated region
  $region1296: #{tpu_custom_call.1} parent=0 // pred_check
    %p2085 = pneg %p2081
  $region1297: #{tpu_custom_call.1} parent=0 // pred_check_branch
    %2087 = sbr.rel (%p2085) target = $region1299
  $region1298: #{tpu_custom_call.1} parent=0 // pred_region
    %s2088 = sshllo.u32 0, 1
    loop: start=0, step=1, limit=1
    $region1300: #{tpu_custom_call.1} parent=1298 // loop_pre_header
      _
    $region1301: #{tpu_custom_call.1} parent=1298 // loop_header
      %s2090 = sphi 0, %s2094
      %p2091 = scmp.ge.s32.totalorder %s2090, 1
      %s2095 = sphi %s2078, %s2078
      %s2096 = sphi %s2079, %s2079
    $region1302: #{tpu_custom_call.1} parent=1298 // loop_header_branch
      %2093 = sbr.rel (%p2091) target = $region1306
    $region1303: #{tpu_custom_call.1} parent=1298 // loop_body
      %v2097 = vld [vmem:[%s2095] sm:%s2088]
      %2098 = vst [vmem:[%s2096] sm:%s2088] %v2097
    $region1304: #{tpu_custom_call.1} parent=1298 // loop_footer
      %s2094 = sadd.s32 1, %s2090
    $region1305: #{tpu_custom_call.1} parent=1298 // loop_footer_branch
      %2089 = sbr.rel target = $region1301
    $region1306: #{tpu_custom_call.1} parent=1298 // loop_exit
      _
  $region1299: #{tpu_custom_call.1} parent=0 // pred_fallthru
    _
  // Predicated region
  $region1318: #{tpu_custom_call.1} parent=0 // pred_check
    _
  $region1319: #{tpu_custom_call.1} parent=0 // pred_check_branch
    %2122 = sbr.rel (0) target = $region1321
  $region1320: #{tpu_custom_call.1} parent=0 // pred_region
    %2123 = vsyncadd [#allocation2], 16
  $region1321: #{tpu_custom_call.1} parent=0 // pred_fallthru
    _
  %s2124 = sadd.s32 %s13, 44
  %s2125 = sld [smem:[#allocation4 + %s2124]]
  %s2126 = scalar_lea.vmem %s1, %s2125
  %s2127 = scalar_lea.vmem %s2, 44
  %p2129 = scmp.lt.u32.totalorder 1, 8
  %p2130 = pneg %p2129
  // Predicated region
  $region1322: #{tpu_custom_call.1} parent=0 // pred_check
    _
  $region1323: #{tpu_custom_call.1} parent=0 // pred_check_branch
    %2132 = sbr.rel (%p2129) target = $region1325
  $region1324: #{tpu_custom_call.1} parent=0 // pred_region
    %s2147 = sand.u32 1, 7
    %p2148 = scmp.eq.s32.totalorder %s2147, 0
    %p2149 = pneg %p2148
    // Predicated region
    $region1337: #{tpu_custom_call.1} parent=1324 // pred_check
      _
    $region1338: #{tpu_custom_call.1} parent=1324 // pred_check_branch
      %2151 = sbr.rel (%p2148) target = $region1340
    $region1339: #{tpu_custom_call.1} parent=1324 // pred_region
      %s2152 = sand.u32 1, 7
      %s2153 = ssub.s32 1, %s2152
      %s2154 = scalar_lea.vmem %s2126, %s2153
      %s2155 = ssub.s32 1, %s2152
      %s2156 = scalar_lea.vmem %s2127, %s2155
      %s2157 = sshllo.u32 0, %s2152
      loop: start=0, step=1, limit=1
      $region1341: #{tpu_custom_call.1} parent=1339 // loop_pre_header
        _
      $region1342: #{tpu_custom_call.1} parent=1339 // loop_header
        %s2159 = sphi 0, %s2163
        %p2160 = scmp.ge.s32.totalorder %s2159, 1
        %s2164 = sphi %s2154, %s2154
        %s2165 = sphi %s2156, %s2156
      $region1343: #{tpu_custom_call.1} parent=1339 // loop_header_branch
        %2162 = sbr.rel (%p2160) target = $region1347
      $region1344: #{tpu_custom_call.1} parent=1339 // loop_body
        %v2166 = vld [vmem:[%s2164] sm:%s2157]
        %2167 = vst [vmem:[%s2165] sm:%s2157] %v2166
      $region1345: #{tpu_custom_call.1} parent=1339 // loop_footer
        %s2163 = sadd.s32 1, %s2159
      $region1346: #{tpu_custom_call.1} parent=1339 // loop_footer_branch
        %2158 = sbr.rel target = $region1342
      $region1347: #{tpu_custom_call.1} parent=1339 // loop_exit
        _
    $region1340: #{tpu_custom_call.1} parent=1324 // pred_fallthru
      _
  $region1325: #{tpu_custom_call.1} parent=0 // pred_fallthru
    _
  // Predicated region
  $region1326: #{tpu_custom_call.1} parent=0 // pred_check
    %p2133 = pneg %p2129
  $region1327: #{tpu_custom_call.1} parent=0 // pred_check_branch
    %2135 = sbr.rel (%p2133) target = $region1329
  $region1328: #{tpu_custom_call.1} parent=0 // pred_region
    %s2136 = sshllo.u32 0, 1
    loop: start=0, step=1, limit=1
    $region1330: #{tpu_custom_call.1} parent=1328 // loop_pre_header
      _
    $region1331: #{tpu_custom_call.1} parent=1328 // loop_header
      %s2138 = sphi 0, %s2142
      %p2139 = scmp.ge.s32.totalorder %s2138, 1
      %s2143 = sphi %s2126, %s2126
      %s2144 = sphi %s2127, %s2127
    $region1332: #{tpu_custom_call.1} parent=1328 // loop_header_branch
      %2141 = sbr.rel (%p2139) target = $region1336
    $region1333: #{tpu_custom_call.1} parent=1328 // loop_body
      %v2145 = vld [vmem:[%s2143] sm:%s2136]
      %2146 = vst [vmem:[%s2144] sm:%s2136] %v2145
    $region1334: #{tpu_custom_call.1} parent=1328 // loop_footer
      %s2142 = sadd.s32 1, %s2138
    $region1335: #{tpu_custom_call.1} parent=1328 // loop_footer_branch
      %2137 = sbr.rel target = $region1331
    $region1336: #{tpu_custom_call.1} parent=1328 // loop_exit
      _
  $region1329: #{tpu_custom_call.1} parent=0 // pred_fallthru
    _
  // Predicated region
  $region1348: #{tpu_custom_call.1} parent=0 // pred_check
    _
  $region1349: #{tpu_custom_call.1} parent=0 // pred_check_branch
    %2170 = sbr.rel (0) target = $region1351
  $region1350: #{tpu_custom_call.1} parent=0 // pred_region
    %2171 = vsyncadd [#allocation2], 16
  $region1351: #{tpu_custom_call.1} parent=0 // pred_fallthru
    _
  %s2172 = sadd.s32 %s13, 45
  %s2173 = sld [smem:[#allocation4 + %s2172]]
  %s2174 = scalar_lea.vmem %s1, %s2173
  %s2175 = scalar_lea.vmem %s2, 45
  %p2177 = scmp.lt.u32.totalorder 1, 8
  %p2178 = pneg %p2177
  // Predicated region
  $region1352: #{tpu_custom_call.1} parent=0 // pred_check
    _
  $region1353: #{tpu_custom_call.1} parent=0 // pred_check_branch
    %2180 = sbr.rel (%p2177) target = $region1355
  $region1354: #{tpu_custom_call.1} parent=0 // pred_region
    %s2195 = sand.u32 1, 7
    %p2196 = scmp.eq.s32.totalorder %s2195, 0
    %p2197 = pneg %p2196
    // Predicated region
    $region1367: #{tpu_custom_call.1} parent=1354 // pred_check
      _
    $region1368: #{tpu_custom_call.1} parent=1354 // pred_check_branch
      %2199 = sbr.rel (%p2196) target = $region1370
    $region1369: #{tpu_custom_call.1} parent=1354 // pred_region
      %s2200 = sand.u32 1, 7
      %s2201 = ssub.s32 1, %s2200
      %s2202 = scalar_lea.vmem %s2174, %s2201
      %s2203 = ssub.s32 1, %s2200
      %s2204 = scalar_lea.vmem %s2175, %s2203
      %s2205 = sshllo.u32 0, %s2200
      loop: start=0, step=1, limit=1
      $region1371: #{tpu_custom_call.1} parent=1369 // loop_pre_header
        _
      $region1372: #{tpu_custom_call.1} parent=1369 // loop_header
        %s2207 = sphi 0, %s2211
        %p2208 = scmp.ge.s32.totalorder %s2207, 1
        %s2212 = sphi %s2202, %s2202
        %s2213 = sphi %s2204, %s2204
      $region1373: #{tpu_custom_call.1} parent=1369 // loop_header_branch
        %2210 = sbr.rel (%p2208) target = $region1377
      $region1374: #{tpu_custom_call.1} parent=1369 // loop_body
        %v2214 = vld [vmem:[%s2212] sm:%s2205]
        %2215 = vst [vmem:[%s2213] sm:%s2205] %v2214
      $region1375: #{tpu_custom_call.1} parent=1369 // loop_footer
        %s2211 = sadd.s32 1, %s2207
      $region1376: #{tpu_custom_call.1} parent=1369 // loop_footer_branch
        %2206 = sbr.rel target = $region1372
      $region1377: #{tpu_custom_call.1} parent=1369 // loop_exit
        _
    $region1370: #{tpu_custom_call.1} parent=1354 // pred_fallthru
      _
  $region1355: #{tpu_custom_call.1} parent=0 // pred_fallthru
    _
  // Predicated region
  $region1356: #{tpu_custom_call.1} parent=0 // pred_check
    %p2181 = pneg %p2177
  $region1357: #{tpu_custom_call.1} parent=0 // pred_check_branch
    %2183 = sbr.rel (%p2181) target = $region1359
  $region1358: #{tpu_custom_call.1} parent=0 // pred_region
    %s2184 = sshllo.u32 0, 1
    loop: start=0, step=1, limit=1
    $region1360: #{tpu_custom_call.1} parent=1358 // loop_pre_header
      _
    $region1361: #{tpu_custom_call.1} parent=1358 // loop_header
      %s2186 = sphi 0, %s2190
      %p2187 = scmp.ge.s32.totalorder %s2186, 1
      %s2191 = sphi %s2174, %s2174
      %s2192 = sphi %s2175, %s2175
    $region1362: #{tpu_custom_call.1} parent=1358 // loop_header_branch
      %2189 = sbr.rel (%p2187) target = $region1366
    $region1363: #{tpu_custom_call.1} parent=1358 // loop_body
      %v2193 = vld [vmem:[%s2191] sm:%s2184]
      %2194 = vst [vmem:[%s2192] sm:%s2184] %v2193
    $region1364: #{tpu_custom_call.1} parent=1358 // loop_footer
      %s2190 = sadd.s32 1, %s2186
    $region1365: #{tpu_custom_call.1} parent=1358 // loop_footer_branch
      %2185 = sbr.rel target = $region1361
    $region1366: #{tpu_custom_call.1} parent=1358 // loop_exit
      _
  $region1359: #{tpu_custom_call.1} parent=0 // pred_fallthru
    _
  // Predicated region
  $region1378: #{tpu_custom_call.1} parent=0 // pred_check
    _
  $region1379: #{tpu_custom_call.1} parent=0 // pred_check_branch
    %2218 = sbr.rel (0) target = $region1381
  $region1380: #{tpu_custom_call.1} parent=0 // pred_region
    %2219 = vsyncadd [#allocation2], 16
  $region1381: #{tpu_custom_call.1} parent=0 // pred_fallthru
    _
  %s2220 = sadd.s32 %s13, 46
  %s2221 = sld [smem:[#allocation4 + %s2220]]
  %s2222 = scalar_lea.vmem %s1, %s2221
  %s2223 = scalar_lea.vmem %s2, 46
  %p2225 = scmp.lt.u32.totalorder 1, 8
  %p2226 = pneg %p2225
  // Predicated region
  $region1382: #{tpu_custom_call.1} parent=0 // pred_check
    _
  $region1383: #{tpu_custom_call.1} parent=0 // pred_check_branch
    %2228 = sbr.rel (%p2225) target = $region1385
  $region1384: #{tpu_custom_call.1} parent=0 // pred_region
    %s2243 = sand.u32 1, 7
    %p2244 = scmp.eq.s32.totalorder %s2243, 0
    %p2245 = pneg %p2244
    // Predicated region
    $region1397: #{tpu_custom_call.1} parent=1384 // pred_check
      _
    $region1398: #{tpu_custom_call.1} parent=1384 // pred_check_branch
      %2247 = sbr.rel (%p2244) target = $region1400
    $region1399: #{tpu_custom_call.1} parent=1384 // pred_region
      %s2248 = sand.u32 1, 7
      %s2249 = ssub.s32 1, %s2248
      %s2250 = scalar_lea.vmem %s2222, %s2249
      %s2251 = ssub.s32 1, %s2248
      %s2252 = scalar_lea.vmem %s2223, %s2251
      %s2253 = sshllo.u32 0, %s2248
      loop: start=0, step=1, limit=1
      $region1401: #{tpu_custom_call.1} parent=1399 // loop_pre_header
        _
      $region1402: #{tpu_custom_call.1} parent=1399 // loop_header
        %s2255 = sphi 0, %s2259
        %p2256 = scmp.ge.s32.totalorder %s2255, 1
        %s2260 = sphi %s2250, %s2250
        %s2261 = sphi %s2252, %s2252
      $region1403: #{tpu_custom_call.1} parent=1399 // loop_header_branch
        %2258 = sbr.rel (%p2256) target = $region1407
      $region1404: #{tpu_custom_call.1} parent=1399 // loop_body
        %v2262 = vld [vmem:[%s2260] sm:%s2253]
        %2263 = vst [vmem:[%s2261] sm:%s2253] %v2262
      $region1405: #{tpu_custom_call.1} parent=1399 // loop_footer
        %s2259 = sadd.s32 1, %s2255
      $region1406: #{tpu_custom_call.1} parent=1399 // loop_footer_branch
        %2254 = sbr.rel target = $region1402
      $region1407: #{tpu_custom_call.1} parent=1399 // loop_exit
        _
    $region1400: #{tpu_custom_call.1} parent=1384 // pred_fallthru
      _
  $region1385: #{tpu_custom_call.1} parent=0 // pred_fallthru
    _
  // Predicated region
  $region1386: #{tpu_custom_call.1} parent=0 // pred_check
    %p2229 = pneg %p2225
  $region1387: #{tpu_custom_call.1} parent=0 // pred_check_branch
    %2231 = sbr.rel (%p2229) target = $region1389
  $region1388: #{tpu_custom_call.1} parent=0 // pred_region
    %s2232 = sshllo.u32 0, 1
    loop: start=0, step=1, limit=1
    $region1390: #{tpu_custom_call.1} parent=1388 // loop_pre_header
      _
    $region1391: #{tpu_custom_call.1} parent=1388 // loop_header
      %s2234 = sphi 0, %s2238
      %p2235 = scmp.ge.s32.totalorder %s2234, 1
      %s2239 = sphi %s2222, %s2222
      %s2240 = sphi %s2223, %s2223
    $region1392: #{tpu_custom_call.1} parent=1388 // loop_header_branch
      %2237 = sbr.rel (%p2235) target = $region1396
    $region1393: #{tpu_custom_call.1} parent=1388 // loop_body
      %v2241 = vld [vmem:[%s2239] sm:%s2232]
      %2242 = vst [vmem:[%s2240] sm:%s2232] %v2241
    $region1394: #{tpu_custom_call.1} parent=1388 // loop_footer
      %s2238 = sadd.s32 1, %s2234
    $region1395: #{tpu_custom_call.1} parent=1388 // loop_footer_branch
      %2233 = sbr.rel target = $region1391
    $region1396: #{tpu_custom_call.1} parent=1388 // loop_exit
      _
  $region1389: #{tpu_custom_call.1} parent=0 // pred_fallthru
    _
  // Predicated region
  $region1408: #{tpu_custom_call.1} parent=0 // pred_check
    _
  $region1409: #{tpu_custom_call.1} parent=0 // pred_check_branch
    %2266 = sbr.rel (0) target = $region1411
  $region1410: #{tpu_custom_call.1} parent=0 // pred_region
    %2267 = vsyncadd [#allocation2], 16
  $region1411: #{tpu_custom_call.1} parent=0 // pred_fallthru
    _
  %s2268 = sadd.s32 %s13, 47
  %s2269 = sld [smem:[#allocation4 + %s2268]]
  %s2270 = scalar_lea.vmem %s1, %s2269
  %s2271 = scalar_lea.vmem %s2, 47
  %p2273 = scmp.lt.u32.totalorder 1, 8
  %p2274 = pneg %p2273
  // Predicated region
  $region1412: #{tpu_custom_call.1} parent=0 // pred_check
    _
  $region1413: #{tpu_custom_call.1} parent=0 // pred_check_branch
    %2276 = sbr.rel (%p2273) target = $region1415
  $region1414: #{tpu_custom_call.1} parent=0 // pred_region
    %s2291 = sand.u32 1, 7
    %p2292 = scmp.eq.s32.totalorder %s2291, 0
    %p2293 = pneg %p2292
    // Predicated region
    $region1427: #{tpu_custom_call.1} parent=1414 // pred_check
      _
    $region1428: #{tpu_custom_call.1} parent=1414 // pred_check_branch
      %2295 = sbr.rel (%p2292) target = $region1430
    $region1429: #{tpu_custom_call.1} parent=1414 // pred_region
      %s2296 = sand.u32 1, 7
      %s2297 = ssub.s32 1, %s2296
      %s2298 = scalar_lea.vmem %s2270, %s2297
      %s2299 = ssub.s32 1, %s2296
      %s2300 = scalar_lea.vmem %s2271, %s2299
      %s2301 = sshllo.u32 0, %s2296
      loop: start=0, step=1, limit=1
      $region1431: #{tpu_custom_call.1} parent=1429 // loop_pre_header
        _
      $region1432: #{tpu_custom_call.1} parent=1429 // loop_header
        %s2303 = sphi 0, %s2307
        %p2304 = scmp.ge.s32.totalorder %s2303, 1
        %s2308 = sphi %s2298, %s2298
        %s2309 = sphi %s2300, %s2300
      $region1433: #{tpu_custom_call.1} parent=1429 // loop_header_branch
        %2306 = sbr.rel (%p2304) target = $region1437
      $region1434: #{tpu_custom_call.1} parent=1429 // loop_body
        %v2310 = vld [vmem:[%s2308] sm:%s2301]
        %2311 = vst [vmem:[%s2309] sm:%s2301] %v2310
      $region1435: #{tpu_custom_call.1} parent=1429 // loop_footer
        %s2307 = sadd.s32 1, %s2303
      $region1436: #{tpu_custom_call.1} parent=1429 // loop_footer_branch
        %2302 = sbr.rel target = $region1432
      $region1437: #{tpu_custom_call.1} parent=1429 // loop_exit
        _
    $region1430: #{tpu_custom_call.1} parent=1414 // pred_fallthru
      _
  $region1415: #{tpu_custom_call.1} parent=0 // pred_fallthru
    _
  // Predicated region
  $region1416: #{tpu_custom_call.1} parent=0 // pred_check
    %p2277 = pneg %p2273
  $region1417: #{tpu_custom_call.1} parent=0 // pred_check_branch
    %2279 = sbr.rel (%p2277) target = $region1419
  $region1418: #{tpu_custom_call.1} parent=0 // pred_region
    %s2280 = sshllo.u32 0, 1
    loop: start=0, step=1, limit=1
    $region1420: #{tpu_custom_call.1} parent=1418 // loop_pre_header
      _
    $region1421: #{tpu_custom_call.1} parent=1418 // loop_header
      %s2282 = sphi 0, %s2286
      %p2283 = scmp.ge.s32.totalorder %s2282, 1
      %s2287 = sphi %s2270, %s2270
      %s2288 = sphi %s2271, %s2271
    $region1422: #{tpu_custom_call.1} parent=1418 // loop_header_branch
      %2285 = sbr.rel (%p2283) target = $region1426
    $region1423: #{tpu_custom_call.1} parent=1418 // loop_body
      %v2289 = vld [vmem:[%s2287] sm:%s2280]
      %2290 = vst [vmem:[%s2288] sm:%s2280] %v2289
    $region1424: #{tpu_custom_call.1} parent=1418 // loop_footer
      %s2286 = sadd.s32 1, %s2282
    $region1425: #{tpu_custom_call.1} parent=1418 // loop_footer_branch
      %2281 = sbr.rel target = $region1421
    $region1426: #{tpu_custom_call.1} parent=1418 // loop_exit
      _
  $region1419: #{tpu_custom_call.1} parent=0 // pred_fallthru
    _
  // Predicated region
  $region1438: #{tpu_custom_call.1} parent=0 // pred_check
    _
  $region1439: #{tpu_custom_call.1} parent=0 // pred_check_branch
    %2314 = sbr.rel (0) target = $region1441
  $region1440: #{tpu_custom_call.1} parent=0 // pred_region
    %2315 = vsyncadd [#allocation2], 16
  $region1441: #{tpu_custom_call.1} parent=0 // pred_fallthru
    _
  %s2316 = sadd.s32 %s13, 48
  %s2317 = sld [smem:[#allocation4 + %s2316]]
  %s2318 = scalar_lea.vmem %s1, %s2317
  %s2319 = scalar_lea.vmem %s2, 48
  %p2321 = scmp.lt.u32.totalorder 1, 8
  %p2322 = pneg %p2321
  // Predicated region
  $region1442: #{tpu_custom_call.1} parent=0 // pred_check
    _
  $region1443: #{tpu_custom_call.1} parent=0 // pred_check_branch
    %2324 = sbr.rel (%p2321) target = $region1445
  $region1444: #{tpu_custom_call.1} parent=0 // pred_region
    %s2339 = sand.u32 1, 7
    %p2340 = scmp.eq.s32.totalorder %s2339, 0
    %p2341 = pneg %p2340
    // Predicated region
    $region1457: #{tpu_custom_call.1} parent=1444 // pred_check
      _
    $region1458: #{tpu_custom_call.1} parent=1444 // pred_check_branch
      %2343 = sbr.rel (%p2340) target = $region1460
    $region1459: #{tpu_custom_call.1} parent=1444 // pred_region
      %s2344 = sand.u32 1, 7
      %s2345 = ssub.s32 1, %s2344
      %s2346 = scalar_lea.vmem %s2318, %s2345
      %s2347 = ssub.s32 1, %s2344
      %s2348 = scalar_lea.vmem %s2319, %s2347
      %s2349 = sshllo.u32 0, %s2344
      loop: start=0, step=1, limit=1
      $region1461: #{tpu_custom_call.1} parent=1459 // loop_pre_header
        _
      $region1462: #{tpu_custom_call.1} parent=1459 // loop_header
        %s2351 = sphi 0, %s2355
        %p2352 = scmp.ge.s32.totalorder %s2351, 1
        %s2356 = sphi %s2346, %s2346
        %s2357 = sphi %s2348, %s2348
      $region1463: #{tpu_custom_call.1} parent=1459 // loop_header_branch
        %2354 = sbr.rel (%p2352) target = $region1467
      $region1464: #{tpu_custom_call.1} parent=1459 // loop_body
        %v2358 = vld [vmem:[%s2356] sm:%s2349]
        %2359 = vst [vmem:[%s2357] sm:%s2349] %v2358
      $region1465: #{tpu_custom_call.1} parent=1459 // loop_footer
        %s2355 = sadd.s32 1, %s2351
      $region1466: #{tpu_custom_call.1} parent=1459 // loop_footer_branch
        %2350 = sbr.rel target = $region1462
      $region1467: #{tpu_custom_call.1} parent=1459 // loop_exit
        _
    $region1460: #{tpu_custom_call.1} parent=1444 // pred_fallthru
      _
  $region1445: #{tpu_custom_call.1} parent=0 // pred_fallthru
    _
  // Predicated region
  $region1446: #{tpu_custom_call.1} parent=0 // pred_check
    %p2325 = pneg %p2321
  $region1447: #{tpu_custom_call.1} parent=0 // pred_check_branch
    %2327 = sbr.rel (%p2325) target = $region1449
  $region1448: #{tpu_custom_call.1} parent=0 // pred_region
    %s2328 = sshllo.u32 0, 1
    loop: start=0, step=1, limit=1
    $region1450: #{tpu_custom_call.1} parent=1448 // loop_pre_header
      _
    $region1451: #{tpu_custom_call.1} parent=1448 // loop_header
      %s2330 = sphi 0, %s2334
      %p2331 = scmp.ge.s32.totalorder %s2330, 1
      %s2335 = sphi %s2318, %s2318
      %s2336 = sphi %s2319, %s2319
    $region1452: #{tpu_custom_call.1} parent=1448 // loop_header_branch
      %2333 = sbr.rel (%p2331) target = $region1456
    $region1453: #{tpu_custom_call.1} parent=1448 // loop_body
      %v2337 = vld [vmem:[%s2335] sm:%s2328]
      %2338 = vst [vmem:[%s2336] sm:%s2328] %v2337
    $region1454: #{tpu_custom_call.1} parent=1448 // loop_footer
      %s2334 = sadd.s32 1, %s2330
    $region1455: #{tpu_custom_call.1} parent=1448 // loop_footer_branch
      %2329 = sbr.rel target = $region1451
    $region1456: #{tpu_custom_call.1} parent=1448 // loop_exit
      _
  $region1449: #{tpu_custom_call.1} parent=0 // pred_fallthru
    _
  // Predicated region
  $region1468: #{tpu_custom_call.1} parent=0 // pred_check
    _
  $region1469: #{tpu_custom_call.1} parent=0 // pred_check_branch
    %2362 = sbr.rel (0) target = $region1471
  $region1470: #{tpu_custom_call.1} parent=0 // pred_region
    %2363 = vsyncadd [#allocation2], 16
  $region1471: #{tpu_custom_call.1} parent=0 // pred_fallthru
    _
  %s2364 = sadd.s32 %s13, 49
  %s2365 = sld [smem:[#allocation4 + %s2364]]
  %s2366 = scalar_lea.vmem %s1, %s2365
  %s2367 = scalar_lea.vmem %s2, 49
  %p2369 = scmp.lt.u32.totalorder 1, 8
  %p2370 = pneg %p2369
  // Predicated region
  $region1472: #{tpu_custom_call.1} parent=0 // pred_check
    _
  $region1473: #{tpu_custom_call.1} parent=0 // pred_check_branch
    %2372 = sbr.rel (%p2369) target = $region1475
  $region1474: #{tpu_custom_call.1} parent=0 // pred_region
    %s2387 = sand.u32 1, 7
    %p2388 = scmp.eq.s32.totalorder %s2387, 0
    %p2389 = pneg %p2388
    // Predicated region
    $region1487: #{tpu_custom_call.1} parent=1474 // pred_check
      _
    $region1488: #{tpu_custom_call.1} parent=1474 // pred_check_branch
      %2391 = sbr.rel (%p2388) target = $region1490
    $region1489: #{tpu_custom_call.1} parent=1474 // pred_region
      %s2392 = sand.u32 1, 7
      %s2393 = ssub.s32 1, %s2392
      %s2394 = scalar_lea.vmem %s2366, %s2393
      %s2395 = ssub.s32 1, %s2392
      %s2396 = scalar_lea.vmem %s2367, %s2395
      %s2397 = sshllo.u32 0, %s2392
      loop: start=0, step=1, limit=1
      $region1491: #{tpu_custom_call.1} parent=1489 // loop_pre_header
        _
      $region1492: #{tpu_custom_call.1} parent=1489 // loop_header
        %s2399 = sphi 0, %s2403
        %p2400 = scmp.ge.s32.totalorder %s2399, 1
        %s2404 = sphi %s2394, %s2394
        %s2405 = sphi %s2396, %s2396
      $region1493: #{tpu_custom_call.1} parent=1489 // loop_header_branch
        %2402 = sbr.rel (%p2400) target = $region1497
      $region1494: #{tpu_custom_call.1} parent=1489 // loop_body
        %v2406 = vld [vmem:[%s2404] sm:%s2397]
        %2407 = vst [vmem:[%s2405] sm:%s2397] %v2406
      $region1495: #{tpu_custom_call.1} parent=1489 // loop_footer
        %s2403 = sadd.s32 1, %s2399
      $region1496: #{tpu_custom_call.1} parent=1489 // loop_footer_branch
        %2398 = sbr.rel target = $region1492
      $region1497: #{tpu_custom_call.1} parent=1489 // loop_exit
        _
    $region1490: #{tpu_custom_call.1} parent=1474 // pred_fallthru
      _
  $region1475: #{tpu_custom_call.1} parent=0 // pred_fallthru
    _
  // Predicated region
  $region1476: #{tpu_custom_call.1} parent=0 // pred_check
    %p2373 = pneg %p2369
  $region1477: #{tpu_custom_call.1} parent=0 // pred_check_branch
    %2375 = sbr.rel (%p2373) target = $region1479
  $region1478: #{tpu_custom_call.1} parent=0 // pred_region
    %s2376 = sshllo.u32 0, 1
    loop: start=0, step=1, limit=1
    $region1480: #{tpu_custom_call.1} parent=1478 // loop_pre_header
      _
    $region1481: #{tpu_custom_call.1} parent=1478 // loop_header
      %s2378 = sphi 0, %s2382
      %p2379 = scmp.ge.s32.totalorder %s2378, 1
      %s2383 = sphi %s2366, %s2366
      %s2384 = sphi %s2367, %s2367
    $region1482: #{tpu_custom_call.1} parent=1478 // loop_header_branch
      %2381 = sbr.rel (%p2379) target = $region1486
    $region1483: #{tpu_custom_call.1} parent=1478 // loop_body
      %v2385 = vld [vmem:[%s2383] sm:%s2376]
      %2386 = vst [vmem:[%s2384] sm:%s2376] %v2385
    $region1484: #{tpu_custom_call.1} parent=1478 // loop_footer
      %s2382 = sadd.s32 1, %s2378
    $region1485: #{tpu_custom_call.1} parent=1478 // loop_footer_branch
      %2377 = sbr.rel target = $region1481
    $region1486: #{tpu_custom_call.1} parent=1478 // loop_exit
      _
  $region1479: #{tpu_custom_call.1} parent=0 // pred_fallthru
    _
  // Predicated region
  $region1498: #{tpu_custom_call.1} parent=0 // pred_check
    _
  $region1499: #{tpu_custom_call.1} parent=0 // pred_check_branch
    %2410 = sbr.rel (0) target = $region1501
  $region1500: #{tpu_custom_call.1} parent=0 // pred_region
    %2411 = vsyncadd [#allocation2], 16
  $region1501: #{tpu_custom_call.1} parent=0 // pred_fallthru
    _
  %s2412 = sadd.s32 %s13, 50
  %s2413 = sld [smem:[#allocation4 + %s2412]]
  %s2414 = scalar_lea.vmem %s1, %s2413
  %s2415 = scalar_lea.vmem %s2, 50
  %p2417 = scmp.lt.u32.totalorder 1, 8
  %p2418 = pneg %p2417
  // Predicated region
  $region1502: #{tpu_custom_call.1} parent=0 // pred_check
    _
  $region1503: #{tpu_custom_call.1} parent=0 // pred_check_branch
    %2420 = sbr.rel (%p2417) target = $region1505
  $region1504: #{tpu_custom_call.1} parent=0 // pred_region
    %s2435 = sand.u32 1, 7
    %p2436 = scmp.eq.s32.totalorder %s2435, 0
    %p2437 = pneg %p2436
    // Predicated region
    $region1517: #{tpu_custom_call.1} parent=1504 // pred_check
      _
    $region1518: #{tpu_custom_call.1} parent=1504 // pred_check_branch
      %2439 = sbr.rel (%p2436) target = $region1520
    $region1519: #{tpu_custom_call.1} parent=1504 // pred_region
      %s2440 = sand.u32 1, 7
      %s2441 = ssub.s32 1, %s2440
      %s2442 = scalar_lea.vmem %s2414, %s2441
      %s2443 = ssub.s32 1, %s2440
      %s2444 = scalar_lea.vmem %s2415, %s2443
      %s2445 = sshllo.u32 0, %s2440
      loop: start=0, step=1, limit=1
      $region1521: #{tpu_custom_call.1} parent=1519 // loop_pre_header
        _
      $region1522: #{tpu_custom_call.1} parent=1519 // loop_header
        %s2447 = sphi 0, %s2451
        %p2448 = scmp.ge.s32.totalorder %s2447, 1
        %s2452 = sphi %s2442, %s2442
        %s2453 = sphi %s2444, %s2444
      $region1523: #{tpu_custom_call.1} parent=1519 // loop_header_branch
        %2450 = sbr.rel (%p2448) target = $region1527
      $region1524: #{tpu_custom_call.1} parent=1519 // loop_body
        %v2454 = vld [vmem:[%s2452] sm:%s2445]
        %2455 = vst [vmem:[%s2453] sm:%s2445] %v2454
      $region1525: #{tpu_custom_call.1} parent=1519 // loop_footer
        %s2451 = sadd.s32 1, %s2447
      $region1526: #{tpu_custom_call.1} parent=1519 // loop_footer_branch
        %2446 = sbr.rel target = $region1522
      $region1527: #{tpu_custom_call.1} parent=1519 // loop_exit
        _
    $region1520: #{tpu_custom_call.1} parent=1504 // pred_fallthru
      _
  $region1505: #{tpu_custom_call.1} parent=0 // pred_fallthru
    _
  // Predicated region
  $region1506: #{tpu_custom_call.1} parent=0 // pred_check
    %p2421 = pneg %p2417
  $region1507: #{tpu_custom_call.1} parent=0 // pred_check_branch
    %2423 = sbr.rel (%p2421) target = $region1509
  $region1508: #{tpu_custom_call.1} parent=0 // pred_region
    %s2424 = sshllo.u32 0, 1
    loop: start=0, step=1, limit=1
    $region1510: #{tpu_custom_call.1} parent=1508 // loop_pre_header
      _
    $region1511: #{tpu_custom_call.1} parent=1508 // loop_header
      %s2426 = sphi 0, %s2430
      %p2427 = scmp.ge.s32.totalorder %s2426, 1
      %s2431 = sphi %s2414, %s2414
      %s2432 = sphi %s2415, %s2415
    $region1512: #{tpu_custom_call.1} parent=1508 // loop_header_branch
      %2429 = sbr.rel (%p2427) target = $region1516
    $region1513: #{tpu_custom_call.1} parent=1508 // loop_body
      %v2433 = vld [vmem:[%s2431] sm:%s2424]
      %2434 = vst [vmem:[%s2432] sm:%s2424] %v2433
    $region1514: #{tpu_custom_call.1} parent=1508 // loop_footer
      %s2430 = sadd.s32 1, %s2426
    $region1515: #{tpu_custom_call.1} parent=1508 // loop_footer_branch
      %2425 = sbr.rel target = $region1511
    $region1516: #{tpu_custom_call.1} parent=1508 // loop_exit
      _
  $region1509: #{tpu_custom_call.1} parent=0 // pred_fallthru
    _
  // Predicated region
  $region1528: #{tpu_custom_call.1} parent=0 // pred_check
    _
  $region1529: #{tpu_custom_call.1} parent=0 // pred_check_branch
    %2458 = sbr.rel (0) target = $region1531
  $region1530: #{tpu_custom_call.1} parent=0 // pred_region
    %2459 = vsyncadd [#allocation2], 16
  $region1531: #{tpu_custom_call.1} parent=0 // pred_fallthru
    _
  %s2460 = sadd.s32 %s13, 51
  %s2461 = sld [smem:[#allocation4 + %s2460]]
  %s2462 = scalar_lea.vmem %s1, %s2461
  %s2463 = scalar_lea.vmem %s2, 51
  %p2465 = scmp.lt.u32.totalorder 1, 8
  %p2466 = pneg %p2465
  // Predicated region
  $region1532: #{tpu_custom_call.1} parent=0 // pred_check
    _
  $region1533: #{tpu_custom_call.1} parent=0 // pred_check_branch
    %2468 = sbr.rel (%p2465) target = $region1535
  $region1534: #{tpu_custom_call.1} parent=0 // pred_region
    %s2483 = sand.u32 1, 7
    %p2484 = scmp.eq.s32.totalorder %s2483, 0
    %p2485 = pneg %p2484
    // Predicated region
    $region1547: #{tpu_custom_call.1} parent=1534 // pred_check
      _
    $region1548: #{tpu_custom_call.1} parent=1534 // pred_check_branch
      %2487 = sbr.rel (%p2484) target = $region1550
    $region1549: #{tpu_custom_call.1} parent=1534 // pred_region
      %s2488 = sand.u32 1, 7
      %s2489 = ssub.s32 1, %s2488
      %s2490 = scalar_lea.vmem %s2462, %s2489
      %s2491 = ssub.s32 1, %s2488
      %s2492 = scalar_lea.vmem %s2463, %s2491
      %s2493 = sshllo.u32 0, %s2488
      loop: start=0, step=1, limit=1
      $region1551: #{tpu_custom_call.1} parent=1549 // loop_pre_header
        _
      $region1552: #{tpu_custom_call.1} parent=1549 // loop_header
        %s2495 = sphi 0, %s2499
        %p2496 = scmp.ge.s32.totalorder %s2495, 1
        %s2500 = sphi %s2490, %s2490
        %s2501 = sphi %s2492, %s2492
      $region1553: #{tpu_custom_call.1} parent=1549 // loop_header_branch
        %2498 = sbr.rel (%p2496) target = $region1557
      $region1554: #{tpu_custom_call.1} parent=1549 // loop_body
        %v2502 = vld [vmem:[%s2500] sm:%s2493]
        %2503 = vst [vmem:[%s2501] sm:%s2493] %v2502
      $region1555: #{tpu_custom_call.1} parent=1549 // loop_footer
        %s2499 = sadd.s32 1, %s2495
      $region1556: #{tpu_custom_call.1} parent=1549 // loop_footer_branch
        %2494 = sbr.rel target = $region1552
      $region1557: #{tpu_custom_call.1} parent=1549 // loop_exit
        _
    $region1550: #{tpu_custom_call.1} parent=1534 // pred_fallthru
      _
  $region1535: #{tpu_custom_call.1} parent=0 // pred_fallthru
    _
  // Predicated region
  $region1536: #{tpu_custom_call.1} parent=0 // pred_check
    %p2469 = pneg %p2465
  $region1537: #{tpu_custom_call.1} parent=0 // pred_check_branch
    %2471 = sbr.rel (%p2469) target = $region1539
  $region1538: #{tpu_custom_call.1} parent=0 // pred_region
    %s2472 = sshllo.u32 0, 1
    loop: start=0, step=1, limit=1
    $region1540: #{tpu_custom_call.1} parent=1538 // loop_pre_header
      _
    $region1541: #{tpu_custom_call.1} parent=1538 // loop_header
      %s2474 = sphi 0, %s2478
      %p2475 = scmp.ge.s32.totalorder %s2474, 1
      %s2479 = sphi %s2462, %s2462
      %s2480 = sphi %s2463, %s2463
    $region1542: #{tpu_custom_call.1} parent=1538 // loop_header_branch
      %2477 = sbr.rel (%p2475) target = $region1546
    $region1543: #{tpu_custom_call.1} parent=1538 // loop_body
      %v2481 = vld [vmem:[%s2479] sm:%s2472]
      %2482 = vst [vmem:[%s2480] sm:%s2472] %v2481
    $region1544: #{tpu_custom_call.1} parent=1538 // loop_footer
      %s2478 = sadd.s32 1, %s2474
    $region1545: #{tpu_custom_call.1} parent=1538 // loop_footer_branch
      %2473 = sbr.rel target = $region1541
    $region1546: #{tpu_custom_call.1} parent=1538 // loop_exit
      _
  $region1539: #{tpu_custom_call.1} parent=0 // pred_fallthru
    _
  // Predicated region
  $region1558: #{tpu_custom_call.1} parent=0 // pred_check
    _
  $region1559: #{tpu_custom_call.1} parent=0 // pred_check_branch
    %2506 = sbr.rel (0) target = $region1561
  $region1560: #{tpu_custom_call.1} parent=0 // pred_region
    %2507 = vsyncadd [#allocation2], 16
  $region1561: #{tpu_custom_call.1} parent=0 // pred_fallthru
    _
  %s2508 = sadd.s32 %s13, 52
  %s2509 = sld [smem:[#allocation4 + %s2508]]
  %s2510 = scalar_lea.vmem %s1, %s2509
  %s2511 = scalar_lea.vmem %s2, 52
  %p2513 = scmp.lt.u32.totalorder 1, 8
  %p2514 = pneg %p2513
  // Predicated region
  $region1562: #{tpu_custom_call.1} parent=0 // pred_check
    _
  $region1563: #{tpu_custom_call.1} parent=0 // pred_check_branch
    %2516 = sbr.rel (%p2513) target = $region1565
  $region1564: #{tpu_custom_call.1} parent=0 // pred_region
    %s2531 = sand.u32 1, 7
    %p2532 = scmp.eq.s32.totalorder %s2531, 0
    %p2533 = pneg %p2532
    // Predicated region
    $region1577: #{tpu_custom_call.1} parent=1564 // pred_check
      _
    $region1578: #{tpu_custom_call.1} parent=1564 // pred_check_branch
      %2535 = sbr.rel (%p2532) target = $region1580
    $region1579: #{tpu_custom_call.1} parent=1564 // pred_region
      %s2536 = sand.u32 1, 7
      %s2537 = ssub.s32 1, %s2536
      %s2538 = scalar_lea.vmem %s2510, %s2537
      %s2539 = ssub.s32 1, %s2536
      %s2540 = scalar_lea.vmem %s2511, %s2539
      %s2541 = sshllo.u32 0, %s2536
      loop: start=0, step=1, limit=1
      $region1581: #{tpu_custom_call.1} parent=1579 // loop_pre_header
        _
      $region1582: #{tpu_custom_call.1} parent=1579 // loop_header
        %s2543 = sphi 0, %s2547
        %p2544 = scmp.ge.s32.totalorder %s2543, 1
        %s2548 = sphi %s2538, %s2538
        %s2549 = sphi %s2540, %s2540
      $region1583: #{tpu_custom_call.1} parent=1579 // loop_header_branch
        %2546 = sbr.rel (%p2544) target = $region1587
      $region1584: #{tpu_custom_call.1} parent=1579 // loop_body
        %v2550 = vld [vmem:[%s2548] sm:%s2541]
        %2551 = vst [vmem:[%s2549] sm:%s2541] %v2550
      $region1585: #{tpu_custom_call.1} parent=1579 // loop_footer
        %s2547 = sadd.s32 1, %s2543
      $region1586: #{tpu_custom_call.1} parent=1579 // loop_footer_branch
        %2542 = sbr.rel target = $region1582
      $region1587: #{tpu_custom_call.1} parent=1579 // loop_exit
        _
    $region1580: #{tpu_custom_call.1} parent=1564 // pred_fallthru
      _
  $region1565: #{tpu_custom_call.1} parent=0 // pred_fallthru
    _
  // Predicated region
  $region1566: #{tpu_custom_call.1} parent=0 // pred_check
    %p2517 = pneg %p2513
  $region1567: #{tpu_custom_call.1} parent=0 // pred_check_branch
    %2519 = sbr.rel (%p2517) target = $region1569
  $region1568: #{tpu_custom_call.1} parent=0 // pred_region
    %s2520 = sshllo.u32 0, 1
    loop: start=0, step=1, limit=1
    $region1570: #{tpu_custom_call.1} parent=1568 // loop_pre_header
      _
    $region1571: #{tpu_custom_call.1} parent=1568 // loop_header
      %s2522 = sphi 0, %s2526
      %p2523 = scmp.ge.s32.totalorder %s2522, 1
      %s2527 = sphi %s2510, %s2510
      %s2528 = sphi %s2511, %s2511
    $region1572: #{tpu_custom_call.1} parent=1568 // loop_header_branch
      %2525 = sbr.rel (%p2523) target = $region1576
    $region1573: #{tpu_custom_call.1} parent=1568 // loop_body
      %v2529 = vld [vmem:[%s2527] sm:%s2520]
      %2530 = vst [vmem:[%s2528] sm:%s2520] %v2529
    $region1574: #{tpu_custom_call.1} parent=1568 // loop_footer
      %s2526 = sadd.s32 1, %s2522
    $region1575: #{tpu_custom_call.1} parent=1568 // loop_footer_branch
      %2521 = sbr.rel target = $region1571
    $region1576: #{tpu_custom_call.1} parent=1568 // loop_exit
      _
  $region1569: #{tpu_custom_call.1} parent=0 // pred_fallthru
    _
  // Predicated region
  $region1588: #{tpu_custom_call.1} parent=0 // pred_check
    _
  $region1589: #{tpu_custom_call.1} parent=0 // pred_check_branch
    %2554 = sbr.rel (0) target = $region1591
  $region1590: #{tpu_custom_call.1} parent=0 // pred_region
    %2555 = vsyncadd [#allocation2], 16
  $region1591: #{tpu_custom_call.1} parent=0 // pred_fallthru
    _
  %s2556 = sadd.s32 %s13, 53
  %s2557 = sld [smem:[#allocation4 + %s2556]]
  %s2558 = scalar_lea.vmem %s1, %s2557
  %s2559 = scalar_lea.vmem %s2, 53
  %p2561 = scmp.lt.u32.totalorder 1, 8
  %p2562 = pneg %p2561
  // Predicated region
  $region1592: #{tpu_custom_call.1} parent=0 // pred_check
    _
  $region1593: #{tpu_custom_call.1} parent=0 // pred_check_branch
    %2564 = sbr.rel (%p2561) target = $region1595
  $region1594: #{tpu_custom_call.1} parent=0 // pred_region
    %s2579 = sand.u32 1, 7
    %p2580 = scmp.eq.s32.totalorder %s2579, 0
    %p2581 = pneg %p2580
    // Predicated region
    $region1607: #{tpu_custom_call.1} parent=1594 // pred_check
      _
    $region1608: #{tpu_custom_call.1} parent=1594 // pred_check_branch
      %2583 = sbr.rel (%p2580) target = $region1610
    $region1609: #{tpu_custom_call.1} parent=1594 // pred_region
      %s2584 = sand.u32 1, 7
      %s2585 = ssub.s32 1, %s2584
      %s2586 = scalar_lea.vmem %s2558, %s2585
      %s2587 = ssub.s32 1, %s2584
      %s2588 = scalar_lea.vmem %s2559, %s2587
      %s2589 = sshllo.u32 0, %s2584
      loop: start=0, step=1, limit=1
      $region1611: #{tpu_custom_call.1} parent=1609 // loop_pre_header
        _
      $region1612: #{tpu_custom_call.1} parent=1609 // loop_header
        %s2591 = sphi 0, %s2595
        %p2592 = scmp.ge.s32.totalorder %s2591, 1
        %s2596 = sphi %s2586, %s2586
        %s2597 = sphi %s2588, %s2588
      $region1613: #{tpu_custom_call.1} parent=1609 // loop_header_branch
        %2594 = sbr.rel (%p2592) target = $region1617
      $region1614: #{tpu_custom_call.1} parent=1609 // loop_body
        %v2598 = vld [vmem:[%s2596] sm:%s2589]
        %2599 = vst [vmem:[%s2597] sm:%s2589] %v2598
      $region1615: #{tpu_custom_call.1} parent=1609 // loop_footer
        %s2595 = sadd.s32 1, %s2591
      $region1616: #{tpu_custom_call.1} parent=1609 // loop_footer_branch
        %2590 = sbr.rel target = $region1612
      $region1617: #{tpu_custom_call.1} parent=1609 // loop_exit
        _
    $region1610: #{tpu_custom_call.1} parent=1594 // pred_fallthru
      _
  $region1595: #{tpu_custom_call.1} parent=0 // pred_fallthru
    _
  // Predicated region
  $region1596: #{tpu_custom_call.1} parent=0 // pred_check
    %p2565 = pneg %p2561
  $region1597: #{tpu_custom_call.1} parent=0 // pred_check_branch
    %2567 = sbr.rel (%p2565) target = $region1599
  $region1598: #{tpu_custom_call.1} parent=0 // pred_region
    %s2568 = sshllo.u32 0, 1
    loop: start=0, step=1, limit=1
    $region1600: #{tpu_custom_call.1} parent=1598 // loop_pre_header
      _
    $region1601: #{tpu_custom_call.1} parent=1598 // loop_header
      %s2570 = sphi 0, %s2574
      %p2571 = scmp.ge.s32.totalorder %s2570, 1
      %s2575 = sphi %s2558, %s2558
      %s2576 = sphi %s2559, %s2559
    $region1602: #{tpu_custom_call.1} parent=1598 // loop_header_branch
      %2573 = sbr.rel (%p2571) target = $region1606
    $region1603: #{tpu_custom_call.1} parent=1598 // loop_body
      %v2577 = vld [vmem:[%s2575] sm:%s2568]
      %2578 = vst [vmem:[%s2576] sm:%s2568] %v2577
    $region1604: #{tpu_custom_call.1} parent=1598 // loop_footer
      %s2574 = sadd.s32 1, %s2570
    $region1605: #{tpu_custom_call.1} parent=1598 // loop_footer_branch
      %2569 = sbr.rel target = $region1601
    $region1606: #{tpu_custom_call.1} parent=1598 // loop_exit
      _
  $region1599: #{tpu_custom_call.1} parent=0 // pred_fallthru
    _
  // Predicated region
  $region1618: #{tpu_custom_call.1} parent=0 // pred_check
    _
  $region1619: #{tpu_custom_call.1} parent=0 // pred_check_branch
    %2602 = sbr.rel (0) target = $region1621
  $region1620: #{tpu_custom_call.1} parent=0 // pred_region
    %2603 = vsyncadd [#allocation2], 16
  $region1621: #{tpu_custom_call.1} parent=0 // pred_fallthru
    _
  %s2604 = sadd.s32 %s13, 54
  %s2605 = sld [smem:[#allocation4 + %s2604]]
  %s2606 = scalar_lea.vmem %s1, %s2605
  %s2607 = scalar_lea.vmem %s2, 54
  %p2609 = scmp.lt.u32.totalorder 1, 8
  %p2610 = pneg %p2609
  // Predicated region
  $region1622: #{tpu_custom_call.1} parent=0 // pred_check
    _
  $region1623: #{tpu_custom_call.1} parent=0 // pred_check_branch
    %2612 = sbr.rel (%p2609) target = $region1625
  $region1624: #{tpu_custom_call.1} parent=0 // pred_region
    %s2627 = sand.u32 1, 7
    %p2628 = scmp.eq.s32.totalorder %s2627, 0
    %p2629 = pneg %p2628
    // Predicated region
    $region1637: #{tpu_custom_call.1} parent=1624 // pred_check
      _
    $region1638: #{tpu_custom_call.1} parent=1624 // pred_check_branch
      %2631 = sbr.rel (%p2628) target = $region1640
    $region1639: #{tpu_custom_call.1} parent=1624 // pred_region
      %s2632 = sand.u32 1, 7
      %s2633 = ssub.s32 1, %s2632
      %s2634 = scalar_lea.vmem %s2606, %s2633
      %s2635 = ssub.s32 1, %s2632
      %s2636 = scalar_lea.vmem %s2607, %s2635
      %s2637 = sshllo.u32 0, %s2632
      loop: start=0, step=1, limit=1
      $region1641: #{tpu_custom_call.1} parent=1639 // loop_pre_header
        _
      $region1642: #{tpu_custom_call.1} parent=1639 // loop_header
        %s2639 = sphi 0, %s2643
        %p2640 = scmp.ge.s32.totalorder %s2639, 1
        %s2644 = sphi %s2634, %s2634
        %s2645 = sphi %s2636, %s2636
      $region1643: #{tpu_custom_call.1} parent=1639 // loop_header_branch
        %2642 = sbr.rel (%p2640) target = $region1647
      $region1644: #{tpu_custom_call.1} parent=1639 // loop_body
        %v2646 = vld [vmem:[%s2644] sm:%s2637]
        %2647 = vst [vmem:[%s2645] sm:%s2637] %v2646
      $region1645: #{tpu_custom_call.1} parent=1639 // loop_footer
        %s2643 = sadd.s32 1, %s2639
      $region1646: #{tpu_custom_call.1} parent=1639 // loop_footer_branch
        %2638 = sbr.rel target = $region1642
      $region1647: #{tpu_custom_call.1} parent=1639 // loop_exit
        _
    $region1640: #{tpu_custom_call.1} parent=1624 // pred_fallthru
      _
  $region1625: #{tpu_custom_call.1} parent=0 // pred_fallthru
    _
  // Predicated region
  $region1626: #{tpu_custom_call.1} parent=0 // pred_check
    %p2613 = pneg %p2609
  $region1627: #{tpu_custom_call.1} parent=0 // pred_check_branch
    %2615 = sbr.rel (%p2613) target = $region1629
  $region1628: #{tpu_custom_call.1} parent=0 // pred_region
    %s2616 = sshllo.u32 0, 1
    loop: start=0, step=1, limit=1
    $region1630: #{tpu_custom_call.1} parent=1628 // loop_pre_header
      _
    $region1631: #{tpu_custom_call.1} parent=1628 // loop_header
      %s2618 = sphi 0, %s2622
      %p2619 = scmp.ge.s32.totalorder %s2618, 1
      %s2623 = sphi %s2606, %s2606
      %s2624 = sphi %s2607, %s2607
    $region1632: #{tpu_custom_call.1} parent=1628 // loop_header_branch
      %2621 = sbr.rel (%p2619) target = $region1636
    $region1633: #{tpu_custom_call.1} parent=1628 // loop_body
      %v2625 = vld [vmem:[%s2623] sm:%s2616]
      %2626 = vst [vmem:[%s2624] sm:%s2616] %v2625
    $region1634: #{tpu_custom_call.1} parent=1628 // loop_footer
      %s2622 = sadd.s32 1, %s2618
    $region1635: #{tpu_custom_call.1} parent=1628 // loop_footer_branch
      %2617 = sbr.rel target = $region1631
    $region1636: #{tpu_custom_call.1} parent=1628 // loop_exit
      _
  $region1629: #{tpu_custom_call.1} parent=0 // pred_fallthru
    _
  // Predicated region
  $region1648: #{tpu_custom_call.1} parent=0 // pred_check
    _
  $region1649: #{tpu_custom_call.1} parent=0 // pred_check_branch
    %2650 = sbr.rel (0) target = $region1651
  $region1650: #{tpu_custom_call.1} parent=0 // pred_region
    %2651 = vsyncadd [#allocation2], 16
  $region1651: #{tpu_custom_call.1} parent=0 // pred_fallthru
    _
  %s2652 = sadd.s32 %s13, 55
  %s2653 = sld [smem:[#allocation4 + %s2652]]
  %s2654 = scalar_lea.vmem %s1, %s2653
  %s2655 = scalar_lea.vmem %s2, 55
  %p2657 = scmp.lt.u32.totalorder 1, 8
  %p2658 = pneg %p2657
  // Predicated region
  $region1652: #{tpu_custom_call.1} parent=0 // pred_check
    _
  $region1653: #{tpu_custom_call.1} parent=0 // pred_check_branch
    %2660 = sbr.rel (%p2657) target = $region1655
  $region1654: #{tpu_custom_call.1} parent=0 // pred_region
    %s2675 = sand.u32 1, 7
    %p2676 = scmp.eq.s32.totalorder %s2675, 0
    %p2677 = pneg %p2676
    // Predicated region
    $region1667: #{tpu_custom_call.1} parent=1654 // pred_check
      _
    $region1668: #{tpu_custom_call.1} parent=1654 // pred_check_branch
      %2679 = sbr.rel (%p2676) target = $region1670
    $region1669: #{tpu_custom_call.1} parent=1654 // pred_region
      %s2680 = sand.u32 1, 7
      %s2681 = ssub.s32 1, %s2680
      %s2682 = scalar_lea.vmem %s2654, %s2681
      %s2683 = ssub.s32 1, %s2680
      %s2684 = scalar_lea.vmem %s2655, %s2683
      %s2685 = sshllo.u32 0, %s2680
      loop: start=0, step=1, limit=1
      $region1671: #{tpu_custom_call.1} parent=1669 // loop_pre_header
        _
      $region1672: #{tpu_custom_call.1} parent=1669 // loop_header
        %s2687 = sphi 0, %s2691
        %p2688 = scmp.ge.s32.totalorder %s2687, 1
        %s2692 = sphi %s2682, %s2682
        %s2693 = sphi %s2684, %s2684
      $region1673: #{tpu_custom_call.1} parent=1669 // loop_header_branch
        %2690 = sbr.rel (%p2688) target = $region1677
      $region1674: #{tpu_custom_call.1} parent=1669 // loop_body
        %v2694 = vld [vmem:[%s2692] sm:%s2685]
        %2695 = vst [vmem:[%s2693] sm:%s2685] %v2694
      $region1675: #{tpu_custom_call.1} parent=1669 // loop_footer
        %s2691 = sadd.s32 1, %s2687
      $region1676: #{tpu_custom_call.1} parent=1669 // loop_footer_branch
        %2686 = sbr.rel target = $region1672
      $region1677: #{tpu_custom_call.1} parent=1669 // loop_exit
        _
    $region1670: #{tpu_custom_call.1} parent=1654 // pred_fallthru
      _
  $region1655: #{tpu_custom_call.1} parent=0 // pred_fallthru
    _
  // Predicated region
  $region1656: #{tpu_custom_call.1} parent=0 // pred_check
    %p2661 = pneg %p2657
  $region1657: #{tpu_custom_call.1} parent=0 // pred_check_branch
    %2663 = sbr.rel (%p2661) target = $region1659
  $region1658: #{tpu_custom_call.1} parent=0 // pred_region
    %s2664 = sshllo.u32 0, 1
    loop: start=0, step=1, limit=1
    $region1660: #{tpu_custom_call.1} parent=1658 // loop_pre_header
      _
    $region1661: #{tpu_custom_call.1} parent=1658 // loop_header
      %s2666 = sphi 0, %s2670
      %p2667 = scmp.ge.s32.totalorder %s2666, 1
      %s2671 = sphi %s2654, %s2654
      %s2672 = sphi %s2655, %s2655
    $region1662: #{tpu_custom_call.1} parent=1658 // loop_header_branch
      %2669 = sbr.rel (%p2667) target = $region1666
    $region1663: #{tpu_custom_call.1} parent=1658 // loop_body
      %v2673 = vld [vmem:[%s2671] sm:%s2664]
      %2674 = vst [vmem:[%s2672] sm:%s2664] %v2673
    $region1664: #{tpu_custom_call.1} parent=1658 // loop_footer
      %s2670 = sadd.s32 1, %s2666
    $region1665: #{tpu_custom_call.1} parent=1658 // loop_footer_branch
      %2665 = sbr.rel target = $region1661
    $region1666: #{tpu_custom_call.1} parent=1658 // loop_exit
      _
  $region1659: #{tpu_custom_call.1} parent=0 // pred_fallthru
    _
  // Predicated region
  $region1678: #{tpu_custom_call.1} parent=0 // pred_check
    _
  $region1679: #{tpu_custom_call.1} parent=0 // pred_check_branch
    %2698 = sbr.rel (0) target = $region1681
  $region1680: #{tpu_custom_call.1} parent=0 // pred_region
    %2699 = vsyncadd [#allocation2], 16
  $region1681: #{tpu_custom_call.1} parent=0 // pred_fallthru
    _
  %s2700 = sadd.s32 %s13, 56
  %s2701 = sld [smem:[#allocation4 + %s2700]]
  %s2702 = scalar_lea.vmem %s1, %s2701
  %s2703 = scalar_lea.vmem %s2, 56
  %p2705 = scmp.lt.u32.totalorder 1, 8
  %p2706 = pneg %p2705
  // Predicated region
  $region1682: #{tpu_custom_call.1} parent=0 // pred_check
    _
  $region1683: #{tpu_custom_call.1} parent=0 // pred_check_branch
    %2708 = sbr.rel (%p2705) target = $region1685
  $region1684: #{tpu_custom_call.1} parent=0 // pred_region
    %s2723 = sand.u32 1, 7
    %p2724 = scmp.eq.s32.totalorder %s2723, 0
    %p2725 = pneg %p2724
    // Predicated region
    $region1697: #{tpu_custom_call.1} parent=1684 // pred_check
      _
    $region1698: #{tpu_custom_call.1} parent=1684 // pred_check_branch
      %2727 = sbr.rel (%p2724) target = $region1700
    $region1699: #{tpu_custom_call.1} parent=1684 // pred_region
      %s2728 = sand.u32 1, 7
      %s2729 = ssub.s32 1, %s2728
      %s2730 = scalar_lea.vmem %s2702, %s2729
      %s2731 = ssub.s32 1, %s2728
      %s2732 = scalar_lea.vmem %s2703, %s2731
      %s2733 = sshllo.u32 0, %s2728
      loop: start=0, step=1, limit=1
      $region1701: #{tpu_custom_call.1} parent=1699 // loop_pre_header
        _
      $region1702: #{tpu_custom_call.1} parent=1699 // loop_header
        %s2735 = sphi 0, %s2739
        %p2736 = scmp.ge.s32.totalorder %s2735, 1
        %s2740 = sphi %s2730, %s2730
        %s2741 = sphi %s2732, %s2732
      $region1703: #{tpu_custom_call.1} parent=1699 // loop_header_branch
        %2738 = sbr.rel (%p2736) target = $region1707
      $region1704: #{tpu_custom_call.1} parent=1699 // loop_body
        %v2742 = vld [vmem:[%s2740] sm:%s2733]
        %2743 = vst [vmem:[%s2741] sm:%s2733] %v2742
      $region1705: #{tpu_custom_call.1} parent=1699 // loop_footer
        %s2739 = sadd.s32 1, %s2735
      $region1706: #{tpu_custom_call.1} parent=1699 // loop_footer_branch
        %2734 = sbr.rel target = $region1702
      $region1707: #{tpu_custom_call.1} parent=1699 // loop_exit
        _
    $region1700: #{tpu_custom_call.1} parent=1684 // pred_fallthru
      _
  $region1685: #{tpu_custom_call.1} parent=0 // pred_fallthru
    _
  // Predicated region
  $region1686: #{tpu_custom_call.1} parent=0 // pred_check
    %p2709 = pneg %p2705
  $region1687: #{tpu_custom_call.1} parent=0 // pred_check_branch
    %2711 = sbr.rel (%p2709) target = $region1689
  $region1688: #{tpu_custom_call.1} parent=0 // pred_region
    %s2712 = sshllo.u32 0, 1
    loop: start=0, step=1, limit=1
    $region1690: #{tpu_custom_call.1} parent=1688 // loop_pre_header
      _
    $region1691: #{tpu_custom_call.1} parent=1688 // loop_header
      %s2714 = sphi 0, %s2718
      %p2715 = scmp.ge.s32.totalorder %s2714, 1
      %s2719 = sphi %s2702, %s2702
      %s2720 = sphi %s2703, %s2703
    $region1692: #{tpu_custom_call.1} parent=1688 // loop_header_branch
      %2717 = sbr.rel (%p2715) target = $region1696
    $region1693: #{tpu_custom_call.1} parent=1688 // loop_body
      %v2721 = vld [vmem:[%s2719] sm:%s2712]
      %2722 = vst [vmem:[%s2720] sm:%s2712] %v2721
    $region1694: #{tpu_custom_call.1} parent=1688 // loop_footer
      %s2718 = sadd.s32 1, %s2714
    $region1695: #{tpu_custom_call.1} parent=1688 // loop_footer_branch
      %2713 = sbr.rel target = $region1691
    $region1696: #{tpu_custom_call.1} parent=1688 // loop_exit
      _
  $region1689: #{tpu_custom_call.1} parent=0 // pred_fallthru
    _
  // Predicated region
  $region1708: #{tpu_custom_call.1} parent=0 // pred_check
    _
  $region1709: #{tpu_custom_call.1} parent=0 // pred_check_branch
    %2746 = sbr.rel (0) target = $region1711
  $region1710: #{tpu_custom_call.1} parent=0 // pred_region
    %2747 = vsyncadd [#allocation2], 16
  $region1711: #{tpu_custom_call.1} parent=0 // pred_fallthru
    _
  %s2748 = sadd.s32 %s13, 57
  %s2749 = sld [smem:[#allocation4 + %s2748]]
  %s2750 = scalar_lea.vmem %s1, %s2749
  %s2751 = scalar_lea.vmem %s2, 57
  %p2753 = scmp.lt.u32.totalorder 1, 8
  %p2754 = pneg %p2753
  // Predicated region
  $region1712: #{tpu_custom_call.1} parent=0 // pred_check
    _
  $region1713: #{tpu_custom_call.1} parent=0 // pred_check_branch
    %2756 = sbr.rel (%p2753) target = $region1715
  $region1714: #{tpu_custom_call.1} parent=0 // pred_region
    %s2771 = sand.u32 1, 7
    %p2772 = scmp.eq.s32.totalorder %s2771, 0
    %p2773 = pneg %p2772
    // Predicated region
    $region1727: #{tpu_custom_call.1} parent=1714 // pred_check
      _
    $region1728: #{tpu_custom_call.1} parent=1714 // pred_check_branch
      %2775 = sbr.rel (%p2772) target = $region1730
    $region1729: #{tpu_custom_call.1} parent=1714 // pred_region
      %s2776 = sand.u32 1, 7
      %s2777 = ssub.s32 1, %s2776
      %s2778 = scalar_lea.vmem %s2750, %s2777
      %s2779 = ssub.s32 1, %s2776
      %s2780 = scalar_lea.vmem %s2751, %s2779
      %s2781 = sshllo.u32 0, %s2776
      loop: start=0, step=1, limit=1
      $region1731: #{tpu_custom_call.1} parent=1729 // loop_pre_header
        _
      $region1732: #{tpu_custom_call.1} parent=1729 // loop_header
        %s2783 = sphi 0, %s2787
        %p2784 = scmp.ge.s32.totalorder %s2783, 1
        %s2788 = sphi %s2778, %s2778
        %s2789 = sphi %s2780, %s2780
      $region1733: #{tpu_custom_call.1} parent=1729 // loop_header_branch
        %2786 = sbr.rel (%p2784) target = $region1737
      $region1734: #{tpu_custom_call.1} parent=1729 // loop_body
        %v2790 = vld [vmem:[%s2788] sm:%s2781]
        %2791 = vst [vmem:[%s2789] sm:%s2781] %v2790
      $region1735: #{tpu_custom_call.1} parent=1729 // loop_footer
        %s2787 = sadd.s32 1, %s2783
      $region1736: #{tpu_custom_call.1} parent=1729 // loop_footer_branch
        %2782 = sbr.rel target = $region1732
      $region1737: #{tpu_custom_call.1} parent=1729 // loop_exit
        _
    $region1730: #{tpu_custom_call.1} parent=1714 // pred_fallthru
      _
  $region1715: #{tpu_custom_call.1} parent=0 // pred_fallthru
    _
  // Predicated region
  $region1716: #{tpu_custom_call.1} parent=0 // pred_check
    %p2757 = pneg %p2753
  $region1717: #{tpu_custom_call.1} parent=0 // pred_check_branch
    %2759 = sbr.rel (%p2757) target = $region1719
  $region1718: #{tpu_custom_call.1} parent=0 // pred_region
    %s2760 = sshllo.u32 0, 1
    loop: start=0, step=1, limit=1
    $region1720: #{tpu_custom_call.1} parent=1718 // loop_pre_header
      _
    $region1721: #{tpu_custom_call.1} parent=1718 // loop_header
      %s2762 = sphi 0, %s2766
      %p2763 = scmp.ge.s32.totalorder %s2762, 1
      %s2767 = sphi %s2750, %s2750
      %s2768 = sphi %s2751, %s2751
    $region1722: #{tpu_custom_call.1} parent=1718 // loop_header_branch
      %2765 = sbr.rel (%p2763) target = $region1726
    $region1723: #{tpu_custom_call.1} parent=1718 // loop_body
      %v2769 = vld [vmem:[%s2767] sm:%s2760]
      %2770 = vst [vmem:[%s2768] sm:%s2760] %v2769
    $region1724: #{tpu_custom_call.1} parent=1718 // loop_footer
      %s2766 = sadd.s32 1, %s2762
    $region1725: #{tpu_custom_call.1} parent=1718 // loop_footer_branch
      %2761 = sbr.rel target = $region1721
    $region1726: #{tpu_custom_call.1} parent=1718 // loop_exit
      _
  $region1719: #{tpu_custom_call.1} parent=0 // pred_fallthru
    _
  // Predicated region
  $region1738: #{tpu_custom_call.1} parent=0 // pred_check
    _
  $region1739: #{tpu_custom_call.1} parent=0 // pred_check_branch
    %2794 = sbr.rel (0) target = $region1741
  $region1740: #{tpu_custom_call.1} parent=0 // pred_region
    %2795 = vsyncadd [#allocation2], 16
  $region1741: #{tpu_custom_call.1} parent=0 // pred_fallthru
    _
  %s2796 = sadd.s32 %s13, 58
  %s2797 = sld [smem:[#allocation4 + %s2796]]
  %s2798 = scalar_lea.vmem %s1, %s2797
  %s2799 = scalar_lea.vmem %s2, 58
  %p2801 = scmp.lt.u32.totalorder 1, 8
  %p2802 = pneg %p2801
  // Predicated region
  $region1742: #{tpu_custom_call.1} parent=0 // pred_check
    _
  $region1743: #{tpu_custom_call.1} parent=0 // pred_check_branch
    %2804 = sbr.rel (%p2801) target = $region1745
  $region1744: #{tpu_custom_call.1} parent=0 // pred_region
    %s2819 = sand.u32 1, 7
    %p2820 = scmp.eq.s32.totalorder %s2819, 0
    %p2821 = pneg %p2820
    // Predicated region
    $region1757: #{tpu_custom_call.1} parent=1744 // pred_check
      _
    $region1758: #{tpu_custom_call.1} parent=1744 // pred_check_branch
      %2823 = sbr.rel (%p2820) target = $region1760
    $region1759: #{tpu_custom_call.1} parent=1744 // pred_region
      %s2824 = sand.u32 1, 7
      %s2825 = ssub.s32 1, %s2824
      %s2826 = scalar_lea.vmem %s2798, %s2825
      %s2827 = ssub.s32 1, %s2824
      %s2828 = scalar_lea.vmem %s2799, %s2827
      %s2829 = sshllo.u32 0, %s2824
      loop: start=0, step=1, limit=1
      $region1761: #{tpu_custom_call.1} parent=1759 // loop_pre_header
        _
      $region1762: #{tpu_custom_call.1} parent=1759 // loop_header
        %s2831 = sphi 0, %s2835
        %p2832 = scmp.ge.s32.totalorder %s2831, 1
        %s2836 = sphi %s2826, %s2826
        %s2837 = sphi %s2828, %s2828
      $region1763: #{tpu_custom_call.1} parent=1759 // loop_header_branch
        %2834 = sbr.rel (%p2832) target = $region1767
      $region1764: #{tpu_custom_call.1} parent=1759 // loop_body
        %v2838 = vld [vmem:[%s2836] sm:%s2829]
        %2839 = vst [vmem:[%s2837] sm:%s2829] %v2838
      $region1765: #{tpu_custom_call.1} parent=1759 // loop_footer
        %s2835 = sadd.s32 1, %s2831
      $region1766: #{tpu_custom_call.1} parent=1759 // loop_footer_branch
        %2830 = sbr.rel target = $region1762
      $region1767: #{tpu_custom_call.1} parent=1759 // loop_exit
        _
    $region1760: #{tpu_custom_call.1} parent=1744 // pred_fallthru
      _
  $region1745: #{tpu_custom_call.1} parent=0 // pred_fallthru
    _
  // Predicated region
  $region1746: #{tpu_custom_call.1} parent=0 // pred_check
    %p2805 = pneg %p2801
  $region1747: #{tpu_custom_call.1} parent=0 // pred_check_branch
    %2807 = sbr.rel (%p2805) target = $region1749
  $region1748: #{tpu_custom_call.1} parent=0 // pred_region
    %s2808 = sshllo.u32 0, 1
    loop: start=0, step=1, limit=1
    $region1750: #{tpu_custom_call.1} parent=1748 // loop_pre_header
      _
    $region1751: #{tpu_custom_call.1} parent=1748 // loop_header
      %s2810 = sphi 0, %s2814
      %p2811 = scmp.ge.s32.totalorder %s2810, 1
      %s2815 = sphi %s2798, %s2798
      %s2816 = sphi %s2799, %s2799
    $region1752: #{tpu_custom_call.1} parent=1748 // loop_header_branch
      %2813 = sbr.rel (%p2811) target = $region1756
    $region1753: #{tpu_custom_call.1} parent=1748 // loop_body
      %v2817 = vld [vmem:[%s2815] sm:%s2808]
      %2818 = vst [vmem:[%s2816] sm:%s2808] %v2817
    $region1754: #{tpu_custom_call.1} parent=1748 // loop_footer
      %s2814 = sadd.s32 1, %s2810
    $region1755: #{tpu_custom_call.1} parent=1748 // loop_footer_branch
      %2809 = sbr.rel target = $region1751
    $region1756: #{tpu_custom_call.1} parent=1748 // loop_exit
      _
  $region1749: #{tpu_custom_call.1} parent=0 // pred_fallthru
    _
  // Predicated region
  $region1768: #{tpu_custom_call.1} parent=0 // pred_check
    _
  $region1769: #{tpu_custom_call.1} parent=0 // pred_check_branch
    %2842 = sbr.rel (0) target = $region1771
  $region1770: #{tpu_custom_call.1} parent=0 // pred_region
    %2843 = vsyncadd [#allocation2], 16
  $region1771: #{tpu_custom_call.1} parent=0 // pred_fallthru
    _
  %s2844 = sadd.s32 %s13, 59
  %s2845 = sld [smem:[#allocation4 + %s2844]]
  %s2846 = scalar_lea.vmem %s1, %s2845
  %s2847 = scalar_lea.vmem %s2, 59
  %p2849 = scmp.lt.u32.totalorder 1, 8
  %p2850 = pneg %p2849
  // Predicated region
  $region1772: #{tpu_custom_call.1} parent=0 // pred_check
    _
  $region1773: #{tpu_custom_call.1} parent=0 // pred_check_branch
    %2852 = sbr.rel (%p2849) target = $region1775
  $region1774: #{tpu_custom_call.1} parent=0 // pred_region
    %s2867 = sand.u32 1, 7
    %p2868 = scmp.eq.s32.totalorder %s2867, 0
    %p2869 = pneg %p2868
    // Predicated region
    $region1787: #{tpu_custom_call.1} parent=1774 // pred_check
      _
    $region1788: #{tpu_custom_call.1} parent=1774 // pred_check_branch
      %2871 = sbr.rel (%p2868) target = $region1790
    $region1789: #{tpu_custom_call.1} parent=1774 // pred_region
      %s2872 = sand.u32 1, 7
      %s2873 = ssub.s32 1, %s2872
      %s2874 = scalar_lea.vmem %s2846, %s2873
      %s2875 = ssub.s32 1, %s2872
      %s2876 = scalar_lea.vmem %s2847, %s2875
      %s2877 = sshllo.u32 0, %s2872
      loop: start=0, step=1, limit=1
      $region1791: #{tpu_custom_call.1} parent=1789 // loop_pre_header
        _
      $region1792: #{tpu_custom_call.1} parent=1789 // loop_header
        %s2879 = sphi 0, %s2883
        %p2880 = scmp.ge.s32.totalorder %s2879, 1
        %s2884 = sphi %s2874, %s2874
        %s2885 = sphi %s2876, %s2876
      $region1793: #{tpu_custom_call.1} parent=1789 // loop_header_branch
        %2882 = sbr.rel (%p2880) target = $region1797
      $region1794: #{tpu_custom_call.1} parent=1789 // loop_body
        %v2886 = vld [vmem:[%s2884] sm:%s2877]
        %2887 = vst [vmem:[%s2885] sm:%s2877] %v2886
      $region1795: #{tpu_custom_call.1} parent=1789 // loop_footer
        %s2883 = sadd.s32 1, %s2879
      $region1796: #{tpu_custom_call.1} parent=1789 // loop_footer_branch
        %2878 = sbr.rel target = $region1792
      $region1797: #{tpu_custom_call.1} parent=1789 // loop_exit
        _
    $region1790: #{tpu_custom_call.1} parent=1774 // pred_fallthru
      _
  $region1775: #{tpu_custom_call.1} parent=0 // pred_fallthru
    _
  // Predicated region
  $region1776: #{tpu_custom_call.1} parent=0 // pred_check
    %p2853 = pneg %p2849
  $region1777: #{tpu_custom_call.1} parent=0 // pred_check_branch
    %2855 = sbr.rel (%p2853) target = $region1779
  $region1778: #{tpu_custom_call.1} parent=0 // pred_region
    %s2856 = sshllo.u32 0, 1
    loop: start=0, step=1, limit=1
    $region1780: #{tpu_custom_call.1} parent=1778 // loop_pre_header
      _
    $region1781: #{tpu_custom_call.1} parent=1778 // loop_header
      %s2858 = sphi 0, %s2862
      %p2859 = scmp.ge.s32.totalorder %s2858, 1
      %s2863 = sphi %s2846, %s2846
      %s2864 = sphi %s2847, %s2847
    $region1782: #{tpu_custom_call.1} parent=1778 // loop_header_branch
      %2861 = sbr.rel (%p2859) target = $region1786
    $region1783: #{tpu_custom_call.1} parent=1778 // loop_body
      %v2865 = vld [vmem:[%s2863] sm:%s2856]
      %2866 = vst [vmem:[%s2864] sm:%s2856] %v2865
    $region1784: #{tpu_custom_call.1} parent=1778 // loop_footer
      %s2862 = sadd.s32 1, %s2858
    $region1785: #{tpu_custom_call.1} parent=1778 // loop_footer_branch
      %2857 = sbr.rel target = $region1781
    $region1786: #{tpu_custom_call.1} parent=1778 // loop_exit
      _
  $region1779: #{tpu_custom_call.1} parent=0 // pred_fallthru
    _
  // Predicated region
  $region1798: #{tpu_custom_call.1} parent=0 // pred_check
    _
  $region1799: #{tpu_custom_call.1} parent=0 // pred_check_branch
    %2890 = sbr.rel (0) target = $region1801
  $region1800: #{tpu_custom_call.1} parent=0 // pred_region
    %2891 = vsyncadd [#allocation2], 16
  $region1801: #{tpu_custom_call.1} parent=0 // pred_fallthru
    _
  %s2892 = sadd.s32 %s13, 60
  %s2893 = sld [smem:[#allocation4 + %s2892]]
  %s2894 = scalar_lea.vmem %s1, %s2893
  %s2895 = scalar_lea.vmem %s2, 60
  %p2897 = scmp.lt.u32.totalorder 1, 8
  %p2898 = pneg %p2897
  // Predicated region
  $region1802: #{tpu_custom_call.1} parent=0 // pred_check
    _
  $region1803: #{tpu_custom_call.1} parent=0 // pred_check_branch
    %2900 = sbr.rel (%p2897) target = $region1805
  $region1804: #{tpu_custom_call.1} parent=0 // pred_region
    %s2915 = sand.u32 1, 7
    %p2916 = scmp.eq.s32.totalorder %s2915, 0
    %p2917 = pneg %p2916
    // Predicated region
    $region1817: #{tpu_custom_call.1} parent=1804 // pred_check
      _
    $region1818: #{tpu_custom_call.1} parent=1804 // pred_check_branch
      %2919 = sbr.rel (%p2916) target = $region1820
    $region1819: #{tpu_custom_call.1} parent=1804 // pred_region
      %s2920 = sand.u32 1, 7
      %s2921 = ssub.s32 1, %s2920
      %s2922 = scalar_lea.vmem %s2894, %s2921
      %s2923 = ssub.s32 1, %s2920
      %s2924 = scalar_lea.vmem %s2895, %s2923
      %s2925 = sshllo.u32 0, %s2920
      loop: start=0, step=1, limit=1
      $region1821: #{tpu_custom_call.1} parent=1819 // loop_pre_header
        _
      $region1822: #{tpu_custom_call.1} parent=1819 // loop_header
        %s2927 = sphi 0, %s2931
        %p2928 = scmp.ge.s32.totalorder %s2927, 1
        %s2932 = sphi %s2922, %s2922
        %s2933 = sphi %s2924, %s2924
      $region1823: #{tpu_custom_call.1} parent=1819 // loop_header_branch
        %2930 = sbr.rel (%p2928) target = $region1827
      $region1824: #{tpu_custom_call.1} parent=1819 // loop_body
        %v2934 = vld [vmem:[%s2932] sm:%s2925]
        %2935 = vst [vmem:[%s2933] sm:%s2925] %v2934
      $region1825: #{tpu_custom_call.1} parent=1819 // loop_footer
        %s2931 = sadd.s32 1, %s2927
      $region1826: #{tpu_custom_call.1} parent=1819 // loop_footer_branch
        %2926 = sbr.rel target = $region1822
      $region1827: #{tpu_custom_call.1} parent=1819 // loop_exit
        _
    $region1820: #{tpu_custom_call.1} parent=1804 // pred_fallthru
      _
  $region1805: #{tpu_custom_call.1} parent=0 // pred_fallthru
    _
  // Predicated region
  $region1806: #{tpu_custom_call.1} parent=0 // pred_check
    %p2901 = pneg %p2897
  $region1807: #{tpu_custom_call.1} parent=0 // pred_check_branch
    %2903 = sbr.rel (%p2901) target = $region1809
  $region1808: #{tpu_custom_call.1} parent=0 // pred_region
    %s2904 = sshllo.u32 0, 1
    loop: start=0, step=1, limit=1
    $region1810: #{tpu_custom_call.1} parent=1808 // loop_pre_header
      _
    $region1811: #{tpu_custom_call.1} parent=1808 // loop_header
      %s2906 = sphi 0, %s2910
      %p2907 = scmp.ge.s32.totalorder %s2906, 1
      %s2911 = sphi %s2894, %s2894
      %s2912 = sphi %s2895, %s2895
    $region1812: #{tpu_custom_call.1} parent=1808 // loop_header_branch
      %2909 = sbr.rel (%p2907) target = $region1816
    $region1813: #{tpu_custom_call.1} parent=1808 // loop_body
      %v2913 = vld [vmem:[%s2911] sm:%s2904]
      %2914 = vst [vmem:[%s2912] sm:%s2904] %v2913
    $region1814: #{tpu_custom_call.1} parent=1808 // loop_footer
      %s2910 = sadd.s32 1, %s2906
    $region1815: #{tpu_custom_call.1} parent=1808 // loop_footer_branch
      %2905 = sbr.rel target = $region1811
    $region1816: #{tpu_custom_call.1} parent=1808 // loop_exit
      _
  $region1809: #{tpu_custom_call.1} parent=0 // pred_fallthru
    _
  // Predicated region
  $region1828: #{tpu_custom_call.1} parent=0 // pred_check
    _
  $region1829: #{tpu_custom_call.1} parent=0 // pred_check_branch
    %2938 = sbr.rel (0) target = $region1831
  $region1830: #{tpu_custom_call.1} parent=0 // pred_region
    %2939 = vsyncadd [#allocation2], 16
  $region1831: #{tpu_custom_call.1} parent=0 // pred_fallthru
    _
  %s2940 = sadd.s32 %s13, 61
  %s2941 = sld [smem:[#allocation4 + %s2940]]
  %s2942 = scalar_lea.vmem %s1, %s2941
  %s2943 = scalar_lea.vmem %s2, 61
  %p2945 = scmp.lt.u32.totalorder 1, 8
  %p2946 = pneg %p2945
  // Predicated region
  $region1832: #{tpu_custom_call.1} parent=0 // pred_check
    _
  $region1833: #{tpu_custom_call.1} parent=0 // pred_check_branch
    %2948 = sbr.rel (%p2945) target = $region1835
  $region1834: #{tpu_custom_call.1} parent=0 // pred_region
    %s2963 = sand.u32 1, 7
    %p2964 = scmp.eq.s32.totalorder %s2963, 0
    %p2965 = pneg %p2964
    // Predicated region
    $region1847: #{tpu_custom_call.1} parent=1834 // pred_check
      _
    $region1848: #{tpu_custom_call.1} parent=1834 // pred_check_branch
      %2967 = sbr.rel (%p2964) target = $region1850
    $region1849: #{tpu_custom_call.1} parent=1834 // pred_region
      %s2968 = sand.u32 1, 7
      %s2969 = ssub.s32 1, %s2968
      %s2970 = scalar_lea.vmem %s2942, %s2969
      %s2971 = ssub.s32 1, %s2968
      %s2972 = scalar_lea.vmem %s2943, %s2971
      %s2973 = sshllo.u32 0, %s2968
      loop: start=0, step=1, limit=1
      $region1851: #{tpu_custom_call.1} parent=1849 // loop_pre_header
        _
      $region1852: #{tpu_custom_call.1} parent=1849 // loop_header
        %s2975 = sphi 0, %s2979
        %p2976 = scmp.ge.s32.totalorder %s2975, 1
        %s2980 = sphi %s2970, %s2970
        %s2981 = sphi %s2972, %s2972
      $region1853: #{tpu_custom_call.1} parent=1849 // loop_header_branch
        %2978 = sbr.rel (%p2976) target = $region1857
      $region1854: #{tpu_custom_call.1} parent=1849 // loop_body
        %v2982 = vld [vmem:[%s2980] sm:%s2973]
        %2983 = vst [vmem:[%s2981] sm:%s2973] %v2982
      $region1855: #{tpu_custom_call.1} parent=1849 // loop_footer
        %s2979 = sadd.s32 1, %s2975
      $region1856: #{tpu_custom_call.1} parent=1849 // loop_footer_branch
        %2974 = sbr.rel target = $region1852
      $region1857: #{tpu_custom_call.1} parent=1849 // loop_exit
        _
    $region1850: #{tpu_custom_call.1} parent=1834 // pred_fallthru
      _
  $region1835: #{tpu_custom_call.1} parent=0 // pred_fallthru
    _
  // Predicated region
  $region1836: #{tpu_custom_call.1} parent=0 // pred_check
    %p2949 = pneg %p2945
  $region1837: #{tpu_custom_call.1} parent=0 // pred_check_branch
    %2951 = sbr.rel (%p2949) target = $region1839
  $region1838: #{tpu_custom_call.1} parent=0 // pred_region
    %s2952 = sshllo.u32 0, 1
    loop: start=0, step=1, limit=1
    $region1840: #{tpu_custom_call.1} parent=1838 // loop_pre_header
      _
    $region1841: #{tpu_custom_call.1} parent=1838 // loop_header
      %s2954 = sphi 0, %s2958
      %p2955 = scmp.ge.s32.totalorder %s2954, 1
      %s2959 = sphi %s2942, %s2942
      %s2960 = sphi %s2943, %s2943
    $region1842: #{tpu_custom_call.1} parent=1838 // loop_header_branch
      %2957 = sbr.rel (%p2955) target = $region1846
    $region1843: #{tpu_custom_call.1} parent=1838 // loop_body
      %v2961 = vld [vmem:[%s2959] sm:%s2952]
      %2962 = vst [vmem:[%s2960] sm:%s2952] %v2961
    $region1844: #{tpu_custom_call.1} parent=1838 // loop_footer
      %s2958 = sadd.s32 1, %s2954
    $region1845: #{tpu_custom_call.1} parent=1838 // loop_footer_branch
      %2953 = sbr.rel target = $region1841
    $region1846: #{tpu_custom_call.1} parent=1838 // loop_exit
      _
  $region1839: #{tpu_custom_call.1} parent=0 // pred_fallthru
    _
  // Predicated region
  $region1858: #{tpu_custom_call.1} parent=0 // pred_check
    _
  $region1859: #{tpu_custom_call.1} parent=0 // pred_check_branch
    %2986 = sbr.rel (0) target = $region1861
  $region1860: #{tpu_custom_call.1} parent=0 // pred_region
    %2987 = vsyncadd [#allocation2], 16
  $region1861: #{tpu_custom_call.1} parent=0 // pred_fallthru
    _
  %s2988 = sadd.s32 %s13, 62
  %s2989 = sld [smem:[#allocation4 + %s2988]]
  %s2990 = scalar_lea.vmem %s1, %s2989
  %s2991 = scalar_lea.vmem %s2, 62
  %p2993 = scmp.lt.u32.totalorder 1, 8
  %p2994 = pneg %p2993
  // Predicated region
  $region1862: #{tpu_custom_call.1} parent=0 // pred_check
    _
  $region1863: #{tpu_custom_call.1} parent=0 // pred_check_branch
    %2996 = sbr.rel (%p2993) target = $region1865
  $region1864: #{tpu_custom_call.1} parent=0 // pred_region
    %s3011 = sand.u32 1, 7
    %p3012 = scmp.eq.s32.totalorder %s3011, 0
    %p3013 = pneg %p3012
    // Predicated region
    $region1877: #{tpu_custom_call.1} parent=1864 // pred_check
      _
    $region1878: #{tpu_custom_call.1} parent=1864 // pred_check_branch
      %3015 = sbr.rel (%p3012) target = $region1880
    $region1879: #{tpu_custom_call.1} parent=1864 // pred_region
      %s3016 = sand.u32 1, 7
      %s3017 = ssub.s32 1, %s3016
      %s3018 = scalar_lea.vmem %s2990, %s3017
      %s3019 = ssub.s32 1, %s3016
      %s3020 = scalar_lea.vmem %s2991, %s3019
      %s3021 = sshllo.u32 0, %s3016
      loop: start=0, step=1, limit=1
      $region1881: #{tpu_custom_call.1} parent=1879 // loop_pre_header
        _
      $region1882: #{tpu_custom_call.1} parent=1879 // loop_header
        %s3023 = sphi 0, %s3027
        %p3024 = scmp.ge.s32.totalorder %s3023, 1
        %s3028 = sphi %s3018, %s3018
        %s3029 = sphi %s3020, %s3020
      $region1883: #{tpu_custom_call.1} parent=1879 // loop_header_branch
        %3026 = sbr.rel (%p3024) target = $region1887
      $region1884: #{tpu_custom_call.1} parent=1879 // loop_body
        %v3030 = vld [vmem:[%s3028] sm:%s3021]
        %3031 = vst [vmem:[%s3029] sm:%s3021] %v3030
      $region1885: #{tpu_custom_call.1} parent=1879 // loop_footer
        %s3027 = sadd.s32 1, %s3023
      $region1886: #{tpu_custom_call.1} parent=1879 // loop_footer_branch
        %3022 = sbr.rel target = $region1882
      $region1887: #{tpu_custom_call.1} parent=1879 // loop_exit
        _
    $region1880: #{tpu_custom_call.1} parent=1864 // pred_fallthru
      _
  $region1865: #{tpu_custom_call.1} parent=0 // pred_fallthru
    _
  // Predicated region
  $region1866: #{tpu_custom_call.1} parent=0 // pred_check
    %p2997 = pneg %p2993
  $region1867: #{tpu_custom_call.1} parent=0 // pred_check_branch
    %2999 = sbr.rel (%p2997) target = $region1869
  $region1868: #{tpu_custom_call.1} parent=0 // pred_region
    %s3000 = sshllo.u32 0, 1
    loop: start=0, step=1, limit=1
    $region1870: #{tpu_custom_call.1} parent=1868 // loop_pre_header
      _
    $region1871: #{tpu_custom_call.1} parent=1868 // loop_header
      %s3002 = sphi 0, %s3006
      %p3003 = scmp.ge.s32.totalorder %s3002, 1
      %s3007 = sphi %s2990, %s2990
      %s3008 = sphi %s2991, %s2991
    $region1872: #{tpu_custom_call.1} parent=1868 // loop_header_branch
      %3005 = sbr.rel (%p3003) target = $region1876
    $region1873: #{tpu_custom_call.1} parent=1868 // loop_body
      %v3009 = vld [vmem:[%s3007] sm:%s3000]
      %3010 = vst [vmem:[%s3008] sm:%s3000] %v3009
    $region1874: #{tpu_custom_call.1} parent=1868 // loop_footer
      %s3006 = sadd.s32 1, %s3002
    $region1875: #{tpu_custom_call.1} parent=1868 // loop_footer_branch
      %3001 = sbr.rel target = $region1871
    $region1876: #{tpu_custom_call.1} parent=1868 // loop_exit
      _
  $region1869: #{tpu_custom_call.1} parent=0 // pred_fallthru
    _
  // Predicated region
  $region1888: #{tpu_custom_call.1} parent=0 // pred_check
    _
  $region1889: #{tpu_custom_call.1} parent=0 // pred_check_branch
    %3034 = sbr.rel (0) target = $region1891
  $region1890: #{tpu_custom_call.1} parent=0 // pred_region
    %3035 = vsyncadd [#allocation2], 16
  $region1891: #{tpu_custom_call.1} parent=0 // pred_fallthru
    _
  %s3036 = sadd.s32 %s13, 63
  %s3037 = sld [smem:[#allocation4 + %s3036]]
  %s3038 = scalar_lea.vmem %s1, %s3037
  %s3039 = scalar_lea.vmem %s2, 63
  %p3041 = scmp.lt.u32.totalorder 1, 8
  %p3042 = pneg %p3041
  // Predicated region
  $region1892: #{tpu_custom_call.1} parent=0 // pred_check
    _
  $region1893: #{tpu_custom_call.1} parent=0 // pred_check_branch
    %3044 = sbr.rel (%p3041) target = $region1895
  $region1894: #{tpu_custom_call.1} parent=0 // pred_region
    %s3059 = sand.u32 1, 7
    %p3060 = scmp.eq.s32.totalorder %s3059, 0
    %p3061 = pneg %p3060
    // Predicated region
    $region1907: #{tpu_custom_call.1} parent=1894 // pred_check
      _
    $region1908: #{tpu_custom_call.1} parent=1894 // pred_check_branch
      %3063 = sbr.rel (%p3060) target = $region1910
    $region1909: #{tpu_custom_call.1} parent=1894 // pred_region
      %s3064 = sand.u32 1, 7
      %s3065 = ssub.s32 1, %s3064
      %s3066 = scalar_lea.vmem %s3038, %s3065
      %s3067 = ssub.s32 1, %s3064
      %s3068 = scalar_lea.vmem %s3039, %s3067
      %s3069 = sshllo.u32 0, %s3064
      loop: start=0, step=1, limit=1
      $region1911: #{tpu_custom_call.1} parent=1909 // loop_pre_header
        _
      $region1912: #{tpu_custom_call.1} parent=1909 // loop_header
        %s3071 = sphi 0, %s3075
        %p3072 = scmp.ge.s32.totalorder %s3071, 1
        %s3076 = sphi %s3066, %s3066
        %s3077 = sphi %s3068, %s3068
      $region1913: #{tpu_custom_call.1} parent=1909 // loop_header_branch
        %3074 = sbr.rel (%p3072) target = $region1917
      $region1914: #{tpu_custom_call.1} parent=1909 // loop_body
        %v3078 = vld [vmem:[%s3076] sm:%s3069]
        %3079 = vst [vmem:[%s3077] sm:%s3069] %v3078
      $region1915: #{tpu_custom_call.1} parent=1909 // loop_footer
        %s3075 = sadd.s32 1, %s3071
      $region1916: #{tpu_custom_call.1} parent=1909 // loop_footer_branch
        %3070 = sbr.rel target = $region1912
      $region1917: #{tpu_custom_call.1} parent=1909 // loop_exit
        _
    $region1910: #{tpu_custom_call.1} parent=1894 // pred_fallthru
      _
  $region1895: #{tpu_custom_call.1} parent=0 // pred_fallthru
    _
  // Predicated region
  $region1896: #{tpu_custom_call.1} parent=0 // pred_check
    %p3045 = pneg %p3041
  $region1897: #{tpu_custom_call.1} parent=0 // pred_check_branch
    %3047 = sbr.rel (%p3045) target = $region1899
  $region1898: #{tpu_custom_call.1} parent=0 // pred_region
    %s3048 = sshllo.u32 0, 1
    loop: start=0, step=1, limit=1
    $region1900: #{tpu_custom_call.1} parent=1898 // loop_pre_header
      _
    $region1901: #{tpu_custom_call.1} parent=1898 // loop_header
      %s3050 = sphi 0, %s3054
      %p3051 = scmp.ge.s32.totalorder %s3050, 1
      %s3055 = sphi %s3038, %s3038
      %s3056 = sphi %s3039, %s3039
    $region1902: #{tpu_custom_call.1} parent=1898 // loop_header_branch
      %3053 = sbr.rel (%p3051) target = $region1906
    $region1903: #{tpu_custom_call.1} parent=1898 // loop_body
      %v3057 = vld [vmem:[%s3055] sm:%s3048]
      %3058 = vst [vmem:[%s3056] sm:%s3048] %v3057
    $region1904: #{tpu_custom_call.1} parent=1898 // loop_footer
      %s3054 = sadd.s32 1, %s3050
    $region1905: #{tpu_custom_call.1} parent=1898 // loop_footer_branch
      %3049 = sbr.rel target = $region1901
    $region1906: #{tpu_custom_call.1} parent=1898 // loop_exit
      _
  $region1899: #{tpu_custom_call.1} parent=0 // pred_fallthru
    _
  // Predicated region
  $region1918: #{tpu_custom_call.1} parent=0 // pred_check
    _
  $region1919: #{tpu_custom_call.1} parent=0 // pred_check_branch
    %3082 = sbr.rel (0) target = $region1921
  $region1920: #{tpu_custom_call.1} parent=0 // pred_region
    %3083 = vsyncadd [#allocation2], 16
  $region1921: #{tpu_custom_call.1} parent=0 // pred_fallthru
    _
  %s3084 = smul.u32 1, 1
  %s3085 = sshll.u32 %s3084, 4
  %3086 = dma.done [#allocation2], %s3085
  %s3087 = sshll.u32 %s3084, 4
  %3088 = dma.done [#allocation2], %s3087
  %s3089 = sshll.u32 %s3084, 4
  %3090 = dma.done [#allocation2], %s3089
  %s3091 = sshll.u32 %s3084, 4
  %3092 = dma.done [#allocation2], %s3091
  %s3093 = sshll.u32 %s3084, 4
  %3094 = dma.done [#allocation2], %s3093
  %s3095 = sshll.u32 %s3084, 4
  %3096 = dma.done [#allocation2], %s3095
  %s3097 = sshll.u32 %s3084, 4
  %3098 = dma.done [#allocation2], %s3097
  %s3099 = sshll.u32 %s3084, 4
  %3100 = dma.done [#allocation2], %s3099
  %s3101 = sshll.u32 %s3084, 4
  %3102 = dma.done [#allocation2], %s3101
  %s3103 = sshll.u32 %s3084, 4
  %3104 = dma.done [#allocation2], %s3103
  %s3105 = sshll.u32 %s3084, 4
  %3106 = dma.done [#allocation2], %s3105
  %s3107 = sshll.u32 %s3084, 4
  %3108 = dma.done [#allocation2], %s3107
  %s3109 = sshll.u32 %s3084, 4
  %3110 = dma.done [#allocation2], %s3109
  %s3111 = sshll.u32 %s3084, 4
  %3112 = dma.done [#allocation2], %s3111
  %s3113 = sshll.u32 %s3084, 4
  %3114 = dma.done [#allocation2], %s3113
  %s3115 = sshll.u32 %s3084, 4
  %3116 = dma.done [#allocation2], %s3115
  %s3117 = sshll.u32 %s3084, 4
  %3118 = dma.done [#allocation2], %s3117
  %s3119 = sshll.u32 %s3084, 4
  %3120 = dma.done [#allocation2], %s3119
  %s3121 = sshll.u32 %s3084, 4
  %3122 = dma.done [#allocation2], %s3121
  %s3123 = sshll.u32 %s3084, 4
  %3124 = dma.done [#allocation2], %s3123
  %s3125 = sshll.u32 %s3084, 4
  %3126 = dma.done [#allocation2], %s3125
  %s3127 = sshll.u32 %s3084, 4
  %3128 = dma.done [#allocation2], %s3127
  %s3129 = sshll.u32 %s3084, 4
  %3130 = dma.done [#allocation2], %s3129
  %s3131 = sshll.u32 %s3084, 4
  %3132 = dma.done [#allocation2], %s3131
  %s3133 = sshll.u32 %s3084, 4
  %3134 = dma.done [#allocation2], %s3133
  %s3135 = sshll.u32 %s3084, 4
  %3136 = dma.done [#allocation2], %s3135
  %s3137 = sshll.u32 %s3084, 4
  %3138 = dma.done [#allocation2], %s3137
  %s3139 = sshll.u32 %s3084, 4
  %3140 = dma.done [#allocation2], %s3139
  %s3141 = sshll.u32 %s3084, 4
  %3142 = dma.done [#allocation2], %s3141
  %s3143 = sshll.u32 %s3084, 4
  %3144 = dma.done [#allocation2], %s3143
  %s3145 = sshll.u32 %s3084, 4
  %3146 = dma.done [#allocation2], %s3145
  %s3147 = sshll.u32 %s3084, 4
  %3148 = dma.done [#allocation2], %s3147
  %s3149 = sshll.u32 %s3084, 4
  %3150 = dma.done [#allocation2], %s3149
  %s3151 = sshll.u32 %s3084, 4
  %3152 = dma.done [#allocation2], %s3151
  %s3153 = sshll.u32 %s3084, 4
  %3154 = dma.done [#allocation2], %s3153
  %s3155 = sshll.u32 %s3084, 4
  %3156 = dma.done [#allocation2], %s3155
  %s3157 = sshll.u32 %s3084, 4
  %3158 = dma.done [#allocation2], %s3157
  %s3159 = sshll.u32 %s3084, 4
  %3160 = dma.done [#allocation2], %s3159
  %s3161 = sshll.u32 %s3084, 4
  %3162 = dma.done [#allocation2], %s3161
  %s3163 = sshll.u32 %s3084, 4
  %3164 = dma.done [#allocation2], %s3163
  %s3165 = sshll.u32 %s3084, 4
  %3166 = dma.done [#allocation2], %s3165
  %s3167 = sshll.u32 %s3084, 4
  %3168 = dma.done [#allocation2], %s3167
  %s3169 = sshll.u32 %s3084, 4
  %3170 = dma.done [#allocation2], %s3169
  %s3171 = sshll.u32 %s3084, 4
  %3172 = dma.done [#allocation2], %s3171
  %s3173 = sshll.u32 %s3084, 4
  %3174 = dma.done [#allocation2], %s3173
  %s3175 = sshll.u32 %s3084, 4
  %3176 = dma.done [#allocation2], %s3175
  %s3177 = sshll.u32 %s3084, 4
  %3178 = dma.done [#allocation2], %s3177
  %s3179 = sshll.u32 %s3084, 4
  %3180 = dma.done [#allocation2], %s3179
  %s3181 = sshll.u32 %s3084, 4
  %3182 = dma.done [#allocation2], %s3181
  %s3183 = sshll.u32 %s3084, 4
  %3184 = dma.done [#allocation2], %s3183
  %s3185 = sshll.u32 %s3084, 4
  %3186 = dma.done [#allocation2], %s3185
  %s3187 = sshll.u32 %s3084, 4
  %3188 = dma.done [#allocation2], %s3187
  %s3189 = sshll.u32 %s3084, 4
  %3190 = dma.done [#allocation2], %s3189
  %s3191 = sshll.u32 %s3084, 4
  %3192 = dma.done [#allocation2], %s3191
  %s3193 = sshll.u32 %s3084, 4
  %3194 = dma.done [#allocation2], %s3193
  %s3195 = sshll.u32 %s3084, 4
  %3196 = dma.done [#allocation2], %s3195
  %s3197 = sshll.u32 %s3084, 4
  %3198 = dma.done [#allocation2], %s3197
  %s3199 = sshll.u32 %s3084, 4
  %3200 = dma.done [#allocation2], %s3199
  %s3201 = sshll.u32 %s3084, 4
  %3202 = dma.done [#allocation2], %s3201
  %s3203 = sshll.u32 %s3084, 4
  %3204 = dma.done [#allocation2], %s3203
  %s3205 = sshll.u32 %s3084, 4
  %3206 = dma.done [#allocation2], %s3205
  %s3207 = sshll.u32 %s3084, 4
  %3208 = dma.done [#allocation2], %s3207
  %s3209 = sshll.u32 %s3084, 4
  %3210 = dma.done [#allocation2], %s3209
  %s3211 = sshll.u32 %s3084, 4
  %3212 = dma.done [#allocation2], %s3211
  // Predicated region
  $region1922: #{tpu_custom_call.1} parent=0 // pred_check
    _
  $region1923: #{tpu_custom_call.1} parent=0 // pred_check_branch
    %3214 = sbr.rel (0) target = $region1925
  $region1924: #{tpu_custom_call.1} parent=0 // pred_region
    _
  $region1925: #{tpu_custom_call.1} parent=0 // pred_fallthru
    _
  // Predicated region
  $region1926: #{tpu_custom_call.1} parent=0 // pred_check
    _
  $region1927: #{tpu_custom_call.1} parent=0 // pred_check_branch
    %3216 = sbr.rel (0) target = $region1929
  $region1928: #{tpu_custom_call.1} parent=0 // pred_region
    _
  $region1929: #{tpu_custom_call.1} parent=0 // pred_fallthru
    _
  %3217 = vsyncmov [#allocation2]
  %s3218 = vpop.sfrf %3217
  %p3219 = scmp.eq.s32.totalorder %s3218, 0
  %p3220 = pneg %p3219
  %3222 = shalt.err (%p3220)

</llo_original>
